<compile_context>
chip_gen: v7x
topology: tpu7x:2x2x1
jax: 0.10.0
libtpu: 0.0.40
codegen_flags: <defaults>
</compile_context>

<pallas_src>
import jax
import jax.numpy as jnp
from jax.experimental import pallas as pl
from jax.experimental.pallas import tpu as pltpu


def _round_up(c, m=128):
    return ((c + m - 1) // m) * m


def _vmem_limit_bytes(need):
    cap = 96 * 1024 * 1024
    try:  # leave headroom below the physical per-core VMEM (64 MiB on v7x)
        cap = min(cap, int(pltpu.get_tpu_info().vmem_capacity_bytes) - (16 << 20))
    except Exception:
        pass
    return int(min(max(need * 3 // 2 + (4 << 20), 32 << 20), cap))


# ----------------------------------------------------------------------------
# Kernel A: ConvTranspose2d 2x2 / stride 2 as a row-tiled matmul.
# stride == kernel size -> taps never overlap; each input pixel emits its 2x2
# output block.  Output layout (rows, r, W, s*C + c) flattens bit-exactly to
# the interleaved NHWC image, so the pixel shuffle is a metadata reshape.
# ----------------------------------------------------------------------------
def _deconv2x2_kernel(x_ref, w_ref, b_ref, o_ref):
    th, W, Cin = x_ref.shape
    C2 = o_ref.shape[3]                      # 2 * Cout_pad (lane-aligned)
    x = x_ref[...].reshape(th * W, Cin)
    y = jnp.dot(x, w_ref[...], preferred_element_type=jnp.float32) + b_ref[...]
    y = y.reshape(th, W, 2 * C2)
    o_ref[:, 0, :, :] = y[:, :, 0:C2].astype(o_ref.dtype)       # even rows
    o_ref[:, 1, :, :] = y[:, :, C2:2 * C2].astype(o_ref.dtype)  # odd rows


def conv_transpose2x2_stride2(x_nhwc, w, b, cout_pad):
    """nn.ConvTranspose2d(C, C, (2,2), 2) in NHWC.
    x_nhwc: (N,H,W,Cin) bf16; w: PyTorch layout (Cin, Cout, 2, 2); b: (Cout,).
    Returns (N, 2H, 2W, cout_pad) bf16 (channels zero-padded to cout_pad)."""
    N, H, W, Cin = x_nhwc.shape
    Cout = w.shape[1]
    NH = N * H
    # pad output channels, then (Cin, Co, r, s) -> (Cin, r, s, Co) -> (Cin, 4*Co)
    wp = jnp.zeros((Cin, cout_pad, 2, 2), w.dtype).at[:, :Cout].set(w)
    wm = jnp.transpose(wp, (0, 2, 3, 1)).reshape(Cin, 4 * cout_pad).astype(jnp.bfloat16)
    bp = jnp.zeros((cout_pad,), jnp.float32).at[:Cout].set(b.astype(jnp.float32))
    bm = jnp.tile(bp, 4).reshape(1, 4 * cout_pad)
    xr = x_nhwc.reshape(NH, W, Cin)          # contiguous -> free reshape

    # ~2048 matmul rows (input pixels) per grid step (review: 512 was too small)
    th = min(NH, max(1, (2048 + W - 1) // W))
    grid = (pl.cdiv(NH, th),)

    need = (2 * th * W * Cin * 2 + 2 * th * 2 * W * 2 * cout_pad * 2
            + 2 * (Cin * 4 * cout_pad * 2 + 4 * cout_pad * 4)
            + th * W * 4 * cout_pad * 4)     # f32 matmul result live value

    y = pl.pallas_call(
        _deconv2x2_kernel,
        out_shape=jax.ShapeDtypeStruct((NH, 2, W, 2 * cout_pad), jnp.bfloat16),
        grid=grid,
        in_specs=[
            pl.BlockSpec((th, W, Cin), lambda i: (i, 0, 0)),
            pl.BlockSpec((Cin, 4 * cout_pad), lambda i: (0, 0)),   # resident weight
            pl.BlockSpec((1, 4 * cout_pad), lambda i: (0, 0)),
        ],
        out_specs=pl.BlockSpec((th, 2, W, 2 * cout_pad), lambda i: (i, 0, 0, 0)),
        compiler_params=pltpu.CompilerParams(
            dimension_semantics=("parallel",),
            vmem_limit_bytes=_vmem_limit_bytes(need),
        ),
        cost_estimate=pl.CostEstimate(
            flops=2 * NH * W * Cin * 4 * cout_pad,
            transcendentals=0,
            bytes_accessed=NH * W * Cin * 2 + NH * 2 * W * 2 * cout_pad * 2
            + Cin * 4 * cout_pad * 2,
        ),
    )(xr, wm, bm)

    # (NH, 2, W, 2*Co) has the exact memory layout of the interleaved
    # (N, 2H, 2W, Co) image -> metadata-only reshape, no data movement.
    return y.reshape(N, 2 * H, 2 * W, cout_pad)


# ----------------------------------------------------------------------------
# Kernels B/C: Conv3x3(pad=1) + folded BatchNorm + ReLU.
# The scratch xw holds the three kw-shifted (and channel-concatenated) views
# of the zero-padded image: xw[r, j, kw*Cin + c] = padded_img[r, j+kw, c].
# The conv is then 3 dots (one per kh) over a 3*Cin contraction.
# ----------------------------------------------------------------------------
def _zero_halo_strips(xw_ref, H, W, Cin):
    # Top/bottom zero rows + the left/right zero columns of the kw=0 / kw=2
    # shifted slots.  Re-zeroed every step (cheap) instead of a program_id==0
    # guard, which would be unsafe if a "parallel" axis is split across cores.
    C3 = xw_ref.shape[2]
    zrow = jnp.zeros((1, W, C3), xw_ref.dtype)
    xw_ref[0:1, :, :] = zrow
    xw_ref[H + 1:H + 2, :, :] = zrow
    zcol = jnp.zeros((H, 1, Cin), xw_ref.dtype)
    xw_ref[1:H + 1, 0:1, 0:Cin] = zcol
    xw_ref[1:H + 1, W - 1:W, 2 * Cin:3 * Cin] = zcol


def _conv_dots_epilogue(xw_ref, w_ref, s_ref, t_ref, o_ref):
    H, W = o_ref.shape[1], o_ref.shape[2]
    C3 = xw_ref.shape[2]
    # 3 dots over kh; first dot is a plain store (no zero-init + RMW).
    acc = jnp.dot(xw_ref[0:H, :, :].reshape(H * W, C3), w_ref[0],
                  preferred_element_type=jnp.float32)
    acc = acc + jnp.dot(xw_ref[1:H + 1, :, :].reshape(H * W, C3), w_ref[1],
                        preferred_element_type=jnp.float32)
    acc = acc + jnp.dot(xw_ref[2:H + 2, :, :].reshape(H * W, C3), w_ref[2],
                        preferred_element_type=jnp.float32)
    y = jnp.maximum(acc * s_ref[...] + t_ref[...], 0.0)   # folded BN + ReLU (f32)
    o_ref[...] = y.reshape(o_ref.shape).astype(o_ref.dtype)


def _concat_conv3x3_bn_relu_kernel(a_ref, b_ref, w_ref, s_ref, t_ref, o_ref, xw_ref):
    H, W = o_ref.shape[1], o_ref.shape[2]
    Ca, Cb = a_ref.shape[3], b_ref.shape[3]
    Cin = Ca + Cb                              # Ca, Cb multiples of 128 -> aligned
    _zero_halo_strips(xw_ref, H, W, Cin)
    a = a_ref[0]
    b = b_ref[0]
    # kw = 0 slot: padded col j -> image col j-1
    xw_ref[1:H + 1, 1:W, 0:Ca] = a[:, 0:W - 1, :]
    xw_ref[1:H + 1, 1:W, Ca:Cin] = b[:, 0:W - 1, :]
    # kw = 1 slot: image col j
    xw_ref[1:H + 1, :, Cin:Cin + Ca] = a
    xw_ref[1:H + 1, :, Cin + Ca:2 * Cin] = b
    # kw = 2 slot: image col j+1
    xw_ref[1:H + 1, 0:W - 1, 2 * Cin:2 * Cin + Ca] = a[:, 1:W, :]
    xw_ref[1:H + 1, 0:W - 1, 2 * Cin + Ca:3 * Cin] = b[:, 1:W, :]
    _conv_dots_epilogue(xw_ref, w_ref, s_ref, t_ref, o_ref)


def _conv3x3_bn_relu_kernel(x_ref, w_ref, s_ref, t_ref, o_ref, xw_ref):
    H, W = o_ref.shape[1], o_ref.shape[2]
    Cin = x_ref.shape[3]
    _zero_halo_strips(xw_ref, H, W, Cin)
    x = x_ref[0]
    xw_ref[1:H + 1, 1:W, 0:Cin] = x[:, 0:W - 1, :]
    xw_ref[1:H + 1, :, Cin:2 * Cin] = x
    xw_ref[1:H + 1, 0:W - 1, 2 * Cin:3 * Cin] = x[:, 1:W, :]
    _conv_dots_epilogue(xw_ref, w_ref, s_ref, t_ref, o_ref)


def _conv_params_and_cost(N, H, W, Cin, Cout, out_dtype, in_bytes):
    out_isize = jnp.dtype(out_dtype).itemsize
    scratch = (H + 2) * W * 3 * Cin * 2                          # bf16 kw-stacked image
    blocks = (2 * (in_bytes // N)                                # double-buffered inputs
              + 2 * H * W * Cout * out_isize                     # double-buffered output
              + 2 * (3 * 3 * Cin * Cout * 2 + 2 * Cout * 4))     # weights + scale/bias
    acc_live = 2 * H * W * Cout * 4                              # f32 matmul partials
    params = pltpu.CompilerParams(
        dimension_semantics=("parallel",),
        vmem_limit_bytes=_vmem_limit_bytes(scratch + blocks + acc_live),
    )
    cost = pl.CostEstimate(
        flops=2 * 9 * N * H * W * Cin * Cout,
        transcendentals=0,
        bytes_accessed=in_bytes + N * H * W * Cout * out_isize + 9 * Cin * Cout * 2,
    )
    return params, cost


def concat_conv3x3_bn_relu(a, b, w3, scale, bias, out_dtype):
    """First ConvBatchNorm, fused with the channel concat.
    a: (N,H,W,Ca) upsampled branch, b: (N,H,W,Cb) skip branch (bf16, 128-padded)."""
    N, H, W, Ca = a.shape
    Cb = b.shape[3]
    Cin, Cout = Ca + Cb, w3.shape[-1]
    params, cost = _conv_params_and_cost(N, H, W, Cin, Cout, out_dtype,
                                         in_bytes=N * H * W * Cin * 2)
    return pl.pallas_call(
        _concat_conv3x3_bn_relu_kernel,
        out_shape=jax.ShapeDtypeStruct((N, H, W, Cout), out_dtype),
        grid=(N,),
        in_specs=[
            pl.BlockSpec((1, H, W, Ca), lambda n: (n, 0, 0, 0)),
            pl.BlockSpec((1, H, W, Cb), lambda n: (n, 0, 0, 0)),
            pl.BlockSpec((3, 3 * Cin, Cout), lambda n: (0, 0, 0)),
            pl.BlockSpec((1, Cout), lambda n: (0, 0)),
            pl.BlockSpec((1, Cout), lambda n: (0, 0)),
        ],
        out_specs=pl.BlockSpec((1, H, W, Cout), lambda n: (n, 0, 0, 0)),
        scratch_shapes=[pltpu.VMEM((H + 2, W, 3 * Cin), jnp.bfloat16)],
        compiler_params=params,
        cost_estimate=cost,
    )(a, b, w3, scale, bias)


def conv3x3_bn_relu(x, w3, scale, bias, out_dtype):
    """Subsequent ConvBatchNorm layers.  x: (N,H,W,Cin) bf16, Cin 128-padded."""
    N, H, W, Cin = x.shape
    Cout = w3.shape[-1]
    params, cost = _conv_params_and_cost(N, H, W, Cin, Cout, out_dtype,
                                         in_bytes=N * H * W * Cin * 2)
    return pl.pallas_call(
        _conv3x3_bn_relu_kernel,
        out_shape=jax.ShapeDtypeStruct((N, H, W, Cout), out_dtype),
        grid=(N,),
        in_specs=[
            pl.BlockSpec((1, H, W, Cin), lambda n: (n, 0, 0, 0)),
            pl.BlockSpec((3, 3 * Cin, Cout), lambda n: (0, 0, 0)),
            pl.BlockSpec((1, Cout), lambda n: (0, 0)),
            pl.BlockSpec((1, Cout), lambda n: (0, 0)),
        ],
        out_specs=pl.BlockSpec((1, H, W, Cout), lambda n: (n, 0, 0, 0)),
        scratch_shapes=[pltpu.VMEM((H + 2, W, 3 * Cin), jnp.bfloat16)],
        compiler_params=params,
        cost_estimate=cost,
    )(x, w3, scale, bias)


# ----------------------------------------------------------------------------
# Parameter prep (weight re-layout, channel padding, BN folding)
# ----------------------------------------------------------------------------
def _prep_conv_weight(w, ch_map, cin_pad, cout_pad):
    """PyTorch conv weight (Cout, Cin, 3, 3) -> (3, 3*cin_pad, cout_pad) bf16,
    kw folded into the contraction dim; ch_map = [(src_start, n, dst_start)]
    scatters input-channel blocks into the (zero-)padded channel layout."""
    cout = w.shape[0]
    wt = jnp.transpose(w, (2, 3, 1, 0))                 # (kh, kw, cin, cout)
    wp = jnp.zeros((3, 3, cin_pad, cout_pad), w.dtype)
    for src, n, dst in ch_map:
        wp = wp.at[:, :, dst:dst + n, 0:cout].set(wt[:, :, src:src + n, :])
    return wp.reshape(3, 3 * cin_pad, cout_pad).astype(jnp.bfloat16)


def _fold_bn(conv_b, gamma, beta, mean, var, cout_pad, eps=1e-5):
    # eval-mode BatchNorm folded into a per-channel affine after the conv;
    # padded channels get scale=bias=0 -> ReLU(0) = 0.
    scale = gamma / jnp.sqrt(var + eps)
    bias = beta + scale * (conv_b - mean)
    cout = gamma.shape[0]
    s = jnp.zeros((1, cout_pad), jnp.float32).at[0, :cout].set(scale.astype(jnp.float32))
    t = jnp.zeros((1, cout_pad), jnp.float32).at[0, :cout].set(bias.astype(jnp.float32))
    return s, t


# ----------------------------------------------------------------------------
# UpBlock forward
# ----------------------------------------------------------------------------
def up_block_forward(params, x_nchw, skip_nchw):
    # NCHW -> NHWC, fused with the bf16 cast (activations travel as bf16).
    x = jnp.transpose(x_nchw, (0, 2, 3, 1)).astype(jnp.bfloat16)
    skip = jnp.transpose(skip_nchw, (0, 2, 3, 1)).astype(jnp.bfloat16)

    ca = params["up_w"].shape[1]               # deconv real out channels
    cb = skip.shape[-1]
    ca_pad, cb_pad = _round_up(ca), _round_up(cb)

    # ConvTranspose2d -> (N, 2H, 2W, ca_pad) bf16 (channels already 128-padded)
    up = conv_transpose2x2_stride2(x, params["up_w"], params["up_b"], ca_pad)
    # skip channels padded to a lane multiple so the concat offset is aligned
    skip = jnp.pad(skip, ((0, 0), (0, 0), (0, 0), (0, cb_pad - cb)))

    convs = params["convs"]
    h = None
    for li, conv in enumerate(convs):
        cout = conv["w"].shape[0]
        cout_pad = _round_up(cout)
        s, t = _fold_bn(conv["b"], conv["gamma"], conv["beta"],
                        conv["mean"], conv["var"], cout_pad)
        out_dtype = jnp.float32 if li == len(convs) - 1 else jnp.bfloat16
        if li == 0:
            cin_pad = ca_pad + cb_pad
            w3 = _prep_conv_weight(conv["w"], [(0, ca, 0), (ca, cb, ca_pad)],
                                   cin_pad, cout_pad)
            h = concat_conv3x3_bn_relu(up, skip, w3, s, t, out_dtype)
        else:
            cin = conv["w"].shape[1]
            w3 = _prep_conv_weight(conv["w"], [(0, cin, 0)],
                                   _round_up(cin), cout_pad)
            h = conv3x3_bn_relu(h, w3, s, t, out_dtype)

    h = h[..., :convs[-1]["w"].shape[0]]            # drop channel padding
    return jnp.transpose(h, (0, 3, 1, 2))           # NHWC -> NCHW


# ----------------------------------------------------------------------------
# Deterministic parameter init (shapes match the PyTorch module __init__)
# ----------------------------------------------------------------------------
def init_params(key, in_channels, out_channels, nb_conv):
    cin_up = in_channels // 2
    keys = jax.random.split(key, 2 + 6 * nb_conv)
    params = {
        "up_w": 0.1 * jax.random.normal(keys[0], (cin_up, cin_up, 2, 2), jnp.float32),
        "up_b": 0.1 * jax.random.normal(keys[1], (cin_up,), jnp.float32),
        "convs": [],
    }
    cin = in_channels
    ki = 2
    for _ in range(nb_conv):
        cout = out_channels
        params["convs"].append({
            "w": 0.1 * jax.random.normal(keys[ki], (cout, cin, 3, 3), jnp.float32),
            "b": 0.1 * jax.random.normal(keys[ki + 1], (cout,), jnp.float32),
            "gamma": 1.0 + 0.1 * jax.random.normal(keys[ki + 2], (cout,), jnp.float32),
            "beta": 0.1 * jax.random.normal(keys[ki + 3], (cout,), jnp.float32),
            "mean": 0.1 * jax.random.normal(keys[ki + 4], (cout,), jnp.float32),
            "var": 1.0 + 0.1 * jax.random.uniform(keys[ki + 5], (cout,), jnp.float32),
        })
        cin = cout
        ki += 6
    return params


if __name__ == "__main__":
    in_channels, out_channels, nb_conv = 8, 8, 2
    N, H, W = 2, 8, 8  # x spatial; skip is 2H x 2W

    key = jax.random.PRNGKey(0)
    k_x, k_skip, k_p = jax.random.split(key, 3)
    x = jax.random.normal(k_x, (N, in_channels // 2, H, W), jnp.float32)
    skip_x = jax.random.normal(k_skip, (N, in_channels // 2, 2 * H, 2 * W), jnp.float32)
    params = init_params(k_p, in_channels, out_channels, nb_conv)

    out = jax.jit(up_block_forward)(params, x, skip_x)
    out = jax.block_until_ready(out)
    assert out.shape == (N, out_channels, 2 * H, 2 * W), out.shape
    assert bool(jnp.all(jnp.isfinite(out)))
    print("KERNEL_OK")
</pallas_src>

<mosaic_0001>
module attributes {stable_mosaic.version = 11 : i64} {
  func.func @_deconv2x2_kernel(%arg0: i32, %arg1: memref<16x8x4xbf16, #tpu.memory_space<vmem>>, %arg2: memref<4x512xbf16, #tpu.memory_space<vmem>>, %arg3: memref<1x512xf32, #tpu.memory_space<vmem>>, %arg4: memref<16x2x8x256xbf16, #tpu.memory_space<vmem>>) attributes {dimension_semantics = [#tpu.dimension_semantics<parallel>], iteration_bounds = array<i64: 1>, scalar_prefetch = 0 : i64, scratch_operands = 0 : i64, tpu.core_type = #tpu.core_type<tc>, window_params = [{transform_indices = @transform_0, window_bounds = array<i64: 16, 8, 4>}, {pipeline_mode = #tpu.pipeline_mode<synchronous>, transform_indices = @transform_1, window_bounds = array<i64: 4, 512>}, {pipeline_mode = #tpu.pipeline_mode<synchronous>, transform_indices = @transform_2, window_bounds = array<i64: 1, 512>}, {transform_indices = @transform_3, window_bounds = array<i64: 16, 2, 8, 256>}]} {
    %c0 = arith.constant 0 : index
    %c0_0 = arith.constant 0 : index
    %c0_1 = arith.constant 0 : index
    %0 = vector.load %arg1[%c0, %c0_0, %c0_1] : memref<16x8x4xbf16, #tpu.memory_space<vmem>>, vector<16x8x4xbf16>
    %1 = vector.shape_cast %0 : vector<16x8x4xbf16> to vector<128x4xbf16>
    %c0_2 = arith.constant 0 : index
    %c0_3 = arith.constant 0 : index
    %2 = vector.load %arg2[%c0_2, %c0_3] : memref<4x512xbf16, #tpu.memory_space<vmem>>, vector<4x512xbf16>
    %cst = arith.constant dense<0.000000e+00> : vector<128x512xf32>
    %3 = tpu.matmul %1, %2, %cst {dimension_numbers = #tpu.dot_dimension_numbers<[1], [0], [0], [1], [0, 0, 1, 1], [], []>} : vector<128x4xbf16>, vector<4x512xbf16>, vector<128x512xf32> -> vector<128x512xf32>
    %c0_4 = arith.constant 0 : index
    %c0_5 = arith.constant 0 : index
    %4 = vector.load %arg3[%c0_4, %c0_5] : memref<1x512xf32, #tpu.memory_space<vmem>>, vector<1x512xf32>
    %5 = vector.broadcast %4 : vector<1x512xf32> to vector<128x512xf32>
    %6 = arith.addf %3, %5 : vector<128x512xf32>
    %7 = vector.shape_cast %6 : vector<128x512xf32> to vector<16x8x512xf32>
    %8 = vector.extract_strided_slice %7 {offsets = [0, 0, 0], sizes = [16, 8, 256], strides = [1, 1, 1]} : vector<16x8x512xf32> to vector<16x8x256xf32>
    %9 = arith.truncf %8 : vector<16x8x256xf32> to vector<16x8x256xbf16>
    %c0_6 = arith.constant 0 : index
    %c0_7 = arith.constant 0 : index
    %c0_8 = arith.constant 0 : index
    %c0_9 = arith.constant 0 : index
    %10 = vector.load %arg4[%c0_6, %c0_7, %c0_8, %c0_9] : memref<16x2x8x256xbf16, #tpu.memory_space<vmem>>, vector<16x1x8x256xbf16>
    %11 = vector.shape_cast %10 : vector<16x1x8x256xbf16> to vector<16x8x256xbf16>
    %12 = vector.shape_cast %9 : vector<16x8x256xbf16> to vector<16x1x8x256xbf16>
    tpu.vector_store %arg4[%c0_6, %c0_7, %c0_8, %c0_9], %12 {strides = array<i32>} : memref<16x2x8x256xbf16, #tpu.memory_space<vmem>>, vector<16x1x8x256xbf16>,
    %13 = vector.extract_strided_slice %7 {offsets = [0, 0, 256], sizes = [16, 8, 256], strides = [1, 1, 1]} : vector<16x8x512xf32> to vector<16x8x256xf32>
    %14 = arith.truncf %13 : vector<16x8x256xf32> to vector<16x8x256xbf16>
    %c0_10 = arith.constant 0 : index
    %c1 = arith.constant 1 : index
    %c0_11 = arith.constant 0 : index
    %c0_12 = arith.constant 0 : index
    %15 = vector.load %arg4[%c0_10, %c1, %c0_11, %c0_12] : memref<16x2x8x256xbf16, #tpu.memory_space<vmem>>, vector<16x1x8x256xbf16>
    %16 = vector.shape_cast %15 : vector<16x1x8x256xbf16> to vector<16x8x256xbf16>
    %17 = vector.shape_cast %14 : vector<16x8x256xbf16> to vector<16x1x8x256xbf16>
    tpu.vector_store %arg4[%c0_10, %c1, %c0_11, %c0_12], %17 {strides = array<i32>} : memref<16x2x8x256xbf16, #tpu.memory_space<vmem>>, vector<16x1x8x256xbf16>,
    return
  }
  func.func @transform_0(%arg0: i32) -> (i32, i32, i32) {
    %c0_i32 = arith.constant 0 : i32
    %c0_i32_0 = arith.constant 0 : i32
    %c0_i32_1 = arith.constant 0 : i32
    return %arg0, %c0_i32, %c0_i32_0 : i32, i32, i32
  }
  func.func @transform_1(%arg0: i32) -> (i32, i32) {
    %c0_i32 = arith.constant 0 : i32
    %c0_i32_0 = arith.constant 0 : i32
    %c0_i32_1 = arith.constant 0 : i32
    return %c0_i32, %c0_i32_0 : i32, i32
  }
  func.func @transform_2(%arg0: i32) -> (i32, i32) {
    %c0_i32 = arith.constant 0 : i32
    %c0_i32_0 = arith.constant 0 : i32
    %c0_i32_1 = arith.constant 0 : i32
    return %c0_i32, %c0_i32_0 : i32, i32
  }
  func.func @transform_3(%arg0: i32) -> (i32, i32, i32, i32) {
    %c0_i32 = arith.constant 0 : i32
    %c0_i32_0 = arith.constant 0 : i32
    %c0_i32_1 = arith.constant 0 : i32
    %c0_i32_2 = arith.constant 0 : i32
    return %arg0, %c0_i32, %c0_i32_0, %c0_i32_1 : i32, i32, i32, i32
  }
}

module attributes {stable_mosaic.version = 11 : i64} {
  func.func @_concat_conv3x3_bn_relu_kernel(%arg0: i32, %arg1: memref<1x16x16x128xbf16, #tpu.memory_space<vmem>>, %arg2: memref<1x16x16x128xbf16, #tpu.memory_space<vmem>>, %arg3: memref<3x768x128xbf16, #tpu.memory_space<vmem>>, %arg4: memref<1x128xf32, #tpu.memory_space<vmem>>, %arg5: memref<1x128xf32, #tpu.memory_space<vmem>>, %arg6: memref<1x16x16x128xbf16, #tpu.memory_space<vmem>>, %arg7: memref<18x16x768xbf16, #tpu.memory_space<vmem>>) attributes {dimension_semantics = [#tpu.dimension_semantics<parallel>], iteration_bounds = array<i64: 2>, scalar_prefetch = 0 : i64, scratch_operands = 1 : i64, tpu.core_type = #tpu.core_type<tc>, window_params = [{transform_indices = @transform_0, window_bounds = array<i64: 1, 16, 16, 128>}, {transform_indices = @transform_1, window_bounds = array<i64: 1, 16, 16, 128>}, {pipeline_mode = #tpu.pipeline_mode<synchronous>, transform_indices = @transform_2, window_bounds = array<i64: 3, 768, 128>}, {pipeline_mode = #tpu.pipeline_mode<synchronous>, transform_indices = @transform_3, window_bounds = array<i64: 1, 128>}, {pipeline_mode = #tpu.pipeline_mode<synchronous>, transform_indices = @transform_4, window_bounds = array<i64: 1, 128>}, {transform_indices = @transform_5, window_bounds = array<i64: 1, 16, 16, 128>}]} {
    %cst = arith.constant 0.000000e+00 : bf16
    %0 = vector.broadcast %cst : bf16 to vector<1x16x768xbf16>
    %c0 = arith.constant 0 : index
    %c0_0 = arith.constant 0 : index
    %c0_1 = arith.constant 0 : index
    %1 = vector.load %arg7[%c0, %c0_0, %c0_1] : memref<18x16x768xbf16, #tpu.memory_space<vmem>>, vector<1x16x768xbf16>
    tpu.vector_store %arg7[%c0, %c0_0, %c0_1], %0 {strides = array<i32>} : memref<18x16x768xbf16, #tpu.memory_space<vmem>>, vector<1x16x768xbf16>,
    %c17 = arith.constant 17 : index
    %c0_2 = arith.constant 0 : index
    %c0_3 = arith.constant 0 : index
    %2 = vector.load %arg7[%c17, %c0_2, %c0_3] : memref<18x16x768xbf16, #tpu.memory_space<vmem>>, vector<1x16x768xbf16>
    tpu.vector_store %arg7[%c17, %c0_2, %c0_3], %0 {strides = array<i32>} : memref<18x16x768xbf16, #tpu.memory_space<vmem>>, vector<1x16x768xbf16>,
    %cst_4 = arith.constant 0.000000e+00 : bf16
    %3 = vector.broadcast %cst_4 : bf16 to vector<16x1x256xbf16>
    %c1 = arith.constant 1 : index
    %c0_5 = arith.constant 0 : index
    %c0_6 = arith.constant 0 : index
    %4 = vector.load %arg7[%c1, %c0_5, %c0_6] : memref<18x16x768xbf16, #tpu.memory_space<vmem>>, vector<16x1x256xbf16>
    tpu.vector_store %arg7[%c1, %c0_5, %c0_6], %3 {strides = array<i32>} : memref<18x16x768xbf16, #tpu.memory_space<vmem>>, vector<16x1x256xbf16>,
    %c1_7 = arith.constant 1 : index
    %c15 = arith.constant 15 : index
    %c512 = arith.constant 512 : index
    %5 = vector.load %arg7[%c1_7, %c15, %c512] : memref<18x16x768xbf16, #tpu.memory_space<vmem>>, vector<16x1x256xbf16>
    tpu.vector_store %arg7[%c1_7, %c15, %c512], %3 {strides = array<i32>} : memref<18x16x768xbf16, #tpu.memory_space<vmem>>, vector<16x1x256xbf16>,
    %c0_8 = arith.constant 0 : index
    %c0_9 = arith.constant 0 : index
    %c0_10 = arith.constant 0 : index
    %c0_11 = arith.constant 0 : index
    %6 = vector.load %arg1[%c0_8, %c0_9, %c0_10, %c0_11] : memref<1x16x16x128xbf16, #tpu.memory_space<vmem>>, vector<1x16x16x128xbf16>
    %7 = vector.shape_cast %6 : vector<1x16x16x128xbf16> to vector<16x16x128xbf16>
    %c0_12 = arith.constant 0 : index
    %c0_13 = arith.constant 0 : index
    %c0_14 = arith.constant 0 : index
    %c0_15 = arith.constant 0 : index
    %8 = vector.load %arg2[%c0_12, %c0_13, %c0_14, %c0_15] : memref<1x16x16x128xbf16, #tpu.memory_space<vmem>>, vector<1x16x16x128xbf16>
    %9 = vector.shape_cast %8 : vector<1x16x16x128xbf16> to vector<16x16x128xbf16>
    %10 = vector.extract_strided_slice %7 {offsets = [0, 0, 0], sizes = [16, 15, 128], strides = [1, 1, 1]} : vector<16x16x128xbf16> to vector<16x15x128xbf16>
    %c1_16 = arith.constant 1 : index
    %c1_17 = arith.constant 1 : index
    %c0_18 = arith.constant 0 : index
    %11 = vector.load %arg7[%c1_16, %c1_17, %c0_18] : memref<18x16x768xbf16, #tpu.memory_space<vmem>>, vector<16x15x128xbf16>
    tpu.vector_store %arg7[%c1_16, %c1_17, %c0_18], %10 {strides = array<i32>} : memref<18x16x768xbf16, #tpu.memory_space<vmem>>, vector<16x15x128xbf16>,
    %12 = vector.extract_strided_slice %9 {offsets = [0, 0, 0], sizes = [16, 15, 128], strides = [1, 1, 1]} : vector<16x16x128xbf16> to vector<16x15x128xbf16>
    %c1_19 = arith.constant 1 : index
    %c1_20 = arith.constant 1 : index
    %c128 = arith.constant 128 : index
    %13 = vector.load %arg7[%c1_19, %c1_20, %c128] : memref<18x16x768xbf16, #tpu.memory_space<vmem>>, vector<16x15x128xbf16>
    tpu.vector_store %arg7[%c1_19, %c1_20, %c128], %12 {strides = array<i32>} : memref<18x16x768xbf16, #tpu.memory_space<vmem>>, vector<16x15x128xbf16>,
    %c1_21 = arith.constant 1 : index
    %c0_22 = arith.constant 0 : index
    %c256 = arith.constant 256 : index
    %14 = vector.load %arg7[%c1_21, %c0_22, %c256] : memref<18x16x768xbf16, #tpu.memory_space<vmem>>, vector<16x16x128xbf16>
    tpu.vector_store %arg7[%c1_21, %c0_22, %c256], %7 {strides = array<i32>} : memref<18x16x768xbf16, #tpu.memory_space<vmem>>, vector<16x16x128xbf16>,
    %c1_23 = arith.constant 1 : index
    %c0_24 = arith.constant 0 : index
    %c384 = arith.constant 384 : index
    %15 = vector.load %arg7[%c1_23, %c0_24, %c384] : memref<18x16x768xbf16, #tpu.memory_space<vmem>>, vector<16x16x128xbf16>
    tpu.vector_store %arg7[%c1_23, %c0_24, %c384], %9 {strides = array<i32>} : memref<18x16x768xbf16, #tpu.memory_space<vmem>>, vector<16x16x128xbf16>,
    %16 = vector.extract_strided_slice %7 {offsets = [0, 1, 0], sizes = [16, 15, 128], strides = [1, 1, 1]} : vector<16x16x128xbf16> to vector<16x15x128xbf16>
    %c1_25 = arith.constant 1 : index
    %c0_26 = arith.constant 0 : index
    %c512_27 = arith.constant 512 : index
    %17 = vector.load %arg7[%c1_25, %c0_26, %c512_27] : memref<18x16x768xbf16, #tpu.memory_space<vmem>>, vector<16x15x128xbf16>
    tpu.vector_store %arg7[%c1_25, %c0_26, %c512_27], %16 {strides = array<i32>} : memref<18x16x768xbf16, #tpu.memory_space<vmem>>, vector<16x15x128xbf16>,
    %18 = vector.extract_strided_slice %9 {offsets = [0, 1, 0], sizes = [16, 15, 128], strides = [1, 1, 1]} : vector<16x16x128xbf16> to vector<16x15x128xbf16>
    %c1_28 = arith.constant 1 : index
    %c0_29 = arith.constant 0 : index
    %c640 = arith.constant 640 : index
    %19 = vector.load %arg7[%c1_28, %c0_29, %c640] : memref<18x16x768xbf16, #tpu.memory_space<vmem>>, vector<16x15x128xbf16>
    tpu.vector_store %arg7[%c1_28, %c0_29, %c640], %18 {strides = array<i32>} : memref<18x16x768xbf16, #tpu.memory_space<vmem>>, vector<16x15x128xbf16>,
    %c0_30 = arith.constant 0 : index
    %c0_31 = arith.constant 0 : index
    %c0_32 = arith.constant 0 : index
    %20 = vector.load %arg7[%c0_30, %c0_31, %c0_32] : memref<18x16x768xbf16, #tpu.memory_space<vmem>>, vector<16x16x768xbf16>
    %21 = vector.shape_cast %20 : vector<16x16x768xbf16> to vector<256x768xbf16>
    %c0_33 = arith.constant 0 : index
    %c0_34 = arith.constant 0 : index
    %c0_35 = arith.constant 0 : index
    %22 = vector.load %arg3[%c0_33, %c0_34, %c0_35] : memref<3x768x128xbf16, #tpu.memory_space<vmem>>, vector<1x768x128xbf16>
    %23 = vector.shape_cast %22 : vector<1x768x128xbf16> to vector<768x128xbf16>
    %cst_36 = arith.constant dense<0.000000e+00> : vector<256x128xf32>
    %24 = tpu.matmul %21, %23, %cst_36 {dimension_numbers = #tpu.dot_dimension_numbers<[1], [0], [0], [1], [0, 0, 1, 1], [], []>} : vector<256x768xbf16>, vector<768x128xbf16>, vector<256x128xf32> -> vector<256x128xf32>
    %c1_37 = arith.constant 1 : index
    %c0_38 = arith.constant 0 : index
    %c0_39 = arith.constant 0 : index
    %25 = vector.load %arg7[%c1_37, %c0_38, %c0_39] : memref<18x16x768xbf16, #tpu.memory_space<vmem>>, vector<16x16x768xbf16>
    %26 = vector.shape_cast %25 : vector<16x16x768xbf16> to vector<256x768xbf16>
    %c1_40 = arith.constant 1 : index
    %c0_41 = arith.constant 0 : index
    %c0_42 = arith.constant 0 : index
    %27 = vector.load %arg3[%c1_40, %c0_41, %c0_42] : memref<3x768x128xbf16, #tpu.memory_space<vmem>>, vector<1x768x128xbf16>
    %28 = vector.shape_cast %27 : vector<1x768x128xbf16> to vector<768x128xbf16>
    %cst_43 = arith.constant dense<0.000000e+00> : vector<256x128xf32>
    %29 = tpu.matmul %26, %28, %cst_43 {dimension_numbers = #tpu.dot_dimension_numbers<[1], [0], [0], [1], [0, 0, 1, 1], [], []>} : vector<256x768xbf16>, vector<768x128xbf16>, vector<256x128xf32> -> vector<256x128xf32>
    %30 = arith.addf %24, %29 : vector<256x128xf32>
    %c2 = arith.constant 2 : index
    %c0_44 = arith.constant 0 : index
    %c0_45 = arith.constant 0 : index
    %31 = vector.load %arg7[%c2, %c0_44, %c0_45] : memref<18x16x768xbf16, #tpu.memory_space<vmem>>, vector<16x16x768xbf16>
    %32 = vector.shape_cast %31 : vector<16x16x768xbf16> to vector<256x768xbf16>
    %c2_46 = arith.constant 2 : index
    %c0_47 = arith.constant 0 : index
    %c0_48 = arith.constant 0 : index
    %33 = vector.load %arg3[%c2_46, %c0_47, %c0_48] : memref<3x768x128xbf16, #tpu.memory_space<vmem>>, vector<1x768x128xbf16>
    %34 = vector.shape_cast %33 : vector<1x768x128xbf16> to vector<768x128xbf16>
    %cst_49 = arith.constant dense<0.000000e+00> : vector<256x128xf32>
    %35 = tpu.matmul %32, %34, %cst_49 {dimension_numbers = #tpu.dot_dimension_numbers<[1], [0], [0], [1], [0, 0, 1, 1], [], []>} : vector<256x768xbf16>, vector<768x128xbf16>, vector<256x128xf32> -> vector<256x128xf32>
    %36 = arith.addf %30, %35 : vector<256x128xf32>
    %c0_50 = arith.constant 0 : index
    %c0_51 = arith.constant 0 : index
    %37 = vector.load %arg4[%c0_50, %c0_51] : memref<1x128xf32, #tpu.memory_space<vmem>>, vector<1x128xf32>
    %38 = vector.broadcast %37 : vector<1x128xf32> to vector<256x128xf32>
    %39 = arith.mulf %36, %38 : vector<256x128xf32>
    %c0_52 = arith.constant 0 : index
    %c0_53 = arith.constant 0 : index
    %40 = vector.load %arg5[%c0_52, %c0_53] : memref<1x128xf32, #tpu.memory_space<vmem>>, vector<1x128xf32>
    %41 = vector.broadcast %40 : vector<1x128xf32> to vector<256x128xf32>
    %42 = arith.addf %39, %41 : vector<256x128xf32>
    %cst_54 = arith.constant 0.000000e+00 : f32
    %43 = vector.broadcast %cst_54 : f32 to vector<256x128xf32>
    %44 = arith.maximumf %42, %43 : vector<256x128xf32>
    %45 = vector.shape_cast %44 : vector<256x128xf32> to vector<1x16x16x128xf32>
    %46 = arith.truncf %45 : vector<1x16x16x128xf32> to vector<1x16x16x128xbf16>
    %c0_55 = arith.constant 0 : index
    %c0_56 = arith.constant 0 : index
    %c0_57 = arith.constant 0 : index
    %c0_58 = arith.constant 0 : index
    %47 = vector.load %arg6[%c0_55, %c0_56, %c0_57, %c0_58] : memref<1x16x16x128xbf16, #tpu.memory_space<vmem>>, vector<1x16x16x128xbf16>
    tpu.vector_store %arg6[%c0_55, %c0_56, %c0_57, %c0_58], %46 {strides = array<i32>} : memref<1x16x16x128xbf16, #tpu.memory_space<vmem>>, vector<1x16x16x128xbf16>,
    return
  }
  func.func @transform_0(%arg0: i32) -> (i32, i32, i32, i32) {
    %c0_i32 = arith.constant 0 : i32
    %c0_i32_0 = arith.constant 0 : i32
    %c0_i32_1 = arith.constant 0 : i32
    %c0_i32_2 = arith.constant 0 : i32
    return %arg0, %c0_i32, %c0_i32_0, %c0_i32_1 : i32, i32, i32, i32
  }
  func.func @transform_1(%arg0: i32) -> (i32, i32, i32, i32) {
    %c0_i32 = arith.constant 0 : i32
    %c0_i32_0 = arith.constant 0 : i32
    %c0_i32_1 = arith.constant 0 : i32
    %c0_i32_2 = arith.constant 0 : i32
    return %arg0, %c0_i32, %c0_i32_0, %c0_i32_1 : i32, i32, i32, i32
  }
  func.func @transform_2(%arg0: i32) -> (i32, i32, i32) {
    %c0_i32 = arith.constant 0 : i32
    %c0_i32_0 = arith.constant 0 : i32
    %c0_i32_1 = arith.constant 0 : i32
    %c0_i32_2 = arith.constant 0 : i32
    return %c0_i32, %c0_i32_0, %c0_i32_1 : i32, i32, i32
  }
  func.func @transform_3(%arg0: i32) -> (i32, i32) {
    %c0_i32 = arith.constant 0 : i32
    %c0_i32_0 = arith.constant 0 : i32
    %c0_i32_1 = arith.constant 0 : i32
    return %c0_i32, %c0_i32_0 : i32, i32
  }
  func.func @transform_4(%arg0: i32) -> (i32, i32) {
    %c0_i32 = arith.constant 0 : i32
    %c0_i32_0 = arith.constant 0 : i32
    %c0_i32_1 = arith.constant 0 : i32
    return %c0_i32, %c0_i32_0 : i32, i32
  }
  func.func @transform_5(%arg0: i32) -> (i32, i32, i32, i32) {
    %c0_i32 = arith.constant 0 : i32
    %c0_i32_0 = arith.constant 0 : i32
    %c0_i32_1 = arith.constant 0 : i32
    %c0_i32_2 = arith.constant 0 : i32
    return %arg0, %c0_i32, %c0_i32_0, %c0_i32_1 : i32, i32, i32, i32
  }
}

module attributes {stable_mosaic.version = 11 : i64} {
  func.func @_conv3x3_bn_relu_kernel(%arg0: i32, %arg1: memref<1x16x16x128xbf16, #tpu.memory_space<vmem>>, %arg2: memref<3x384x128xbf16, #tpu.memory_space<vmem>>, %arg3: memref<1x128xf32, #tpu.memory_space<vmem>>, %arg4: memref<1x128xf32, #tpu.memory_space<vmem>>, %arg5: memref<1x16x16x128xf32, #tpu.memory_space<vmem>>, %arg6: memref<18x16x384xbf16, #tpu.memory_space<vmem>>) attributes {dimension_semantics = [#tpu.dimension_semantics<parallel>], iteration_bounds = array<i64: 2>, scalar_prefetch = 0 : i64, scratch_operands = 1 : i64, tpu.core_type = #tpu.core_type<tc>, window_params = [{transform_indices = @transform_0, window_bounds = array<i64: 1, 16, 16, 128>}, {pipeline_mode = #tpu.pipeline_mode<synchronous>, transform_indices = @transform_1, window_bounds = array<i64: 3, 384, 128>}, {pipeline_mode = #tpu.pipeline_mode<synchronous>, transform_indices = @transform_2, window_bounds = array<i64: 1, 128>}, {pipeline_mode = #tpu.pipeline_mode<synchronous>, transform_indices = @transform_3, window_bounds = array<i64: 1, 128>}, {transform_indices = @transform_4, window_bounds = array<i64: 1, 16, 16, 128>}]} {
    %cst = arith.constant 0.000000e+00 : bf16
    %0 = vector.broadcast %cst : bf16 to vector<1x16x384xbf16>
    %c0 = arith.constant 0 : index
    %c0_0 = arith.constant 0 : index
    %c0_1 = arith.constant 0 : index
    %1 = vector.load %arg6[%c0, %c0_0, %c0_1] : memref<18x16x384xbf16, #tpu.memory_space<vmem>>, vector<1x16x384xbf16>
    tpu.vector_store %arg6[%c0, %c0_0, %c0_1], %0 {strides = array<i32>} : memref<18x16x384xbf16, #tpu.memory_space<vmem>>, vector<1x16x384xbf16>,
    %c17 = arith.constant 17 : index
    %c0_2 = arith.constant 0 : index
    %c0_3 = arith.constant 0 : index
    %2 = vector.load %arg6[%c17, %c0_2, %c0_3] : memref<18x16x384xbf16, #tpu.memory_space<vmem>>, vector<1x16x384xbf16>
    tpu.vector_store %arg6[%c17, %c0_2, %c0_3], %0 {strides = array<i32>} : memref<18x16x384xbf16, #tpu.memory_space<vmem>>, vector<1x16x384xbf16>,
    %cst_4 = arith.constant 0.000000e+00 : bf16
    %3 = vector.broadcast %cst_4 : bf16 to vector<16x1x128xbf16>
    %c1 = arith.constant 1 : index
    %c0_5 = arith.constant 0 : index
    %c0_6 = arith.constant 0 : index
    %4 = vector.load %arg6[%c1, %c0_5, %c0_6] : memref<18x16x384xbf16, #tpu.memory_space<vmem>>, vector<16x1x128xbf16>
    tpu.vector_store %arg6[%c1, %c0_5, %c0_6], %3 {strides = array<i32>} : memref<18x16x384xbf16, #tpu.memory_space<vmem>>, vector<16x1x128xbf16>,
    %c1_7 = arith.constant 1 : index
    %c15 = arith.constant 15 : index
    %c256 = arith.constant 256 : index
    %5 = vector.load %arg6[%c1_7, %c15, %c256] : memref<18x16x384xbf16, #tpu.memory_space<vmem>>, vector<16x1x128xbf16>
    tpu.vector_store %arg6[%c1_7, %c15, %c256], %3 {strides = array<i32>} : memref<18x16x384xbf16, #tpu.memory_space<vmem>>, vector<16x1x128xbf16>,
    %c0_8 = arith.constant 0 : index
    %c0_9 = arith.constant 0 : index
    %c0_10 = arith.constant 0 : index
    %c0_11 = arith.constant 0 : index
    %6 = vector.load %arg1[%c0_8, %c0_9, %c0_10, %c0_11] : memref<1x16x16x128xbf16, #tpu.memory_space<vmem>>, vector<1x16x16x128xbf16>
    %7 = vector.shape_cast %6 : vector<1x16x16x128xbf16> to vector<16x16x128xbf16>
    %8 = vector.extract_strided_slice %7 {offsets = [0, 0, 0], sizes = [16, 15, 128], strides = [1, 1, 1]} : vector<16x16x128xbf16> to vector<16x15x128xbf16>
    %c1_12 = arith.constant 1 : index
    %c1_13 = arith.constant 1 : index
    %c0_14 = arith.constant 0 : index
    %9 = vector.load %arg6[%c1_12, %c1_13, %c0_14] : memref<18x16x384xbf16, #tpu.memory_space<vmem>>, vector<16x15x128xbf16>
    tpu.vector_store %arg6[%c1_12, %c1_13, %c0_14], %8 {strides = array<i32>} : memref<18x16x384xbf16, #tpu.memory_space<vmem>>, vector<16x15x128xbf16>,
    %c1_15 = arith.constant 1 : index
    %c0_16 = arith.constant 0 : index
    %c128 = arith.constant 128 : index
    %10 = vector.load %arg6[%c1_15, %c0_16, %c128] : memref<18x16x384xbf16, #tpu.memory_space<vmem>>, vector<16x16x128xbf16>
    tpu.vector_store %arg6[%c1_15, %c0_16, %c128], %7 {strides = array<i32>} : memref<18x16x384xbf16, #tpu.memory_space<vmem>>, vector<16x16x128xbf16>,
    %11 = vector.extract_strided_slice %7 {offsets = [0, 1, 0], sizes = [16, 15, 128], strides = [1, 1, 1]} : vector<16x16x128xbf16> to vector<16x15x128xbf16>
    %c1_17 = arith.constant 1 : index
    %c0_18 = arith.constant 0 : index
    %c256_19 = arith.constant 256 : index
    %12 = vector.load %arg6[%c1_17, %c0_18, %c256_19] : memref<18x16x384xbf16, #tpu.memory_space<vmem>>, vector<16x15x128xbf16>
    tpu.vector_store %arg6[%c1_17, %c0_18, %c256_19], %11 {strides = array<i32>} : memref<18x16x384xbf16, #tpu.memory_space<vmem>>, vector<16x15x128xbf16>,
    %c0_20 = arith.constant 0 : index
    %c0_21 = arith.constant 0 : index
    %c0_22 = arith.constant 0 : index
    %13 = vector.load %arg6[%c0_20, %c0_21, %c0_22] : memref<18x16x384xbf16, #tpu.memory_space<vmem>>, vector<16x16x384xbf16>
    %14 = vector.shape_cast %13 : vector<16x16x384xbf16> to vector<256x384xbf16>
    %c0_23 = arith.constant 0 : index
    %c0_24 = arith.constant 0 : index
    %c0_25 = arith.constant 0 : index
    %15 = vector.load %arg2[%c0_23, %c0_24, %c0_25] : memref<3x384x128xbf16, #tpu.memory_space<vmem>>, vector<1x384x128xbf16>
    %16 = vector.shape_cast %15 : vector<1x384x128xbf16> to vector<384x128xbf16>
    %cst_26 = arith.constant dense<0.000000e+00> : vector<256x128xf32>
    %17 = tpu.matmul %14, %16, %cst_26 {dimension_numbers = #tpu.dot_dimension_numbers<[1], [0], [0], [1], [0, 0, 1, 1], [], []>} : vector<256x384xbf16>, vector<384x128xbf16>, vector<256x128xf32> -> vector<256x128xf32>
    %c1_27 = arith.constant 1 : index
    %c0_28 = arith.constant 0 : index
    %c0_29 = arith.constant 0 : index
    %18 = vector.load %arg6[%c1_27, %c0_28, %c0_29] : memref<18x16x384xbf16, #tpu.memory_space<vmem>>, vector<16x16x384xbf16>
    %19 = vector.shape_cast %18 : vector<16x16x384xbf16> to vector<256x384xbf16>
    %c1_30 = arith.constant 1 : index
    %c0_31 = arith.constant 0 : index
    %c0_32 = arith.constant 0 : index
    %20 = vector.load %arg2[%c1_30, %c0_31, %c0_32] : memref<3x384x128xbf16, #tpu.memory_space<vmem>>, vector<1x384x128xbf16>
    %21 = vector.shape_cast %20 : vector<1x384x128xbf16> to vector<384x128xbf16>
    %cst_33 = arith.constant dense<0.000000e+00> : vector<256x128xf32>
    %22 = tpu.matmul %19, %21, %cst_33 {dimension_numbers = #tpu.dot_dimension_numbers<[1], [0], [0], [1], [0, 0, 1, 1], [], []>} : vector<256x384xbf16>, vector<384x128xbf16>, vector<256x128xf32> -> vector<256x128xf32>
    %23 = arith.addf %17, %22 : vector<256x128xf32>
    %c2 = arith.constant 2 : index
    %c0_34 = arith.constant 0 : index
    %c0_35 = arith.constant 0 : index
    %24 = vector.load %arg6[%c2, %c0_34, %c0_35] : memref<18x16x384xbf16, #tpu.memory_space<vmem>>, vector<16x16x384xbf16>
    %25 = vector.shape_cast %24 : vector<16x16x384xbf16> to vector<256x384xbf16>
    %c2_36 = arith.constant 2 : index
    %c0_37 = arith.constant 0 : index
    %c0_38 = arith.constant 0 : index
    %26 = vector.load %arg2[%c2_36, %c0_37, %c0_38] : memref<3x384x128xbf16, #tpu.memory_space<vmem>>, vector<1x384x128xbf16>
    %27 = vector.shape_cast %26 : vector<1x384x128xbf16> to vector<384x128xbf16>
    %cst_39 = arith.constant dense<0.000000e+00> : vector<256x128xf32>
    %28 = tpu.matmul %25, %27, %cst_39 {dimension_numbers = #tpu.dot_dimension_numbers<[1], [0], [0], [1], [0, 0, 1, 1], [], []>} : vector<256x384xbf16>, vector<384x128xbf16>, vector<256x128xf32> -> vector<256x128xf32>
    %29 = arith.addf %23, %28 : vector<256x128xf32>
    %c0_40 = arith.constant 0 : index
    %c0_41 = arith.constant 0 : index
    %30 = vector.load %arg3[%c0_40, %c0_41] : memref<1x128xf32, #tpu.memory_space<vmem>>, vector<1x128xf32>
    %31 = vector.broadcast %30 : vector<1x128xf32> to vector<256x128xf32>
    %32 = arith.mulf %29, %31 : vector<256x128xf32>
    %c0_42 = arith.constant 0 : index
    %c0_43 = arith.constant 0 : index
    %33 = vector.load %arg4[%c0_42, %c0_43] : memref<1x128xf32, #tpu.memory_space<vmem>>, vector<1x128xf32>
    %34 = vector.broadcast %33 : vector<1x128xf32> to vector<256x128xf32>
    %35 = arith.addf %32, %34 : vector<256x128xf32>
    %cst_44 = arith.constant 0.000000e+00 : f32
    %36 = vector.broadcast %cst_44 : f32 to vector<256x128xf32>
    %37 = arith.maximumf %35, %36 : vector<256x128xf32>
    %38 = vector.shape_cast %37 : vector<256x128xf32> to vector<1x16x16x128xf32>
    %c0_45 = arith.constant 0 : index
    %c0_46 = arith.constant 0 : index
    %c0_47 = arith.constant 0 : index
    %c0_48 = arith.constant 0 : index
    %39 = vector.load %arg5[%c0_45, %c0_46, %c0_47, %c0_48] : memref<1x16x16x128xf32, #tpu.memory_space<vmem>>, vector<1x16x16x128xf32>
    tpu.vector_store %arg5[%c0_45, %c0_46, %c0_47, %c0_48], %38 {strides = array<i32>} : memref<1x16x16x128xf32, #tpu.memory_space<vmem>>, vector<1x16x16x128xf32>,
    return
  }
  func.func @transform_0(%arg0: i32) -> (i32, i32, i32, i32) {
    %c0_i32 = arith.constant 0 : i32
    %c0_i32_0 = arith.constant 0 : i32
    %c0_i32_1 = arith.constant 0 : i32
    %c0_i32_2 = arith.constant 0 : i32
    return %arg0, %c0_i32, %c0_i32_0, %c0_i32_1 : i32, i32, i32, i32
  }
  func.func @transform_1(%arg0: i32) -> (i32, i32, i32) {
    %c0_i32 = arith.constant 0 : i32
    %c0_i32_0 = arith.constant 0 : i32
    %c0_i32_1 = arith.constant 0 : i32
    %c0_i32_2 = arith.constant 0 : i32
    return %c0_i32, %c0_i32_0, %c0_i32_1 : i32, i32, i32
  }
  func.func @transform_2(%arg0: i32) -> (i32, i32) {
    %c0_i32 = arith.constant 0 : i32
    %c0_i32_0 = arith.constant 0 : i32
    %c0_i32_1 = arith.constant 0 : i32
    return %c0_i32, %c0_i32_0 : i32, i32
  }
  func.func @transform_3(%arg0: i32) -> (i32, i32) {
    %c0_i32 = arith.constant 0 : i32
    %c0_i32_0 = arith.constant 0 : i32
    %c0_i32_1 = arith.constant 0 : i32
    return %c0_i32, %c0_i32_0 : i32, i32
  }
  func.func @transform_4(%arg0: i32) -> (i32, i32, i32, i32) {
    %c0_i32 = arith.constant 0 : i32
    %c0_i32_0 = arith.constant 0 : i32
    %c0_i32_1 = arith.constant 0 : i32
    %c0_i32_2 = arith.constant 0 : i32
    return %arg0, %c0_i32, %c0_i32_0, %c0_i32_1 : i32, i32, i32, i32
  }
}

</mosaic_0001>

<llo_original>
// kernel: tile.8
$region0: #{tile.8}
  #allocation0 [shape = 's32[1]{0}', space=sflag, size = 0x4, scoped, tag = 'scoped memory for tile.8']
  %s0 = inlined_call_operand.vmem [shape: f32[128], index: 0, kind: input, shape index: {}]
  %s1 = inlined_call_operand.vmem [shape: f32[4,128], index: 1, kind: output, shape index: {}]
  // Predicated region
  $region2: #{tile.8} parent=0 // pred_check
    _
  $region3: #{tile.8} parent=0 // pred_check_branch
    %3 = sbr.rel (0) target = $region5
  $region4: #{tile.8} parent=0 // pred_region
    _
  $region5: #{tile.8} parent=0 // pred_fallthru
    _
  %v4 = vld [vmem:[%s0] ss:$0 sm:$0xff]
  %5 = vst [vmem:[%s1] sm:$0xf] %v4

// kernel: up_block_forward.3
$region0: #{up_block_forward.3}
  #allocation0 [shape = 'u32[]', space=smem, size = 0x4, offset = 0x4, fixed_abs, tag = 'smem constant byte address 0x4 - core index']
  #allocation1 [shape = 'u32[144,128]{1,0:T(1,128)}', space=vmem, size = 0x12000, scoped, tag = 'internal scratch']
  %s0 = inlined_call_operand.vmem [shape: bf16[16,8,4], index: 0, kind: input, shape index: {}]
  %s1 = inlined_call_operand.vmem [shape: bf16[4,512], index: 1, kind: input, shape index: {}]
  %s2 = inlined_call_operand.vmem [shape: f32[1,512], index: 2, kind: input, shape index: {}]
  %s3 = inlined_call_operand.vmem [shape: bf16[16,2,8,256], index: 3, kind: output, shape index: {}]
  %s4 = sld [smem:[#allocation0]]
  $region22: #{up_block_forward.3} parent=0
    _
  %s6 = ssub.s32 1, %s4
  %s7 = scalar_select 0, %s6, %s4
  // Predicated region
  $region2: #{up_block_forward.3} parent=0 // pred_check
    _
  $region3: #{up_block_forward.3} parent=0 // pred_check_branch
    %9 = sbr.rel (0) target = $region5
  $region4: #{up_block_forward.3} parent=0 // pred_region
    _
  $region5: #{up_block_forward.3} parent=0 // pred_fallthru
    _
  // Predicated region
  $region6: #{up_block_forward.3} parent=0 // pred_check
    _
  $region7: #{up_block_forward.3} parent=0 // pred_check_branch
    %11 = sbr.rel (0) target = $region9
  $region8: #{up_block_forward.3} parent=0 // pred_region
    _
  $region9: #{up_block_forward.3} parent=0 // pred_fallthru
    _
  // Predicated region
  $region10: #{up_block_forward.3} parent=0 // pred_check
    _
  $region11: #{up_block_forward.3} parent=0 // pred_check_branch
    %13 = sbr.rel (0) target = $region13
  $region12: #{up_block_forward.3} parent=0 // pred_region
    _
  $region13: #{up_block_forward.3} parent=0 // pred_fallthru
    _
  %v15 = vld [vmem:[%s0] sm:$0xf]
  %v16 = vld [vmem:[%s0 + $0x4] sm:$0xf]
  %v17 = vld [vmem:[%s0 + $0x8] sm:$0xf]
  %v18 = vld [vmem:[%s0 + $0xc] sm:$0xf]
  %v19 = vld [vmem:[%s0 + $0x10] sm:$0xf]
  %v20 = vld [vmem:[%s0 + $0x14] sm:$0xf]
  %v21 = vld [vmem:[%s0 + $0x18] sm:$0xf]
  %v22 = vld [vmem:[%s0 + $0x1c] sm:$0xf]
  %v23 = vld [vmem:[%s0 + $0x20] sm:$0xf]
  %v24 = vld [vmem:[%s0 + $0x24] sm:$0xf]
  %v25 = vld [vmem:[%s0 + $0x28] sm:$0xf]
  %v26 = vld [vmem:[%s0 + $0x2c] sm:$0xf]
  %v27 = vld [vmem:[%s0 + $0x30] sm:$0xf]
  %v28 = vld [vmem:[%s0 + $0x34] sm:$0xf]
  %v29 = vld [vmem:[%s0 + $0x38] sm:$0xf]
  %v30 = vld [vmem:[%s0 + $0x3c] sm:$0xf]
  %v31 = vld [vmem:[%s1] sm:$0xff]
  %v32 = vld [vmem:[%s2] sm:$0xf]
  %v34 = vlaneseq
  %v35 = vshrl.u32 %v34, 7
  %v36 = vsub.s32 0, %v35
  %v37 = vrot.slane %v32, %v36
  %v38 = vlaneseq
  %v39 = vshrl.u32 %v38, 7
  %v40 = vsub.s32 1, %v39
  %v41 = vrot.slane %v32, %v40
  %v42 = vlaneseq
  %v43 = vshrl.u32 %v42, 7
  %v44 = vsub.s32 2, %v43
  %v45 = vrot.slane %v32, %v44
  %v46 = vlaneseq
  %v47 = vshrl.u32 %v46, 7
  %v48 = vsub.s32 3, %v47
  %v49 = vrot.slane %v32, %v48
  %v70 = vunpack.c.l.b16 %v15
  %v71 = vunpack.c.l.b16 %v16
  %v72 = vunpack.c.l.b16 %v17
  %v73 = vunpack.c.l.b16 %v18
  %v74 = vunpack.c.l.b16 %v19
  %v75 = vunpack.c.l.b16 %v20
  %v76 = vunpack.c.l.b16 %v21
  %v77 = vunpack.c.l.b16 %v22
  %v78 = vunpack.c.l.b16 %v23
  %v79 = vunpack.c.l.b16 %v24
  %v80 = vunpack.c.l.b16 %v25
  %v81 = vunpack.c.l.b16 %v26
  %v82 = vunpack.c.l.b16 %v27
  %v83 = vunpack.c.l.b16 %v28
  %v84 = vunpack.c.l.b16 %v29
  %v85 = vunpack.c.l.b16 %v30
  %v86 = vpack.c.b16 %v71, %v70
  %v87 = vpack.c.b16 %v73, %v72
  %v88 = vpack.c.b16 %v75, %v74
  %v89 = vpack.c.b16 %v77, %v76
  %v90 = vpack.c.b16 %v79, %v78
  %v91 = vpack.c.b16 %v81, %v80
  %v92 = vpack.c.b16 %v83, %v82
  %v93 = vpack.c.b16 %v85, %v84
  %v95 = vcombine.high %v31, %v31
  %v97 = vunpack.c.l.s4 1983009808
  %v98 = vunpack.c.0.s8 %v97
  %v99 = vlaneseq
  %v100 = vshrl.u32 %v99, 7
  %v101 = vsub.s32 %v98, %v100
  %v102 = vrot.slane %v31, %v101
  %v104 = vunpack.c.l.s4 1983009808
  %v105 = vunpack.c.0.s8 %v104
  %v106 = vlaneseq
  %v107 = vshrl.u32 %v106, 7
  %v108 = vsub.s32 %v105, %v107
  %v109 = vrot.slane %v95, %v108
  %v110 = vcombine.high %v102, %v102
  %v111 = vcombine.high %v109, %v109
  %vm112 = vcmask 31744
  %v114 = vsel %vm112, %v86, 0
  %v117 = vsel %vm112, %v87, 0
  %v120 = vsel %vm112, %v88, 0
  %v123 = vsel %vm112, %v89, 0
  %v126 = vsel %vm112, %v90, 0
  %v129 = vsel %vm112, %v91, 0
  %v132 = vsel %vm112, %v92, 0
  %v135 = vsel %vm112, %v93, 0
  %vm137 = vcmask 1041408
  %v139 = vsel %vm137, %v102, 0
  %v142 = vsel %vm137, %v110, 0
  %v145 = vsel %vm137, %v109, 0
  %v148 = vsel %vm137, %v111, 0
  %150 = vmatprep.subr.bf16.mxu0 %v142
  %151 = vmatpush1.bf16.msra.mxu0 %v139
  %152 = vmatprep.subr.bf16.mxu0 0
  %153 = vmatpush1.bf16.msra.mxu0 0
  %154 = vmatprep.subr.bf16.mxu0 0
  %155 = vmatpush1.bf16.msra.mxu0 0
  %156 = vmatprep.subr.bf16.mxu0 0
  %157 = vmatpush1.bf16.msra.mxu0 0
  %158 = vmatprep.subr.bf16.mxu0 0
  %159 = vmatpush1.bf16.msra.mxu0 0
  %160 = vmatprep.subr.bf16.mxu0 0
  %161 = vmatpush1.bf16.msra.mxu0 0
  %162 = vmatprep.subr.bf16.mxu0 0
  %163 = vmatpush1.bf16.msra.mxu0 0
  %164 = vmatprep.subr.bf16.mxu0 0
  %165 = vmatpush1.bf16.msra.mxu0 0
  %166 = vmatprep.subr.bf16.mxu0 0
  %167 = vmatpush1.bf16.msra.mxu0 0
  %168 = vmatprep.subr.bf16.mxu0 0
  %169 = vmatpush1.bf16.msra.mxu0 0
  %170 = vmatprep.subr.bf16.mxu0 0
  %171 = vmatpush1.bf16.msra.mxu0 0
  %172 = vmatprep.subr.bf16.mxu0 0
  %173 = vmatpush1.bf16.msra.mxu0 0
  %174 = vmatprep.subr.bf16.mxu0 0
  %175 = vmatpush1.bf16.msra.mxu0 0
  %176 = vmatprep.subr.bf16.mxu0 0
  %177 = vmatpush1.bf16.msra.mxu0 0
  %178 = vmatprep.subr.bf16.mxu0 0
  %179 = vmatpush1.bf16.msra.mxu0 0
  %180 = vmatprep.subr.bf16.mxu0 0
  %181 = vmatpush1.bf16.msra.mxu0 0
  %182 = vmatprep.mubr.bf16.mxu0 0
  %183 = vmatmul.mubr.bf16.gmra.mrb[0].mxu0 %v114
  %v184 = vpop.f32.mrb[0].mxu0
  %v185 = vadd.f32 %v37, %v184
  %v186 = vpop.f32.mrb[0].mxu0
  %v187 = vadd.f32 %v41, %v186
  %v188 = vpop.f32.mrb[0].mxu0
  %v189 = vadd.f32 %v37, %v188
  %v190 = vpop.f32.mrb[0].mxu0
  %v191 = vadd.f32 %v41, %v190
  %192 = vmatprep.mubr.bf16.mxu0 0
  %193 = vmatmul.mubr.bf16.gmra.mrb[0].mxu0 %v117
  %v194 = vpop.f32.mrb[0].mxu0
  %v195 = vadd.f32 %v37, %v194
  %v196 = vpop.f32.mrb[0].mxu0
  %v197 = vadd.f32 %v41, %v196
  %v198 = vpop.f32.mrb[0].mxu0
  %v199 = vadd.f32 %v37, %v198
  %v200 = vpop.f32.mrb[0].mxu0
  %v201 = vadd.f32 %v41, %v200
  %202 = vmatprep.mubr.bf16.mxu0 0
  %203 = vmatmul.mubr.bf16.gmra.mrb[0].mxu0 %v120
  %v204 = vpop.f32.mrb[0].mxu0
  %v205 = vadd.f32 %v37, %v204
  %v206 = vpop.f32.mrb[0].mxu0
  %v207 = vadd.f32 %v41, %v206
  %v208 = vpop.f32.mrb[0].mxu0
  %v209 = vadd.f32 %v37, %v208
  %v210 = vpop.f32.mrb[0].mxu0
  %v211 = vadd.f32 %v41, %v210
  %212 = vmatprep.mubr.bf16.mxu0 0
  %213 = vmatmul.mubr.bf16.gmra.mrb[0].mxu0 %v123
  %v214 = vpop.f32.mrb[0].mxu0
  %v215 = vadd.f32 %v37, %v214
  %v216 = vpop.f32.mrb[0].mxu0
  %v217 = vadd.f32 %v41, %v216
  %v218 = vpop.f32.mrb[0].mxu0
  %v219 = vadd.f32 %v37, %v218
  %v220 = vpop.f32.mrb[0].mxu0
  %v221 = vadd.f32 %v41, %v220
  %222 = vmatprep.mubr.bf16.mxu0 0
  %223 = vmatmul.mubr.bf16.gmra.mrb[0].mxu0 %v126
  %v224 = vpop.f32.mrb[0].mxu0
  %v225 = vadd.f32 %v37, %v224
  %v226 = vpop.f32.mrb[0].mxu0
  %v227 = vadd.f32 %v41, %v226
  %v228 = vpop.f32.mrb[0].mxu0
  %v229 = vadd.f32 %v37, %v228
  %v230 = vpop.f32.mrb[0].mxu0
  %v231 = vadd.f32 %v41, %v230
  %232 = vmatprep.mubr.bf16.mxu0 0
  %233 = vmatmul.mubr.bf16.gmra.mrb[0].mxu0 %v129
  %v234 = vpop.f32.mrb[0].mxu0
  %v235 = vadd.f32 %v37, %v234
  %v236 = vpop.f32.mrb[0].mxu0
  %v237 = vadd.f32 %v41, %v236
  %v238 = vpop.f32.mrb[0].mxu0
  %v239 = vadd.f32 %v37, %v238
  %v240 = vpop.f32.mrb[0].mxu0
  %v241 = vadd.f32 %v41, %v240
  %242 = vmatprep.mubr.bf16.mxu0 0
  %243 = vmatmul.mubr.bf16.gmra.mrb[0].mxu0 %v132
  %v244 = vpop.f32.mrb[0].mxu0
  %v245 = vadd.f32 %v37, %v244
  %v246 = vpop.f32.mrb[0].mxu0
  %v247 = vadd.f32 %v41, %v246
  %v248 = vpop.f32.mrb[0].mxu0
  %v249 = vadd.f32 %v37, %v248
  %v250 = vpop.f32.mrb[0].mxu0
  %v251 = vadd.f32 %v41, %v250
  %252 = vmatprep.mubr.bf16.mxu0 0
  %253 = vmatmul.mubr.bf16.gmra.mrb[0].mxu0 %v135
  %v254 = vpop.f32.mrb[0].mxu0
  %v255 = vadd.f32 %v37, %v254
  %v256 = vpop.f32.mrb[0].mxu0
  %v257 = vadd.f32 %v41, %v256
  %v258 = vpop.f32.mrb[0].mxu0
  %v259 = vadd.f32 %v37, %v258
  %v260 = vpop.f32.mrb[0].mxu0
  %v261 = vadd.f32 %v41, %v260
  %262 = vdwg.mxu0
  %263 = vmatprep.subr.bf16.mxu0 %v148
  %264 = vmatpush1.bf16.msra.mxu0 %v145
  %265 = vmatprep.subr.bf16.mxu0 0
  %266 = vmatpush1.bf16.msra.mxu0 0
  %267 = vmatprep.subr.bf16.mxu0 0
  %268 = vmatpush1.bf16.msra.mxu0 0
  %269 = vmatprep.subr.bf16.mxu0 0
  %270 = vmatpush1.bf16.msra.mxu0 0
  %271 = vmatprep.subr.bf16.mxu0 0
  %272 = vmatpush1.bf16.msra.mxu0 0
  %273 = vmatprep.subr.bf16.mxu0 0
  %274 = vmatpush1.bf16.msra.mxu0 0
  %275 = vmatprep.subr.bf16.mxu0 0
  %276 = vmatpush1.bf16.msra.mxu0 0
  %277 = vmatprep.subr.bf16.mxu0 0
  %278 = vmatpush1.bf16.msra.mxu0 0
  %279 = vmatprep.subr.bf16.mxu0 0
  %280 = vmatpush1.bf16.msra.mxu0 0
  %281 = vmatprep.subr.bf16.mxu0 0
  %282 = vmatpush1.bf16.msra.mxu0 0
  %283 = vmatprep.subr.bf16.mxu0 0
  %284 = vmatpush1.bf16.msra.mxu0 0
  %285 = vmatprep.subr.bf16.mxu0 0
  %286 = vmatpush1.bf16.msra.mxu0 0
  %287 = vmatprep.subr.bf16.mxu0 0
  %288 = vmatpush1.bf16.msra.mxu0 0
  %289 = vmatprep.subr.bf16.mxu0 0
  %290 = vmatpush1.bf16.msra.mxu0 0
  %291 = vmatprep.subr.bf16.mxu0 0
  %292 = vmatpush1.bf16.msra.mxu0 0
  %293 = vmatprep.subr.bf16.mxu0 0
  %294 = vmatpush1.bf16.msra.mxu0 0
  %295 = vmatprep.mubr.bf16.mxu0 0
  %296 = vmatmul.mubr.bf16.gmra.mrb[0].mxu0 %v114
  %v297 = vpop.f32.mrb[0].mxu0
  %v298 = vadd.f32 %v45, %v297
  %v299 = vpop.f32.mrb[0].mxu0
  %v300 = vadd.f32 %v49, %v299
  %v301 = vpop.f32.mrb[0].mxu0
  %v302 = vadd.f32 %v45, %v301
  %v303 = vpop.f32.mrb[0].mxu0
  %v304 = vadd.f32 %v49, %v303
  %305 = vmatprep.mubr.bf16.mxu0 0
  %306 = vmatmul.mubr.bf16.gmra.mrb[0].mxu0 %v117
  %v307 = vpop.f32.mrb[0].mxu0
  %v308 = vadd.f32 %v45, %v307
  %v309 = vpop.f32.mrb[0].mxu0
  %v310 = vadd.f32 %v49, %v309
  %v311 = vpop.f32.mrb[0].mxu0
  %v312 = vadd.f32 %v45, %v311
  %v313 = vpop.f32.mrb[0].mxu0
  %v314 = vadd.f32 %v49, %v313
  %315 = vmatprep.mubr.bf16.mxu0 0
  %316 = vmatmul.mubr.bf16.gmra.mrb[0].mxu0 %v120
  %v317 = vpop.f32.mrb[0].mxu0
  %v318 = vadd.f32 %v45, %v317
  %v319 = vpop.f32.mrb[0].mxu0
  %v320 = vadd.f32 %v49, %v319
  %v321 = vpop.f32.mrb[0].mxu0
  %v322 = vadd.f32 %v45, %v321
  %v323 = vpop.f32.mrb[0].mxu0
  %v324 = vadd.f32 %v49, %v323
  %325 = vmatprep.mubr.bf16.mxu0 0
  %326 = vmatmul.mubr.bf16.gmra.mrb[0].mxu0 %v123
  %v327 = vpop.f32.mrb[0].mxu0
  %v328 = vadd.f32 %v45, %v327
  %v329 = vpop.f32.mrb[0].mxu0
  %v330 = vadd.f32 %v49, %v329
  %v331 = vpop.f32.mrb[0].mxu0
  %v332 = vadd.f32 %v45, %v331
  %v333 = vpop.f32.mrb[0].mxu0
  %v334 = vadd.f32 %v49, %v333
  %335 = vmatprep.mubr.bf16.mxu0 0
  %336 = vmatmul.mubr.bf16.gmra.mrb[0].mxu0 %v126
  %v337 = vpop.f32.mrb[0].mxu0
  %v338 = vadd.f32 %v45, %v337
  %v339 = vpop.f32.mrb[0].mxu0
  %v340 = vadd.f32 %v49, %v339
  %v341 = vpop.f32.mrb[0].mxu0
  %v342 = vadd.f32 %v45, %v341
  %v343 = vpop.f32.mrb[0].mxu0
  %v344 = vadd.f32 %v49, %v343
  %345 = vmatprep.mubr.bf16.mxu0 0
  %346 = vmatmul.mubr.bf16.gmra.mrb[0].mxu0 %v129
  %v347 = vpop.f32.mrb[0].mxu0
  %v348 = vadd.f32 %v45, %v347
  %v349 = vpop.f32.mrb[0].mxu0
  %v350 = vadd.f32 %v49, %v349
  %v351 = vpop.f32.mrb[0].mxu0
  %v352 = vadd.f32 %v45, %v351
  %v353 = vpop.f32.mrb[0].mxu0
  %v354 = vadd.f32 %v49, %v353
  %355 = vmatprep.mubr.bf16.mxu0 0
  %356 = vmatmul.mubr.bf16.gmra.mrb[0].mxu0 %v132
  %v357 = vpop.f32.mrb[0].mxu0
  %v358 = vadd.f32 %v45, %v357
  %v359 = vpop.f32.mrb[0].mxu0
  %v360 = vadd.f32 %v49, %v359
  %v361 = vpop.f32.mrb[0].mxu0
  %v362 = vadd.f32 %v45, %v361
  %v363 = vpop.f32.mrb[0].mxu0
  %v364 = vadd.f32 %v49, %v363
  %365 = vmatprep.mubr.bf16.mxu0 0
  %366 = vmatmul.mubr.bf16.gmra.mrb[0].mxu0 %v135
  %v367 = vpop.f32.mrb[0].mxu0
  %v368 = vadd.f32 %v45, %v367
  %v369 = vpop.f32.mrb[0].mxu0
  %v370 = vadd.f32 %v49, %v369
  %v371 = vpop.f32.mrb[0].mxu0
  %v372 = vadd.f32 %v45, %v371
  %v373 = vpop.f32.mrb[0].mxu0
  %v374 = vadd.f32 %v49, %v373
  %375 = vdwg.mxu0
  %v376 = vpack.c.bf16 %v185, %v185
  %v377 = vpack.c.bf16 %v187, %v187
  %v378 = vpack.c.bf16 %v189, %v189
  %v379 = vpack.c.bf16 %v191, %v191
  %v380 = vpack.c.bf16 %v195, %v195
  %v381 = vpack.c.bf16 %v197, %v197
  %v382 = vpack.c.bf16 %v199, %v199
  %v383 = vpack.c.bf16 %v201, %v201
  %v384 = vpack.c.bf16 %v205, %v205
  %v385 = vpack.c.bf16 %v207, %v207
  %v386 = vpack.c.bf16 %v209, %v209
  %v387 = vpack.c.bf16 %v211, %v211
  %v388 = vpack.c.bf16 %v215, %v215
  %v389 = vpack.c.bf16 %v217, %v217
  %v390 = vpack.c.bf16 %v219, %v219
  %v391 = vpack.c.bf16 %v221, %v221
  %v392 = vpack.c.bf16 %v225, %v225
  %v393 = vpack.c.bf16 %v227, %v227
  %v394 = vpack.c.bf16 %v229, %v229
  %v395 = vpack.c.bf16 %v231, %v231
  %v396 = vpack.c.bf16 %v235, %v235
  %v397 = vpack.c.bf16 %v237, %v237
  %v398 = vpack.c.bf16 %v239, %v239
  %v399 = vpack.c.bf16 %v241, %v241
  %v400 = vpack.c.bf16 %v245, %v245
  %v401 = vpack.c.bf16 %v247, %v247
  %v402 = vpack.c.bf16 %v249, %v249
  %v403 = vpack.c.bf16 %v251, %v251
  %v404 = vpack.c.bf16 %v255, %v255
  %v405 = vpack.c.bf16 %v257, %v257
  %v406 = vpack.c.bf16 %v259, %v259
  %v407 = vpack.c.bf16 %v261, %v261
  %v440 = vunpack.c.l.b16 %v376
  %v441 = vunpack.c.l.b16 %v377
  %v442 = vunpack.c.l.b16 %v378
  %v443 = vunpack.c.l.b16 %v379
  %v444 = vunpack.c.l.b16 %v380
  %v445 = vunpack.c.l.b16 %v381
  %v446 = vunpack.c.l.b16 %v382
  %v447 = vunpack.c.l.b16 %v383
  %v448 = vunpack.c.l.b16 %v384
  %v449 = vunpack.c.l.b16 %v385
  %v450 = vunpack.c.l.b16 %v386
  %v451 = vunpack.c.l.b16 %v387
  %v452 = vunpack.c.l.b16 %v388
  %v453 = vunpack.c.l.b16 %v389
  %v454 = vunpack.c.l.b16 %v390
  %v455 = vunpack.c.l.b16 %v391
  %v456 = vunpack.c.l.b16 %v392
  %v457 = vunpack.c.l.b16 %v393
  %v458 = vunpack.c.l.b16 %v394
  %v459 = vunpack.c.l.b16 %v395
  %v460 = vunpack.c.l.b16 %v396
  %v461 = vunpack.c.l.b16 %v397
  %v462 = vunpack.c.l.b16 %v398
  %v463 = vunpack.c.l.b16 %v399
  %v464 = vunpack.c.l.b16 %v400
  %v465 = vunpack.c.l.b16 %v401
  %v466 = vunpack.c.l.b16 %v402
  %v467 = vunpack.c.l.b16 %v403
  %v468 = vunpack.c.l.b16 %v404
  %v469 = vunpack.c.l.b16 %v405
  %v470 = vunpack.c.l.b16 %v406
  %v471 = vunpack.c.l.b16 %v407
  %v472 = vpack.c.b16 %v441, %v440
  %v473 = vpack.c.b16 %v443, %v442
  %v474 = vpack.c.b16 %v445, %v444
  %v475 = vpack.c.b16 %v447, %v446
  %v476 = vpack.c.b16 %v449, %v448
  %v477 = vpack.c.b16 %v451, %v450
  %v478 = vpack.c.b16 %v453, %v452
  %v479 = vpack.c.b16 %v455, %v454
  %v480 = vpack.c.b16 %v457, %v456
  %v481 = vpack.c.b16 %v459, %v458
  %v482 = vpack.c.b16 %v461, %v460
  %v483 = vpack.c.b16 %v463, %v462
  %v484 = vpack.c.b16 %v465, %v464
  %v485 = vpack.c.b16 %v467, %v466
  %v486 = vpack.c.b16 %v469, %v468
  %v487 = vpack.c.b16 %v471, %v470
  %504 = vst [vmem:[%s3] sm:$0xff] %v472
  %505 = vst [vmem:[%s3 + $0x10] sm:$0xff] %v473
  %506 = vst [vmem:[%s3 + $0x20] sm:$0xff] %v474
  %507 = vst [vmem:[%s3 + $0x30] sm:$0xff] %v475
  %508 = vst [vmem:[%s3 + $0x40] sm:$0xff] %v476
  %509 = vst [vmem:[%s3 + $0x50] sm:$0xff] %v477
  %510 = vst [vmem:[%s3 + $0x60] sm:$0xff] %v478
  %511 = vst [vmem:[%s3 + $0x70] sm:$0xff] %v479
  %512 = vst [vmem:[%s3 + $0x80] sm:$0xff] %v480
  %513 = vst [vmem:[%s3 + $0x90] sm:$0xff] %v481
  %514 = vst [vmem:[%s3 + $0xa0] sm:$0xff] %v482
  %515 = vst [vmem:[%s3 + $0xb0] sm:$0xff] %v483
  %516 = vst [vmem:[%s3 + $0xc0] sm:$0xff] %v484
  %517 = vst [vmem:[%s3 + $0xd0] sm:$0xff] %v485
  %518 = vst [vmem:[%s3 + $0xe0] sm:$0xff] %v486
  %519 = vst [vmem:[%s3 + $0xf0] sm:$0xff] %v487
  %v520 = vpack.c.bf16 %v298, %v298
  %v521 = vpack.c.bf16 %v300, %v300
  %v522 = vpack.c.bf16 %v302, %v302
  %v523 = vpack.c.bf16 %v304, %v304
  %v524 = vpack.c.bf16 %v308, %v308
  %v525 = vpack.c.bf16 %v310, %v310
  %v526 = vpack.c.bf16 %v312, %v312
  %v527 = vpack.c.bf16 %v314, %v314
  %v528 = vpack.c.bf16 %v318, %v318
  %v529 = vpack.c.bf16 %v320, %v320
  %v530 = vpack.c.bf16 %v322, %v322
  %v531 = vpack.c.bf16 %v324, %v324
  %v532 = vpack.c.bf16 %v328, %v328
  %v533 = vpack.c.bf16 %v330, %v330
  %v534 = vpack.c.bf16 %v332, %v332
  %v535 = vpack.c.bf16 %v334, %v334
  %v536 = vpack.c.bf16 %v338, %v338
  %v537 = vpack.c.bf16 %v340, %v340
  %v538 = vpack.c.bf16 %v342, %v342
  %v539 = vpack.c.bf16 %v344, %v344
  %v540 = vpack.c.bf16 %v348, %v348
  %v541 = vpack.c.bf16 %v350, %v350
  %v542 = vpack.c.bf16 %v352, %v352
  %v543 = vpack.c.bf16 %v354, %v354
  %v544 = vpack.c.bf16 %v358, %v358
  %v545 = vpack.c.bf16 %v360, %v360
  %v546 = vpack.c.bf16 %v362, %v362
  %v547 = vpack.c.bf16 %v364, %v364
  %v548 = vpack.c.bf16 %v368, %v368
  %v549 = vpack.c.bf16 %v370, %v370
  %v550 = vpack.c.bf16 %v372, %v372
  %v551 = vpack.c.bf16 %v374, %v374
  %v584 = vunpack.c.l.b16 %v520
  %v585 = vunpack.c.l.b16 %v521
  %v586 = vunpack.c.l.b16 %v522
  %v587 = vunpack.c.l.b16 %v523
  %v588 = vunpack.c.l.b16 %v524
  %v589 = vunpack.c.l.b16 %v525
  %v590 = vunpack.c.l.b16 %v526
  %v591 = vunpack.c.l.b16 %v527
  %v592 = vunpack.c.l.b16 %v528
  %v593 = vunpack.c.l.b16 %v529
  %v594 = vunpack.c.l.b16 %v530
  %v595 = vunpack.c.l.b16 %v531
  %v596 = vunpack.c.l.b16 %v532
  %v597 = vunpack.c.l.b16 %v533
  %v598 = vunpack.c.l.b16 %v534
  %v599 = vunpack.c.l.b16 %v535
  %v600 = vunpack.c.l.b16 %v536
  %v601 = vunpack.c.l.b16 %v537
  %v602 = vunpack.c.l.b16 %v538
  %v603 = vunpack.c.l.b16 %v539
  %v604 = vunpack.c.l.b16 %v540
  %v605 = vunpack.c.l.b16 %v541
  %v606 = vunpack.c.l.b16 %v542
  %v607 = vunpack.c.l.b16 %v543
  %v608 = vunpack.c.l.b16 %v544
  %v609 = vunpack.c.l.b16 %v545
  %v610 = vunpack.c.l.b16 %v546
  %v611 = vunpack.c.l.b16 %v547
  %v612 = vunpack.c.l.b16 %v548
  %v613 = vunpack.c.l.b16 %v549
  %v614 = vunpack.c.l.b16 %v550
  %v615 = vunpack.c.l.b16 %v551
  %v616 = vpack.c.b16 %v585, %v584
  %v617 = vpack.c.b16 %v587, %v586
  %v618 = vpack.c.b16 %v589, %v588
  %v619 = vpack.c.b16 %v591, %v590
  %v620 = vpack.c.b16 %v593, %v592
  %v621 = vpack.c.b16 %v595, %v594
  %v622 = vpack.c.b16 %v597, %v596
  %v623 = vpack.c.b16 %v599, %v598
  %v624 = vpack.c.b16 %v601, %v600
  %v625 = vpack.c.b16 %v603, %v602
  %v626 = vpack.c.b16 %v605, %v604
  %v627 = vpack.c.b16 %v607, %v606
  %v628 = vpack.c.b16 %v609, %v608
  %v629 = vpack.c.b16 %v611, %v610
  %v630 = vpack.c.b16 %v613, %v612
  %v631 = vpack.c.b16 %v615, %v614
  %s648 = scalar_lea.vmem %s3, 8
  %649 = vst [vmem:[%s648] sm:$0xff] %v616
  %650 = vst [vmem:[%s648 + $0x10] sm:$0xff] %v617
  %651 = vst [vmem:[%s648 + $0x20] sm:$0xff] %v618
  %652 = vst [vmem:[%s648 + $0x30] sm:$0xff] %v619
  %653 = vst [vmem:[%s648 + $0x40] sm:$0xff] %v620
  %654 = vst [vmem:[%s648 + $0x50] sm:$0xff] %v621
  %655 = vst [vmem:[%s648 + $0x60] sm:$0xff] %v622
  %656 = vst [vmem:[%s648 + $0x70] sm:$0xff] %v623
  %657 = vst [vmem:[%s648 + $0x80] sm:$0xff] %v624
  %658 = vst [vmem:[%s648 + $0x90] sm:$0xff] %v625
  %659 = vst [vmem:[%s648 + $0xa0] sm:$0xff] %v626
  %660 = vst [vmem:[%s648 + $0xb0] sm:$0xff] %v627
  %661 = vst [vmem:[%s648 + $0xc0] sm:$0xff] %v628
  %662 = vst [vmem:[%s648 + $0xd0] sm:$0xff] %v629
  %663 = vst [vmem:[%s648 + $0xe0] sm:$0xff] %v630
  %664 = vst [vmem:[%s648 + $0xf0] sm:$0xff] %v631
  // Predicated region
  $region14: #{up_block_forward.3} parent=0 // pred_check
    _
  $region15: #{up_block_forward.3} parent=0 // pred_check_branch
    %666 = sbr.rel (0) target = $region17
  $region16: #{up_block_forward.3} parent=0 // pred_region
    _
  $region17: #{up_block_forward.3} parent=0 // pred_fallthru
    _
  // Predicated region
  $region18: #{up_block_forward.3} parent=0 // pred_check
    _
  $region19: #{up_block_forward.3} parent=0 // pred_check_branch
    %668 = sbr.rel (0) target = $region21
  $region20: #{up_block_forward.3} parent=0 // pred_region
    _
  $region21: #{up_block_forward.3} parent=0 // pred_fallthru
    _

// kernel: up_block_forward.5
$region0: #{up_block_forward.5}
  #allocation0 [shape = 'u32[]', space=smem, size = 0x4, offset = 0x4, fixed_abs, tag = 'smem constant byte address 0x4 - core index']
  #allocation1 [shape = 'u32[144,128]{1,0:T(1,128)}', space=vmem, size = 0x12000, scoped, tag = 'internal scratch']
  #allocation2 [shape = 'bf16[18,16,384]{2,1,0:T(16,128)(2,1)}', space=vmem, size = 0x36000, scoped, tag = 'scratch operand']
  %s0 = inlined_call_operand.vmem [shape: bf16[2,16,16,128], index: 0, kind: input, shape index: {}]
  %s1 = inlined_call_operand.vmem [shape: bf16[3,384,128], index: 1, kind: input, shape index: {}]
  %s2 = inlined_call_operand.vmem [shape: f32[1,128], index: 2, kind: input, shape index: {}]
  %s3 = inlined_call_operand.vmem [shape: f32[1,128], index: 3, kind: input, shape index: {}]
  %s4 = inlined_call_operand.vmem [shape: f32[2,16,16,128], index: 4, kind: output, shape index: {}]
  %s5 = sld [smem:[#allocation0]]
  $region49: #{up_block_forward.5} parent=0
    _
  %s7 = ssub.s32 1, %s5
  %s8 = scalar_select 0, %s7, %s5
  loop: start=0, step=1, limit=4
  $region2: #{up_block_forward.5} parent=0 // loop_pre_header
    _
  $region3: #{up_block_forward.5} parent=0 // loop_header
    %s10 = sphi 0, %s14
    %p11 = scmp.ge.s32.totalorder %s10, 4
    %s20 = sphi 0, %s22
    %s23 = sphi 0, %s20
    %s24 = sphi 0, %s23
    %s40 = sphi 0, %s24
    %s44 = sphi 0, %s44
    %s46 = sphi 0, %s44
    %s47 = sphi 0, %s46
    %s61 = sphi 0, %s47
    %s65 = sphi 0, %s65
    %s67 = sphi 0, %s65
    %s68 = sphi 0, %s67
    %s82 = sphi 0, %s68
    %s86 = sphi 0, %s86
    %s88 = sphi 0, %s86
    %s89 = sphi 0, %s88
    %s103 = sphi 0, %s89
    %s109 = sphi 0, %s111
    %s112 = sphi 0, %s109
    %s113 = sphi 0, %s112
    %s129 = sphi 0, %s113
  $region4: #{up_block_forward.5} parent=0 // loop_header_branch
    %13 = sbr.rel (%p11) target = $region8
  $region5: #{up_block_forward.5} parent=0 // loop_body
    %s15 = ssub.s32 %s10, 1
    %s16 = ssub.s32 %s10, 2
    %s17 = sadd.s32 %s10, 1
    %s18 = ssub.s32 %s10, %s17
    %p19 = scmp.eq.s32.totalorder %s18, 0
    %s21 = sadd.s32 %s20, 1
    %s22 = scalar_select %p19, %s20, %s21
    %p25 = pneg %p19
    %p26 = scmp.eq.s32.totalorder %s10, 1
    %p27 = por %p25, %p26
    %p28 = scmp.ne.s32.totalorder %s20, %s23
    %p29 = scmp.eq.s32.totalorder %s10, 0
    %p30 = por %p28, %p29
    %p31 = scmp.ne.s32.totalorder %s20, %s23
    %p32 = scmp.eq.s32.totalorder %s15, 1
    %p33 = por %p31, %p32
    %p34 = scmp.ne.s32.totalorder %s23, %s24
    %p35 = scmp.eq.s32.totalorder %s15, 0
    %p36 = por %p34, %p35
    %p37 = scmp.ne.s32.totalorder %s23, %s24
    %p38 = scmp.eq.s32.totalorder %s16, 1
    %p39 = por %p37, %p38
    %p41 = scmp.ne.s32.totalorder %s24, %s40
    %p42 = scmp.eq.s32.totalorder %s16, 0
    %p43 = por %p41, %p42
    %s45 = sadd.s32 %s44, 1
    %p48 = scmp.eq.s32.totalorder %s10, 1
    %p49 = scmp.ne.s32.totalorder %s44, %s46
    %p50 = scmp.eq.s32.totalorder %s10, 0
    %p51 = por %p49, %p50
    %p52 = scmp.ne.s32.totalorder %s44, %s46
    %p53 = scmp.eq.s32.totalorder %s15, 1
    %p54 = por %p52, %p53
    %p55 = scmp.ne.s32.totalorder %s46, %s47
    %p56 = scmp.eq.s32.totalorder %s15, 0
    %p57 = por %p55, %p56
    %p58 = scmp.ne.s32.totalorder %s46, %s47
    %p59 = scmp.eq.s32.totalorder %s16, 1
    %p60 = por %p58, %p59
    %p62 = scmp.ne.s32.totalorder %s47, %s61
    %p63 = scmp.eq.s32.totalorder %s16, 0
    %p64 = por %p62, %p63
    %s66 = sadd.s32 %s65, 1
    %p69 = scmp.eq.s32.totalorder %s10, 1
    %p70 = scmp.ne.s32.totalorder %s65, %s67
    %p71 = scmp.eq.s32.totalorder %s10, 0
    %p72 = por %p70, %p71
    %p73 = scmp.ne.s32.totalorder %s65, %s67
    %p74 = scmp.eq.s32.totalorder %s15, 1
    %p75 = por %p73, %p74
    %p76 = scmp.ne.s32.totalorder %s67, %s68
    %p77 = scmp.eq.s32.totalorder %s15, 0
    %p78 = por %p76, %p77
    %p79 = scmp.ne.s32.totalorder %s67, %s68
    %p80 = scmp.eq.s32.totalorder %s16, 1
    %p81 = por %p79, %p80
    %p83 = scmp.ne.s32.totalorder %s68, %s82
    %p84 = scmp.eq.s32.totalorder %s16, 0
    %p85 = por %p83, %p84
    %s87 = sadd.s32 %s86, 1
    %p90 = scmp.eq.s32.totalorder %s10, 1
    %p91 = scmp.ne.s32.totalorder %s86, %s88
    %p92 = scmp.eq.s32.totalorder %s10, 0
    %p93 = por %p91, %p92
    %p94 = scmp.ne.s32.totalorder %s86, %s88
    %p95 = scmp.eq.s32.totalorder %s15, 1
    %p96 = por %p94, %p95
    %p97 = scmp.ne.s32.totalorder %s88, %s89
    %p98 = scmp.eq.s32.totalorder %s15, 0
    %p99 = por %p97, %p98
    %p100 = scmp.ne.s32.totalorder %s88, %s89
    %p101 = scmp.eq.s32.totalorder %s16, 1
    %p102 = por %p100, %p101
    %p104 = scmp.ne.s32.totalorder %s89, %s103
    %p105 = scmp.eq.s32.totalorder %s16, 0
    %p106 = por %p104, %p105
    %s107 = ssub.s32 %s10, %s17
    %p108 = scmp.eq.s32.totalorder %s107, 0
    %s110 = sadd.s32 %s109, 1
    %s111 = scalar_select %p108, %s109, %s110
    %p114 = pneg %p108
    %p115 = scmp.eq.s32.totalorder %s10, 1
    %p116 = por %p114, %p115
    %p117 = scmp.ne.s32.totalorder %s109, %s112
    %p118 = scmp.eq.s32.totalorder %s10, 0
    %p119 = por %p117, %p118
    %p120 = scmp.ne.s32.totalorder %s109, %s112
    %p121 = scmp.eq.s32.totalorder %s15, 1
    %p122 = por %p120, %p121
    %p123 = scmp.ne.s32.totalorder %s112, %s113
    %p124 = scmp.eq.s32.totalorder %s15, 0
    %p125 = por %p123, %p124
    %p126 = scmp.ne.s32.totalorder %s112, %s113
    %p127 = scmp.eq.s32.totalorder %s16, 1
    %p128 = por %p126, %p127
    %p130 = scmp.ne.s32.totalorder %s113, %s129
    %p131 = scmp.eq.s32.totalorder %s16, 0
    %p132 = por %p130, %p131
    %p133 = scmp.le.s32.totalorder 1, %s10
    %p134 = scmp.lt.s32.totalorder %s10, 3
    %p135 = pnand %p133, %p134
    %p136 = pneg %p135
    // Predicated region
    $region9: #{up_block_forward.5} parent=5 // pred_check
      _
    $region10: #{up_block_forward.5} parent=5 // pred_check_branch
      %138 = sbr.rel (%p135) target = $region12
    $region11: #{up_block_forward.5} parent=5 // pred_region
      %s139 = ssub.s32 %s10, 1
      // Predicated region
      $region13: #{up_block_forward.5} parent=11 // pred_check
        %p140 = pneg %p57
      $region14: #{up_block_forward.5} parent=11 // pred_check_branch
        %142 = sbr.rel (%p140) target = $region16
      $region15: #{up_block_forward.5} parent=11 // pred_region
        _
      $region16: #{up_block_forward.5} parent=11 // pred_fallthru
        _
      // Predicated region
      $region17: #{up_block_forward.5} parent=11 // pred_check
        %p143 = pneg %p78
      $region18: #{up_block_forward.5} parent=11 // pred_check_branch
        %145 = sbr.rel (%p143) target = $region20
      $region19: #{up_block_forward.5} parent=11 // pred_region
        _
      $region20: #{up_block_forward.5} parent=11 // pred_fallthru
        _
      // Predicated region
      $region21: #{up_block_forward.5} parent=11 // pred_check
        %p146 = pneg %p99
      $region22: #{up_block_forward.5} parent=11 // pred_check_branch
        %148 = sbr.rel (%p146) target = $region24
      $region23: #{up_block_forward.5} parent=11 // pred_region
        _
      $region24: #{up_block_forward.5} parent=11 // pred_fallthru
        _
    $region12: #{up_block_forward.5} parent=5 // pred_fallthru
      _
    %p149 = scmp.lt.s32.totalorder %s10, 2
    // Predicated region
    $region25: #{up_block_forward.5} parent=5 // pred_check
      %p150 = pneg %p149
    $region26: #{up_block_forward.5} parent=5 // pred_check_branch
      %152 = sbr.rel (%p150) target = $region28
    $region27: #{up_block_forward.5} parent=5 // pred_region
      // Predicated region
      $region29: #{up_block_forward.5} parent=27 // pred_check
        %p153 = pneg %p30
      $region30: #{up_block_forward.5} parent=27 // pred_check_branch
        %155 = sbr.rel (%p153) target = $region32
      $region31: #{up_block_forward.5} parent=27 // pred_region
        %p156 = scmp.lt.s32.totalorder %s10, 1
        %s157 = scalar_select %p156, %s10, 1
        %s158 = smul.addr %s157, 32
        %s159 = smul.addr %s158, 4
        %s160 = scalar_lea.vmem %s0, %s159
      $region32: #{up_block_forward.5} parent=27 // pred_fallthru
        _
    $region28: #{up_block_forward.5} parent=5 // pred_fallthru
      _
    %p161 = scmp.le.s32.totalorder 1, %s10
    %p162 = scmp.lt.s32.totalorder %s10, 3
    %p163 = pnand %p161, %p162
    %p164 = pneg %p163
    // Predicated region
    $region33: #{up_block_forward.5} parent=5 // pred_check
      _
    $region34: #{up_block_forward.5} parent=5 // pred_check_branch
      %166 = sbr.rel (%p163) target = $region36
    $region35: #{up_block_forward.5} parent=5 // pred_region
      %s167 = ssub.s32 %s10, 1
      %p168 = scmp.lt.s32.totalorder %s15, 1
      %s169 = scalar_select %p168, %s15, 1
      %s170 = smul.addr %s169, 32
      %s171 = smul.addr %s170, 4
      %s172 = scalar_lea.vmem %s0, %s171
      %p173 = pneg %p36
      %p174 = pneg %p33
      %p175 = pneg %p57
      %p176 = pneg %p54
      %p177 = pneg %p78
      %p178 = pneg %p75
      %p179 = pneg %p99
      %p180 = pneg %p96
      %p181 = pneg %p125
      %p182 = pneg %p122
      %p183 = scmp.lt.s32.totalorder %s15, 1
      %s184 = scalar_select %p183, %s15, 1
      %s185 = smul.addr %s184, 32
      %s186 = smul.addr %s185, 8
      %s187 = scalar_lea.vmem %s4, %s186
      %p188 = scmp.lt.s32.totalorder %s15, 1
      %s189 = scalar_select %p188, %s15, 1
      %s190 = smul.addr %s189, 32
      %s191 = smul.addr %s190, 4
      %s192 = scalar_lea.vmem %s0, %s191
      %p193 = scmp.lt.s32.totalorder %s15, 1
      %s194 = scalar_select %p193, %s15, 1
      %s195 = smul.addr %s194, 32
      %s196 = smul.addr %s195, 8
      %s197 = scalar_lea.vmem %s4, %s196
      %199 = vst [vmem:[#allocation2] sm:$0xff] 0
      %200 = vst [vmem:[#allocation2 + $0x8] sm:$0xff] 0
      %201 = vst [vmem:[#allocation2 + $0x10] sm:$0xff] 0
      %s202 = scalar_lea.vmem [#allocation2], 408
      %203 = vst [vmem:[%s202] sm:$0xff] 0
      %204 = vst [vmem:[%s202 + $0x8] sm:$0xff] 0
      %205 = vst [vmem:[%s202 + $0x10] sm:$0xff] 0
      %s206 = scalar_lea.vmem [#allocation2], 24
      %vm207 = vcmask 1040384
      %vm208 = vsmask.f32 256
      %vm209 = vmand %vm207, %vm208
      %v210 = vld [vmem:[%s206] sm:$0x1]
      %v211 = vsel %vm209, 0, %v210
      %212 = vst [vmem:[%s206] sm:$0x1] %v211
      %v213 = vld [vmem:[%s206 + $0x18] sm:$0x1]
      %v214 = vsel %vm209, 0, %v213
      %215 = vst [vmem:[%s206 + $0x18] sm:$0x1] %v214
      %v216 = vld [vmem:[%s206 + $0x30] sm:$0x1]
      %v217 = vsel %vm209, 0, %v216
      %218 = vst [vmem:[%s206 + $0x30] sm:$0x1] %v217
      %v219 = vld [vmem:[%s206 + $0x48] sm:$0x1]
      %v220 = vsel %vm209, 0, %v219
      %221 = vst [vmem:[%s206 + $0x48] sm:$0x1] %v220
      %v222 = vld [vmem:[%s206 + $0x60] sm:$0x1]
      %v223 = vsel %vm209, 0, %v222
      %224 = vst [vmem:[%s206 + $0x60] sm:$0x1] %v223
      %v225 = vld [vmem:[%s206 + $0x78] sm:$0x1]
      %v226 = vsel %vm209, 0, %v225
      %227 = vst [vmem:[%s206 + $0x78] sm:$0x1] %v226
      %v228 = vld [vmem:[%s206 + $0x90] sm:$0x1]
      %v229 = vsel %vm209, 0, %v228
      %230 = vst [vmem:[%s206 + $0x90] sm:$0x1] %v229
      %v231 = vld [vmem:[%s206 + $0xa8] sm:$0x1]
      %v232 = vsel %vm209, 0, %v231
      %233 = vst [vmem:[%s206 + $0xa8] sm:$0x1] %v232
      %v234 = vld [vmem:[%s206 + $0xc0] sm:$0x1]
      %v235 = vsel %vm209, 0, %v234
      %236 = vst [vmem:[%s206 + $0xc0] sm:$0x1] %v235
      %v237 = vld [vmem:[%s206 + $0xd8] sm:$0x1]
      %v238 = vsel %vm209, 0, %v237
      %239 = vst [vmem:[%s206 + $0xd8] sm:$0x1] %v238
      %v240 = vld [vmem:[%s206 + $0xf0] sm:$0x1]
      %v241 = vsel %vm209, 0, %v240
      %242 = vst [vmem:[%s206 + $0xf0] sm:$0x1] %v241
      %v243 = vld [vmem:[%s206 + $0x108] sm:$0x1]
      %v244 = vsel %vm209, 0, %v243
      %245 = vst [vmem:[%s206 + $0x108] sm:$0x1] %v244
      %v246 = vld [vmem:[%s206 + $0x120] sm:$0x1]
      %v247 = vsel %vm209, 0, %v246
      %248 = vst [vmem:[%s206 + $0x120] sm:$0x1] %v247
      %v249 = vld [vmem:[%s206 + $0x138] sm:$0x1]
      %v250 = vsel %vm209, 0, %v249
      %251 = vst [vmem:[%s206 + $0x138] sm:$0x1] %v250
      %v252 = vld [vmem:[%s206 + $0x150] sm:$0x1]
      %v253 = vsel %vm209, 0, %v252
      %254 = vst [vmem:[%s206 + $0x150] sm:$0x1] %v253
      %v255 = vld [vmem:[%s206 + $0x168] sm:$0x1]
      %v256 = vsel %vm209, 0, %v255
      %257 = vst [vmem:[%s206 + $0x168] sm:$0x1] %v256
      %vm258 = vcmask 1047559
      %vm259 = vsmask.f32 7966
      %vm260 = vmand %vm258, %vm259
      %v261 = vld [vmem:[%s206 + $0x10] sm:$0x80]
      %v262 = vsel %vm260, 0, %v261
      %263 = vst [vmem:[%s206 + $0x10] sm:$0x80] %v262
      %v264 = vld [vmem:[%s206 + $0x28] sm:$0x80]
      %v265 = vsel %vm260, 0, %v264
      %266 = vst [vmem:[%s206 + $0x28] sm:$0x80] %v265
      %v267 = vld [vmem:[%s206 + $0x40] sm:$0x80]
      %v268 = vsel %vm260, 0, %v267
      %269 = vst [vmem:[%s206 + $0x40] sm:$0x80] %v268
      %v270 = vld [vmem:[%s206 + $0x58] sm:$0x80]
      %v271 = vsel %vm260, 0, %v270
      %272 = vst [vmem:[%s206 + $0x58] sm:$0x80] %v271
      %v273 = vld [vmem:[%s206 + $0x70] sm:$0x80]
      %v274 = vsel %vm260, 0, %v273
      %275 = vst [vmem:[%s206 + $0x70] sm:$0x80] %v274
      %v276 = vld [vmem:[%s206 + $0x88] sm:$0x80]
      %v277 = vsel %vm260, 0, %v276
      %278 = vst [vmem:[%s206 + $0x88] sm:$0x80] %v277
      %v279 = vld [vmem:[%s206 + $0xa0] sm:$0x80]
      %v280 = vsel %vm260, 0, %v279
      %281 = vst [vmem:[%s206 + $0xa0] sm:$0x80] %v280
      %v282 = vld [vmem:[%s206 + $0xb8] sm:$0x80]
      %v283 = vsel %vm260, 0, %v282
      %284 = vst [vmem:[%s206 + $0xb8] sm:$0x80] %v283
      %v285 = vld [vmem:[%s206 + $0xd0] sm:$0x80]
      %v286 = vsel %vm260, 0, %v285
      %287 = vst [vmem:[%s206 + $0xd0] sm:$0x80] %v286
      %v288 = vld [vmem:[%s206 + $0xe8] sm:$0x80]
      %v289 = vsel %vm260, 0, %v288
      %290 = vst [vmem:[%s206 + $0xe8] sm:$0x80] %v289
      %v291 = vld [vmem:[%s206 + $0x100] sm:$0x80]
      %v292 = vsel %vm260, 0, %v291
      %293 = vst [vmem:[%s206 + $0x100] sm:$0x80] %v292
      %v294 = vld [vmem:[%s206 + $0x118] sm:$0x80]
      %v295 = vsel %vm260, 0, %v294
      %296 = vst [vmem:[%s206 + $0x118] sm:$0x80] %v295
      %v297 = vld [vmem:[%s206 + $0x130] sm:$0x80]
      %v298 = vsel %vm260, 0, %v297
      %299 = vst [vmem:[%s206 + $0x130] sm:$0x80] %v298
      %v300 = vld [vmem:[%s206 + $0x148] sm:$0x80]
      %v301 = vsel %vm260, 0, %v300
      %302 = vst [vmem:[%s206 + $0x148] sm:$0x80] %v301
      %v303 = vld [vmem:[%s206 + $0x160] sm:$0x80]
      %v304 = vsel %vm260, 0, %v303
      %305 = vst [vmem:[%s206 + $0x160] sm:$0x80] %v304
      %v306 = vld [vmem:[%s206 + $0x178] sm:$0x80]
      %v307 = vsel %vm260, 0, %v306
      %308 = vst [vmem:[%s206 + $0x178] sm:$0x80] %v307
      %v309 = vld [vmem:[%s192] sm:$0xf]
      %v310 = vld [vmem:[%s192 + $0x4] sm:$0xf]
      %v311 = vld [vmem:[%s192 + $0x8] sm:$0xf]
      %v312 = vld [vmem:[%s192 + $0xc] sm:$0xf]
      %v313 = vld [vmem:[%s192 + $0x10] sm:$0xf]
      %v314 = vld [vmem:[%s192 + $0x14] sm:$0xf]
      %v315 = vld [vmem:[%s192 + $0x18] sm:$0xf]
      %v316 = vld [vmem:[%s192 + $0x1c] sm:$0xf]
      %v317 = vld [vmem:[%s192 + $0x20] sm:$0xf]
      %v318 = vld [vmem:[%s192 + $0x24] sm:$0xf]
      %v319 = vld [vmem:[%s192 + $0x28] sm:$0xf]
      %v320 = vld [vmem:[%s192 + $0x2c] sm:$0xf]
      %v321 = vld [vmem:[%s192 + $0x30] sm:$0xf]
      %v322 = vld [vmem:[%s192 + $0x34] sm:$0xf]
      %v323 = vld [vmem:[%s192 + $0x38] sm:$0xf]
      %v324 = vld [vmem:[%s192 + $0x3c] sm:$0xf]
      %v325 = vld [vmem:[%s192 + $0x40] sm:$0xf]
      %v326 = vld [vmem:[%s192 + $0x44] sm:$0xf]
      %v327 = vld [vmem:[%s192 + $0x48] sm:$0xf]
      %v328 = vld [vmem:[%s192 + $0x4c] sm:$0xf]
      %v329 = vld [vmem:[%s192 + $0x50] sm:$0xf]
      %v330 = vld [vmem:[%s192 + $0x54] sm:$0xf]
      %v331 = vld [vmem:[%s192 + $0x58] sm:$0xf]
      %v332 = vld [vmem:[%s192 + $0x5c] sm:$0xf]
      %v333 = vld [vmem:[%s192 + $0x60] sm:$0xf]
      %v334 = vld [vmem:[%s192 + $0x64] sm:$0xf]
      %v335 = vld [vmem:[%s192 + $0x68] sm:$0xf]
      %v336 = vld [vmem:[%s192 + $0x6c] sm:$0xf]
      %v337 = vld [vmem:[%s192 + $0x70] sm:$0xf]
      %v338 = vld [vmem:[%s192 + $0x74] sm:$0xf]
      %v339 = vld [vmem:[%s192 + $0x78] sm:$0xf]
      %v340 = vld [vmem:[%s192 + $0x7c] sm:$0xf]
      %v373 = vunpack.c.l.b16 %v309
      %v374 = vunpack.c.l.b16 %v310
      %v375 = vunpack.c.l.b16 %v311
      %v376 = vunpack.c.l.b16 %v312
      %v377 = vunpack.c.l.b16 %v313
      %v378 = vunpack.c.l.b16 %v314
      %v379 = vunpack.c.l.b16 %v315
      %v380 = vunpack.c.l.b16 %v316
      %v381 = vunpack.c.l.b16 %v317
      %v382 = vunpack.c.l.b16 %v318
      %v383 = vunpack.c.l.b16 %v319
      %v384 = vunpack.c.l.b16 %v320
      %v385 = vunpack.c.l.b16 %v321
      %v386 = vunpack.c.l.b16 %v322
      %v387 = vunpack.c.l.b16 %v323
      %v388 = vunpack.c.l.b16 %v324
      %v389 = vunpack.c.l.b16 %v325
      %v390 = vunpack.c.l.b16 %v326
      %v391 = vunpack.c.l.b16 %v327
      %v392 = vunpack.c.l.b16 %v328
      %v393 = vunpack.c.l.b16 %v329
      %v394 = vunpack.c.l.b16 %v330
      %v395 = vunpack.c.l.b16 %v331
      %v396 = vunpack.c.l.b16 %v332
      %v397 = vunpack.c.l.b16 %v333
      %v398 = vunpack.c.l.b16 %v334
      %v399 = vunpack.c.l.b16 %v335
      %v400 = vunpack.c.l.b16 %v336
      %v401 = vunpack.c.l.b16 %v337
      %v402 = vunpack.c.l.b16 %v338
      %v403 = vunpack.c.l.b16 %v339
      %v404 = vunpack.c.l.b16 %v340
      %v405 = vpack.c.b16 %v374, %v373
      %v406 = vpack.c.b16 %v376, %v375
      %v407 = vpack.c.b16 %v378, %v377
      %v408 = vpack.c.b16 %v380, %v379
      %v409 = vpack.c.b16 %v382, %v381
      %v410 = vpack.c.b16 %v384, %v383
      %v411 = vpack.c.b16 %v386, %v385
      %v412 = vpack.c.b16 %v388, %v387
      %v413 = vpack.c.b16 %v390, %v389
      %v414 = vpack.c.b16 %v392, %v391
      %v415 = vpack.c.b16 %v394, %v393
      %v416 = vpack.c.b16 %v396, %v395
      %v417 = vpack.c.b16 %v398, %v397
      %v418 = vpack.c.b16 %v400, %v399
      %v419 = vpack.c.b16 %v402, %v401
      %v420 = vpack.c.b16 %v404, %v403
      %v422 = vshrl.u32 %v405, 16
      %v424 = vrot.slane %v422, 7
      %v425 = vshll.u32 %v405, 16
      %v427 = vor.u32 %v424, %v425
      %v429 = vshrl.u32 %v406, 16
      %v431 = vrot.slane %v429, 7
      %v432 = vshll.u32 %v406, 16
      %v434 = vor.u32 %v431, %v432
      %v436 = vshrl.u32 %v407, 16
      %v438 = vrot.slane %v436, 7
      %v439 = vshll.u32 %v407, 16
      %v441 = vor.u32 %v438, %v439
      %v443 = vshrl.u32 %v408, 16
      %v445 = vrot.slane %v443, 7
      %v446 = vshll.u32 %v408, 16
      %v448 = vor.u32 %v445, %v446
      %v450 = vshrl.u32 %v409, 16
      %v452 = vrot.slane %v450, 7
      %v453 = vshll.u32 %v409, 16
      %v455 = vor.u32 %v452, %v453
      %v457 = vshrl.u32 %v410, 16
      %v459 = vrot.slane %v457, 7
      %v460 = vshll.u32 %v410, 16
      %v462 = vor.u32 %v459, %v460
      %v464 = vshrl.u32 %v411, 16
      %v466 = vrot.slane %v464, 7
      %v467 = vshll.u32 %v411, 16
      %v469 = vor.u32 %v466, %v467
      %v471 = vshrl.u32 %v412, 16
      %v473 = vrot.slane %v471, 7
      %v474 = vshll.u32 %v412, 16
      %v476 = vor.u32 %v473, %v474
      %v478 = vshrl.u32 %v413, 16
      %v480 = vrot.slane %v478, 7
      %v481 = vshll.u32 %v413, 16
      %v483 = vor.u32 %v480, %v481
      %v485 = vshrl.u32 %v414, 16
      %v487 = vrot.slane %v485, 7
      %v488 = vshll.u32 %v414, 16
      %v490 = vor.u32 %v487, %v488
      %v492 = vshrl.u32 %v415, 16
      %v494 = vrot.slane %v492, 7
      %v495 = vshll.u32 %v415, 16
      %v497 = vor.u32 %v494, %v495
      %v499 = vshrl.u32 %v416, 16
      %v501 = vrot.slane %v499, 7
      %v502 = vshll.u32 %v416, 16
      %v504 = vor.u32 %v501, %v502
      %v506 = vshrl.u32 %v417, 16
      %v508 = vrot.slane %v506, 7
      %v509 = vshll.u32 %v417, 16
      %v511 = vor.u32 %v508, %v509
      %v513 = vshrl.u32 %v418, 16
      %v515 = vrot.slane %v513, 7
      %v516 = vshll.u32 %v418, 16
      %v518 = vor.u32 %v515, %v516
      %v520 = vshrl.u32 %v419, 16
      %v522 = vrot.slane %v520, 7
      %v523 = vshll.u32 %v419, 16
      %v525 = vor.u32 %v522, %v523
      %v527 = vshrl.u32 %v420, 16
      %v529 = vrot.slane %v527, 7
      %v530 = vshll.u32 %v420, 16
      %v532 = vor.u32 %v529, %v530
      %vm549 = vcmask 1047552
      %vm550 = vsmask.f32 7938
      %vm551 = vmand %vm549, %vm550
      %v552 = vld [vmem:[%s206] sm:$0xff]
      %v553 = vsel %vm551, %v427, %v552
      %554 = vst [vmem:[%s206] sm:$0xff] %v553
      %v555 = vld [vmem:[%s206 + $0x18] sm:$0xff]
      %v556 = vsel %vm551, %v434, %v555
      %557 = vst [vmem:[%s206 + $0x18] sm:$0xff] %v556
      %v558 = vld [vmem:[%s206 + $0x30] sm:$0xff]
      %v559 = vsel %vm551, %v441, %v558
      %560 = vst [vmem:[%s206 + $0x30] sm:$0xff] %v559
      %v561 = vld [vmem:[%s206 + $0x48] sm:$0xff]
      %v562 = vsel %vm551, %v448, %v561
      %563 = vst [vmem:[%s206 + $0x48] sm:$0xff] %v562
      %v564 = vld [vmem:[%s206 + $0x60] sm:$0xff]
      %v565 = vsel %vm551, %v455, %v564
      %566 = vst [vmem:[%s206 + $0x60] sm:$0xff] %v565
      %v567 = vld [vmem:[%s206 + $0x78] sm:$0xff]
      %v568 = vsel %vm551, %v462, %v567
      %569 = vst [vmem:[%s206 + $0x78] sm:$0xff] %v568
      %v570 = vld [vmem:[%s206 + $0x90] sm:$0xff]
      %v571 = vsel %vm551, %v469, %v570
      %572 = vst [vmem:[%s206 + $0x90] sm:$0xff] %v571
      %v573 = vld [vmem:[%s206 + $0xa8] sm:$0xff]
      %v574 = vsel %vm551, %v476, %v573
      %575 = vst [vmem:[%s206 + $0xa8] sm:$0xff] %v574
      %v576 = vld [vmem:[%s206 + $0xc0] sm:$0xff]
      %v577 = vsel %vm551, %v483, %v576
      %578 = vst [vmem:[%s206 + $0xc0] sm:$0xff] %v577
      %v579 = vld [vmem:[%s206 + $0xd8] sm:$0xff]
      %v580 = vsel %vm551, %v490, %v579
      %581 = vst [vmem:[%s206 + $0xd8] sm:$0xff] %v580
      %v582 = vld [vmem:[%s206 + $0xf0] sm:$0xff]
      %v583 = vsel %vm551, %v497, %v582
      %584 = vst [vmem:[%s206 + $0xf0] sm:$0xff] %v583
      %v585 = vld [vmem:[%s206 + $0x108] sm:$0xff]
      %v586 = vsel %vm551, %v504, %v585
      %587 = vst [vmem:[%s206 + $0x108] sm:$0xff] %v586
      %v588 = vld [vmem:[%s206 + $0x120] sm:$0xff]
      %v589 = vsel %vm551, %v511, %v588
      %590 = vst [vmem:[%s206 + $0x120] sm:$0xff] %v589
      %v591 = vld [vmem:[%s206 + $0x138] sm:$0xff]
      %v592 = vsel %vm551, %v518, %v591
      %593 = vst [vmem:[%s206 + $0x138] sm:$0xff] %v592
      %v594 = vld [vmem:[%s206 + $0x150] sm:$0xff]
      %v595 = vsel %vm551, %v525, %v594
      %596 = vst [vmem:[%s206 + $0x150] sm:$0xff] %v595
      %v597 = vld [vmem:[%s206 + $0x168] sm:$0xff]
      %v598 = vsel %vm551, %v532, %v597
      %599 = vst [vmem:[%s206 + $0x168] sm:$0xff] %v598
      %616 = vst [vmem:[%s206 + $0x8] sm:$0xff] %v405
      %617 = vst [vmem:[%s206 + $0x20] sm:$0xff] %v406
      %618 = vst [vmem:[%s206 + $0x38] sm:$0xff] %v407
      %619 = vst [vmem:[%s206 + $0x50] sm:$0xff] %v408
      %620 = vst [vmem:[%s206 + $0x68] sm:$0xff] %v409
      %621 = vst [vmem:[%s206 + $0x80] sm:$0xff] %v410
      %622 = vst [vmem:[%s206 + $0x98] sm:$0xff] %v411
      %623 = vst [vmem:[%s206 + $0xb0] sm:$0xff] %v412
      %624 = vst [vmem:[%s206 + $0xc8] sm:$0xff] %v413
      %625 = vst [vmem:[%s206 + $0xe0] sm:$0xff] %v414
      %626 = vst [vmem:[%s206 + $0xf8] sm:$0xff] %v415
      %627 = vst [vmem:[%s206 + $0x110] sm:$0xff] %v416
      %628 = vst [vmem:[%s206 + $0x128] sm:$0xff] %v417
      %629 = vst [vmem:[%s206 + $0x140] sm:$0xff] %v418
      %630 = vst [vmem:[%s206 + $0x158] sm:$0xff] %v419
      %631 = vst [vmem:[%s206 + $0x170] sm:$0xff] %v420
      %v632 = vrot.slane %v425, 1
      %v633 = vor.u32 %v422, %v632
      %v634 = vrot.slane %v432, 1
      %v635 = vor.u32 %v429, %v634
      %v636 = vrot.slane %v439, 1
      %v637 = vor.u32 %v436, %v636
      %v638 = vrot.slane %v446, 1
      %v639 = vor.u32 %v443, %v638
      %v640 = vrot.slane %v453, 1
      %v641 = vor.u32 %v450, %v640
      %v642 = vrot.slane %v460, 1
      %v643 = vor.u32 %v457, %v642
      %v644 = vrot.slane %v467, 1
      %v645 = vor.u32 %v464, %v644
      %v646 = vrot.slane %v474, 1
      %v647 = vor.u32 %v471, %v646
      %v648 = vrot.slane %v481, 1
      %v649 = vor.u32 %v478, %v648
      %v650 = vrot.slane %v488, 1
      %v651 = vor.u32 %v485, %v650
      %v652 = vrot.slane %v495, 1
      %v653 = vor.u32 %v492, %v652
      %v654 = vrot.slane %v502, 1
      %v655 = vor.u32 %v499, %v654
      %v656 = vrot.slane %v509, 1
      %v657 = vor.u32 %v506, %v656
      %v658 = vrot.slane %v516, 1
      %v659 = vor.u32 %v513, %v658
      %v660 = vrot.slane %v523, 1
      %v661 = vor.u32 %v520, %v660
      %v662 = vrot.slane %v530, 1
      %v663 = vor.u32 %v527, %v662
      %vm680 = vsmask.f32 7424
      %vm681 = vmand %vm549, %vm680
      %v682 = vld [vmem:[%s206 + $0x10] sm:$0xff]
      %v683 = vsel %vm681, %v633, %v682
      %684 = vst [vmem:[%s206 + $0x10] sm:$0xff] %v683
      %v685 = vld [vmem:[%s206 + $0x28] sm:$0xff]
      %v686 = vsel %vm681, %v635, %v685
      %687 = vst [vmem:[%s206 + $0x28] sm:$0xff] %v686
      %v688 = vld [vmem:[%s206 + $0x40] sm:$0xff]
      %v689 = vsel %vm681, %v637, %v688
      %690 = vst [vmem:[%s206 + $0x40] sm:$0xff] %v689
      %v691 = vld [vmem:[%s206 + $0x58] sm:$0xff]
      %v692 = vsel %vm681, %v639, %v691
      %693 = vst [vmem:[%s206 + $0x58] sm:$0xff] %v692
      %v694 = vld [vmem:[%s206 + $0x70] sm:$0xff]
      %v695 = vsel %vm681, %v641, %v694
      %696 = vst [vmem:[%s206 + $0x70] sm:$0xff] %v695
      %v697 = vld [vmem:[%s206 + $0x88] sm:$0xff]
      %v698 = vsel %vm681, %v643, %v697
      %699 = vst [vmem:[%s206 + $0x88] sm:$0xff] %v698
      %v700 = vld [vmem:[%s206 + $0xa0] sm:$0xff]
      %v701 = vsel %vm681, %v645, %v700
      %702 = vst [vmem:[%s206 + $0xa0] sm:$0xff] %v701
      %v703 = vld [vmem:[%s206 + $0xb8] sm:$0xff]
      %v704 = vsel %vm681, %v647, %v703
      %705 = vst [vmem:[%s206 + $0xb8] sm:$0xff] %v704
      %v706 = vld [vmem:[%s206 + $0xd0] sm:$0xff]
      %v707 = vsel %vm681, %v649, %v706
      %708 = vst [vmem:[%s206 + $0xd0] sm:$0xff] %v707
      %v709 = vld [vmem:[%s206 + $0xe8] sm:$0xff]
      %v710 = vsel %vm681, %v651, %v709
      %711 = vst [vmem:[%s206 + $0xe8] sm:$0xff] %v710
      %v712 = vld [vmem:[%s206 + $0x100] sm:$0xff]
      %v713 = vsel %vm681, %v653, %v712
      %714 = vst [vmem:[%s206 + $0x100] sm:$0xff] %v713
      %v715 = vld [vmem:[%s206 + $0x118] sm:$0xff]
      %v716 = vsel %vm681, %v655, %v715
      %717 = vst [vmem:[%s206 + $0x118] sm:$0xff] %v716
      %v718 = vld [vmem:[%s206 + $0x130] sm:$0xff]
      %v719 = vsel %vm681, %v657, %v718
      %720 = vst [vmem:[%s206 + $0x130] sm:$0xff] %v719
      %v721 = vld [vmem:[%s206 + $0x148] sm:$0xff]
      %v722 = vsel %vm681, %v659, %v721
      %723 = vst [vmem:[%s206 + $0x148] sm:$0xff] %v722
      %v724 = vld [vmem:[%s206 + $0x160] sm:$0xff]
      %v725 = vsel %vm681, %v661, %v724
      %726 = vst [vmem:[%s206 + $0x160] sm:$0xff] %v725
      %v727 = vld [vmem:[%s206 + $0x178] sm:$0xff]
      %v728 = vsel %vm681, %v663, %v727
      %729 = vst [vmem:[%s206 + $0x178] sm:$0xff] %v728
      %v730 = vld [vmem:[#allocation2] sm:$0xff]
      %v731 = vld [vmem:[#allocation2 + $0x8] sm:$0xff]
      %v732 = vld [vmem:[#allocation2 + $0x10] sm:$0xff]
      %v733 = vld [vmem:[#allocation2 + $0x18] sm:$0xff]
      %v734 = vld [vmem:[#allocation2 + $0x20] sm:$0xff]
      %v735 = vld [vmem:[#allocation2 + $0x28] sm:$0xff]
      %v736 = vld [vmem:[#allocation2 + $0x30] sm:$0xff]
      %v737 = vld [vmem:[#allocation2 + $0x38] sm:$0xff]
      %v738 = vld [vmem:[#allocation2 + $0x40] sm:$0xff]
      %v739 = vld [vmem:[#allocation2 + $0x48] sm:$0xff]
      %v740 = vld [vmem:[#allocation2 + $0x50] sm:$0xff]
      %v741 = vld [vmem:[#allocation2 + $0x58] sm:$0xff]
      %v742 = vld [vmem:[#allocation2 + $0x60] sm:$0xff]
      %v743 = vld [vmem:[#allocation2 + $0x68] sm:$0xff]
      %v744 = vld [vmem:[#allocation2 + $0x70] sm:$0xff]
      %v745 = vld [vmem:[#allocation2 + $0x78] sm:$0xff]
      %v746 = vld [vmem:[#allocation2 + $0x80] sm:$0xff]
      %v747 = vld [vmem:[#allocation2 + $0x88] sm:$0xff]
      %v748 = vld [vmem:[#allocation2 + $0x90] sm:$0xff]
      %v749 = vld [vmem:[#allocation2 + $0x98] sm:$0xff]
      %v750 = vld [vmem:[#allocation2 + $0xa0] sm:$0xff]
      %v751 = vld [vmem:[#allocation2 + $0xa8] sm:$0xff]
      %v752 = vld [vmem:[#allocation2 + $0xb0] sm:$0xff]
      %v753 = vld [vmem:[#allocation2 + $0xb8] sm:$0xff]
      %v754 = vld [vmem:[#allocation2 + $0xc0] sm:$0xff]
      %v755 = vld [vmem:[#allocation2 + $0xc8] sm:$0xff]
      %v756 = vld [vmem:[#allocation2 + $0xd0] sm:$0xff]
      %v757 = vld [vmem:[#allocation2 + $0xd8] sm:$0xff]
      %v758 = vld [vmem:[#allocation2 + $0xe0] sm:$0xff]
      %v759 = vld [vmem:[#allocation2 + $0xe8] sm:$0xff]
      %v760 = vld [vmem:[#allocation2 + $0xf0] sm:$0xff]
      %v761 = vld [vmem:[#allocation2 + $0xf8] sm:$0xff]
      %v762 = vld [vmem:[#allocation2 + $0x100] sm:$0xff]
      %v763 = vld [vmem:[#allocation2 + $0x108] sm:$0xff]
      %v764 = vld [vmem:[#allocation2 + $0x110] sm:$0xff]
      %v765 = vld [vmem:[#allocation2 + $0x118] sm:$0xff]
      %v766 = vld [vmem:[#allocation2 + $0x120] sm:$0xff]
      %v767 = vld [vmem:[#allocation2 + $0x128] sm:$0xff]
      %v768 = vld [vmem:[#allocation2 + $0x130] sm:$0xff]
      %v769 = vld [vmem:[#allocation2 + $0x138] sm:$0xff]
      %v770 = vld [vmem:[#allocation2 + $0x140] sm:$0xff]
      %v771 = vld [vmem:[#allocation2 + $0x148] sm:$0xff]
      %v772 = vld [vmem:[#allocation2 + $0x150] sm:$0xff]
      %v773 = vld [vmem:[#allocation2 + $0x158] sm:$0xff]
      %v774 = vld [vmem:[#allocation2 + $0x160] sm:$0xff]
      %v775 = vld [vmem:[#allocation2 + $0x168] sm:$0xff]
      %v776 = vld [vmem:[#allocation2 + $0x170] sm:$0xff]
      %v777 = vld [vmem:[#allocation2 + $0x178] sm:$0xff]
      %v778 = vld [vmem:[%s1] sm:$0xf]
      %v779 = vld [vmem:[%s1 + $0x4] sm:$0xf]
      %v780 = vld [vmem:[%s1 + $0x8] sm:$0xf]
      %v781 = vld [vmem:[%s1 + $0xc] sm:$0xf]
      %v782 = vld [vmem:[%s1 + $0x10] sm:$0xf]
      %v783 = vld [vmem:[%s1 + $0x14] sm:$0xf]
      %v784 = vld [vmem:[%s1 + $0x18] sm:$0xf]
      %v785 = vld [vmem:[%s1 + $0x1c] sm:$0xf]
      %v786 = vld [vmem:[%s1 + $0x20] sm:$0xf]
      %v787 = vld [vmem:[%s1 + $0x24] sm:$0xf]
      %v788 = vld [vmem:[%s1 + $0x28] sm:$0xf]
      %v789 = vld [vmem:[%s1 + $0x2c] sm:$0xf]
      %v790 = vld [vmem:[%s1 + $0x30] sm:$0xf]
      %v791 = vld [vmem:[%s1 + $0x34] sm:$0xf]
      %v792 = vld [vmem:[%s1 + $0x38] sm:$0xf]
      %v793 = vld [vmem:[%s1 + $0x3c] sm:$0xf]
      %v794 = vld [vmem:[%s1 + $0x40] sm:$0xf]
      %v795 = vld [vmem:[%s1 + $0x44] sm:$0xf]
      %v796 = vld [vmem:[%s1 + $0x48] sm:$0xf]
      %v797 = vld [vmem:[%s1 + $0x4c] sm:$0xf]
      %v798 = vld [vmem:[%s1 + $0x50] sm:$0xf]
      %v799 = vld [vmem:[%s1 + $0x54] sm:$0xf]
      %v800 = vld [vmem:[%s1 + $0x58] sm:$0xf]
      %v801 = vld [vmem:[%s1 + $0x5c] sm:$0xf]
      %v802 = vld [vmem:[%s1 + $0x60] sm:$0xf]
      %v803 = vld [vmem:[%s1 + $0x64] sm:$0xf]
      %v804 = vld [vmem:[%s1 + $0x68] sm:$0xf]
      %v805 = vld [vmem:[%s1 + $0x6c] sm:$0xf]
      %v806 = vld [vmem:[%s1 + $0x70] sm:$0xf]
      %v807 = vld [vmem:[%s1 + $0x74] sm:$0xf]
      %v808 = vld [vmem:[%s1 + $0x78] sm:$0xf]
      %v809 = vld [vmem:[%s1 + $0x7c] sm:$0xf]
      %v810 = vld [vmem:[%s1 + $0x80] sm:$0xf]
      %v811 = vld [vmem:[%s1 + $0x84] sm:$0xf]
      %v812 = vld [vmem:[%s1 + $0x88] sm:$0xf]
      %v813 = vld [vmem:[%s1 + $0x8c] sm:$0xf]
      %v814 = vld [vmem:[%s1 + $0x90] sm:$0xf]
      %v815 = vld [vmem:[%s1 + $0x94] sm:$0xf]
      %v816 = vld [vmem:[%s1 + $0x98] sm:$0xf]
      %v817 = vld [vmem:[%s1 + $0x9c] sm:$0xf]
      %v818 = vld [vmem:[%s1 + $0xa0] sm:$0xf]
      %v819 = vld [vmem:[%s1 + $0xa4] sm:$0xf]
      %v820 = vld [vmem:[%s1 + $0xa8] sm:$0xf]
      %v821 = vld [vmem:[%s1 + $0xac] sm:$0xf]
      %v822 = vld [vmem:[%s1 + $0xb0] sm:$0xf]
      %v823 = vld [vmem:[%s1 + $0xb4] sm:$0xf]
      %v824 = vld [vmem:[%s1 + $0xb8] sm:$0xf]
      %v825 = vld [vmem:[%s1 + $0xbc] sm:$0xf]
      %v826 = vld [vmem:[%s206] sm:$0xff]
      %v827 = vld [vmem:[%s206 + $0x8] sm:$0xff]
      %v828 = vld [vmem:[%s206 + $0x10] sm:$0xff]
      %v829 = vld [vmem:[%s206 + $0x18] sm:$0xff]
      %v830 = vld [vmem:[%s206 + $0x20] sm:$0xff]
      %v831 = vld [vmem:[%s206 + $0x28] sm:$0xff]
      %v832 = vld [vmem:[%s206 + $0x30] sm:$0xff]
      %v833 = vld [vmem:[%s206 + $0x38] sm:$0xff]
      %v834 = vld [vmem:[%s206 + $0x40] sm:$0xff]
      %v835 = vld [vmem:[%s206 + $0x48] sm:$0xff]
      %v836 = vld [vmem:[%s206 + $0x50] sm:$0xff]
      %v837 = vld [vmem:[%s206 + $0x58] sm:$0xff]
      %v838 = vld [vmem:[%s206 + $0x60] sm:$0xff]
      %v839 = vld [vmem:[%s206 + $0x68] sm:$0xff]
      %v840 = vld [vmem:[%s206 + $0x70] sm:$0xff]
      %v841 = vld [vmem:[%s206 + $0x78] sm:$0xff]
      %v842 = vld [vmem:[%s206 + $0x80] sm:$0xff]
      %v843 = vld [vmem:[%s206 + $0x88] sm:$0xff]
      %v844 = vld [vmem:[%s206 + $0x90] sm:$0xff]
      %v845 = vld [vmem:[%s206 + $0x98] sm:$0xff]
      %v846 = vld [vmem:[%s206 + $0xa0] sm:$0xff]
      %v847 = vld [vmem:[%s206 + $0xa8] sm:$0xff]
      %v848 = vld [vmem:[%s206 + $0xb0] sm:$0xff]
      %v849 = vld [vmem:[%s206 + $0xb8] sm:$0xff]
      %v850 = vld [vmem:[%s206 + $0xc0] sm:$0xff]
      %v851 = vld [vmem:[%s206 + $0xc8] sm:$0xff]
      %v852 = vld [vmem:[%s206 + $0xd0] sm:$0xff]
      %v853 = vld [vmem:[%s206 + $0xd8] sm:$0xff]
      %v854 = vld [vmem:[%s206 + $0xe0] sm:$0xff]
      %v855 = vld [vmem:[%s206 + $0xe8] sm:$0xff]
      %v856 = vld [vmem:[%s206 + $0xf0] sm:$0xff]
      %v857 = vld [vmem:[%s206 + $0xf8] sm:$0xff]
      %v858 = vld [vmem:[%s206 + $0x100] sm:$0xff]
      %v859 = vld [vmem:[%s206 + $0x108] sm:$0xff]
      %v860 = vld [vmem:[%s206 + $0x110] sm:$0xff]
      %v861 = vld [vmem:[%s206 + $0x118] sm:$0xff]
      %v862 = vld [vmem:[%s206 + $0x120] sm:$0xff]
      %v863 = vld [vmem:[%s206 + $0x128] sm:$0xff]
      %v864 = vld [vmem:[%s206 + $0x130] sm:$0xff]
      %v865 = vld [vmem:[%s206 + $0x138] sm:$0xff]
      %v866 = vld [vmem:[%s206 + $0x140] sm:$0xff]
      %v867 = vld [vmem:[%s206 + $0x148] sm:$0xff]
      %v868 = vld [vmem:[%s206 + $0x150] sm:$0xff]
      %v869 = vld [vmem:[%s206 + $0x158] sm:$0xff]
      %v870 = vld [vmem:[%s206 + $0x160] sm:$0xff]
      %v871 = vld [vmem:[%s206 + $0x168] sm:$0xff]
      %v872 = vld [vmem:[%s206 + $0x170] sm:$0xff]
      %v873 = vld [vmem:[%s206 + $0x178] sm:$0xff]
      %s874 = scalar_lea.vmem %s1, 192
      %v875 = vld [vmem:[%s874] sm:$0xf]
      %v876 = vld [vmem:[%s874 + $0x4] sm:$0xf]
      %v877 = vld [vmem:[%s874 + $0x8] sm:$0xf]
      %v878 = vld [vmem:[%s874 + $0xc] sm:$0xf]
      %v879 = vld [vmem:[%s874 + $0x10] sm:$0xf]
      %v880 = vld [vmem:[%s874 + $0x14] sm:$0xf]
      %v881 = vld [vmem:[%s874 + $0x18] sm:$0xf]
      %v882 = vld [vmem:[%s874 + $0x1c] sm:$0xf]
      %v883 = vld [vmem:[%s874 + $0x20] sm:$0xf]
      %v884 = vld [vmem:[%s874 + $0x24] sm:$0xf]
      %v885 = vld [vmem:[%s874 + $0x28] sm:$0xf]
      %v886 = vld [vmem:[%s874 + $0x2c] sm:$0xf]
      %v887 = vld [vmem:[%s874 + $0x30] sm:$0xf]
      %v888 = vld [vmem:[%s874 + $0x34] sm:$0xf]
      %v889 = vld [vmem:[%s874 + $0x38] sm:$0xf]
      %v890 = vld [vmem:[%s874 + $0x3c] sm:$0xf]
      %v891 = vld [vmem:[%s874 + $0x40] sm:$0xf]
      %v892 = vld [vmem:[%s874 + $0x44] sm:$0xf]
      %v893 = vld [vmem:[%s874 + $0x48] sm:$0xf]
      %v894 = vld [vmem:[%s874 + $0x4c] sm:$0xf]
      %v895 = vld [vmem:[%s874 + $0x50] sm:$0xf]
      %v896 = vld [vmem:[%s874 + $0x54] sm:$0xf]
      %v897 = vld [vmem:[%s874 + $0x58] sm:$0xf]
      %v898 = vld [vmem:[%s874 + $0x5c] sm:$0xf]
      %v899 = vld [vmem:[%s874 + $0x60] sm:$0xf]
      %v900 = vld [vmem:[%s874 + $0x64] sm:$0xf]
      %v901 = vld [vmem:[%s874 + $0x68] sm:$0xf]
      %v902 = vld [vmem:[%s874 + $0x6c] sm:$0xf]
      %v903 = vld [vmem:[%s874 + $0x70] sm:$0xf]
      %v904 = vld [vmem:[%s874 + $0x74] sm:$0xf]
      %v905 = vld [vmem:[%s874 + $0x78] sm:$0xf]
      %v906 = vld [vmem:[%s874 + $0x7c] sm:$0xf]
      %v907 = vld [vmem:[%s874 + $0x80] sm:$0xf]
      %v908 = vld [vmem:[%s874 + $0x84] sm:$0xf]
      %v909 = vld [vmem:[%s874 + $0x88] sm:$0xf]
      %v910 = vld [vmem:[%s874 + $0x8c] sm:$0xf]
      %v911 = vld [vmem:[%s874 + $0x90] sm:$0xf]
      %v912 = vld [vmem:[%s874 + $0x94] sm:$0xf]
      %v913 = vld [vmem:[%s874 + $0x98] sm:$0xf]
      %v914 = vld [vmem:[%s874 + $0x9c] sm:$0xf]
      %v915 = vld [vmem:[%s874 + $0xa0] sm:$0xf]
      %v916 = vld [vmem:[%s874 + $0xa4] sm:$0xf]
      %v917 = vld [vmem:[%s874 + $0xa8] sm:$0xf]
      %v918 = vld [vmem:[%s874 + $0xac] sm:$0xf]
      %v919 = vld [vmem:[%s874 + $0xb0] sm:$0xf]
      %v920 = vld [vmem:[%s874 + $0xb4] sm:$0xf]
      %v921 = vld [vmem:[%s874 + $0xb8] sm:$0xf]
      %v922 = vld [vmem:[%s874 + $0xbc] sm:$0xf]
      %v971 = vunpack.c.l.b16 %v875
      %v972 = vunpack.c.l.b16 %v876
      %v973 = vunpack.c.l.b16 %v877
      %v974 = vunpack.c.l.b16 %v878
      %v975 = vunpack.c.l.b16 %v879
      %v976 = vunpack.c.l.b16 %v880
      %v977 = vunpack.c.l.b16 %v881
      %v978 = vunpack.c.l.b16 %v882
      %v979 = vunpack.c.l.b16 %v883
      %v980 = vunpack.c.l.b16 %v884
      %v981 = vunpack.c.l.b16 %v885
      %v982 = vunpack.c.l.b16 %v886
      %v983 = vunpack.c.l.b16 %v887
      %v984 = vunpack.c.l.b16 %v888
      %v985 = vunpack.c.l.b16 %v889
      %v986 = vunpack.c.l.b16 %v890
      %v987 = vunpack.c.l.b16 %v891
      %v988 = vunpack.c.l.b16 %v892
      %v989 = vunpack.c.l.b16 %v893
      %v990 = vunpack.c.l.b16 %v894
      %v991 = vunpack.c.l.b16 %v895
      %v992 = vunpack.c.l.b16 %v896
      %v993 = vunpack.c.l.b16 %v897
      %v994 = vunpack.c.l.b16 %v898
      %v995 = vunpack.c.l.b16 %v899
      %v996 = vunpack.c.l.b16 %v900
      %v997 = vunpack.c.l.b16 %v901
      %v998 = vunpack.c.l.b16 %v902
      %v999 = vunpack.c.l.b16 %v903
      %v1000 = vunpack.c.l.b16 %v904
      %v1001 = vunpack.c.l.b16 %v905
      %v1002 = vunpack.c.l.b16 %v906
      %v1003 = vunpack.c.l.b16 %v907
      %v1004 = vunpack.c.l.b16 %v908
      %v1005 = vunpack.c.l.b16 %v909
      %v1006 = vunpack.c.l.b16 %v910
      %v1007 = vunpack.c.l.b16 %v911
      %v1008 = vunpack.c.l.b16 %v912
      %v1009 = vunpack.c.l.b16 %v913
      %v1010 = vunpack.c.l.b16 %v914
      %v1011 = vunpack.c.l.b16 %v915
      %v1012 = vunpack.c.l.b16 %v916
      %v1013 = vunpack.c.l.b16 %v917
      %v1014 = vunpack.c.l.b16 %v918
      %v1015 = vunpack.c.l.b16 %v919
      %v1016 = vunpack.c.l.b16 %v920
      %v1017 = vunpack.c.l.b16 %v921
      %v1018 = vunpack.c.l.b16 %v922
      %v1019 = vpack.c.b16 %v972, %v971
      %v1020 = vpack.c.b16 %v974, %v973
      %v1021 = vpack.c.b16 %v976, %v975
      %v1022 = vpack.c.b16 %v978, %v977
      %v1023 = vpack.c.b16 %v980, %v979
      %v1024 = vpack.c.b16 %v982, %v981
      %v1025 = vpack.c.b16 %v984, %v983
      %v1026 = vpack.c.b16 %v986, %v985
      %v1027 = vpack.c.b16 %v988, %v987
      %v1028 = vpack.c.b16 %v990, %v989
      %v1029 = vpack.c.b16 %v992, %v991
      %v1030 = vpack.c.b16 %v994, %v993
      %v1031 = vpack.c.b16 %v996, %v995
      %v1032 = vpack.c.b16 %v998, %v997
      %v1033 = vpack.c.b16 %v1000, %v999
      %v1034 = vpack.c.b16 %v1002, %v1001
      %v1035 = vpack.c.b16 %v1004, %v1003
      %v1036 = vpack.c.b16 %v1006, %v1005
      %v1037 = vpack.c.b16 %v1008, %v1007
      %v1038 = vpack.c.b16 %v1010, %v1009
      %v1039 = vpack.c.b16 %v1012, %v1011
      %v1040 = vpack.c.b16 %v1014, %v1013
      %v1041 = vpack.c.b16 %v1016, %v1015
      %v1042 = vpack.c.b16 %v1018, %v1017
      %1067 = vmatprep.subr.bf16.mxu0 0
      %1068 = vmatpush1.bf16.msra.mxu0 %v1019
      %1069 = vmatprep.subr.bf16.mxu0 0
      %1070 = vmatpush1.bf16.msra.mxu0 %v1020
      %1071 = vmatprep.subr.bf16.mxu0 0
      %1072 = vmatpush1.bf16.msra.mxu0 %v1021
      %1073 = vmatprep.subr.bf16.mxu0 0
      %1074 = vmatpush1.bf16.msra.mxu0 %v1022
      %1075 = vmatprep.subr.bf16.mxu0 0
      %1076 = vmatpush1.bf16.msra.mxu0 %v1023
      %1077 = vmatprep.subr.bf16.mxu0 0
      %1078 = vmatpush1.bf16.msra.mxu0 %v1024
      %1079 = vmatprep.subr.bf16.mxu0 0
      %1080 = vmatpush1.bf16.msra.mxu0 %v1025
      %1081 = vmatprep.subr.bf16.mxu0 0
      %1082 = vmatpush1.bf16.msra.mxu0 %v1026
      %1083 = vmatprep.subr.bf16.mxu0 0
      %1084 = vmatpush1.bf16.msra.mxu0 %v1027
      %1085 = vmatprep.subr.bf16.mxu0 0
      %1086 = vmatpush1.bf16.msra.mxu0 %v1028
      %1087 = vmatprep.subr.bf16.mxu0 0
      %1088 = vmatpush1.bf16.msra.mxu0 %v1029
      %1089 = vmatprep.subr.bf16.mxu0 0
      %1090 = vmatpush1.bf16.msra.mxu0 %v1030
      %1091 = vmatprep.subr.bf16.mxu0 0
      %1092 = vmatpush1.bf16.msra.mxu0 %v1031
      %1093 = vmatprep.subr.bf16.mxu0 0
      %1094 = vmatpush1.bf16.msra.mxu0 %v1032
      %1095 = vmatprep.subr.bf16.mxu0 0
      %1096 = vmatpush1.bf16.msra.mxu0 %v1033
      %1097 = vmatprep.subr.bf16.mxu0 0
      %1098 = vmatpush1.bf16.msra.mxu0 %v1034
      %1099 = vmatprep.mubr.bf16.mxu0 %v827
      %1100 = vmatmul.mubr.bf16.gmra.mrb[0].mxu0 %v826
      %v1101 = vpop.f32.mrb[0].mxu0
      %v1102 = vadd.f32 0.0, %v1101
      %v1103 = vpop.f32.mrb[0].mxu0
      %v1104 = vpop.f32.mrb[0].mxu0
      %v1105 = vadd.f32 0.0, %v1104
      %v1106 = vpop.f32.mrb[0].mxu0
      %1107 = vmatprep.mubr.bf16.mxu0 %v830
      %1108 = vmatmul.mubr.bf16.gmra.mrb[0].mxu0 %v829
      %v1109 = vpop.f32.mrb[0].mxu0
      %v1110 = vadd.f32 0.0, %v1109
      %v1111 = vpop.f32.mrb[0].mxu0
      %v1112 = vpop.f32.mrb[0].mxu0
      %v1113 = vadd.f32 0.0, %v1112
      %v1114 = vpop.f32.mrb[0].mxu0
      %1115 = vmatprep.mubr.bf16.mxu0 %v833
      %1116 = vmatmul.mubr.bf16.gmra.mrb[0].mxu0 %v832
      %v1117 = vpop.f32.mrb[0].mxu0
      %v1118 = vadd.f32 0.0, %v1117
      %v1119 = vpop.f32.mrb[0].mxu0
      %v1120 = vpop.f32.mrb[0].mxu0
      %v1121 = vadd.f32 0.0, %v1120
      %v1122 = vpop.f32.mrb[0].mxu0
      %1123 = vmatprep.mubr.bf16.mxu0 %v836
      %1124 = vmatmul.mubr.bf16.gmra.mrb[0].mxu0 %v835
      %v1125 = vpop.f32.mrb[0].mxu0
      %v1126 = vadd.f32 0.0, %v1125
      %v1127 = vpop.f32.mrb[0].mxu0
      %v1128 = vpop.f32.mrb[0].mxu0
      %v1129 = vadd.f32 0.0, %v1128
      %v1130 = vpop.f32.mrb[0].mxu0
      %1131 = vmatprep.mubr.bf16.mxu0 %v839
      %1132 = vmatmul.mubr.bf16.gmra.mrb[0].mxu0 %v838
      %v1133 = vpop.f32.mrb[0].mxu0
      %v1134 = vadd.f32 0.0, %v1133
      %v1135 = vpop.f32.mrb[0].mxu0
      %v1136 = vpop.f32.mrb[0].mxu0
      %v1137 = vadd.f32 0.0, %v1136
      %v1138 = vpop.f32.mrb[0].mxu0
      %1139 = vmatprep.mubr.bf16.mxu0 %v842
      %1140 = vmatmul.mubr.bf16.gmra.mrb[0].mxu0 %v841
      %v1141 = vpop.f32.mrb[0].mxu0
      %v1142 = vadd.f32 0.0, %v1141
      %v1143 = vpop.f32.mrb[0].mxu0
      %v1144 = vpop.f32.mrb[0].mxu0
      %v1145 = vadd.f32 0.0, %v1144
      %v1146 = vpop.f32.mrb[0].mxu0
      %1147 = vmatprep.mubr.bf16.mxu0 %v845
      %1148 = vmatmul.mubr.bf16.gmra.mrb[0].mxu0 %v844
      %v1149 = vpop.f32.mrb[0].mxu0
      %v1150 = vadd.f32 0.0, %v1149
      %v1151 = vpop.f32.mrb[0].mxu0
      %v1152 = vpop.f32.mrb[0].mxu0
      %v1153 = vadd.f32 0.0, %v1152
      %v1154 = vpop.f32.mrb[0].mxu0
      %1155 = vmatprep.mubr.bf16.mxu0 %v848
      %1156 = vmatmul.mubr.bf16.gmra.mrb[0].mxu0 %v847
      %v1157 = vpop.f32.mrb[0].mxu0
      %v1158 = vadd.f32 0.0, %v1157
      %v1159 = vpop.f32.mrb[0].mxu0
      %v1160 = vpop.f32.mrb[0].mxu0
      %v1161 = vadd.f32 0.0, %v1160
      %v1162 = vpop.f32.mrb[0].mxu0
      %1163 = vmatprep.mubr.bf16.mxu0 %v851
      %1164 = vmatmul.mubr.bf16.gmra.mrb[0].mxu0 %v850
      %v1165 = vpop.f32.mrb[0].mxu0
      %v1166 = vadd.f32 0.0, %v1165
      %v1167 = vpop.f32.mrb[0].mxu0
      %v1168 = vpop.f32.mrb[0].mxu0
      %v1169 = vadd.f32 0.0, %v1168
      %v1170 = vpop.f32.mrb[0].mxu0
      %1171 = vmatprep.mubr.bf16.mxu0 %v854
      %1172 = vmatmul.mubr.bf16.gmra.mrb[0].mxu0 %v853
      %v1173 = vpop.f32.mrb[0].mxu0
      %v1174 = vadd.f32 0.0, %v1173
      %v1175 = vpop.f32.mrb[0].mxu0
      %v1176 = vpop.f32.mrb[0].mxu0
      %v1177 = vadd.f32 0.0, %v1176
      %v1178 = vpop.f32.mrb[0].mxu0
      %1179 = vmatprep.mubr.bf16.mxu0 %v857
      %1180 = vmatmul.mubr.bf16.gmra.mrb[0].mxu0 %v856
      %v1181 = vpop.f32.mrb[0].mxu0
      %v1182 = vadd.f32 0.0, %v1181
      %v1183 = vpop.f32.mrb[0].mxu0
      %v1184 = vpop.f32.mrb[0].mxu0
      %v1185 = vadd.f32 0.0, %v1184
      %v1186 = vpop.f32.mrb[0].mxu0
      %1187 = vmatprep.mubr.bf16.mxu0 %v860
      %1188 = vmatmul.mubr.bf16.gmra.mrb[0].mxu0 %v859
      %v1189 = vpop.f32.mrb[0].mxu0
      %v1190 = vadd.f32 0.0, %v1189
      %v1191 = vpop.f32.mrb[0].mxu0
      %v1192 = vpop.f32.mrb[0].mxu0
      %v1193 = vadd.f32 0.0, %v1192
      %v1194 = vpop.f32.mrb[0].mxu0
      %1195 = vmatprep.mubr.bf16.mxu0 %v863
      %1196 = vmatmul.mubr.bf16.gmra.mrb[0].mxu0 %v862
      %v1197 = vpop.f32.mrb[0].mxu0
      %v1198 = vadd.f32 0.0, %v1197
      %v1199 = vpop.f32.mrb[0].mxu0
      %v1200 = vpop.f32.mrb[0].mxu0
      %v1201 = vadd.f32 0.0, %v1200
      %v1202 = vpop.f32.mrb[0].mxu0
      %1203 = vmatprep.mubr.bf16.mxu0 %v866
      %1204 = vmatmul.mubr.bf16.gmra.mrb[0].mxu0 %v865
      %v1205 = vpop.f32.mrb[0].mxu0
      %v1206 = vadd.f32 0.0, %v1205
      %v1207 = vpop.f32.mrb[0].mxu0
      %v1208 = vpop.f32.mrb[0].mxu0
      %v1209 = vadd.f32 0.0, %v1208
      %v1210 = vpop.f32.mrb[0].mxu0
      %1211 = vmatprep.mubr.bf16.mxu0 %v869
      %1212 = vmatmul.mubr.bf16.gmra.mrb[0].mxu0 %v868
      %v1213 = vpop.f32.mrb[0].mxu0
      %v1214 = vadd.f32 0.0, %v1213
      %v1215 = vpop.f32.mrb[0].mxu0
      %v1216 = vpop.f32.mrb[0].mxu0
      %v1217 = vadd.f32 0.0, %v1216
      %v1218 = vpop.f32.mrb[0].mxu0
      %1219 = vmatprep.mubr.bf16.mxu0 %v872
      %1220 = vmatmul.mubr.bf16.gmra.mrb[0].mxu0 %v871
      %v1221 = vpop.f32.mrb[0].mxu0
      %v1222 = vadd.f32 0.0, %v1221
      %v1223 = vpop.f32.mrb[0].mxu0
      %v1224 = vpop.f32.mrb[0].mxu0
      %v1225 = vadd.f32 0.0, %v1224
      %v1226 = vpop.f32.mrb[0].mxu0
      %1227 = vdwg.mxu0
      %1228 = vmatprep.subr.bf16.mxu0 0
      %1229 = vmatpush1.bf16.msra.mxu0 %v1035
      %1230 = vmatprep.subr.bf16.mxu0 0
      %1231 = vmatpush1.bf16.msra.mxu0 %v1036
      %1232 = vmatprep.subr.bf16.mxu0 0
      %1233 = vmatpush1.bf16.msra.mxu0 %v1037
      %1234 = vmatprep.subr.bf16.mxu0 0
      %1235 = vmatpush1.bf16.msra.mxu0 %v1038
      %1236 = vmatprep.subr.bf16.mxu0 0
      %1237 = vmatpush1.bf16.msra.mxu0 %v1039
      %1238 = vmatprep.subr.bf16.mxu0 0
      %1239 = vmatpush1.bf16.msra.mxu0 %v1040
      %1240 = vmatprep.subr.bf16.mxu0 0
      %1241 = vmatpush1.bf16.msra.mxu0 %v1041
      %1242 = vmatprep.subr.bf16.mxu0 0
      %1243 = vmatpush1.bf16.msra.mxu0 %v1042
      %1244 = vmatprep.subr.bf16.mxu0 0
      %1245 = vmatpush1.bf16.msra.mxu0 0
      %1246 = vmatprep.subr.bf16.mxu0 0
      %1247 = vmatpush1.bf16.msra.mxu0 0
      %1248 = vmatprep.subr.bf16.mxu0 0
      %1249 = vmatpush1.bf16.msra.mxu0 0
      %1250 = vmatprep.subr.bf16.mxu0 0
      %1251 = vmatpush1.bf16.msra.mxu0 0
      %1252 = vmatprep.subr.bf16.mxu0 0
      %1253 = vmatpush1.bf16.msra.mxu0 0
      %1254 = vmatprep.subr.bf16.mxu0 0
      %1255 = vmatpush1.bf16.msra.mxu0 0
      %1256 = vmatprep.subr.bf16.mxu0 0
      %1257 = vmatpush1.bf16.msra.mxu0 0
      %1258 = vmatprep.subr.bf16.mxu0 0
      %1259 = vmatpush1.bf16.msra.mxu0 0
      %1260 = vmatprep.mubr.bf16.mxu0 0
      %1261 = vmatmul.mubr.bf16.gmra.mrb[0].mxu0 %v828
      %v1262 = vpop.f32.mrb[0].mxu0
      %v1263 = vadd.f32 %v1102, %v1262
      %v1264 = vpop.f32.mrb[0].mxu0
      %v1265 = vpop.f32.mrb[0].mxu0
      %v1266 = vadd.f32 %v1105, %v1265
      %v1267 = vpop.f32.mrb[0].mxu0
      %1268 = vmatprep.mubr.bf16.mxu0 0
      %1269 = vmatmul.mubr.bf16.gmra.mrb[0].mxu0 %v831
      %v1270 = vpop.f32.mrb[0].mxu0
      %v1271 = vadd.f32 %v1110, %v1270
      %v1272 = vpop.f32.mrb[0].mxu0
      %v1273 = vpop.f32.mrb[0].mxu0
      %v1274 = vadd.f32 %v1113, %v1273
      %v1275 = vpop.f32.mrb[0].mxu0
      %1276 = vmatprep.mubr.bf16.mxu0 0
      %1277 = vmatmul.mubr.bf16.gmra.mrb[0].mxu0 %v834
      %v1278 = vpop.f32.mrb[0].mxu0
      %v1279 = vadd.f32 %v1118, %v1278
      %v1280 = vpop.f32.mrb[0].mxu0
      %v1281 = vpop.f32.mrb[0].mxu0
      %v1282 = vadd.f32 %v1121, %v1281
      %v1283 = vpop.f32.mrb[0].mxu0
      %1284 = vmatprep.mubr.bf16.mxu0 0
      %1285 = vmatmul.mubr.bf16.gmra.mrb[0].mxu0 %v837
      %v1286 = vpop.f32.mrb[0].mxu0
      %v1287 = vadd.f32 %v1126, %v1286
      %v1288 = vpop.f32.mrb[0].mxu0
      %v1289 = vpop.f32.mrb[0].mxu0
      %v1290 = vadd.f32 %v1129, %v1289
      %v1291 = vpop.f32.mrb[0].mxu0
      %1292 = vmatprep.mubr.bf16.mxu0 0
      %1293 = vmatmul.mubr.bf16.gmra.mrb[0].mxu0 %v840
      %v1294 = vpop.f32.mrb[0].mxu0
      %v1295 = vadd.f32 %v1134, %v1294
      %v1296 = vpop.f32.mrb[0].mxu0
      %v1297 = vpop.f32.mrb[0].mxu0
      %v1298 = vadd.f32 %v1137, %v1297
      %v1299 = vpop.f32.mrb[0].mxu0
      %1300 = vmatprep.mubr.bf16.mxu0 0
      %1301 = vmatmul.mubr.bf16.gmra.mrb[0].mxu0 %v843
      %v1302 = vpop.f32.mrb[0].mxu0
      %v1303 = vadd.f32 %v1142, %v1302
      %v1304 = vpop.f32.mrb[0].mxu0
      %v1305 = vpop.f32.mrb[0].mxu0
      %v1306 = vadd.f32 %v1145, %v1305
      %v1307 = vpop.f32.mrb[0].mxu0
      %1308 = vmatprep.mubr.bf16.mxu0 0
      %1309 = vmatmul.mubr.bf16.gmra.mrb[0].mxu0 %v846
      %v1310 = vpop.f32.mrb[0].mxu0
      %v1311 = vadd.f32 %v1150, %v1310
      %v1312 = vpop.f32.mrb[0].mxu0
      %v1313 = vpop.f32.mrb[0].mxu0
      %v1314 = vadd.f32 %v1153, %v1313
      %v1315 = vpop.f32.mrb[0].mxu0
      %1316 = vmatprep.mubr.bf16.mxu0 0
      %1317 = vmatmul.mubr.bf16.gmra.mrb[0].mxu0 %v849
      %v1318 = vpop.f32.mrb[0].mxu0
      %v1319 = vadd.f32 %v1158, %v1318
      %v1320 = vpop.f32.mrb[0].mxu0
      %v1321 = vpop.f32.mrb[0].mxu0
      %v1322 = vadd.f32 %v1161, %v1321
      %v1323 = vpop.f32.mrb[0].mxu0
      %1324 = vmatprep.mubr.bf16.mxu0 0
      %1325 = vmatmul.mubr.bf16.gmra.mrb[0].mxu0 %v852
      %v1326 = vpop.f32.mrb[0].mxu0
      %v1327 = vadd.f32 %v1166, %v1326
      %v1328 = vpop.f32.mrb[0].mxu0
      %v1329 = vpop.f32.mrb[0].mxu0
      %v1330 = vadd.f32 %v1169, %v1329
      %v1331 = vpop.f32.mrb[0].mxu0
      %1332 = vmatprep.mubr.bf16.mxu0 0
      %1333 = vmatmul.mubr.bf16.gmra.mrb[0].mxu0 %v855
      %v1334 = vpop.f32.mrb[0].mxu0
      %v1335 = vadd.f32 %v1174, %v1334
      %v1336 = vpop.f32.mrb[0].mxu0
      %v1337 = vpop.f32.mrb[0].mxu0
      %v1338 = vadd.f32 %v1177, %v1337
      %v1339 = vpop.f32.mrb[0].mxu0
      %1340 = vmatprep.mubr.bf16.mxu0 0
      %1341 = vmatmul.mubr.bf16.gmra.mrb[0].mxu0 %v858
      %v1342 = vpop.f32.mrb[0].mxu0
      %v1343 = vadd.f32 %v1182, %v1342
      %v1344 = vpop.f32.mrb[0].mxu0
      %v1345 = vpop.f32.mrb[0].mxu0
      %v1346 = vadd.f32 %v1185, %v1345
      %v1347 = vpop.f32.mrb[0].mxu0
      %1348 = vmatprep.mubr.bf16.mxu0 0
      %1349 = vmatmul.mubr.bf16.gmra.mrb[0].mxu0 %v861
      %v1350 = vpop.f32.mrb[0].mxu0
      %v1351 = vadd.f32 %v1190, %v1350
      %v1352 = vpop.f32.mrb[0].mxu0
      %v1353 = vpop.f32.mrb[0].mxu0
      %v1354 = vadd.f32 %v1193, %v1353
      %v1355 = vpop.f32.mrb[0].mxu0
      %1356 = vmatprep.mubr.bf16.mxu0 0
      %1357 = vmatmul.mubr.bf16.gmra.mrb[0].mxu0 %v864
      %v1358 = vpop.f32.mrb[0].mxu0
      %v1359 = vadd.f32 %v1198, %v1358
      %v1360 = vpop.f32.mrb[0].mxu0
      %v1361 = vpop.f32.mrb[0].mxu0
      %v1362 = vadd.f32 %v1201, %v1361
      %v1363 = vpop.f32.mrb[0].mxu0
      %1364 = vmatprep.mubr.bf16.mxu0 0
      %1365 = vmatmul.mubr.bf16.gmra.mrb[0].mxu0 %v867
      %v1366 = vpop.f32.mrb[0].mxu0
      %v1367 = vadd.f32 %v1206, %v1366
      %v1368 = vpop.f32.mrb[0].mxu0
      %v1369 = vpop.f32.mrb[0].mxu0
      %v1370 = vadd.f32 %v1209, %v1369
      %v1371 = vpop.f32.mrb[0].mxu0
      %1372 = vmatprep.mubr.bf16.mxu0 0
      %1373 = vmatmul.mubr.bf16.gmra.mrb[0].mxu0 %v870
      %v1374 = vpop.f32.mrb[0].mxu0
      %v1375 = vadd.f32 %v1214, %v1374
      %v1376 = vpop.f32.mrb[0].mxu0
      %v1377 = vpop.f32.mrb[0].mxu0
      %v1378 = vadd.f32 %v1217, %v1377
      %v1379 = vpop.f32.mrb[0].mxu0
      %1380 = vmatprep.mubr.bf16.mxu0 0
      %1381 = vmatmul.mubr.bf16.gmra.mrb[0].mxu0 %v873
      %v1382 = vpop.f32.mrb[0].mxu0
      %v1383 = vadd.f32 %v1222, %v1382
      %v1384 = vpop.f32.mrb[0].mxu0
      %v1385 = vpop.f32.mrb[0].mxu0
      %v1386 = vadd.f32 %v1225, %v1385
      %v1387 = vpop.f32.mrb[0].mxu0
      %1388 = vdwg.mxu0
      %v1437 = vunpack.c.l.b16 %v778
      %v1438 = vunpack.c.l.b16 %v779
      %v1439 = vunpack.c.l.b16 %v780
      %v1440 = vunpack.c.l.b16 %v781
      %v1441 = vunpack.c.l.b16 %v782
      %v1442 = vunpack.c.l.b16 %v783
      %v1443 = vunpack.c.l.b16 %v784
      %v1444 = vunpack.c.l.b16 %v785
      %v1445 = vunpack.c.l.b16 %v786
      %v1446 = vunpack.c.l.b16 %v787
      %v1447 = vunpack.c.l.b16 %v788
      %v1448 = vunpack.c.l.b16 %v789
      %v1449 = vunpack.c.l.b16 %v790
      %v1450 = vunpack.c.l.b16 %v791
      %v1451 = vunpack.c.l.b16 %v792
      %v1452 = vunpack.c.l.b16 %v793
      %v1453 = vunpack.c.l.b16 %v794
      %v1454 = vunpack.c.l.b16 %v795
      %v1455 = vunpack.c.l.b16 %v796
      %v1456 = vunpack.c.l.b16 %v797
      %v1457 = vunpack.c.l.b16 %v798
      %v1458 = vunpack.c.l.b16 %v799
      %v1459 = vunpack.c.l.b16 %v800
      %v1460 = vunpack.c.l.b16 %v801
      %v1461 = vunpack.c.l.b16 %v802
      %v1462 = vunpack.c.l.b16 %v803
      %v1463 = vunpack.c.l.b16 %v804
      %v1464 = vunpack.c.l.b16 %v805
      %v1465 = vunpack.c.l.b16 %v806
      %v1466 = vunpack.c.l.b16 %v807
      %v1467 = vunpack.c.l.b16 %v808
      %v1468 = vunpack.c.l.b16 %v809
      %v1469 = vunpack.c.l.b16 %v810
      %v1470 = vunpack.c.l.b16 %v811
      %v1471 = vunpack.c.l.b16 %v812
      %v1472 = vunpack.c.l.b16 %v813
      %v1473 = vunpack.c.l.b16 %v814
      %v1474 = vunpack.c.l.b16 %v815
      %v1475 = vunpack.c.l.b16 %v816
      %v1476 = vunpack.c.l.b16 %v817
      %v1477 = vunpack.c.l.b16 %v818
      %v1478 = vunpack.c.l.b16 %v819
      %v1479 = vunpack.c.l.b16 %v820
      %v1480 = vunpack.c.l.b16 %v821
      %v1481 = vunpack.c.l.b16 %v822
      %v1482 = vunpack.c.l.b16 %v823
      %v1483 = vunpack.c.l.b16 %v824
      %v1484 = vunpack.c.l.b16 %v825
      %v1485 = vpack.c.b16 %v1438, %v1437
      %v1486 = vpack.c.b16 %v1440, %v1439
      %v1487 = vpack.c.b16 %v1442, %v1441
      %v1488 = vpack.c.b16 %v1444, %v1443
      %v1489 = vpack.c.b16 %v1446, %v1445
      %v1490 = vpack.c.b16 %v1448, %v1447
      %v1491 = vpack.c.b16 %v1450, %v1449
      %v1492 = vpack.c.b16 %v1452, %v1451
      %v1493 = vpack.c.b16 %v1454, %v1453
      %v1494 = vpack.c.b16 %v1456, %v1455
      %v1495 = vpack.c.b16 %v1458, %v1457
      %v1496 = vpack.c.b16 %v1460, %v1459
      %v1497 = vpack.c.b16 %v1462, %v1461
      %v1498 = vpack.c.b16 %v1464, %v1463
      %v1499 = vpack.c.b16 %v1466, %v1465
      %v1500 = vpack.c.b16 %v1468, %v1467
      %v1501 = vpack.c.b16 %v1470, %v1469
      %v1502 = vpack.c.b16 %v1472, %v1471
      %v1503 = vpack.c.b16 %v1474, %v1473
      %v1504 = vpack.c.b16 %v1476, %v1475
      %v1505 = vpack.c.b16 %v1478, %v1477
      %v1506 = vpack.c.b16 %v1480, %v1479
      %v1507 = vpack.c.b16 %v1482, %v1481
      %v1508 = vpack.c.b16 %v1484, %v1483
      %1533 = vmatprep.subr.bf16.mxu0 0
      %1534 = vmatpush1.bf16.msra.mxu0 %v1485
      %1535 = vmatprep.subr.bf16.mxu0 0
      %1536 = vmatpush1.bf16.msra.mxu0 %v1486
      %1537 = vmatprep.subr.bf16.mxu0 0
      %1538 = vmatpush1.bf16.msra.mxu0 %v1487
      %1539 = vmatprep.subr.bf16.mxu0 0
      %1540 = vmatpush1.bf16.msra.mxu0 %v1488
      %1541 = vmatprep.subr.bf16.mxu0 0
      %1542 = vmatpush1.bf16.msra.mxu0 %v1489
      %1543 = vmatprep.subr.bf16.mxu0 0
      %1544 = vmatpush1.bf16.msra.mxu0 %v1490
      %1545 = vmatprep.subr.bf16.mxu0 0
      %1546 = vmatpush1.bf16.msra.mxu0 %v1491
      %1547 = vmatprep.subr.bf16.mxu0 0
      %1548 = vmatpush1.bf16.msra.mxu0 %v1492
      %1549 = vmatprep.subr.bf16.mxu0 0
      %1550 = vmatpush1.bf16.msra.mxu0 %v1493
      %1551 = vmatprep.subr.bf16.mxu0 0
      %1552 = vmatpush1.bf16.msra.mxu0 %v1494
      %1553 = vmatprep.subr.bf16.mxu0 0
      %1554 = vmatpush1.bf16.msra.mxu0 %v1495
      %1555 = vmatprep.subr.bf16.mxu0 0
      %1556 = vmatpush1.bf16.msra.mxu0 %v1496
      %1557 = vmatprep.subr.bf16.mxu0 0
      %1558 = vmatpush1.bf16.msra.mxu0 %v1497
      %1559 = vmatprep.subr.bf16.mxu0 0
      %1560 = vmatpush1.bf16.msra.mxu0 %v1498
      %1561 = vmatprep.subr.bf16.mxu0 0
      %1562 = vmatpush1.bf16.msra.mxu0 %v1499
      %1563 = vmatprep.subr.bf16.mxu0 0
      %1564 = vmatpush1.bf16.msra.mxu0 %v1500
      %1565 = vmatprep.mubr.bf16.mxu0 %v731
      %1566 = vmatmul.mubr.bf16.gmra.mrb[0].mxu0 %v730
      %v1567 = vpop.f32.mrb[0].mxu0
      %v1568 = vadd.f32 %v1263, %v1567
      %v1569 = vpop.f32.mrb[0].mxu0
      %v1570 = vpop.f32.mrb[0].mxu0
      %v1571 = vadd.f32 %v1266, %v1570
      %v1572 = vpop.f32.mrb[0].mxu0
      %1573 = vmatprep.mubr.bf16.mxu0 %v734
      %1574 = vmatmul.mubr.bf16.gmra.mrb[0].mxu0 %v733
      %v1575 = vpop.f32.mrb[0].mxu0
      %v1576 = vadd.f32 %v1271, %v1575
      %v1577 = vpop.f32.mrb[0].mxu0
      %v1578 = vpop.f32.mrb[0].mxu0
      %v1579 = vadd.f32 %v1274, %v1578
      %v1580 = vpop.f32.mrb[0].mxu0
      %1581 = vmatprep.mubr.bf16.mxu0 %v737
      %1582 = vmatmul.mubr.bf16.gmra.mrb[0].mxu0 %v736
      %v1583 = vpop.f32.mrb[0].mxu0
      %v1584 = vadd.f32 %v1279, %v1583
      %v1585 = vpop.f32.mrb[0].mxu0
      %v1586 = vpop.f32.mrb[0].mxu0
      %v1587 = vadd.f32 %v1282, %v1586
      %v1588 = vpop.f32.mrb[0].mxu0
      %1589 = vmatprep.mubr.bf16.mxu0 %v740
      %1590 = vmatmul.mubr.bf16.gmra.mrb[0].mxu0 %v739
      %v1591 = vpop.f32.mrb[0].mxu0
      %v1592 = vadd.f32 %v1287, %v1591
      %v1593 = vpop.f32.mrb[0].mxu0
      %v1594 = vpop.f32.mrb[0].mxu0
      %v1595 = vadd.f32 %v1290, %v1594
      %v1596 = vpop.f32.mrb[0].mxu0
      %1597 = vmatprep.mubr.bf16.mxu0 %v743
      %1598 = vmatmul.mubr.bf16.gmra.mrb[0].mxu0 %v742
      %v1599 = vpop.f32.mrb[0].mxu0
      %v1600 = vadd.f32 %v1295, %v1599
      %v1601 = vpop.f32.mrb[0].mxu0
      %v1602 = vpop.f32.mrb[0].mxu0
      %v1603 = vadd.f32 %v1298, %v1602
      %v1604 = vpop.f32.mrb[0].mxu0
      %1605 = vmatprep.mubr.bf16.mxu0 %v746
      %1606 = vmatmul.mubr.bf16.gmra.mrb[0].mxu0 %v745
      %v1607 = vpop.f32.mrb[0].mxu0
      %v1608 = vadd.f32 %v1303, %v1607
      %v1609 = vpop.f32.mrb[0].mxu0
      %v1610 = vpop.f32.mrb[0].mxu0
      %v1611 = vadd.f32 %v1306, %v1610
      %v1612 = vpop.f32.mrb[0].mxu0
      %1613 = vmatprep.mubr.bf16.mxu0 %v749
      %1614 = vmatmul.mubr.bf16.gmra.mrb[0].mxu0 %v748
      %v1615 = vpop.f32.mrb[0].mxu0
      %v1616 = vadd.f32 %v1311, %v1615
      %v1617 = vpop.f32.mrb[0].mxu0
      %v1618 = vpop.f32.mrb[0].mxu0
      %v1619 = vadd.f32 %v1314, %v1618
      %v1620 = vpop.f32.mrb[0].mxu0
      %1621 = vmatprep.mubr.bf16.mxu0 %v752
      %1622 = vmatmul.mubr.bf16.gmra.mrb[0].mxu0 %v751
      %v1623 = vpop.f32.mrb[0].mxu0
      %v1624 = vadd.f32 %v1319, %v1623
      %v1625 = vpop.f32.mrb[0].mxu0
      %v1626 = vpop.f32.mrb[0].mxu0
      %v1627 = vadd.f32 %v1322, %v1626
      %v1628 = vpop.f32.mrb[0].mxu0
      %1629 = vmatprep.mubr.bf16.mxu0 %v755
      %1630 = vmatmul.mubr.bf16.gmra.mrb[0].mxu0 %v754
      %v1631 = vpop.f32.mrb[0].mxu0
      %v1632 = vadd.f32 %v1327, %v1631
      %v1633 = vpop.f32.mrb[0].mxu0
      %v1634 = vpop.f32.mrb[0].mxu0
      %v1635 = vadd.f32 %v1330, %v1634
      %v1636 = vpop.f32.mrb[0].mxu0
      %1637 = vmatprep.mubr.bf16.mxu0 %v758
      %1638 = vmatmul.mubr.bf16.gmra.mrb[0].mxu0 %v757
      %v1639 = vpop.f32.mrb[0].mxu0
      %v1640 = vadd.f32 %v1335, %v1639
      %v1641 = vpop.f32.mrb[0].mxu0
      %v1642 = vpop.f32.mrb[0].mxu0
      %v1643 = vadd.f32 %v1338, %v1642
      %v1644 = vpop.f32.mrb[0].mxu0
      %1645 = vmatprep.mubr.bf16.mxu0 %v761
      %1646 = vmatmul.mubr.bf16.gmra.mrb[0].mxu0 %v760
      %v1647 = vpop.f32.mrb[0].mxu0
      %v1648 = vadd.f32 %v1343, %v1647
      %v1649 = vpop.f32.mrb[0].mxu0
      %v1650 = vpop.f32.mrb[0].mxu0
      %v1651 = vadd.f32 %v1346, %v1650
      %v1652 = vpop.f32.mrb[0].mxu0
      %1653 = vmatprep.mubr.bf16.mxu0 %v764
      %1654 = vmatmul.mubr.bf16.gmra.mrb[0].mxu0 %v763
      %v1655 = vpop.f32.mrb[0].mxu0
      %v1656 = vadd.f32 %v1351, %v1655
      %v1657 = vpop.f32.mrb[0].mxu0
      %v1658 = vpop.f32.mrb[0].mxu0
      %v1659 = vadd.f32 %v1354, %v1658
      %v1660 = vpop.f32.mrb[0].mxu0
      %1661 = vmatprep.mubr.bf16.mxu0 %v767
      %1662 = vmatmul.mubr.bf16.gmra.mrb[0].mxu0 %v766
      %v1663 = vpop.f32.mrb[0].mxu0
      %v1664 = vadd.f32 %v1359, %v1663
      %v1665 = vpop.f32.mrb[0].mxu0
      %v1666 = vpop.f32.mrb[0].mxu0
      %v1667 = vadd.f32 %v1362, %v1666
      %v1668 = vpop.f32.mrb[0].mxu0
      %1669 = vmatprep.mubr.bf16.mxu0 %v770
      %1670 = vmatmul.mubr.bf16.gmra.mrb[0].mxu0 %v769
      %v1671 = vpop.f32.mrb[0].mxu0
      %v1672 = vadd.f32 %v1367, %v1671
      %v1673 = vpop.f32.mrb[0].mxu0
      %v1674 = vpop.f32.mrb[0].mxu0
      %v1675 = vadd.f32 %v1370, %v1674
      %v1676 = vpop.f32.mrb[0].mxu0
      %1677 = vmatprep.mubr.bf16.mxu0 %v773
      %1678 = vmatmul.mubr.bf16.gmra.mrb[0].mxu0 %v772
      %v1679 = vpop.f32.mrb[0].mxu0
      %v1680 = vadd.f32 %v1375, %v1679
      %v1681 = vpop.f32.mrb[0].mxu0
      %v1682 = vpop.f32.mrb[0].mxu0
      %v1683 = vadd.f32 %v1378, %v1682
      %v1684 = vpop.f32.mrb[0].mxu0
      %1685 = vmatprep.mubr.bf16.mxu0 %v776
      %1686 = vmatmul.mubr.bf16.gmra.mrb[0].mxu0 %v775
      %v1687 = vpop.f32.mrb[0].mxu0
      %v1688 = vadd.f32 %v1383, %v1687
      %v1689 = vpop.f32.mrb[0].mxu0
      %v1690 = vpop.f32.mrb[0].mxu0
      %v1691 = vadd.f32 %v1386, %v1690
      %v1692 = vpop.f32.mrb[0].mxu0
      %1693 = vdwg.mxu0
      %1694 = vmatprep.subr.bf16.mxu0 0
      %1695 = vmatpush1.bf16.msra.mxu0 %v1501
      %1696 = vmatprep.subr.bf16.mxu0 0
      %1697 = vmatpush1.bf16.msra.mxu0 %v1502
      %1698 = vmatprep.subr.bf16.mxu0 0
      %1699 = vmatpush1.bf16.msra.mxu0 %v1503
      %1700 = vmatprep.subr.bf16.mxu0 0
      %1701 = vmatpush1.bf16.msra.mxu0 %v1504
      %1702 = vmatprep.subr.bf16.mxu0 0
      %1703 = vmatpush1.bf16.msra.mxu0 %v1505
      %1704 = vmatprep.subr.bf16.mxu0 0
      %1705 = vmatpush1.bf16.msra.mxu0 %v1506
      %1706 = vmatprep.subr.bf16.mxu0 0
      %1707 = vmatpush1.bf16.msra.mxu0 %v1507
      %1708 = vmatprep.subr.bf16.mxu0 0
      %1709 = vmatpush1.bf16.msra.mxu0 %v1508
      %1710 = vmatprep.subr.bf16.mxu0 0
      %1711 = vmatpush1.bf16.msra.mxu0 0
      %1712 = vmatprep.subr.bf16.mxu0 0
      %1713 = vmatpush1.bf16.msra.mxu0 0
      %1714 = vmatprep.subr.bf16.mxu0 0
      %1715 = vmatpush1.bf16.msra.mxu0 0
      %1716 = vmatprep.subr.bf16.mxu0 0
      %1717 = vmatpush1.bf16.msra.mxu0 0
      %1718 = vmatprep.subr.bf16.mxu0 0
      %1719 = vmatpush1.bf16.msra.mxu0 0
      %1720 = vmatprep.subr.bf16.mxu0 0
      %1721 = vmatpush1.bf16.msra.mxu0 0
      %1722 = vmatprep.subr.bf16.mxu0 0
      %1723 = vmatpush1.bf16.msra.mxu0 0
      %1724 = vmatprep.subr.bf16.mxu0 0
      %1725 = vmatpush1.bf16.msra.mxu0 0
      %1726 = vmatprep.mubr.bf16.mxu0 0
      %1727 = vmatmul.mubr.bf16.gmra.mrb[0].mxu0 %v732
      %v1728 = vpop.f32.mrb[0].mxu0
      %v1729 = vadd.f32 %v1568, %v1728
      %v1730 = vpop.f32.mrb[0].mxu0
      %v1731 = vpop.f32.mrb[0].mxu0
      %v1732 = vadd.f32 %v1571, %v1731
      %v1733 = vpop.f32.mrb[0].mxu0
      %1734 = vmatprep.mubr.bf16.mxu0 0
      %1735 = vmatmul.mubr.bf16.gmra.mrb[0].mxu0 %v735
      %v1736 = vpop.f32.mrb[0].mxu0
      %v1737 = vadd.f32 %v1576, %v1736
      %v1738 = vpop.f32.mrb[0].mxu0
      %v1739 = vpop.f32.mrb[0].mxu0
      %v1740 = vadd.f32 %v1579, %v1739
      %v1741 = vpop.f32.mrb[0].mxu0
      %1742 = vmatprep.mubr.bf16.mxu0 0
      %1743 = vmatmul.mubr.bf16.gmra.mrb[0].mxu0 %v738
      %v1744 = vpop.f32.mrb[0].mxu0
      %v1745 = vadd.f32 %v1584, %v1744
      %v1746 = vpop.f32.mrb[0].mxu0
      %v1747 = vpop.f32.mrb[0].mxu0
      %v1748 = vadd.f32 %v1587, %v1747
      %v1749 = vpop.f32.mrb[0].mxu0
      %1750 = vmatprep.mubr.bf16.mxu0 0
      %1751 = vmatmul.mubr.bf16.gmra.mrb[0].mxu0 %v741
      %v1752 = vpop.f32.mrb[0].mxu0
      %v1753 = vadd.f32 %v1592, %v1752
      %v1754 = vpop.f32.mrb[0].mxu0
      %v1755 = vpop.f32.mrb[0].mxu0
      %v1756 = vadd.f32 %v1595, %v1755
      %v1757 = vpop.f32.mrb[0].mxu0
      %1758 = vmatprep.mubr.bf16.mxu0 0
      %1759 = vmatmul.mubr.bf16.gmra.mrb[0].mxu0 %v744
      %v1760 = vpop.f32.mrb[0].mxu0
      %v1761 = vadd.f32 %v1600, %v1760
      %v1762 = vpop.f32.mrb[0].mxu0
      %v1763 = vpop.f32.mrb[0].mxu0
      %v1764 = vadd.f32 %v1603, %v1763
      %v1765 = vpop.f32.mrb[0].mxu0
      %1766 = vmatprep.mubr.bf16.mxu0 0
      %1767 = vmatmul.mubr.bf16.gmra.mrb[0].mxu0 %v747
      %v1768 = vpop.f32.mrb[0].mxu0
      %v1769 = vadd.f32 %v1608, %v1768
      %v1770 = vpop.f32.mrb[0].mxu0
      %v1771 = vpop.f32.mrb[0].mxu0
      %v1772 = vadd.f32 %v1611, %v1771
      %v1773 = vpop.f32.mrb[0].mxu0
      %1774 = vmatprep.mubr.bf16.mxu0 0
      %1775 = vmatmul.mubr.bf16.gmra.mrb[0].mxu0 %v750
      %v1776 = vpop.f32.mrb[0].mxu0
      %v1777 = vadd.f32 %v1616, %v1776
      %v1778 = vpop.f32.mrb[0].mxu0
      %v1779 = vpop.f32.mrb[0].mxu0
      %v1780 = vadd.f32 %v1619, %v1779
      %v1781 = vpop.f32.mrb[0].mxu0
      %1782 = vmatprep.mubr.bf16.mxu0 0
      %1783 = vmatmul.mubr.bf16.gmra.mrb[0].mxu0 %v753
      %v1784 = vpop.f32.mrb[0].mxu0
      %v1785 = vadd.f32 %v1624, %v1784
      %v1786 = vpop.f32.mrb[0].mxu0
      %v1787 = vpop.f32.mrb[0].mxu0
      %v1788 = vadd.f32 %v1627, %v1787
      %v1789 = vpop.f32.mrb[0].mxu0
      %1790 = vmatprep.mubr.bf16.mxu0 0
      %1791 = vmatmul.mubr.bf16.gmra.mrb[0].mxu0 %v756
      %v1792 = vpop.f32.mrb[0].mxu0
      %v1793 = vadd.f32 %v1632, %v1792
      %v1794 = vpop.f32.mrb[0].mxu0
      %v1795 = vpop.f32.mrb[0].mxu0
      %v1796 = vadd.f32 %v1635, %v1795
      %v1797 = vpop.f32.mrb[0].mxu0
      %1798 = vmatprep.mubr.bf16.mxu0 0
      %1799 = vmatmul.mubr.bf16.gmra.mrb[0].mxu0 %v759
      %v1800 = vpop.f32.mrb[0].mxu0
      %v1801 = vadd.f32 %v1640, %v1800
      %v1802 = vpop.f32.mrb[0].mxu0
      %v1803 = vpop.f32.mrb[0].mxu0
      %v1804 = vadd.f32 %v1643, %v1803
      %v1805 = vpop.f32.mrb[0].mxu0
      %1806 = vmatprep.mubr.bf16.mxu0 0
      %1807 = vmatmul.mubr.bf16.gmra.mrb[0].mxu0 %v762
      %v1808 = vpop.f32.mrb[0].mxu0
      %v1809 = vadd.f32 %v1648, %v1808
      %v1810 = vpop.f32.mrb[0].mxu0
      %v1811 = vpop.f32.mrb[0].mxu0
      %v1812 = vadd.f32 %v1651, %v1811
      %v1813 = vpop.f32.mrb[0].mxu0
      %1814 = vmatprep.mubr.bf16.mxu0 0
      %1815 = vmatmul.mubr.bf16.gmra.mrb[0].mxu0 %v765
      %v1816 = vpop.f32.mrb[0].mxu0
      %v1817 = vadd.f32 %v1656, %v1816
      %v1818 = vpop.f32.mrb[0].mxu0
      %v1819 = vpop.f32.mrb[0].mxu0
      %v1820 = vadd.f32 %v1659, %v1819
      %v1821 = vpop.f32.mrb[0].mxu0
      %1822 = vmatprep.mubr.bf16.mxu0 0
      %1823 = vmatmul.mubr.bf16.gmra.mrb[0].mxu0 %v768
      %v1824 = vpop.f32.mrb[0].mxu0
      %v1825 = vadd.f32 %v1664, %v1824
      %v1826 = vpop.f32.mrb[0].mxu0
      %v1827 = vpop.f32.mrb[0].mxu0
      %v1828 = vadd.f32 %v1667, %v1827
      %v1829 = vpop.f32.mrb[0].mxu0
      %1830 = vmatprep.mubr.bf16.mxu0 0
      %1831 = vmatmul.mubr.bf16.gmra.mrb[0].mxu0 %v771
      %v1832 = vpop.f32.mrb[0].mxu0
      %v1833 = vadd.f32 %v1672, %v1832
      %v1834 = vpop.f32.mrb[0].mxu0
      %v1835 = vpop.f32.mrb[0].mxu0
      %v1836 = vadd.f32 %v1675, %v1835
      %v1837 = vpop.f32.mrb[0].mxu0
      %1838 = vmatprep.mubr.bf16.mxu0 0
      %1839 = vmatmul.mubr.bf16.gmra.mrb[0].mxu0 %v774
      %v1840 = vpop.f32.mrb[0].mxu0
      %v1841 = vadd.f32 %v1680, %v1840
      %v1842 = vpop.f32.mrb[0].mxu0
      %v1843 = vpop.f32.mrb[0].mxu0
      %v1844 = vadd.f32 %v1683, %v1843
      %v1845 = vpop.f32.mrb[0].mxu0
      %1846 = vmatprep.mubr.bf16.mxu0 0
      %1847 = vmatmul.mubr.bf16.gmra.mrb[0].mxu0 %v777
      %v1848 = vpop.f32.mrb[0].mxu0
      %v1849 = vadd.f32 %v1688, %v1848
      %v1850 = vpop.f32.mrb[0].mxu0
      %v1851 = vpop.f32.mrb[0].mxu0
      %v1852 = vadd.f32 %v1691, %v1851
      %v1853 = vpop.f32.mrb[0].mxu0
      %1854 = vdwg.mxu0
      %s1855 = scalar_lea.vmem [#allocation2], 48
      %v1856 = vld [vmem:[%s1855] sm:$0xff]
      %v1857 = vld [vmem:[%s1855 + $0x8] sm:$0xff]
      %v1858 = vld [vmem:[%s1855 + $0x10] sm:$0xff]
      %v1859 = vld [vmem:[%s1855 + $0x18] sm:$0xff]
      %v1860 = vld [vmem:[%s1855 + $0x20] sm:$0xff]
      %v1861 = vld [vmem:[%s1855 + $0x28] sm:$0xff]
      %v1862 = vld [vmem:[%s1855 + $0x30] sm:$0xff]
      %v1863 = vld [vmem:[%s1855 + $0x38] sm:$0xff]
      %v1864 = vld [vmem:[%s1855 + $0x40] sm:$0xff]
      %v1865 = vld [vmem:[%s1855 + $0x48] sm:$0xff]
      %v1866 = vld [vmem:[%s1855 + $0x50] sm:$0xff]
      %v1867 = vld [vmem:[%s1855 + $0x58] sm:$0xff]
      %v1868 = vld [vmem:[%s1855 + $0x60] sm:$0xff]
      %v1869 = vld [vmem:[%s1855 + $0x68] sm:$0xff]
      %v1870 = vld [vmem:[%s1855 + $0x70] sm:$0xff]
      %v1871 = vld [vmem:[%s1855 + $0x78] sm:$0xff]
      %v1872 = vld [vmem:[%s1855 + $0x80] sm:$0xff]
      %v1873 = vld [vmem:[%s1855 + $0x88] sm:$0xff]
      %v1874 = vld [vmem:[%s1855 + $0x90] sm:$0xff]
      %v1875 = vld [vmem:[%s1855 + $0x98] sm:$0xff]
      %v1876 = vld [vmem:[%s1855 + $0xa0] sm:$0xff]
      %v1877 = vld [vmem:[%s1855 + $0xa8] sm:$0xff]
      %v1878 = vld [vmem:[%s1855 + $0xb0] sm:$0xff]
      %v1879 = vld [vmem:[%s1855 + $0xb8] sm:$0xff]
      %v1880 = vld [vmem:[%s1855 + $0xc0] sm:$0xff]
      %v1881 = vld [vmem:[%s1855 + $0xc8] sm:$0xff]
      %v1882 = vld [vmem:[%s1855 + $0xd0] sm:$0xff]
      %v1883 = vld [vmem:[%s1855 + $0xd8] sm:$0xff]
      %v1884 = vld [vmem:[%s1855 + $0xe0] sm:$0xff]
      %v1885 = vld [vmem:[%s1855 + $0xe8] sm:$0xff]
      %v1886 = vld [vmem:[%s1855 + $0xf0] sm:$0xff]
      %v1887 = vld [vmem:[%s1855 + $0xf8] sm:$0xff]
      %v1888 = vld [vmem:[%s1855 + $0x100] sm:$0xff]
      %v1889 = vld [vmem:[%s1855 + $0x108] sm:$0xff]
      %v1890 = vld [vmem:[%s1855 + $0x110] sm:$0xff]
      %v1891 = vld [vmem:[%s1855 + $0x118] sm:$0xff]
      %v1892 = vld [vmem:[%s1855 + $0x120] sm:$0xff]
      %v1893 = vld [vmem:[%s1855 + $0x128] sm:$0xff]
      %v1894 = vld [vmem:[%s1855 + $0x130] sm:$0xff]
      %v1895 = vld [vmem:[%s1855 + $0x138] sm:$0xff]
      %v1896 = vld [vmem:[%s1855 + $0x140] sm:$0xff]
      %v1897 = vld [vmem:[%s1855 + $0x148] sm:$0xff]
      %v1898 = vld [vmem:[%s1855 + $0x150] sm:$0xff]
      %v1899 = vld [vmem:[%s1855 + $0x158] sm:$0xff]
      %v1900 = vld [vmem:[%s1855 + $0x160] sm:$0xff]
      %v1901 = vld [vmem:[%s1855 + $0x168] sm:$0xff]
      %v1902 = vld [vmem:[%s1855 + $0x170] sm:$0xff]
      %v1903 = vld [vmem:[%s1855 + $0x178] sm:$0xff]
      %s1904 = scalar_lea.vmem %s1, 384
      %v1905 = vld [vmem:[%s1904] sm:$0xf]
      %v1906 = vld [vmem:[%s1904 + $0x4] sm:$0xf]
      %v1907 = vld [vmem:[%s1904 + $0x8] sm:$0xf]
      %v1908 = vld [vmem:[%s1904 + $0xc] sm:$0xf]
      %v1909 = vld [vmem:[%s1904 + $0x10] sm:$0xf]
      %v1910 = vld [vmem:[%s1904 + $0x14] sm:$0xf]
      %v1911 = vld [vmem:[%s1904 + $0x18] sm:$0xf]
      %v1912 = vld [vmem:[%s1904 + $0x1c] sm:$0xf]
      %v1913 = vld [vmem:[%s1904 + $0x20] sm:$0xf]
      %v1914 = vld [vmem:[%s1904 + $0x24] sm:$0xf]
      %v1915 = vld [vmem:[%s1904 + $0x28] sm:$0xf]
      %v1916 = vld [vmem:[%s1904 + $0x2c] sm:$0xf]
      %v1917 = vld [vmem:[%s1904 + $0x30] sm:$0xf]
      %v1918 = vld [vmem:[%s1904 + $0x34] sm:$0xf]
      %v1919 = vld [vmem:[%s1904 + $0x38] sm:$0xf]
      %v1920 = vld [vmem:[%s1904 + $0x3c] sm:$0xf]
      %v1921 = vld [vmem:[%s1904 + $0x40] sm:$0xf]
      %v1922 = vld [vmem:[%s1904 + $0x44] sm:$0xf]
      %v1923 = vld [vmem:[%s1904 + $0x48] sm:$0xf]
      %v1924 = vld [vmem:[%s1904 + $0x4c] sm:$0xf]
      %v1925 = vld [vmem:[%s1904 + $0x50] sm:$0xf]
      %v1926 = vld [vmem:[%s1904 + $0x54] sm:$0xf]
      %v1927 = vld [vmem:[%s1904 + $0x58] sm:$0xf]
      %v1928 = vld [vmem:[%s1904 + $0x5c] sm:$0xf]
      %v1929 = vld [vmem:[%s1904 + $0x60] sm:$0xf]
      %v1930 = vld [vmem:[%s1904 + $0x64] sm:$0xf]
      %v1931 = vld [vmem:[%s1904 + $0x68] sm:$0xf]
      %v1932 = vld [vmem:[%s1904 + $0x6c] sm:$0xf]
      %v1933 = vld [vmem:[%s1904 + $0x70] sm:$0xf]
      %v1934 = vld [vmem:[%s1904 + $0x74] sm:$0xf]
      %v1935 = vld [vmem:[%s1904 + $0x78] sm:$0xf]
      %v1936 = vld [vmem:[%s1904 + $0x7c] sm:$0xf]
      %v1937 = vld [vmem:[%s1904 + $0x80] sm:$0xf]
      %v1938 = vld [vmem:[%s1904 + $0x84] sm:$0xf]
      %v1939 = vld [vmem:[%s1904 + $0x88] sm:$0xf]
      %v1940 = vld [vmem:[%s1904 + $0x8c] sm:$0xf]
      %v1941 = vld [vmem:[%s1904 + $0x90] sm:$0xf]
      %v1942 = vld [vmem:[%s1904 + $0x94] sm:$0xf]
      %v1943 = vld [vmem:[%s1904 + $0x98] sm:$0xf]
      %v1944 = vld [vmem:[%s1904 + $0x9c] sm:$0xf]
      %v1945 = vld [vmem:[%s1904 + $0xa0] sm:$0xf]
      %v1946 = vld [vmem:[%s1904 + $0xa4] sm:$0xf]
      %v1947 = vld [vmem:[%s1904 + $0xa8] sm:$0xf]
      %v1948 = vld [vmem:[%s1904 + $0xac] sm:$0xf]
      %v1949 = vld [vmem:[%s1904 + $0xb0] sm:$0xf]
      %v1950 = vld [vmem:[%s1904 + $0xb4] sm:$0xf]
      %v1951 = vld [vmem:[%s1904 + $0xb8] sm:$0xf]
      %v1952 = vld [vmem:[%s1904 + $0xbc] sm:$0xf]
      %v2001 = vunpack.c.l.b16 %v1905
      %v2002 = vunpack.c.l.b16 %v1906
      %v2003 = vunpack.c.l.b16 %v1907
      %v2004 = vunpack.c.l.b16 %v1908
      %v2005 = vunpack.c.l.b16 %v1909
      %v2006 = vunpack.c.l.b16 %v1910
      %v2007 = vunpack.c.l.b16 %v1911
      %v2008 = vunpack.c.l.b16 %v1912
      %v2009 = vunpack.c.l.b16 %v1913
      %v2010 = vunpack.c.l.b16 %v1914
      %v2011 = vunpack.c.l.b16 %v1915
      %v2012 = vunpack.c.l.b16 %v1916
      %v2013 = vunpack.c.l.b16 %v1917
      %v2014 = vunpack.c.l.b16 %v1918
      %v2015 = vunpack.c.l.b16 %v1919
      %v2016 = vunpack.c.l.b16 %v1920
      %v2017 = vunpack.c.l.b16 %v1921
      %v2018 = vunpack.c.l.b16 %v1922
      %v2019 = vunpack.c.l.b16 %v1923
      %v2020 = vunpack.c.l.b16 %v1924
      %v2021 = vunpack.c.l.b16 %v1925
      %v2022 = vunpack.c.l.b16 %v1926
      %v2023 = vunpack.c.l.b16 %v1927
      %v2024 = vunpack.c.l.b16 %v1928
      %v2025 = vunpack.c.l.b16 %v1929
      %v2026 = vunpack.c.l.b16 %v1930
      %v2027 = vunpack.c.l.b16 %v1931
      %v2028 = vunpack.c.l.b16 %v1932
      %v2029 = vunpack.c.l.b16 %v1933
      %v2030 = vunpack.c.l.b16 %v1934
      %v2031 = vunpack.c.l.b16 %v1935
      %v2032 = vunpack.c.l.b16 %v1936
      %v2033 = vunpack.c.l.b16 %v1937
      %v2034 = vunpack.c.l.b16 %v1938
      %v2035 = vunpack.c.l.b16 %v1939
      %v2036 = vunpack.c.l.b16 %v1940
      %v2037 = vunpack.c.l.b16 %v1941
      %v2038 = vunpack.c.l.b16 %v1942
      %v2039 = vunpack.c.l.b16 %v1943
      %v2040 = vunpack.c.l.b16 %v1944
      %v2041 = vunpack.c.l.b16 %v1945
      %v2042 = vunpack.c.l.b16 %v1946
      %v2043 = vunpack.c.l.b16 %v1947
      %v2044 = vunpack.c.l.b16 %v1948
      %v2045 = vunpack.c.l.b16 %v1949
      %v2046 = vunpack.c.l.b16 %v1950
      %v2047 = vunpack.c.l.b16 %v1951
      %v2048 = vunpack.c.l.b16 %v1952
      %v2049 = vpack.c.b16 %v2002, %v2001
      %v2050 = vpack.c.b16 %v2004, %v2003
      %v2051 = vpack.c.b16 %v2006, %v2005
      %v2052 = vpack.c.b16 %v2008, %v2007
      %v2053 = vpack.c.b16 %v2010, %v2009
      %v2054 = vpack.c.b16 %v2012, %v2011
      %v2055 = vpack.c.b16 %v2014, %v2013
      %v2056 = vpack.c.b16 %v2016, %v2015
      %v2057 = vpack.c.b16 %v2018, %v2017
      %v2058 = vpack.c.b16 %v2020, %v2019
      %v2059 = vpack.c.b16 %v2022, %v2021
      %v2060 = vpack.c.b16 %v2024, %v2023
      %v2061 = vpack.c.b16 %v2026, %v2025
      %v2062 = vpack.c.b16 %v2028, %v2027
      %v2063 = vpack.c.b16 %v2030, %v2029
      %v2064 = vpack.c.b16 %v2032, %v2031
      %v2065 = vpack.c.b16 %v2034, %v2033
      %v2066 = vpack.c.b16 %v2036, %v2035
      %v2067 = vpack.c.b16 %v2038, %v2037
      %v2068 = vpack.c.b16 %v2040, %v2039
      %v2069 = vpack.c.b16 %v2042, %v2041
      %v2070 = vpack.c.b16 %v2044, %v2043
      %v2071 = vpack.c.b16 %v2046, %v2045
      %v2072 = vpack.c.b16 %v2048, %v2047
      %2097 = vmatprep.subr.bf16.mxu0 0
      %2098 = vmatpush1.bf16.msra.mxu0 %v2049
      %2099 = vmatprep.subr.bf16.mxu0 0
      %2100 = vmatpush1.bf16.msra.mxu0 %v2050
      %2101 = vmatprep.subr.bf16.mxu0 0
      %2102 = vmatpush1.bf16.msra.mxu0 %v2051
      %2103 = vmatprep.subr.bf16.mxu0 0
      %2104 = vmatpush1.bf16.msra.mxu0 %v2052
      %2105 = vmatprep.subr.bf16.mxu0 0
      %2106 = vmatpush1.bf16.msra.mxu0 %v2053
      %2107 = vmatprep.subr.bf16.mxu0 0
      %2108 = vmatpush1.bf16.msra.mxu0 %v2054
      %2109 = vmatprep.subr.bf16.mxu0 0
      %2110 = vmatpush1.bf16.msra.mxu0 %v2055
      %2111 = vmatprep.subr.bf16.mxu0 0
      %2112 = vmatpush1.bf16.msra.mxu0 %v2056
      %2113 = vmatprep.subr.bf16.mxu0 0
      %2114 = vmatpush1.bf16.msra.mxu0 %v2057
      %2115 = vmatprep.subr.bf16.mxu0 0
      %2116 = vmatpush1.bf16.msra.mxu0 %v2058
      %2117 = vmatprep.subr.bf16.mxu0 0
      %2118 = vmatpush1.bf16.msra.mxu0 %v2059
      %2119 = vmatprep.subr.bf16.mxu0 0
      %2120 = vmatpush1.bf16.msra.mxu0 %v2060
      %2121 = vmatprep.subr.bf16.mxu0 0
      %2122 = vmatpush1.bf16.msra.mxu0 %v2061
      %2123 = vmatprep.subr.bf16.mxu0 0
      %2124 = vmatpush1.bf16.msra.mxu0 %v2062
      %2125 = vmatprep.subr.bf16.mxu0 0
      %2126 = vmatpush1.bf16.msra.mxu0 %v2063
      %2127 = vmatprep.subr.bf16.mxu0 0
      %2128 = vmatpush1.bf16.msra.mxu0 %v2064
      %2129 = vmatprep.mubr.bf16.mxu0 %v1857
      %2130 = vmatmul.mubr.bf16.gmra.mrb[0].mxu0 %v1856
      %v2131 = vpop.f32.mrb[0].mxu0
      %v2132 = vadd.f32 0.0, %v2131
      %v2133 = vpop.f32.mrb[0].mxu0
      %v2134 = vpop.f32.mrb[0].mxu0
      %v2135 = vadd.f32 0.0, %v2134
      %v2136 = vpop.f32.mrb[0].mxu0
      %2137 = vmatprep.mubr.bf16.mxu0 %v1860
      %2138 = vmatmul.mubr.bf16.gmra.mrb[0].mxu0 %v1859
      %v2139 = vpop.f32.mrb[0].mxu0
      %v2140 = vadd.f32 0.0, %v2139
      %v2141 = vpop.f32.mrb[0].mxu0
      %v2142 = vpop.f32.mrb[0].mxu0
      %v2143 = vadd.f32 0.0, %v2142
      %v2144 = vpop.f32.mrb[0].mxu0
      %2145 = vmatprep.mubr.bf16.mxu0 %v1863
      %2146 = vmatmul.mubr.bf16.gmra.mrb[0].mxu0 %v1862
      %v2147 = vpop.f32.mrb[0].mxu0
      %v2148 = vadd.f32 0.0, %v2147
      %v2149 = vpop.f32.mrb[0].mxu0
      %v2150 = vpop.f32.mrb[0].mxu0
      %v2151 = vadd.f32 0.0, %v2150
      %v2152 = vpop.f32.mrb[0].mxu0
      %2153 = vmatprep.mubr.bf16.mxu0 %v1866
      %2154 = vmatmul.mubr.bf16.gmra.mrb[0].mxu0 %v1865
      %v2155 = vpop.f32.mrb[0].mxu0
      %v2156 = vadd.f32 0.0, %v2155
      %v2157 = vpop.f32.mrb[0].mxu0
      %v2158 = vpop.f32.mrb[0].mxu0
      %v2159 = vadd.f32 0.0, %v2158
      %v2160 = vpop.f32.mrb[0].mxu0
      %2161 = vmatprep.mubr.bf16.mxu0 %v1869
      %2162 = vmatmul.mubr.bf16.gmra.mrb[0].mxu0 %v1868
      %v2163 = vpop.f32.mrb[0].mxu0
      %v2164 = vadd.f32 0.0, %v2163
      %v2165 = vpop.f32.mrb[0].mxu0
      %v2166 = vpop.f32.mrb[0].mxu0
      %v2167 = vadd.f32 0.0, %v2166
      %v2168 = vpop.f32.mrb[0].mxu0
      %2169 = vmatprep.mubr.bf16.mxu0 %v1872
      %2170 = vmatmul.mubr.bf16.gmra.mrb[0].mxu0 %v1871
      %v2171 = vpop.f32.mrb[0].mxu0
      %v2172 = vadd.f32 0.0, %v2171
      %v2173 = vpop.f32.mrb[0].mxu0
      %v2174 = vpop.f32.mrb[0].mxu0
      %v2175 = vadd.f32 0.0, %v2174
      %v2176 = vpop.f32.mrb[0].mxu0
      %2177 = vmatprep.mubr.bf16.mxu0 %v1875
      %2178 = vmatmul.mubr.bf16.gmra.mrb[0].mxu0 %v1874
      %v2179 = vpop.f32.mrb[0].mxu0
      %v2180 = vadd.f32 0.0, %v2179
      %v2181 = vpop.f32.mrb[0].mxu0
      %v2182 = vpop.f32.mrb[0].mxu0
      %v2183 = vadd.f32 0.0, %v2182
      %v2184 = vpop.f32.mrb[0].mxu0
      %2185 = vmatprep.mubr.bf16.mxu0 %v1878
      %2186 = vmatmul.mubr.bf16.gmra.mrb[0].mxu0 %v1877
      %v2187 = vpop.f32.mrb[0].mxu0
      %v2188 = vadd.f32 0.0, %v2187
      %v2189 = vpop.f32.mrb[0].mxu0
      %v2190 = vpop.f32.mrb[0].mxu0
      %v2191 = vadd.f32 0.0, %v2190
      %v2192 = vpop.f32.mrb[0].mxu0
      %2193 = vmatprep.mubr.bf16.mxu0 %v1881
      %2194 = vmatmul.mubr.bf16.gmra.mrb[0].mxu0 %v1880
      %v2195 = vpop.f32.mrb[0].mxu0
      %v2196 = vadd.f32 0.0, %v2195
      %v2197 = vpop.f32.mrb[0].mxu0
      %v2198 = vpop.f32.mrb[0].mxu0
      %v2199 = vadd.f32 0.0, %v2198
      %v2200 = vpop.f32.mrb[0].mxu0
      %2201 = vmatprep.mubr.bf16.mxu0 %v1884
      %2202 = vmatmul.mubr.bf16.gmra.mrb[0].mxu0 %v1883
      %v2203 = vpop.f32.mrb[0].mxu0
      %v2204 = vadd.f32 0.0, %v2203
      %v2205 = vpop.f32.mrb[0].mxu0
      %v2206 = vpop.f32.mrb[0].mxu0
      %v2207 = vadd.f32 0.0, %v2206
      %v2208 = vpop.f32.mrb[0].mxu0
      %2209 = vmatprep.mubr.bf16.mxu0 %v1887
      %2210 = vmatmul.mubr.bf16.gmra.mrb[0].mxu0 %v1886
      %v2211 = vpop.f32.mrb[0].mxu0
      %v2212 = vadd.f32 0.0, %v2211
      %v2213 = vpop.f32.mrb[0].mxu0
      %v2214 = vpop.f32.mrb[0].mxu0
      %v2215 = vadd.f32 0.0, %v2214
      %v2216 = vpop.f32.mrb[0].mxu0
      %2217 = vmatprep.mubr.bf16.mxu0 %v1890
      %2218 = vmatmul.mubr.bf16.gmra.mrb[0].mxu0 %v1889
      %v2219 = vpop.f32.mrb[0].mxu0
      %v2220 = vadd.f32 0.0, %v2219
      %v2221 = vpop.f32.mrb[0].mxu0
      %v2222 = vpop.f32.mrb[0].mxu0
      %v2223 = vadd.f32 0.0, %v2222
      %v2224 = vpop.f32.mrb[0].mxu0
      %2225 = vmatprep.mubr.bf16.mxu0 %v1893
      %2226 = vmatmul.mubr.bf16.gmra.mrb[0].mxu0 %v1892
      %v2227 = vpop.f32.mrb[0].mxu0
      %v2228 = vadd.f32 0.0, %v2227
      %v2229 = vpop.f32.mrb[0].mxu0
      %v2230 = vpop.f32.mrb[0].mxu0
      %v2231 = vadd.f32 0.0, %v2230
      %v2232 = vpop.f32.mrb[0].mxu0
      %2233 = vmatprep.mubr.bf16.mxu0 %v1896
      %2234 = vmatmul.mubr.bf16.gmra.mrb[0].mxu0 %v1895
      %v2235 = vpop.f32.mrb[0].mxu0
      %v2236 = vadd.f32 0.0, %v2235
      %v2237 = vpop.f32.mrb[0].mxu0
      %v2238 = vpop.f32.mrb[0].mxu0
      %v2239 = vadd.f32 0.0, %v2238
      %v2240 = vpop.f32.mrb[0].mxu0
      %2241 = vmatprep.mubr.bf16.mxu0 %v1899
      %2242 = vmatmul.mubr.bf16.gmra.mrb[0].mxu0 %v1898
      %v2243 = vpop.f32.mrb[0].mxu0
      %v2244 = vadd.f32 0.0, %v2243
      %v2245 = vpop.f32.mrb[0].mxu0
      %v2246 = vpop.f32.mrb[0].mxu0
      %v2247 = vadd.f32 0.0, %v2246
      %v2248 = vpop.f32.mrb[0].mxu0
      %2249 = vmatprep.mubr.bf16.mxu0 %v1902
      %2250 = vmatmul.mubr.bf16.gmra.mrb[0].mxu0 %v1901
      %v2251 = vpop.f32.mrb[0].mxu0
      %v2252 = vadd.f32 0.0, %v2251
      %v2253 = vpop.f32.mrb[0].mxu0
      %v2254 = vpop.f32.mrb[0].mxu0
      %v2255 = vadd.f32 0.0, %v2254
      %v2256 = vpop.f32.mrb[0].mxu0
      %2257 = vdwg.mxu0
      %2258 = vmatprep.subr.bf16.mxu0 0
      %2259 = vmatpush1.bf16.msra.mxu0 %v2065
      %2260 = vmatprep.subr.bf16.mxu0 0
      %2261 = vmatpush1.bf16.msra.mxu0 %v2066
      %2262 = vmatprep.subr.bf16.mxu0 0
      %2263 = vmatpush1.bf16.msra.mxu0 %v2067
      %2264 = vmatprep.subr.bf16.mxu0 0
      %2265 = vmatpush1.bf16.msra.mxu0 %v2068
      %2266 = vmatprep.subr.bf16.mxu0 0
      %2267 = vmatpush1.bf16.msra.mxu0 %v2069
      %2268 = vmatprep.subr.bf16.mxu0 0
      %2269 = vmatpush1.bf16.msra.mxu0 %v2070
      %2270 = vmatprep.subr.bf16.mxu0 0
      %2271 = vmatpush1.bf16.msra.mxu0 %v2071
      %2272 = vmatprep.subr.bf16.mxu0 0
      %2273 = vmatpush1.bf16.msra.mxu0 %v2072
      %2274 = vmatprep.subr.bf16.mxu0 0
      %2275 = vmatpush1.bf16.msra.mxu0 0
      %2276 = vmatprep.subr.bf16.mxu0 0
      %2277 = vmatpush1.bf16.msra.mxu0 0
      %2278 = vmatprep.subr.bf16.mxu0 0
      %2279 = vmatpush1.bf16.msra.mxu0 0
      %2280 = vmatprep.subr.bf16.mxu0 0
      %2281 = vmatpush1.bf16.msra.mxu0 0
      %2282 = vmatprep.subr.bf16.mxu0 0
      %2283 = vmatpush1.bf16.msra.mxu0 0
      %2284 = vmatprep.subr.bf16.mxu0 0
      %2285 = vmatpush1.bf16.msra.mxu0 0
      %2286 = vmatprep.subr.bf16.mxu0 0
      %2287 = vmatpush1.bf16.msra.mxu0 0
      %2288 = vmatprep.subr.bf16.mxu0 0
      %2289 = vmatpush1.bf16.msra.mxu0 0
      %2290 = vmatprep.mubr.bf16.mxu0 0
      %2291 = vmatmul.mubr.bf16.gmra.mrb[0].mxu0 %v1858
      %v2292 = vpop.f32.mrb[0].mxu0
      %v2293 = vadd.f32 %v2132, %v2292
      %v2294 = vpop.f32.mrb[0].mxu0
      %v2295 = vpop.f32.mrb[0].mxu0
      %v2296 = vadd.f32 %v2135, %v2295
      %v2297 = vpop.f32.mrb[0].mxu0
      %2298 = vmatprep.mubr.bf16.mxu0 0
      %2299 = vmatmul.mubr.bf16.gmra.mrb[0].mxu0 %v1861
      %v2300 = vpop.f32.mrb[0].mxu0
      %v2301 = vadd.f32 %v2140, %v2300
      %v2302 = vpop.f32.mrb[0].mxu0
      %v2303 = vpop.f32.mrb[0].mxu0
      %v2304 = vadd.f32 %v2143, %v2303
      %v2305 = vpop.f32.mrb[0].mxu0
      %2306 = vmatprep.mubr.bf16.mxu0 0
      %2307 = vmatmul.mubr.bf16.gmra.mrb[0].mxu0 %v1864
      %v2308 = vpop.f32.mrb[0].mxu0
      %v2309 = vadd.f32 %v2148, %v2308
      %v2310 = vpop.f32.mrb[0].mxu0
      %v2311 = vpop.f32.mrb[0].mxu0
      %v2312 = vadd.f32 %v2151, %v2311
      %v2313 = vpop.f32.mrb[0].mxu0
      %2314 = vmatprep.mubr.bf16.mxu0 0
      %2315 = vmatmul.mubr.bf16.gmra.mrb[0].mxu0 %v1867
      %v2316 = vpop.f32.mrb[0].mxu0
      %v2317 = vadd.f32 %v2156, %v2316
      %v2318 = vpop.f32.mrb[0].mxu0
      %v2319 = vpop.f32.mrb[0].mxu0
      %v2320 = vadd.f32 %v2159, %v2319
      %v2321 = vpop.f32.mrb[0].mxu0
      %2322 = vmatprep.mubr.bf16.mxu0 0
      %2323 = vmatmul.mubr.bf16.gmra.mrb[0].mxu0 %v1870
      %v2324 = vpop.f32.mrb[0].mxu0
      %v2325 = vadd.f32 %v2164, %v2324
      %v2326 = vpop.f32.mrb[0].mxu0
      %v2327 = vpop.f32.mrb[0].mxu0
      %v2328 = vadd.f32 %v2167, %v2327
      %v2329 = vpop.f32.mrb[0].mxu0
      %2330 = vmatprep.mubr.bf16.mxu0 0
      %2331 = vmatmul.mubr.bf16.gmra.mrb[0].mxu0 %v1873
      %v2332 = vpop.f32.mrb[0].mxu0
      %v2333 = vadd.f32 %v2172, %v2332
      %v2334 = vpop.f32.mrb[0].mxu0
      %v2335 = vpop.f32.mrb[0].mxu0
      %v2336 = vadd.f32 %v2175, %v2335
      %v2337 = vpop.f32.mrb[0].mxu0
      %2338 = vmatprep.mubr.bf16.mxu0 0
      %2339 = vmatmul.mubr.bf16.gmra.mrb[0].mxu0 %v1876
      %v2340 = vpop.f32.mrb[0].mxu0
      %v2341 = vadd.f32 %v2180, %v2340
      %v2342 = vpop.f32.mrb[0].mxu0
      %v2343 = vpop.f32.mrb[0].mxu0
      %v2344 = vadd.f32 %v2183, %v2343
      %v2345 = vpop.f32.mrb[0].mxu0
      %2346 = vmatprep.mubr.bf16.mxu0 0
      %2347 = vmatmul.mubr.bf16.gmra.mrb[0].mxu0 %v1879
      %v2348 = vpop.f32.mrb[0].mxu0
      %v2349 = vadd.f32 %v2188, %v2348
      %v2350 = vpop.f32.mrb[0].mxu0
      %v2351 = vpop.f32.mrb[0].mxu0
      %v2352 = vadd.f32 %v2191, %v2351
      %v2353 = vpop.f32.mrb[0].mxu0
      %2354 = vmatprep.mubr.bf16.mxu0 0
      %2355 = vmatmul.mubr.bf16.gmra.mrb[0].mxu0 %v1882
      %v2356 = vpop.f32.mrb[0].mxu0
      %v2357 = vadd.f32 %v2196, %v2356
      %v2358 = vpop.f32.mrb[0].mxu0
      %v2359 = vpop.f32.mrb[0].mxu0
      %v2360 = vadd.f32 %v2199, %v2359
      %v2361 = vpop.f32.mrb[0].mxu0
      %2362 = vmatprep.mubr.bf16.mxu0 0
      %2363 = vmatmul.mubr.bf16.gmra.mrb[0].mxu0 %v1885
      %v2364 = vpop.f32.mrb[0].mxu0
      %v2365 = vadd.f32 %v2204, %v2364
      %v2366 = vpop.f32.mrb[0].mxu0
      %v2367 = vpop.f32.mrb[0].mxu0
      %v2368 = vadd.f32 %v2207, %v2367
      %v2369 = vpop.f32.mrb[0].mxu0
      %2370 = vmatprep.mubr.bf16.mxu0 0
      %2371 = vmatmul.mubr.bf16.gmra.mrb[0].mxu0 %v1888
      %v2372 = vpop.f32.mrb[0].mxu0
      %v2373 = vadd.f32 %v2212, %v2372
      %v2374 = vpop.f32.mrb[0].mxu0
      %v2375 = vpop.f32.mrb[0].mxu0
      %v2376 = vadd.f32 %v2215, %v2375
      %v2377 = vpop.f32.mrb[0].mxu0
      %2378 = vmatprep.mubr.bf16.mxu0 0
      %2379 = vmatmul.mubr.bf16.gmra.mrb[0].mxu0 %v1891
      %v2380 = vpop.f32.mrb[0].mxu0
      %v2381 = vadd.f32 %v2220, %v2380
      %v2382 = vpop.f32.mrb[0].mxu0
      %v2383 = vpop.f32.mrb[0].mxu0
      %v2384 = vadd.f32 %v2223, %v2383
      %v2385 = vpop.f32.mrb[0].mxu0
      %2386 = vmatprep.mubr.bf16.mxu0 0
      %2387 = vmatmul.mubr.bf16.gmra.mrb[0].mxu0 %v1894
      %v2388 = vpop.f32.mrb[0].mxu0
      %v2389 = vadd.f32 %v2228, %v2388
      %v2390 = vpop.f32.mrb[0].mxu0
      %v2391 = vpop.f32.mrb[0].mxu0
      %v2392 = vadd.f32 %v2231, %v2391
      %v2393 = vpop.f32.mrb[0].mxu0
      %2394 = vmatprep.mubr.bf16.mxu0 0
      %2395 = vmatmul.mubr.bf16.gmra.mrb[0].mxu0 %v1897
      %v2396 = vpop.f32.mrb[0].mxu0
      %v2397 = vadd.f32 %v2236, %v2396
      %v2398 = vpop.f32.mrb[0].mxu0
      %v2399 = vpop.f32.mrb[0].mxu0
      %v2400 = vadd.f32 %v2239, %v2399
      %v2401 = vpop.f32.mrb[0].mxu0
      %2402 = vmatprep.mubr.bf16.mxu0 0
      %2403 = vmatmul.mubr.bf16.gmra.mrb[0].mxu0 %v1900
      %v2404 = vpop.f32.mrb[0].mxu0
      %v2405 = vadd.f32 %v2244, %v2404
      %v2406 = vpop.f32.mrb[0].mxu0
      %v2407 = vpop.f32.mrb[0].mxu0
      %v2408 = vadd.f32 %v2247, %v2407
      %v2409 = vpop.f32.mrb[0].mxu0
      %2410 = vmatprep.mubr.bf16.mxu0 0
      %2411 = vmatmul.mubr.bf16.gmra.mrb[0].mxu0 %v1903
      %v2412 = vpop.f32.mrb[0].mxu0
      %v2413 = vadd.f32 %v2252, %v2412
      %v2414 = vpop.f32.mrb[0].mxu0
      %v2415 = vpop.f32.mrb[0].mxu0
      %v2416 = vadd.f32 %v2255, %v2415
      %v2417 = vpop.f32.mrb[0].mxu0
      %2418 = vdwg.mxu0
      %v2419 = vadd.f32 %v1729, %v2293
      %v2420 = vadd.f32 %v1732, %v2296
      %v2421 = vadd.f32 %v1737, %v2301
      %v2422 = vadd.f32 %v1740, %v2304
      %v2423 = vadd.f32 %v1745, %v2309
      %v2424 = vadd.f32 %v1748, %v2312
      %v2425 = vadd.f32 %v1753, %v2317
      %v2426 = vadd.f32 %v1756, %v2320
      %v2427 = vadd.f32 %v1761, %v2325
      %v2428 = vadd.f32 %v1764, %v2328
      %v2429 = vadd.f32 %v1769, %v2333
      %v2430 = vadd.f32 %v1772, %v2336
      %v2431 = vadd.f32 %v1777, %v2341
      %v2432 = vadd.f32 %v1780, %v2344
      %v2433 = vadd.f32 %v1785, %v2349
      %v2434 = vadd.f32 %v1788, %v2352
      %v2435 = vadd.f32 %v1793, %v2357
      %v2436 = vadd.f32 %v1796, %v2360
      %v2437 = vadd.f32 %v1801, %v2365
      %v2438 = vadd.f32 %v1804, %v2368
      %v2439 = vadd.f32 %v1809, %v2373
      %v2440 = vadd.f32 %v1812, %v2376
      %v2441 = vadd.f32 %v1817, %v2381
      %v2442 = vadd.f32 %v1820, %v2384
      %v2443 = vadd.f32 %v1825, %v2389
      %v2444 = vadd.f32 %v1828, %v2392
      %v2445 = vadd.f32 %v1833, %v2397
      %v2446 = vadd.f32 %v1836, %v2400
      %v2447 = vadd.f32 %v1841, %v2405
      %v2448 = vadd.f32 %v1844, %v2408
      %v2449 = vadd.f32 %v1849, %v2413
      %v2450 = vadd.f32 %v1852, %v2416
      %v2451 = vld [vmem:[%s2] sm:$0x1]
      %v2453 = vlaneseq
      %v2454 = vshrl.u32 %v2453, 7
      %v2455 = vsub.s32 0, %v2454
      %v2456 = vrot.slane %v2451, %v2455
      %v2458 = vmul.f32 %v2419, %v2456
      %v2459 = vmul.f32 %v2420, %v2456
      %v2460 = vmul.f32 %v2421, %v2456
      %v2461 = vmul.f32 %v2422, %v2456
      %v2462 = vmul.f32 %v2423, %v2456
      %v2463 = vmul.f32 %v2424, %v2456
      %v2464 = vmul.f32 %v2425, %v2456
      %v2465 = vmul.f32 %v2426, %v2456
      %v2466 = vmul.f32 %v2427, %v2456
      %v2467 = vmul.f32 %v2428, %v2456
      %v2468 = vmul.f32 %v2429, %v2456
      %v2469 = vmul.f32 %v2430, %v2456
      %v2470 = vmul.f32 %v2431, %v2456
      %v2471 = vmul.f32 %v2432, %v2456
      %v2472 = vmul.f32 %v2433, %v2456
      %v2473 = vmul.f32 %v2434, %v2456
      %v2474 = vmul.f32 %v2435, %v2456
      %v2475 = vmul.f32 %v2436, %v2456
      %v2476 = vmul.f32 %v2437, %v2456
      %v2477 = vmul.f32 %v2438, %v2456
      %v2478 = vmul.f32 %v2439, %v2456
      %v2479 = vmul.f32 %v2440, %v2456
      %v2480 = vmul.f32 %v2441, %v2456
      %v2481 = vmul.f32 %v2442, %v2456
      %v2482 = vmul.f32 %v2443, %v2456
      %v2483 = vmul.f32 %v2444, %v2456
      %v2484 = vmul.f32 %v2445, %v2456
      %v2485 = vmul.f32 %v2446, %v2456
      %v2486 = vmul.f32 %v2447, %v2456
      %v2487 = vmul.f32 %v2448, %v2456
      %v2488 = vmul.f32 %v2449, %v2456
      %v2489 = vmul.f32 %v2450, %v2456
      %v2490 = vld [vmem:[%s3] sm:$0x1]
      %v2492 = vlaneseq
      %v2493 = vshrl.u32 %v2492, 7
      %v2494 = vsub.s32 0, %v2493
      %v2495 = vrot.slane %v2490, %v2494
      %v2497 = vadd.f32 %v2458, %v2495
      %v2498 = vadd.f32 %v2459, %v2495
      %v2499 = vadd.f32 %v2460, %v2495
      %v2500 = vadd.f32 %v2461, %v2495
      %v2501 = vadd.f32 %v2462, %v2495
      %v2502 = vadd.f32 %v2463, %v2495
      %v2503 = vadd.f32 %v2464, %v2495
      %v2504 = vadd.f32 %v2465, %v2495
      %v2505 = vadd.f32 %v2466, %v2495
      %v2506 = vadd.f32 %v2467, %v2495
      %v2507 = vadd.f32 %v2468, %v2495
      %v2508 = vadd.f32 %v2469, %v2495
      %v2509 = vadd.f32 %v2470, %v2495
      %v2510 = vadd.f32 %v2471, %v2495
      %v2511 = vadd.f32 %v2472, %v2495
      %v2512 = vadd.f32 %v2473, %v2495
      %v2513 = vadd.f32 %v2474, %v2495
      %v2514 = vadd.f32 %v2475, %v2495
      %v2515 = vadd.f32 %v2476, %v2495
      %v2516 = vadd.f32 %v2477, %v2495
      %v2517 = vadd.f32 %v2478, %v2495
      %v2518 = vadd.f32 %v2479, %v2495
      %v2519 = vadd.f32 %v2480, %v2495
      %v2520 = vadd.f32 %v2481, %v2495
      %v2521 = vadd.f32 %v2482, %v2495
      %v2522 = vadd.f32 %v2483, %v2495
      %v2523 = vadd.f32 %v2484, %v2495
      %v2524 = vadd.f32 %v2485, %v2495
      %v2525 = vadd.f32 %v2486, %v2495
      %v2526 = vadd.f32 %v2487, %v2495
      %v2527 = vadd.f32 %v2488, %v2495
      %v2528 = vadd.f32 %v2489, %v2495
      %v2529 = vmax.f32 %v2497, 0.0
      %v2530 = vmax.f32 %v2498, 0.0
      %v2531 = vmax.f32 %v2499, 0.0
      %v2532 = vmax.f32 %v2500, 0.0
      %v2533 = vmax.f32 %v2501, 0.0
      %v2534 = vmax.f32 %v2502, 0.0
      %v2535 = vmax.f32 %v2503, 0.0
      %v2536 = vmax.f32 %v2504, 0.0
      %v2537 = vmax.f32 %v2505, 0.0
      %v2538 = vmax.f32 %v2506, 0.0
      %v2539 = vmax.f32 %v2507, 0.0
      %v2540 = vmax.f32 %v2508, 0.0
      %v2541 = vmax.f32 %v2509, 0.0
      %v2542 = vmax.f32 %v2510, 0.0
      %v2543 = vmax.f32 %v2511, 0.0
      %v2544 = vmax.f32 %v2512, 0.0
      %v2545 = vmax.f32 %v2513, 0.0
      %v2546 = vmax.f32 %v2514, 0.0
      %v2547 = vmax.f32 %v2515, 0.0
      %v2548 = vmax.f32 %v2516, 0.0
      %v2549 = vmax.f32 %v2517, 0.0
      %v2550 = vmax.f32 %v2518, 0.0
      %v2551 = vmax.f32 %v2519, 0.0
      %v2552 = vmax.f32 %v2520, 0.0
      %v2553 = vmax.f32 %v2521, 0.0
      %v2554 = vmax.f32 %v2522, 0.0
      %v2555 = vmax.f32 %v2523, 0.0
      %v2556 = vmax.f32 %v2524, 0.0
      %v2557 = vmax.f32 %v2525, 0.0
      %v2558 = vmax.f32 %v2526, 0.0
      %v2559 = vmax.f32 %v2527, 0.0
      %v2560 = vmax.f32 %v2528, 0.0
      %2561 = vst [vmem:[%s197] sm:$0xff] %v2529
      %2562 = vst [vmem:[%s197 + $0x8] sm:$0xff] %v2530
      %2563 = vst [vmem:[%s197 + $0x10] sm:$0xff] %v2531
      %2564 = vst [vmem:[%s197 + $0x18] sm:$0xff] %v2532
      %2565 = vst [vmem:[%s197 + $0x20] sm:$0xff] %v2533
      %2566 = vst [vmem:[%s197 + $0x28] sm:$0xff] %v2534
      %2567 = vst [vmem:[%s197 + $0x30] sm:$0xff] %v2535
      %2568 = vst [vmem:[%s197 + $0x38] sm:$0xff] %v2536
      %2569 = vst [vmem:[%s197 + $0x40] sm:$0xff] %v2537
      %2570 = vst [vmem:[%s197 + $0x48] sm:$0xff] %v2538
      %2571 = vst [vmem:[%s197 + $0x50] sm:$0xff] %v2539
      %2572 = vst [vmem:[%s197 + $0x58] sm:$0xff] %v2540
      %2573 = vst [vmem:[%s197 + $0x60] sm:$0xff] %v2541
      %2574 = vst [vmem:[%s197 + $0x68] sm:$0xff] %v2542
      %2575 = vst [vmem:[%s197 + $0x70] sm:$0xff] %v2543
      %2576 = vst [vmem:[%s197 + $0x78] sm:$0xff] %v2544
      %2577 = vst [vmem:[%s197 + $0x80] sm:$0xff] %v2545
      %2578 = vst [vmem:[%s197 + $0x88] sm:$0xff] %v2546
      %2579 = vst [vmem:[%s197 + $0x90] sm:$0xff] %v2547
      %2580 = vst [vmem:[%s197 + $0x98] sm:$0xff] %v2548
      %2581 = vst [vmem:[%s197 + $0xa0] sm:$0xff] %v2549
      %2582 = vst [vmem:[%s197 + $0xa8] sm:$0xff] %v2550
      %2583 = vst [vmem:[%s197 + $0xb0] sm:$0xff] %v2551
      %2584 = vst [vmem:[%s197 + $0xb8] sm:$0xff] %v2552
      %2585 = vst [vmem:[%s197 + $0xc0] sm:$0xff] %v2553
      %2586 = vst [vmem:[%s197 + $0xc8] sm:$0xff] %v2554
      %2587 = vst [vmem:[%s197 + $0xd0] sm:$0xff] %v2555
      %2588 = vst [vmem:[%s197 + $0xd8] sm:$0xff] %v2556
      %2589 = vst [vmem:[%s197 + $0xe0] sm:$0xff] %v2557
      %2590 = vst [vmem:[%s197 + $0xe8] sm:$0xff] %v2558
      %2591 = vst [vmem:[%s197 + $0xf0] sm:$0xff] %v2559
      %2592 = vst [vmem:[%s197 + $0xf8] sm:$0xff] %v2560
      %p2593 = scmp.lt.s32.totalorder %s15, 1
      %s2594 = scalar_select %p2593, %s15, 1
      %s2595 = smul.addr %s2594, 32
      %s2596 = smul.addr %s2595, 8
      %s2597 = scalar_lea.vmem %s4, %s2596
      // Predicated region
      $region37: #{up_block_forward.5} parent=35 // pred_check
        %p2598 = pneg %p122
      $region38: #{up_block_forward.5} parent=35 // pred_check_branch
        %2600 = sbr.rel (%p2598) target = $region40
      $region39: #{up_block_forward.5} parent=35 // pred_region
        _
      $region40: #{up_block_forward.5} parent=35 // pred_fallthru
        _
    $region36: #{up_block_forward.5} parent=5 // pred_fallthru
      _
    %p2601 = scmp.le.s32.totalorder 2, %s10
    // Predicated region
    $region41: #{up_block_forward.5} parent=5 // pred_check
      %p2602 = pneg %p2601
    $region42: #{up_block_forward.5} parent=5 // pred_check_branch
      %2604 = sbr.rel (%p2602) target = $region44
    $region43: #{up_block_forward.5} parent=5 // pred_region
      %s2605 = ssub.s32 %s10, 2
      // Predicated region
      $region45: #{up_block_forward.5} parent=43 // pred_check
        %p2606 = pneg %p128
      $region46: #{up_block_forward.5} parent=43 // pred_check_branch
        %2608 = sbr.rel (%p2606) target = $region48
      $region47: #{up_block_forward.5} parent=43 // pred_region
        %p2609 = scmp.lt.s32.totalorder %s16, 1
        %s2610 = scalar_select %p2609, %s16, 1
        %s2611 = smul.addr %s2610, 32
        %s2612 = smul.addr %s2611, 8
        %s2613 = scalar_lea.vmem %s4, %s2612
      $region48: #{up_block_forward.5} parent=43 // pred_fallthru
        _
    $region44: #{up_block_forward.5} parent=5 // pred_fallthru
      _
  $region6: #{up_block_forward.5} parent=0 // loop_footer
    %s14 = sadd.s32 1, %s10
  $region7: #{up_block_forward.5} parent=0 // loop_footer_branch
    %9 = sbr.rel target = $region3
  $region8: #{up_block_forward.5} parent=0 // loop_exit
    _

// kernel: up_block_forward.4
$region0: #{up_block_forward.4}
  #allocation0 [shape = 'u32[]', space=smem, size = 0x4, offset = 0x4, fixed_abs, tag = 'smem constant byte address 0x4 - core index']
  #allocation1 [shape = 'u32[144,128]{1,0:T(1,128)}', space=vmem, size = 0x12000, scoped, tag = 'internal scratch']
  #allocation2 [shape = 'bf16[18,16,768]{2,1,0:T(16,128)(2,1)}', space=vmem, size = 0x6c000, scoped, tag = 'scratch operand']
  %s0 = inlined_call_operand.vmem [shape: bf16[2,16,16,128], index: 0, kind: input, shape index: {}]
  %s1 = inlined_call_operand.vmem [shape: bf16[2,16,16,128], index: 1, kind: input, shape index: {}]
  %s2 = inlined_call_operand.vmem [shape: bf16[3,768,128], index: 2, kind: input, shape index: {}]
  %s3 = inlined_call_operand.vmem [shape: f32[1,128], index: 3, kind: input, shape index: {}]
  %s4 = inlined_call_operand.vmem [shape: f32[1,128], index: 4, kind: input, shape index: {}]
  %s5 = inlined_call_operand.vmem [shape: bf16[2,16,16,128], index: 5, kind: output, shape index: {}]
  %s6 = sld [smem:[#allocation0]]
  $region53: #{up_block_forward.4} parent=0
    _
  %s8 = ssub.s32 1, %s6
  %s9 = scalar_select 0, %s8, %s6
  loop: start=0, step=1, limit=4
  $region2: #{up_block_forward.4} parent=0 // loop_pre_header
    _
  $region3: #{up_block_forward.4} parent=0 // loop_header
    %s11 = sphi 0, %s15
    %p12 = scmp.ge.s32.totalorder %s11, 4
    %s21 = sphi 0, %s23
    %s24 = sphi 0, %s21
    %s25 = sphi 0, %s24
    %s41 = sphi 0, %s25
    %s47 = sphi 0, %s49
    %s50 = sphi 0, %s47
    %s51 = sphi 0, %s50
    %s67 = sphi 0, %s51
    %s71 = sphi 0, %s71
    %s73 = sphi 0, %s71
    %s74 = sphi 0, %s73
    %s88 = sphi 0, %s74
    %s92 = sphi 0, %s92
    %s94 = sphi 0, %s92
    %s95 = sphi 0, %s94
    %s109 = sphi 0, %s95
    %s113 = sphi 0, %s113
    %s115 = sphi 0, %s113
    %s116 = sphi 0, %s115
    %s130 = sphi 0, %s116
    %s136 = sphi 0, %s138
    %s139 = sphi 0, %s136
    %s140 = sphi 0, %s139
    %s156 = sphi 0, %s140
  $region4: #{up_block_forward.4} parent=0 // loop_header_branch
    %14 = sbr.rel (%p12) target = $region8
  $region5: #{up_block_forward.4} parent=0 // loop_body
    %s16 = ssub.s32 %s11, 1
    %s17 = ssub.s32 %s11, 2
    %s18 = sadd.s32 %s11, 1
    %s19 = ssub.s32 %s11, %s18
    %p20 = scmp.eq.s32.totalorder %s19, 0
    %s22 = sadd.s32 %s21, 1
    %s23 = scalar_select %p20, %s21, %s22
    %p26 = pneg %p20
    %p27 = scmp.eq.s32.totalorder %s11, 1
    %p28 = por %p26, %p27
    %p29 = scmp.ne.s32.totalorder %s21, %s24
    %p30 = scmp.eq.s32.totalorder %s11, 0
    %p31 = por %p29, %p30
    %p32 = scmp.ne.s32.totalorder %s21, %s24
    %p33 = scmp.eq.s32.totalorder %s16, 1
    %p34 = por %p32, %p33
    %p35 = scmp.ne.s32.totalorder %s24, %s25
    %p36 = scmp.eq.s32.totalorder %s16, 0
    %p37 = por %p35, %p36
    %p38 = scmp.ne.s32.totalorder %s24, %s25
    %p39 = scmp.eq.s32.totalorder %s17, 1
    %p40 = por %p38, %p39
    %p42 = scmp.ne.s32.totalorder %s25, %s41
    %p43 = scmp.eq.s32.totalorder %s17, 0
    %p44 = por %p42, %p43
    %s45 = ssub.s32 %s11, %s18
    %p46 = scmp.eq.s32.totalorder %s45, 0
    %s48 = sadd.s32 %s47, 1
    %s49 = scalar_select %p46, %s47, %s48
    %p52 = pneg %p46
    %p53 = scmp.eq.s32.totalorder %s11, 1
    %p54 = por %p52, %p53
    %p55 = scmp.ne.s32.totalorder %s47, %s50
    %p56 = scmp.eq.s32.totalorder %s11, 0
    %p57 = por %p55, %p56
    %p58 = scmp.ne.s32.totalorder %s47, %s50
    %p59 = scmp.eq.s32.totalorder %s16, 1
    %p60 = por %p58, %p59
    %p61 = scmp.ne.s32.totalorder %s50, %s51
    %p62 = scmp.eq.s32.totalorder %s16, 0
    %p63 = por %p61, %p62
    %p64 = scmp.ne.s32.totalorder %s50, %s51
    %p65 = scmp.eq.s32.totalorder %s17, 1
    %p66 = por %p64, %p65
    %p68 = scmp.ne.s32.totalorder %s51, %s67
    %p69 = scmp.eq.s32.totalorder %s17, 0
    %p70 = por %p68, %p69
    %s72 = sadd.s32 %s71, 1
    %p75 = scmp.eq.s32.totalorder %s11, 1
    %p76 = scmp.ne.s32.totalorder %s71, %s73
    %p77 = scmp.eq.s32.totalorder %s11, 0
    %p78 = por %p76, %p77
    %p79 = scmp.ne.s32.totalorder %s71, %s73
    %p80 = scmp.eq.s32.totalorder %s16, 1
    %p81 = por %p79, %p80
    %p82 = scmp.ne.s32.totalorder %s73, %s74
    %p83 = scmp.eq.s32.totalorder %s16, 0
    %p84 = por %p82, %p83
    %p85 = scmp.ne.s32.totalorder %s73, %s74
    %p86 = scmp.eq.s32.totalorder %s17, 1
    %p87 = por %p85, %p86
    %p89 = scmp.ne.s32.totalorder %s74, %s88
    %p90 = scmp.eq.s32.totalorder %s17, 0
    %p91 = por %p89, %p90
    %s93 = sadd.s32 %s92, 1
    %p96 = scmp.eq.s32.totalorder %s11, 1
    %p97 = scmp.ne.s32.totalorder %s92, %s94
    %p98 = scmp.eq.s32.totalorder %s11, 0
    %p99 = por %p97, %p98
    %p100 = scmp.ne.s32.totalorder %s92, %s94
    %p101 = scmp.eq.s32.totalorder %s16, 1
    %p102 = por %p100, %p101
    %p103 = scmp.ne.s32.totalorder %s94, %s95
    %p104 = scmp.eq.s32.totalorder %s16, 0
    %p105 = por %p103, %p104
    %p106 = scmp.ne.s32.totalorder %s94, %s95
    %p107 = scmp.eq.s32.totalorder %s17, 1
    %p108 = por %p106, %p107
    %p110 = scmp.ne.s32.totalorder %s95, %s109
    %p111 = scmp.eq.s32.totalorder %s17, 0
    %p112 = por %p110, %p111
    %s114 = sadd.s32 %s113, 1
    %p117 = scmp.eq.s32.totalorder %s11, 1
    %p118 = scmp.ne.s32.totalorder %s113, %s115
    %p119 = scmp.eq.s32.totalorder %s11, 0
    %p120 = por %p118, %p119
    %p121 = scmp.ne.s32.totalorder %s113, %s115
    %p122 = scmp.eq.s32.totalorder %s16, 1
    %p123 = por %p121, %p122
    %p124 = scmp.ne.s32.totalorder %s115, %s116
    %p125 = scmp.eq.s32.totalorder %s16, 0
    %p126 = por %p124, %p125
    %p127 = scmp.ne.s32.totalorder %s115, %s116
    %p128 = scmp.eq.s32.totalorder %s17, 1
    %p129 = por %p127, %p128
    %p131 = scmp.ne.s32.totalorder %s116, %s130
    %p132 = scmp.eq.s32.totalorder %s17, 0
    %p133 = por %p131, %p132
    %s134 = ssub.s32 %s11, %s18
    %p135 = scmp.eq.s32.totalorder %s134, 0
    %s137 = sadd.s32 %s136, 1
    %s138 = scalar_select %p135, %s136, %s137
    %p141 = pneg %p135
    %p142 = scmp.eq.s32.totalorder %s11, 1
    %p143 = por %p141, %p142
    %p144 = scmp.ne.s32.totalorder %s136, %s139
    %p145 = scmp.eq.s32.totalorder %s11, 0
    %p146 = por %p144, %p145
    %p147 = scmp.ne.s32.totalorder %s136, %s139
    %p148 = scmp.eq.s32.totalorder %s16, 1
    %p149 = por %p147, %p148
    %p150 = scmp.ne.s32.totalorder %s139, %s140
    %p151 = scmp.eq.s32.totalorder %s16, 0
    %p152 = por %p150, %p151
    %p153 = scmp.ne.s32.totalorder %s139, %s140
    %p154 = scmp.eq.s32.totalorder %s17, 1
    %p155 = por %p153, %p154
    %p157 = scmp.ne.s32.totalorder %s140, %s156
    %p158 = scmp.eq.s32.totalorder %s17, 0
    %p159 = por %p157, %p158
    %p160 = scmp.le.s32.totalorder 1, %s11
    %p161 = scmp.lt.s32.totalorder %s11, 3
    %p162 = pnand %p160, %p161
    %p163 = pneg %p162
    // Predicated region
    $region9: #{up_block_forward.4} parent=5 // pred_check
      _
    $region10: #{up_block_forward.4} parent=5 // pred_check_branch
      %165 = sbr.rel (%p162) target = $region12
    $region11: #{up_block_forward.4} parent=5 // pred_region
      %s166 = ssub.s32 %s11, 1
      // Predicated region
      $region13: #{up_block_forward.4} parent=11 // pred_check
        %p167 = pneg %p84
      $region14: #{up_block_forward.4} parent=11 // pred_check_branch
        %169 = sbr.rel (%p167) target = $region16
      $region15: #{up_block_forward.4} parent=11 // pred_region
        _
      $region16: #{up_block_forward.4} parent=11 // pred_fallthru
        _
      // Predicated region
      $region17: #{up_block_forward.4} parent=11 // pred_check
        %p170 = pneg %p105
      $region18: #{up_block_forward.4} parent=11 // pred_check_branch
        %172 = sbr.rel (%p170) target = $region20
      $region19: #{up_block_forward.4} parent=11 // pred_region
        _
      $region20: #{up_block_forward.4} parent=11 // pred_fallthru
        _
      // Predicated region
      $region21: #{up_block_forward.4} parent=11 // pred_check
        %p173 = pneg %p126
      $region22: #{up_block_forward.4} parent=11 // pred_check_branch
        %175 = sbr.rel (%p173) target = $region24
      $region23: #{up_block_forward.4} parent=11 // pred_region
        _
      $region24: #{up_block_forward.4} parent=11 // pred_fallthru
        _
    $region12: #{up_block_forward.4} parent=5 // pred_fallthru
      _
    %p176 = scmp.lt.s32.totalorder %s11, 2
    // Predicated region
    $region25: #{up_block_forward.4} parent=5 // pred_check
      %p177 = pneg %p176
    $region26: #{up_block_forward.4} parent=5 // pred_check_branch
      %179 = sbr.rel (%p177) target = $region28
    $region27: #{up_block_forward.4} parent=5 // pred_region
      // Predicated region
      $region29: #{up_block_forward.4} parent=27 // pred_check
        %p180 = pneg %p31
      $region30: #{up_block_forward.4} parent=27 // pred_check_branch
        %182 = sbr.rel (%p180) target = $region32
      $region31: #{up_block_forward.4} parent=27 // pred_region
        %p183 = scmp.lt.s32.totalorder %s11, 1
        %s184 = scalar_select %p183, %s11, 1
        %s185 = smul.addr %s184, 32
        %s186 = smul.addr %s185, 4
        %s187 = scalar_lea.vmem %s0, %s186
      $region32: #{up_block_forward.4} parent=27 // pred_fallthru
        _
      // Predicated region
      $region33: #{up_block_forward.4} parent=27 // pred_check
        %p188 = pneg %p57
      $region34: #{up_block_forward.4} parent=27 // pred_check_branch
        %190 = sbr.rel (%p188) target = $region36
      $region35: #{up_block_forward.4} parent=27 // pred_region
        %p191 = scmp.lt.s32.totalorder %s11, 1
        %s192 = scalar_select %p191, %s11, 1
        %s193 = smul.addr %s192, 32
        %s194 = smul.addr %s193, 4
        %s195 = scalar_lea.vmem %s1, %s194
      $region36: #{up_block_forward.4} parent=27 // pred_fallthru
        _
    $region28: #{up_block_forward.4} parent=5 // pred_fallthru
      _
    %p196 = scmp.le.s32.totalorder 1, %s11
    %p197 = scmp.lt.s32.totalorder %s11, 3
    %p198 = pnand %p196, %p197
    %p199 = pneg %p198
    // Predicated region
    $region37: #{up_block_forward.4} parent=5 // pred_check
      _
    $region38: #{up_block_forward.4} parent=5 // pred_check_branch
      %201 = sbr.rel (%p198) target = $region40
    $region39: #{up_block_forward.4} parent=5 // pred_region
      %s202 = ssub.s32 %s11, 1
      %p203 = scmp.lt.s32.totalorder %s16, 1
      %s204 = scalar_select %p203, %s16, 1
      %s205 = smul.addr %s204, 32
      %s206 = smul.addr %s205, 4
      %s207 = scalar_lea.vmem %s0, %s206
      %p208 = pneg %p37
      %p209 = pneg %p34
      %p210 = scmp.lt.s32.totalorder %s16, 1
      %s211 = scalar_select %p210, %s16, 1
      %s212 = smul.addr %s211, 32
      %s213 = smul.addr %s212, 4
      %s214 = scalar_lea.vmem %s1, %s213
      %p215 = pneg %p63
      %p216 = pneg %p60
      %p217 = pneg %p84
      %p218 = pneg %p81
      %p219 = pneg %p105
      %p220 = pneg %p102
      %p221 = pneg %p126
      %p222 = pneg %p123
      %p223 = pneg %p152
      %p224 = pneg %p149
      %p225 = scmp.lt.s32.totalorder %s16, 1
      %s226 = scalar_select %p225, %s16, 1
      %s227 = smul.addr %s226, 32
      %s228 = smul.addr %s227, 4
      %s229 = scalar_lea.vmem %s5, %s228
      %p230 = scmp.lt.s32.totalorder %s16, 1
      %s231 = scalar_select %p230, %s16, 1
      %s232 = smul.addr %s231, 32
      %s233 = smul.addr %s232, 4
      %s234 = scalar_lea.vmem %s0, %s233
      %p235 = scmp.lt.s32.totalorder %s16, 1
      %s236 = scalar_select %p235, %s16, 1
      %s237 = smul.addr %s236, 32
      %s238 = smul.addr %s237, 4
      %s239 = scalar_lea.vmem %s1, %s238
      %p240 = scmp.lt.s32.totalorder %s16, 1
      %s241 = scalar_select %p240, %s16, 1
      %s242 = smul.addr %s241, 32
      %s243 = smul.addr %s242, 4
      %s244 = scalar_lea.vmem %s5, %s243
      %246 = vst [vmem:[#allocation2] sm:$0xff] 0
      %247 = vst [vmem:[#allocation2 + $0x8] sm:$0xff] 0
      %248 = vst [vmem:[#allocation2 + $0x10] sm:$0xff] 0
      %249 = vst [vmem:[#allocation2 + $0x18] sm:$0xff] 0
      %250 = vst [vmem:[#allocation2 + $0x20] sm:$0xff] 0
      %251 = vst [vmem:[#allocation2 + $0x28] sm:$0xff] 0
      %s252 = scalar_lea.vmem [#allocation2], 816
      %253 = vst [vmem:[%s252] sm:$0xff] 0
      %254 = vst [vmem:[%s252 + $0x8] sm:$0xff] 0
      %255 = vst [vmem:[%s252 + $0x10] sm:$0xff] 0
      %256 = vst [vmem:[%s252 + $0x18] sm:$0xff] 0
      %257 = vst [vmem:[%s252 + $0x20] sm:$0xff] 0
      %258 = vst [vmem:[%s252 + $0x28] sm:$0xff] 0
      %s259 = scalar_lea.vmem [#allocation2], 48
      %vm260 = vcmask 1040384
      %vm261 = vsmask.f32 256
      %vm262 = vmand %vm260, %vm261
      %v263 = vld [vmem:[%s259] sm:$0x1]
      %v264 = vsel %vm262, 0, %v263
      %265 = vst [vmem:[%s259] sm:$0x1] %v264
      %v266 = vld [vmem:[%s259 + $0x8] sm:$0x1]
      %v267 = vsel %vm262, 0, %v266
      %268 = vst [vmem:[%s259 + $0x8] sm:$0x1] %v267
      %v269 = vld [vmem:[%s259 + $0x30] sm:$0x1]
      %v270 = vsel %vm262, 0, %v269
      %271 = vst [vmem:[%s259 + $0x30] sm:$0x1] %v270
      %v272 = vld [vmem:[%s259 + $0x38] sm:$0x1]
      %v273 = vsel %vm262, 0, %v272
      %274 = vst [vmem:[%s259 + $0x38] sm:$0x1] %v273
      %v275 = vld [vmem:[%s259 + $0x60] sm:$0x1]
      %v276 = vsel %vm262, 0, %v275
      %277 = vst [vmem:[%s259 + $0x60] sm:$0x1] %v276
      %v278 = vld [vmem:[%s259 + $0x68] sm:$0x1]
      %v279 = vsel %vm262, 0, %v278
      %280 = vst [vmem:[%s259 + $0x68] sm:$0x1] %v279
      %v281 = vld [vmem:[%s259 + $0x90] sm:$0x1]
      %v282 = vsel %vm262, 0, %v281
      %283 = vst [vmem:[%s259 + $0x90] sm:$0x1] %v282
      %v284 = vld [vmem:[%s259 + $0x98] sm:$0x1]
      %v285 = vsel %vm262, 0, %v284
      %286 = vst [vmem:[%s259 + $0x98] sm:$0x1] %v285
      %v287 = vld [vmem:[%s259 + $0xc0] sm:$0x1]
      %v288 = vsel %vm262, 0, %v287
      %289 = vst [vmem:[%s259 + $0xc0] sm:$0x1] %v288
      %v290 = vld [vmem:[%s259 + $0xc8] sm:$0x1]
      %v291 = vsel %vm262, 0, %v290
      %292 = vst [vmem:[%s259 + $0xc8] sm:$0x1] %v291
      %v293 = vld [vmem:[%s259 + $0xf0] sm:$0x1]
      %v294 = vsel %vm262, 0, %v293
      %295 = vst [vmem:[%s259 + $0xf0] sm:$0x1] %v294
      %v296 = vld [vmem:[%s259 + $0xf8] sm:$0x1]
      %v297 = vsel %vm262, 0, %v296
      %298 = vst [vmem:[%s259 + $0xf8] sm:$0x1] %v297
      %v299 = vld [vmem:[%s259 + $0x120] sm:$0x1]
      %v300 = vsel %vm262, 0, %v299
      %301 = vst [vmem:[%s259 + $0x120] sm:$0x1] %v300
      %v302 = vld [vmem:[%s259 + $0x128] sm:$0x1]
      %v303 = vsel %vm262, 0, %v302
      %304 = vst [vmem:[%s259 + $0x128] sm:$0x1] %v303
      %v305 = vld [vmem:[%s259 + $0x150] sm:$0x1]
      %v306 = vsel %vm262, 0, %v305
      %307 = vst [vmem:[%s259 + $0x150] sm:$0x1] %v306
      %v308 = vld [vmem:[%s259 + $0x158] sm:$0x1]
      %v309 = vsel %vm262, 0, %v308
      %310 = vst [vmem:[%s259 + $0x158] sm:$0x1] %v309
      %v311 = vld [vmem:[%s259 + $0x180] sm:$0x1]
      %v312 = vsel %vm262, 0, %v311
      %313 = vst [vmem:[%s259 + $0x180] sm:$0x1] %v312
      %v314 = vld [vmem:[%s259 + $0x188] sm:$0x1]
      %v315 = vsel %vm262, 0, %v314
      %316 = vst [vmem:[%s259 + $0x188] sm:$0x1] %v315
      %v317 = vld [vmem:[%s259 + $0x1b0] sm:$0x1]
      %v318 = vsel %vm262, 0, %v317
      %319 = vst [vmem:[%s259 + $0x1b0] sm:$0x1] %v318
      %v320 = vld [vmem:[%s259 + $0x1b8] sm:$0x1]
      %v321 = vsel %vm262, 0, %v320
      %322 = vst [vmem:[%s259 + $0x1b8] sm:$0x1] %v321
      %v323 = vld [vmem:[%s259 + $0x1e0] sm:$0x1]
      %v324 = vsel %vm262, 0, %v323
      %325 = vst [vmem:[%s259 + $0x1e0] sm:$0x1] %v324
      %v326 = vld [vmem:[%s259 + $0x1e8] sm:$0x1]
      %v327 = vsel %vm262, 0, %v326
      %328 = vst [vmem:[%s259 + $0x1e8] sm:$0x1] %v327
      %v329 = vld [vmem:[%s259 + $0x210] sm:$0x1]
      %v330 = vsel %vm262, 0, %v329
      %331 = vst [vmem:[%s259 + $0x210] sm:$0x1] %v330
      %v332 = vld [vmem:[%s259 + $0x218] sm:$0x1]
      %v333 = vsel %vm262, 0, %v332
      %334 = vst [vmem:[%s259 + $0x218] sm:$0x1] %v333
      %v335 = vld [vmem:[%s259 + $0x240] sm:$0x1]
      %v336 = vsel %vm262, 0, %v335
      %337 = vst [vmem:[%s259 + $0x240] sm:$0x1] %v336
      %v338 = vld [vmem:[%s259 + $0x248] sm:$0x1]
      %v339 = vsel %vm262, 0, %v338
      %340 = vst [vmem:[%s259 + $0x248] sm:$0x1] %v339
      %v341 = vld [vmem:[%s259 + $0x270] sm:$0x1]
      %v342 = vsel %vm262, 0, %v341
      %343 = vst [vmem:[%s259 + $0x270] sm:$0x1] %v342
      %v344 = vld [vmem:[%s259 + $0x278] sm:$0x1]
      %v345 = vsel %vm262, 0, %v344
      %346 = vst [vmem:[%s259 + $0x278] sm:$0x1] %v345
      %v347 = vld [vmem:[%s259 + $0x2a0] sm:$0x1]
      %v348 = vsel %vm262, 0, %v347
      %349 = vst [vmem:[%s259 + $0x2a0] sm:$0x1] %v348
      %v350 = vld [vmem:[%s259 + $0x2a8] sm:$0x1]
      %v351 = vsel %vm262, 0, %v350
      %352 = vst [vmem:[%s259 + $0x2a8] sm:$0x1] %v351
      %v353 = vld [vmem:[%s259 + $0x2d0] sm:$0x1]
      %v354 = vsel %vm262, 0, %v353
      %355 = vst [vmem:[%s259 + $0x2d0] sm:$0x1] %v354
      %v356 = vld [vmem:[%s259 + $0x2d8] sm:$0x1]
      %v357 = vsel %vm262, 0, %v356
      %358 = vst [vmem:[%s259 + $0x2d8] sm:$0x1] %v357
      %vm359 = vcmask 1047559
      %vm360 = vsmask.f32 7966
      %vm361 = vmand %vm359, %vm360
      %v362 = vld [vmem:[%s259 + $0x20] sm:$0x80]
      %v363 = vsel %vm361, 0, %v362
      %364 = vst [vmem:[%s259 + $0x20] sm:$0x80] %v363
      %v365 = vld [vmem:[%s259 + $0x28] sm:$0x80]
      %v366 = vsel %vm361, 0, %v365
      %367 = vst [vmem:[%s259 + $0x28] sm:$0x80] %v366
      %v368 = vld [vmem:[%s259 + $0x50] sm:$0x80]
      %v369 = vsel %vm361, 0, %v368
      %370 = vst [vmem:[%s259 + $0x50] sm:$0x80] %v369
      %v371 = vld [vmem:[%s259 + $0x58] sm:$0x80]
      %v372 = vsel %vm361, 0, %v371
      %373 = vst [vmem:[%s259 + $0x58] sm:$0x80] %v372
      %v374 = vld [vmem:[%s259 + $0x80] sm:$0x80]
      %v375 = vsel %vm361, 0, %v374
      %376 = vst [vmem:[%s259 + $0x80] sm:$0x80] %v375
      %v377 = vld [vmem:[%s259 + $0x88] sm:$0x80]
      %v378 = vsel %vm361, 0, %v377
      %379 = vst [vmem:[%s259 + $0x88] sm:$0x80] %v378
      %v380 = vld [vmem:[%s259 + $0xb0] sm:$0x80]
      %v381 = vsel %vm361, 0, %v380
      %382 = vst [vmem:[%s259 + $0xb0] sm:$0x80] %v381
      %v383 = vld [vmem:[%s259 + $0xb8] sm:$0x80]
      %v384 = vsel %vm361, 0, %v383
      %385 = vst [vmem:[%s259 + $0xb8] sm:$0x80] %v384
      %v386 = vld [vmem:[%s259 + $0xe0] sm:$0x80]
      %v387 = vsel %vm361, 0, %v386
      %388 = vst [vmem:[%s259 + $0xe0] sm:$0x80] %v387
      %v389 = vld [vmem:[%s259 + $0xe8] sm:$0x80]
      %v390 = vsel %vm361, 0, %v389
      %391 = vst [vmem:[%s259 + $0xe8] sm:$0x80] %v390
      %v392 = vld [vmem:[%s259 + $0x110] sm:$0x80]
      %v393 = vsel %vm361, 0, %v392
      %394 = vst [vmem:[%s259 + $0x110] sm:$0x80] %v393
      %v395 = vld [vmem:[%s259 + $0x118] sm:$0x80]
      %v396 = vsel %vm361, 0, %v395
      %397 = vst [vmem:[%s259 + $0x118] sm:$0x80] %v396
      %v398 = vld [vmem:[%s259 + $0x140] sm:$0x80]
      %v399 = vsel %vm361, 0, %v398
      %400 = vst [vmem:[%s259 + $0x140] sm:$0x80] %v399
      %v401 = vld [vmem:[%s259 + $0x148] sm:$0x80]
      %v402 = vsel %vm361, 0, %v401
      %403 = vst [vmem:[%s259 + $0x148] sm:$0x80] %v402
      %v404 = vld [vmem:[%s259 + $0x170] sm:$0x80]
      %v405 = vsel %vm361, 0, %v404
      %406 = vst [vmem:[%s259 + $0x170] sm:$0x80] %v405
      %v407 = vld [vmem:[%s259 + $0x178] sm:$0x80]
      %v408 = vsel %vm361, 0, %v407
      %409 = vst [vmem:[%s259 + $0x178] sm:$0x80] %v408
      %v410 = vld [vmem:[%s259 + $0x1a0] sm:$0x80]
      %v411 = vsel %vm361, 0, %v410
      %412 = vst [vmem:[%s259 + $0x1a0] sm:$0x80] %v411
      %v413 = vld [vmem:[%s259 + $0x1a8] sm:$0x80]
      %v414 = vsel %vm361, 0, %v413
      %415 = vst [vmem:[%s259 + $0x1a8] sm:$0x80] %v414
      %v416 = vld [vmem:[%s259 + $0x1d0] sm:$0x80]
      %v417 = vsel %vm361, 0, %v416
      %418 = vst [vmem:[%s259 + $0x1d0] sm:$0x80] %v417
      %v419 = vld [vmem:[%s259 + $0x1d8] sm:$0x80]
      %v420 = vsel %vm361, 0, %v419
      %421 = vst [vmem:[%s259 + $0x1d8] sm:$0x80] %v420
      %v422 = vld [vmem:[%s259 + $0x200] sm:$0x80]
      %v423 = vsel %vm361, 0, %v422
      %424 = vst [vmem:[%s259 + $0x200] sm:$0x80] %v423
      %v425 = vld [vmem:[%s259 + $0x208] sm:$0x80]
      %v426 = vsel %vm361, 0, %v425
      %427 = vst [vmem:[%s259 + $0x208] sm:$0x80] %v426
      %v428 = vld [vmem:[%s259 + $0x230] sm:$0x80]
      %v429 = vsel %vm361, 0, %v428
      %430 = vst [vmem:[%s259 + $0x230] sm:$0x80] %v429
      %v431 = vld [vmem:[%s259 + $0x238] sm:$0x80]
      %v432 = vsel %vm361, 0, %v431
      %433 = vst [vmem:[%s259 + $0x238] sm:$0x80] %v432
      %v434 = vld [vmem:[%s259 + $0x260] sm:$0x80]
      %v435 = vsel %vm361, 0, %v434
      %436 = vst [vmem:[%s259 + $0x260] sm:$0x80] %v435
      %v437 = vld [vmem:[%s259 + $0x268] sm:$0x80]
      %v438 = vsel %vm361, 0, %v437
      %439 = vst [vmem:[%s259 + $0x268] sm:$0x80] %v438
      %v440 = vld [vmem:[%s259 + $0x290] sm:$0x80]
      %v441 = vsel %vm361, 0, %v440
      %442 = vst [vmem:[%s259 + $0x290] sm:$0x80] %v441
      %v443 = vld [vmem:[%s259 + $0x298] sm:$0x80]
      %v444 = vsel %vm361, 0, %v443
      %445 = vst [vmem:[%s259 + $0x298] sm:$0x80] %v444
      %v446 = vld [vmem:[%s259 + $0x2c0] sm:$0x80]
      %v447 = vsel %vm361, 0, %v446
      %448 = vst [vmem:[%s259 + $0x2c0] sm:$0x80] %v447
      %v449 = vld [vmem:[%s259 + $0x2c8] sm:$0x80]
      %v450 = vsel %vm361, 0, %v449
      %451 = vst [vmem:[%s259 + $0x2c8] sm:$0x80] %v450
      %v452 = vld [vmem:[%s259 + $0x2f0] sm:$0x80]
      %v453 = vsel %vm361, 0, %v452
      %454 = vst [vmem:[%s259 + $0x2f0] sm:$0x80] %v453
      %v455 = vld [vmem:[%s259 + $0x2f8] sm:$0x80]
      %v456 = vsel %vm361, 0, %v455
      %457 = vst [vmem:[%s259 + $0x2f8] sm:$0x80] %v456
      %v458 = vld [vmem:[%s234] sm:$0xf]
      %v459 = vld [vmem:[%s234 + $0x4] sm:$0xf]
      %v460 = vld [vmem:[%s234 + $0x8] sm:$0xf]
      %v461 = vld [vmem:[%s234 + $0xc] sm:$0xf]
      %v462 = vld [vmem:[%s234 + $0x10] sm:$0xf]
      %v463 = vld [vmem:[%s234 + $0x14] sm:$0xf]
      %v464 = vld [vmem:[%s234 + $0x18] sm:$0xf]
      %v465 = vld [vmem:[%s234 + $0x1c] sm:$0xf]
      %v466 = vld [vmem:[%s234 + $0x20] sm:$0xf]
      %v467 = vld [vmem:[%s234 + $0x24] sm:$0xf]
      %v468 = vld [vmem:[%s234 + $0x28] sm:$0xf]
      %v469 = vld [vmem:[%s234 + $0x2c] sm:$0xf]
      %v470 = vld [vmem:[%s234 + $0x30] sm:$0xf]
      %v471 = vld [vmem:[%s234 + $0x34] sm:$0xf]
      %v472 = vld [vmem:[%s234 + $0x38] sm:$0xf]
      %v473 = vld [vmem:[%s234 + $0x3c] sm:$0xf]
      %v474 = vld [vmem:[%s234 + $0x40] sm:$0xf]
      %v475 = vld [vmem:[%s234 + $0x44] sm:$0xf]
      %v476 = vld [vmem:[%s234 + $0x48] sm:$0xf]
      %v477 = vld [vmem:[%s234 + $0x4c] sm:$0xf]
      %v478 = vld [vmem:[%s234 + $0x50] sm:$0xf]
      %v479 = vld [vmem:[%s234 + $0x54] sm:$0xf]
      %v480 = vld [vmem:[%s234 + $0x58] sm:$0xf]
      %v481 = vld [vmem:[%s234 + $0x5c] sm:$0xf]
      %v482 = vld [vmem:[%s234 + $0x60] sm:$0xf]
      %v483 = vld [vmem:[%s234 + $0x64] sm:$0xf]
      %v484 = vld [vmem:[%s234 + $0x68] sm:$0xf]
      %v485 = vld [vmem:[%s234 + $0x6c] sm:$0xf]
      %v486 = vld [vmem:[%s234 + $0x70] sm:$0xf]
      %v487 = vld [vmem:[%s234 + $0x74] sm:$0xf]
      %v488 = vld [vmem:[%s234 + $0x78] sm:$0xf]
      %v489 = vld [vmem:[%s234 + $0x7c] sm:$0xf]
      %v490 = vld [vmem:[%s239] sm:$0xf]
      %v491 = vld [vmem:[%s239 + $0x4] sm:$0xf]
      %v492 = vld [vmem:[%s239 + $0x8] sm:$0xf]
      %v493 = vld [vmem:[%s239 + $0xc] sm:$0xf]
      %v494 = vld [vmem:[%s239 + $0x10] sm:$0xf]
      %v495 = vld [vmem:[%s239 + $0x14] sm:$0xf]
      %v496 = vld [vmem:[%s239 + $0x18] sm:$0xf]
      %v497 = vld [vmem:[%s239 + $0x1c] sm:$0xf]
      %v498 = vld [vmem:[%s239 + $0x20] sm:$0xf]
      %v499 = vld [vmem:[%s239 + $0x24] sm:$0xf]
      %v500 = vld [vmem:[%s239 + $0x28] sm:$0xf]
      %v501 = vld [vmem:[%s239 + $0x2c] sm:$0xf]
      %v502 = vld [vmem:[%s239 + $0x30] sm:$0xf]
      %v503 = vld [vmem:[%s239 + $0x34] sm:$0xf]
      %v504 = vld [vmem:[%s239 + $0x38] sm:$0xf]
      %v505 = vld [vmem:[%s239 + $0x3c] sm:$0xf]
      %v506 = vld [vmem:[%s239 + $0x40] sm:$0xf]
      %v507 = vld [vmem:[%s239 + $0x44] sm:$0xf]
      %v508 = vld [vmem:[%s239 + $0x48] sm:$0xf]
      %v509 = vld [vmem:[%s239 + $0x4c] sm:$0xf]
      %v510 = vld [vmem:[%s239 + $0x50] sm:$0xf]
      %v511 = vld [vmem:[%s239 + $0x54] sm:$0xf]
      %v512 = vld [vmem:[%s239 + $0x58] sm:$0xf]
      %v513 = vld [vmem:[%s239 + $0x5c] sm:$0xf]
      %v514 = vld [vmem:[%s239 + $0x60] sm:$0xf]
      %v515 = vld [vmem:[%s239 + $0x64] sm:$0xf]
      %v516 = vld [vmem:[%s239 + $0x68] sm:$0xf]
      %v517 = vld [vmem:[%s239 + $0x6c] sm:$0xf]
      %v518 = vld [vmem:[%s239 + $0x70] sm:$0xf]
      %v519 = vld [vmem:[%s239 + $0x74] sm:$0xf]
      %v520 = vld [vmem:[%s239 + $0x78] sm:$0xf]
      %v521 = vld [vmem:[%s239 + $0x7c] sm:$0xf]
      %v554 = vunpack.c.l.b16 %v458
      %v555 = vunpack.c.l.b16 %v459
      %v556 = vunpack.c.l.b16 %v460
      %v557 = vunpack.c.l.b16 %v461
      %v558 = vunpack.c.l.b16 %v462
      %v559 = vunpack.c.l.b16 %v463
      %v560 = vunpack.c.l.b16 %v464
      %v561 = vunpack.c.l.b16 %v465
      %v562 = vunpack.c.l.b16 %v466
      %v563 = vunpack.c.l.b16 %v467
      %v564 = vunpack.c.l.b16 %v468
      %v565 = vunpack.c.l.b16 %v469
      %v566 = vunpack.c.l.b16 %v470
      %v567 = vunpack.c.l.b16 %v471
      %v568 = vunpack.c.l.b16 %v472
      %v569 = vunpack.c.l.b16 %v473
      %v570 = vunpack.c.l.b16 %v474
      %v571 = vunpack.c.l.b16 %v475
      %v572 = vunpack.c.l.b16 %v476
      %v573 = vunpack.c.l.b16 %v477
      %v574 = vunpack.c.l.b16 %v478
      %v575 = vunpack.c.l.b16 %v479
      %v576 = vunpack.c.l.b16 %v480
      %v577 = vunpack.c.l.b16 %v481
      %v578 = vunpack.c.l.b16 %v482
      %v579 = vunpack.c.l.b16 %v483
      %v580 = vunpack.c.l.b16 %v484
      %v581 = vunpack.c.l.b16 %v485
      %v582 = vunpack.c.l.b16 %v486
      %v583 = vunpack.c.l.b16 %v487
      %v584 = vunpack.c.l.b16 %v488
      %v585 = vunpack.c.l.b16 %v489
      %v586 = vpack.c.b16 %v555, %v554
      %v587 = vpack.c.b16 %v557, %v556
      %v588 = vpack.c.b16 %v559, %v558
      %v589 = vpack.c.b16 %v561, %v560
      %v590 = vpack.c.b16 %v563, %v562
      %v591 = vpack.c.b16 %v565, %v564
      %v592 = vpack.c.b16 %v567, %v566
      %v593 = vpack.c.b16 %v569, %v568
      %v594 = vpack.c.b16 %v571, %v570
      %v595 = vpack.c.b16 %v573, %v572
      %v596 = vpack.c.b16 %v575, %v574
      %v597 = vpack.c.b16 %v577, %v576
      %v598 = vpack.c.b16 %v579, %v578
      %v599 = vpack.c.b16 %v581, %v580
      %v600 = vpack.c.b16 %v583, %v582
      %v601 = vpack.c.b16 %v585, %v584
      %v603 = vshrl.u32 %v586, 16
      %v605 = vrot.slane %v603, 7
      %v606 = vshll.u32 %v586, 16
      %v608 = vor.u32 %v605, %v606
      %v610 = vshrl.u32 %v587, 16
      %v612 = vrot.slane %v610, 7
      %v613 = vshll.u32 %v587, 16
      %v615 = vor.u32 %v612, %v613
      %v617 = vshrl.u32 %v588, 16
      %v619 = vrot.slane %v617, 7
      %v620 = vshll.u32 %v588, 16
      %v622 = vor.u32 %v619, %v620
      %v624 = vshrl.u32 %v589, 16
      %v626 = vrot.slane %v624, 7
      %v627 = vshll.u32 %v589, 16
      %v629 = vor.u32 %v626, %v627
      %v631 = vshrl.u32 %v590, 16
      %v633 = vrot.slane %v631, 7
      %v634 = vshll.u32 %v590, 16
      %v636 = vor.u32 %v633, %v634
      %v638 = vshrl.u32 %v591, 16
      %v640 = vrot.slane %v638, 7
      %v641 = vshll.u32 %v591, 16
      %v643 = vor.u32 %v640, %v641
      %v645 = vshrl.u32 %v592, 16
      %v647 = vrot.slane %v645, 7
      %v648 = vshll.u32 %v592, 16
      %v650 = vor.u32 %v647, %v648
      %v652 = vshrl.u32 %v593, 16
      %v654 = vrot.slane %v652, 7
      %v655 = vshll.u32 %v593, 16
      %v657 = vor.u32 %v654, %v655
      %v659 = vshrl.u32 %v594, 16
      %v661 = vrot.slane %v659, 7
      %v662 = vshll.u32 %v594, 16
      %v664 = vor.u32 %v661, %v662
      %v666 = vshrl.u32 %v595, 16
      %v668 = vrot.slane %v666, 7
      %v669 = vshll.u32 %v595, 16
      %v671 = vor.u32 %v668, %v669
      %v673 = vshrl.u32 %v596, 16
      %v675 = vrot.slane %v673, 7
      %v676 = vshll.u32 %v596, 16
      %v678 = vor.u32 %v675, %v676
      %v680 = vshrl.u32 %v597, 16
      %v682 = vrot.slane %v680, 7
      %v683 = vshll.u32 %v597, 16
      %v685 = vor.u32 %v682, %v683
      %v687 = vshrl.u32 %v598, 16
      %v689 = vrot.slane %v687, 7
      %v690 = vshll.u32 %v598, 16
      %v692 = vor.u32 %v689, %v690
      %v694 = vshrl.u32 %v599, 16
      %v696 = vrot.slane %v694, 7
      %v697 = vshll.u32 %v599, 16
      %v699 = vor.u32 %v696, %v697
      %v701 = vshrl.u32 %v600, 16
      %v703 = vrot.slane %v701, 7
      %v704 = vshll.u32 %v600, 16
      %v706 = vor.u32 %v703, %v704
      %v708 = vshrl.u32 %v601, 16
      %v710 = vrot.slane %v708, 7
      %v711 = vshll.u32 %v601, 16
      %v713 = vor.u32 %v710, %v711
      %vm730 = vcmask 1047552
      %vm731 = vsmask.f32 7938
      %vm732 = vmand %vm730, %vm731
      %v733 = vld [vmem:[%s259] sm:$0xff]
      %v734 = vsel %vm732, %v608, %v733
      %735 = vst [vmem:[%s259] sm:$0xff] %v734
      %v736 = vld [vmem:[%s259 + $0x30] sm:$0xff]
      %v737 = vsel %vm732, %v615, %v736
      %738 = vst [vmem:[%s259 + $0x30] sm:$0xff] %v737
      %v739 = vld [vmem:[%s259 + $0x60] sm:$0xff]
      %v740 = vsel %vm732, %v622, %v739
      %741 = vst [vmem:[%s259 + $0x60] sm:$0xff] %v740
      %v742 = vld [vmem:[%s259 + $0x90] sm:$0xff]
      %v743 = vsel %vm732, %v629, %v742
      %744 = vst [vmem:[%s259 + $0x90] sm:$0xff] %v743
      %v745 = vld [vmem:[%s259 + $0xc0] sm:$0xff]
      %v746 = vsel %vm732, %v636, %v745
      %747 = vst [vmem:[%s259 + $0xc0] sm:$0xff] %v746
      %v748 = vld [vmem:[%s259 + $0xf0] sm:$0xff]
      %v749 = vsel %vm732, %v643, %v748
      %750 = vst [vmem:[%s259 + $0xf0] sm:$0xff] %v749
      %v751 = vld [vmem:[%s259 + $0x120] sm:$0xff]
      %v752 = vsel %vm732, %v650, %v751
      %753 = vst [vmem:[%s259 + $0x120] sm:$0xff] %v752
      %v754 = vld [vmem:[%s259 + $0x150] sm:$0xff]
      %v755 = vsel %vm732, %v657, %v754
      %756 = vst [vmem:[%s259 + $0x150] sm:$0xff] %v755
      %v757 = vld [vmem:[%s259 + $0x180] sm:$0xff]
      %v758 = vsel %vm732, %v664, %v757
      %759 = vst [vmem:[%s259 + $0x180] sm:$0xff] %v758
      %v760 = vld [vmem:[%s259 + $0x1b0] sm:$0xff]
      %v761 = vsel %vm732, %v671, %v760
      %762 = vst [vmem:[%s259 + $0x1b0] sm:$0xff] %v761
      %v763 = vld [vmem:[%s259 + $0x1e0] sm:$0xff]
      %v764 = vsel %vm732, %v678, %v763
      %765 = vst [vmem:[%s259 + $0x1e0] sm:$0xff] %v764
      %v766 = vld [vmem:[%s259 + $0x210] sm:$0xff]
      %v767 = vsel %vm732, %v685, %v766
      %768 = vst [vmem:[%s259 + $0x210] sm:$0xff] %v767
      %v769 = vld [vmem:[%s259 + $0x240] sm:$0xff]
      %v770 = vsel %vm732, %v692, %v769
      %771 = vst [vmem:[%s259 + $0x240] sm:$0xff] %v770
      %v772 = vld [vmem:[%s259 + $0x270] sm:$0xff]
      %v773 = vsel %vm732, %v699, %v772
      %774 = vst [vmem:[%s259 + $0x270] sm:$0xff] %v773
      %v775 = vld [vmem:[%s259 + $0x2a0] sm:$0xff]
      %v776 = vsel %vm732, %v706, %v775
      %777 = vst [vmem:[%s259 + $0x2a0] sm:$0xff] %v776
      %v778 = vld [vmem:[%s259 + $0x2d0] sm:$0xff]
      %v779 = vsel %vm732, %v713, %v778
      %780 = vst [vmem:[%s259 + $0x2d0] sm:$0xff] %v779
      %v813 = vunpack.c.l.b16 %v490
      %v814 = vunpack.c.l.b16 %v491
      %v815 = vunpack.c.l.b16 %v492
      %v816 = vunpack.c.l.b16 %v493
      %v817 = vunpack.c.l.b16 %v494
      %v818 = vunpack.c.l.b16 %v495
      %v819 = vunpack.c.l.b16 %v496
      %v820 = vunpack.c.l.b16 %v497
      %v821 = vunpack.c.l.b16 %v498
      %v822 = vunpack.c.l.b16 %v499
      %v823 = vunpack.c.l.b16 %v500
      %v824 = vunpack.c.l.b16 %v501
      %v825 = vunpack.c.l.b16 %v502
      %v826 = vunpack.c.l.b16 %v503
      %v827 = vunpack.c.l.b16 %v504
      %v828 = vunpack.c.l.b16 %v505
      %v829 = vunpack.c.l.b16 %v506
      %v830 = vunpack.c.l.b16 %v507
      %v831 = vunpack.c.l.b16 %v508
      %v832 = vunpack.c.l.b16 %v509
      %v833 = vunpack.c.l.b16 %v510
      %v834 = vunpack.c.l.b16 %v511
      %v835 = vunpack.c.l.b16 %v512
      %v836 = vunpack.c.l.b16 %v513
      %v837 = vunpack.c.l.b16 %v514
      %v838 = vunpack.c.l.b16 %v515
      %v839 = vunpack.c.l.b16 %v516
      %v840 = vunpack.c.l.b16 %v517
      %v841 = vunpack.c.l.b16 %v518
      %v842 = vunpack.c.l.b16 %v519
      %v843 = vunpack.c.l.b16 %v520
      %v844 = vunpack.c.l.b16 %v521
      %v845 = vpack.c.b16 %v814, %v813
      %v846 = vpack.c.b16 %v816, %v815
      %v847 = vpack.c.b16 %v818, %v817
      %v848 = vpack.c.b16 %v820, %v819
      %v849 = vpack.c.b16 %v822, %v821
      %v850 = vpack.c.b16 %v824, %v823
      %v851 = vpack.c.b16 %v826, %v825
      %v852 = vpack.c.b16 %v828, %v827
      %v853 = vpack.c.b16 %v830, %v829
      %v854 = vpack.c.b16 %v832, %v831
      %v855 = vpack.c.b16 %v834, %v833
      %v856 = vpack.c.b16 %v836, %v835
      %v857 = vpack.c.b16 %v838, %v837
      %v858 = vpack.c.b16 %v840, %v839
      %v859 = vpack.c.b16 %v842, %v841
      %v860 = vpack.c.b16 %v844, %v843
      %v862 = vshrl.u32 %v845, 16
      %v864 = vrot.slane %v862, 7
      %v865 = vshll.u32 %v845, 16
      %v867 = vor.u32 %v864, %v865
      %v869 = vshrl.u32 %v846, 16
      %v871 = vrot.slane %v869, 7
      %v872 = vshll.u32 %v846, 16
      %v874 = vor.u32 %v871, %v872
      %v876 = vshrl.u32 %v847, 16
      %v878 = vrot.slane %v876, 7
      %v879 = vshll.u32 %v847, 16
      %v881 = vor.u32 %v878, %v879
      %v883 = vshrl.u32 %v848, 16
      %v885 = vrot.slane %v883, 7
      %v886 = vshll.u32 %v848, 16
      %v888 = vor.u32 %v885, %v886
      %v890 = vshrl.u32 %v849, 16
      %v892 = vrot.slane %v890, 7
      %v893 = vshll.u32 %v849, 16
      %v895 = vor.u32 %v892, %v893
      %v897 = vshrl.u32 %v850, 16
      %v899 = vrot.slane %v897, 7
      %v900 = vshll.u32 %v850, 16
      %v902 = vor.u32 %v899, %v900
      %v904 = vshrl.u32 %v851, 16
      %v906 = vrot.slane %v904, 7
      %v907 = vshll.u32 %v851, 16
      %v909 = vor.u32 %v906, %v907
      %v911 = vshrl.u32 %v852, 16
      %v913 = vrot.slane %v911, 7
      %v914 = vshll.u32 %v852, 16
      %v916 = vor.u32 %v913, %v914
      %v918 = vshrl.u32 %v853, 16
      %v920 = vrot.slane %v918, 7
      %v921 = vshll.u32 %v853, 16
      %v923 = vor.u32 %v920, %v921
      %v925 = vshrl.u32 %v854, 16
      %v927 = vrot.slane %v925, 7
      %v928 = vshll.u32 %v854, 16
      %v930 = vor.u32 %v927, %v928
      %v932 = vshrl.u32 %v855, 16
      %v934 = vrot.slane %v932, 7
      %v935 = vshll.u32 %v855, 16
      %v937 = vor.u32 %v934, %v935
      %v939 = vshrl.u32 %v856, 16
      %v941 = vrot.slane %v939, 7
      %v942 = vshll.u32 %v856, 16
      %v944 = vor.u32 %v941, %v942
      %v946 = vshrl.u32 %v857, 16
      %v948 = vrot.slane %v946, 7
      %v949 = vshll.u32 %v857, 16
      %v951 = vor.u32 %v948, %v949
      %v953 = vshrl.u32 %v858, 16
      %v955 = vrot.slane %v953, 7
      %v956 = vshll.u32 %v858, 16
      %v958 = vor.u32 %v955, %v956
      %v960 = vshrl.u32 %v859, 16
      %v962 = vrot.slane %v960, 7
      %v963 = vshll.u32 %v859, 16
      %v965 = vor.u32 %v962, %v963
      %v967 = vshrl.u32 %v860, 16
      %v969 = vrot.slane %v967, 7
      %v970 = vshll.u32 %v860, 16
      %v972 = vor.u32 %v969, %v970
      %v989 = vld [vmem:[%s259 + $0x8] sm:$0xff]
      %v990 = vsel %vm732, %v867, %v989
      %991 = vst [vmem:[%s259 + $0x8] sm:$0xff] %v990
      %v992 = vld [vmem:[%s259 + $0x38] sm:$0xff]
      %v993 = vsel %vm732, %v874, %v992
      %994 = vst [vmem:[%s259 + $0x38] sm:$0xff] %v993
      %v995 = vld [vmem:[%s259 + $0x68] sm:$0xff]
      %v996 = vsel %vm732, %v881, %v995
      %997 = vst [vmem:[%s259 + $0x68] sm:$0xff] %v996
      %v998 = vld [vmem:[%s259 + $0x98] sm:$0xff]
      %v999 = vsel %vm732, %v888, %v998
      %1000 = vst [vmem:[%s259 + $0x98] sm:$0xff] %v999
      %v1001 = vld [vmem:[%s259 + $0xc8] sm:$0xff]
      %v1002 = vsel %vm732, %v895, %v1001
      %1003 = vst [vmem:[%s259 + $0xc8] sm:$0xff] %v1002
      %v1004 = vld [vmem:[%s259 + $0xf8] sm:$0xff]
      %v1005 = vsel %vm732, %v902, %v1004
      %1006 = vst [vmem:[%s259 + $0xf8] sm:$0xff] %v1005
      %v1007 = vld [vmem:[%s259 + $0x128] sm:$0xff]
      %v1008 = vsel %vm732, %v909, %v1007
      %1009 = vst [vmem:[%s259 + $0x128] sm:$0xff] %v1008
      %v1010 = vld [vmem:[%s259 + $0x158] sm:$0xff]
      %v1011 = vsel %vm732, %v916, %v1010
      %1012 = vst [vmem:[%s259 + $0x158] sm:$0xff] %v1011
      %v1013 = vld [vmem:[%s259 + $0x188] sm:$0xff]
      %v1014 = vsel %vm732, %v923, %v1013
      %1015 = vst [vmem:[%s259 + $0x188] sm:$0xff] %v1014
      %v1016 = vld [vmem:[%s259 + $0x1b8] sm:$0xff]
      %v1017 = vsel %vm732, %v930, %v1016
      %1018 = vst [vmem:[%s259 + $0x1b8] sm:$0xff] %v1017
      %v1019 = vld [vmem:[%s259 + $0x1e8] sm:$0xff]
      %v1020 = vsel %vm732, %v937, %v1019
      %1021 = vst [vmem:[%s259 + $0x1e8] sm:$0xff] %v1020
      %v1022 = vld [vmem:[%s259 + $0x218] sm:$0xff]
      %v1023 = vsel %vm732, %v944, %v1022
      %1024 = vst [vmem:[%s259 + $0x218] sm:$0xff] %v1023
      %v1025 = vld [vmem:[%s259 + $0x248] sm:$0xff]
      %v1026 = vsel %vm732, %v951, %v1025
      %1027 = vst [vmem:[%s259 + $0x248] sm:$0xff] %v1026
      %v1028 = vld [vmem:[%s259 + $0x278] sm:$0xff]
      %v1029 = vsel %vm732, %v958, %v1028
      %1030 = vst [vmem:[%s259 + $0x278] sm:$0xff] %v1029
      %v1031 = vld [vmem:[%s259 + $0x2a8] sm:$0xff]
      %v1032 = vsel %vm732, %v965, %v1031
      %1033 = vst [vmem:[%s259 + $0x2a8] sm:$0xff] %v1032
      %v1034 = vld [vmem:[%s259 + $0x2d8] sm:$0xff]
      %v1035 = vsel %vm732, %v972, %v1034
      %1036 = vst [vmem:[%s259 + $0x2d8] sm:$0xff] %v1035
      %1053 = vst [vmem:[%s259 + $0x10] sm:$0xff] %v586
      %1054 = vst [vmem:[%s259 + $0x40] sm:$0xff] %v587
      %1055 = vst [vmem:[%s259 + $0x70] sm:$0xff] %v588
      %1056 = vst [vmem:[%s259 + $0xa0] sm:$0xff] %v589
      %1057 = vst [vmem:[%s259 + $0xd0] sm:$0xff] %v590
      %1058 = vst [vmem:[%s259 + $0x100] sm:$0xff] %v591
      %1059 = vst [vmem:[%s259 + $0x130] sm:$0xff] %v592
      %1060 = vst [vmem:[%s259 + $0x160] sm:$0xff] %v593
      %1061 = vst [vmem:[%s259 + $0x190] sm:$0xff] %v594
      %1062 = vst [vmem:[%s259 + $0x1c0] sm:$0xff] %v595
      %1063 = vst [vmem:[%s259 + $0x1f0] sm:$0xff] %v596
      %1064 = vst [vmem:[%s259 + $0x220] sm:$0xff] %v597
      %1065 = vst [vmem:[%s259 + $0x250] sm:$0xff] %v598
      %1066 = vst [vmem:[%s259 + $0x280] sm:$0xff] %v599
      %1067 = vst [vmem:[%s259 + $0x2b0] sm:$0xff] %v600
      %1068 = vst [vmem:[%s259 + $0x2e0] sm:$0xff] %v601
      %1085 = vst [vmem:[%s259 + $0x18] sm:$0xff] %v845
      %1086 = vst [vmem:[%s259 + $0x48] sm:$0xff] %v846
      %1087 = vst [vmem:[%s259 + $0x78] sm:$0xff] %v847
      %1088 = vst [vmem:[%s259 + $0xa8] sm:$0xff] %v848
      %1089 = vst [vmem:[%s259 + $0xd8] sm:$0xff] %v849
      %1090 = vst [vmem:[%s259 + $0x108] sm:$0xff] %v850
      %1091 = vst [vmem:[%s259 + $0x138] sm:$0xff] %v851
      %1092 = vst [vmem:[%s259 + $0x168] sm:$0xff] %v852
      %1093 = vst [vmem:[%s259 + $0x198] sm:$0xff] %v853
      %1094 = vst [vmem:[%s259 + $0x1c8] sm:$0xff] %v854
      %1095 = vst [vmem:[%s259 + $0x1f8] sm:$0xff] %v855
      %1096 = vst [vmem:[%s259 + $0x228] sm:$0xff] %v856
      %1097 = vst [vmem:[%s259 + $0x258] sm:$0xff] %v857
      %1098 = vst [vmem:[%s259 + $0x288] sm:$0xff] %v858
      %1099 = vst [vmem:[%s259 + $0x2b8] sm:$0xff] %v859
      %1100 = vst [vmem:[%s259 + $0x2e8] sm:$0xff] %v860
      %v1101 = vrot.slane %v606, 1
      %v1102 = vor.u32 %v603, %v1101
      %v1103 = vrot.slane %v613, 1
      %v1104 = vor.u32 %v610, %v1103
      %v1105 = vrot.slane %v620, 1
      %v1106 = vor.u32 %v617, %v1105
      %v1107 = vrot.slane %v627, 1
      %v1108 = vor.u32 %v624, %v1107
      %v1109 = vrot.slane %v634, 1
      %v1110 = vor.u32 %v631, %v1109
      %v1111 = vrot.slane %v641, 1
      %v1112 = vor.u32 %v638, %v1111
      %v1113 = vrot.slane %v648, 1
      %v1114 = vor.u32 %v645, %v1113
      %v1115 = vrot.slane %v655, 1
      %v1116 = vor.u32 %v652, %v1115
      %v1117 = vrot.slane %v662, 1
      %v1118 = vor.u32 %v659, %v1117
      %v1119 = vrot.slane %v669, 1
      %v1120 = vor.u32 %v666, %v1119
      %v1121 = vrot.slane %v676, 1
      %v1122 = vor.u32 %v673, %v1121
      %v1123 = vrot.slane %v683, 1
      %v1124 = vor.u32 %v680, %v1123
      %v1125 = vrot.slane %v690, 1
      %v1126 = vor.u32 %v687, %v1125
      %v1127 = vrot.slane %v697, 1
      %v1128 = vor.u32 %v694, %v1127
      %v1129 = vrot.slane %v704, 1
      %v1130 = vor.u32 %v701, %v1129
      %v1131 = vrot.slane %v711, 1
      %v1132 = vor.u32 %v708, %v1131
      %vm1149 = vsmask.f32 7424
      %vm1150 = vmand %vm730, %vm1149
      %v1151 = vld [vmem:[%s259 + $0x20] sm:$0xff]
      %v1152 = vsel %vm1150, %v1102, %v1151
      %1153 = vst [vmem:[%s259 + $0x20] sm:$0xff] %v1152
      %v1154 = vld [vmem:[%s259 + $0x50] sm:$0xff]
      %v1155 = vsel %vm1150, %v1104, %v1154
      %1156 = vst [vmem:[%s259 + $0x50] sm:$0xff] %v1155
      %v1157 = vld [vmem:[%s259 + $0x80] sm:$0xff]
      %v1158 = vsel %vm1150, %v1106, %v1157
      %1159 = vst [vmem:[%s259 + $0x80] sm:$0xff] %v1158
      %v1160 = vld [vmem:[%s259 + $0xb0] sm:$0xff]
      %v1161 = vsel %vm1150, %v1108, %v1160
      %1162 = vst [vmem:[%s259 + $0xb0] sm:$0xff] %v1161
      %v1163 = vld [vmem:[%s259 + $0xe0] sm:$0xff]
      %v1164 = vsel %vm1150, %v1110, %v1163
      %1165 = vst [vmem:[%s259 + $0xe0] sm:$0xff] %v1164
      %v1166 = vld [vmem:[%s259 + $0x110] sm:$0xff]
      %v1167 = vsel %vm1150, %v1112, %v1166
      %1168 = vst [vmem:[%s259 + $0x110] sm:$0xff] %v1167
      %v1169 = vld [vmem:[%s259 + $0x140] sm:$0xff]
      %v1170 = vsel %vm1150, %v1114, %v1169
      %1171 = vst [vmem:[%s259 + $0x140] sm:$0xff] %v1170
      %v1172 = vld [vmem:[%s259 + $0x170] sm:$0xff]
      %v1173 = vsel %vm1150, %v1116, %v1172
      %1174 = vst [vmem:[%s259 + $0x170] sm:$0xff] %v1173
      %v1175 = vld [vmem:[%s259 + $0x1a0] sm:$0xff]
      %v1176 = vsel %vm1150, %v1118, %v1175
      %1177 = vst [vmem:[%s259 + $0x1a0] sm:$0xff] %v1176
      %v1178 = vld [vmem:[%s259 + $0x1d0] sm:$0xff]
      %v1179 = vsel %vm1150, %v1120, %v1178
      %1180 = vst [vmem:[%s259 + $0x1d0] sm:$0xff] %v1179
      %v1181 = vld [vmem:[%s259 + $0x200] sm:$0xff]
      %v1182 = vsel %vm1150, %v1122, %v1181
      %1183 = vst [vmem:[%s259 + $0x200] sm:$0xff] %v1182
      %v1184 = vld [vmem:[%s259 + $0x230] sm:$0xff]
      %v1185 = vsel %vm1150, %v1124, %v1184
      %1186 = vst [vmem:[%s259 + $0x230] sm:$0xff] %v1185
      %v1187 = vld [vmem:[%s259 + $0x260] sm:$0xff]
      %v1188 = vsel %vm1150, %v1126, %v1187
      %1189 = vst [vmem:[%s259 + $0x260] sm:$0xff] %v1188
      %v1190 = vld [vmem:[%s259 + $0x290] sm:$0xff]
      %v1191 = vsel %vm1150, %v1128, %v1190
      %1192 = vst [vmem:[%s259 + $0x290] sm:$0xff] %v1191
      %v1193 = vld [vmem:[%s259 + $0x2c0] sm:$0xff]
      %v1194 = vsel %vm1150, %v1130, %v1193
      %1195 = vst [vmem:[%s259 + $0x2c0] sm:$0xff] %v1194
      %v1196 = vld [vmem:[%s259 + $0x2f0] sm:$0xff]
      %v1197 = vsel %vm1150, %v1132, %v1196
      %1198 = vst [vmem:[%s259 + $0x2f0] sm:$0xff] %v1197
      %v1199 = vrot.slane %v865, 1
      %v1200 = vor.u32 %v862, %v1199
      %v1201 = vrot.slane %v872, 1
      %v1202 = vor.u32 %v869, %v1201
      %v1203 = vrot.slane %v879, 1
      %v1204 = vor.u32 %v876, %v1203
      %v1205 = vrot.slane %v886, 1
      %v1206 = vor.u32 %v883, %v1205
      %v1207 = vrot.slane %v893, 1
      %v1208 = vor.u32 %v890, %v1207
      %v1209 = vrot.slane %v900, 1
      %v1210 = vor.u32 %v897, %v1209
      %v1211 = vrot.slane %v907, 1
      %v1212 = vor.u32 %v904, %v1211
      %v1213 = vrot.slane %v914, 1
      %v1214 = vor.u32 %v911, %v1213
      %v1215 = vrot.slane %v921, 1
      %v1216 = vor.u32 %v918, %v1215
      %v1217 = vrot.slane %v928, 1
      %v1218 = vor.u32 %v925, %v1217
      %v1219 = vrot.slane %v935, 1
      %v1220 = vor.u32 %v932, %v1219
      %v1221 = vrot.slane %v942, 1
      %v1222 = vor.u32 %v939, %v1221
      %v1223 = vrot.slane %v949, 1
      %v1224 = vor.u32 %v946, %v1223
      %v1225 = vrot.slane %v956, 1
      %v1226 = vor.u32 %v953, %v1225
      %v1227 = vrot.slane %v963, 1
      %v1228 = vor.u32 %v960, %v1227
      %v1229 = vrot.slane %v970, 1
      %v1230 = vor.u32 %v967, %v1229
      %v1247 = vld [vmem:[%s259 + $0x28] sm:$0xff]
      %v1248 = vsel %vm1150, %v1200, %v1247
      %1249 = vst [vmem:[%s259 + $0x28] sm:$0xff] %v1248
      %v1250 = vld [vmem:[%s259 + $0x58] sm:$0xff]
      %v1251 = vsel %vm1150, %v1202, %v1250
      %1252 = vst [vmem:[%s259 + $0x58] sm:$0xff] %v1251
      %v1253 = vld [vmem:[%s259 + $0x88] sm:$0xff]
      %v1254 = vsel %vm1150, %v1204, %v1253
      %1255 = vst [vmem:[%s259 + $0x88] sm:$0xff] %v1254
      %v1256 = vld [vmem:[%s259 + $0xb8] sm:$0xff]
      %v1257 = vsel %vm1150, %v1206, %v1256
      %1258 = vst [vmem:[%s259 + $0xb8] sm:$0xff] %v1257
      %v1259 = vld [vmem:[%s259 + $0xe8] sm:$0xff]
      %v1260 = vsel %vm1150, %v1208, %v1259
      %1261 = vst [vmem:[%s259 + $0xe8] sm:$0xff] %v1260
      %v1262 = vld [vmem:[%s259 + $0x118] sm:$0xff]
      %v1263 = vsel %vm1150, %v1210, %v1262
      %1264 = vst [vmem:[%s259 + $0x118] sm:$0xff] %v1263
      %v1265 = vld [vmem:[%s259 + $0x148] sm:$0xff]
      %v1266 = vsel %vm1150, %v1212, %v1265
      %1267 = vst [vmem:[%s259 + $0x148] sm:$0xff] %v1266
      %v1268 = vld [vmem:[%s259 + $0x178] sm:$0xff]
      %v1269 = vsel %vm1150, %v1214, %v1268
      %1270 = vst [vmem:[%s259 + $0x178] sm:$0xff] %v1269
      %v1271 = vld [vmem:[%s259 + $0x1a8] sm:$0xff]
      %v1272 = vsel %vm1150, %v1216, %v1271
      %1273 = vst [vmem:[%s259 + $0x1a8] sm:$0xff] %v1272
      %v1274 = vld [vmem:[%s259 + $0x1d8] sm:$0xff]
      %v1275 = vsel %vm1150, %v1218, %v1274
      %1276 = vst [vmem:[%s259 + $0x1d8] sm:$0xff] %v1275
      %v1277 = vld [vmem:[%s259 + $0x208] sm:$0xff]
      %v1278 = vsel %vm1150, %v1220, %v1277
      %1279 = vst [vmem:[%s259 + $0x208] sm:$0xff] %v1278
      %v1280 = vld [vmem:[%s259 + $0x238] sm:$0xff]
      %v1281 = vsel %vm1150, %v1222, %v1280
      %1282 = vst [vmem:[%s259 + $0x238] sm:$0xff] %v1281
      %v1283 = vld [vmem:[%s259 + $0x268] sm:$0xff]
      %v1284 = vsel %vm1150, %v1224, %v1283
      %1285 = vst [vmem:[%s259 + $0x268] sm:$0xff] %v1284
      %v1286 = vld [vmem:[%s259 + $0x298] sm:$0xff]
      %v1287 = vsel %vm1150, %v1226, %v1286
      %1288 = vst [vmem:[%s259 + $0x298] sm:$0xff] %v1287
      %v1289 = vld [vmem:[%s259 + $0x2c8] sm:$0xff]
      %v1290 = vsel %vm1150, %v1228, %v1289
      %1291 = vst [vmem:[%s259 + $0x2c8] sm:$0xff] %v1290
      %v1292 = vld [vmem:[%s259 + $0x2f8] sm:$0xff]
      %v1293 = vsel %vm1150, %v1230, %v1292
      %1294 = vst [vmem:[%s259 + $0x2f8] sm:$0xff] %v1293
      %v1295 = vld [vmem:[#allocation2] sm:$0xff]
      %v1296 = vld [vmem:[#allocation2 + $0x8] sm:$0xff]
      %v1297 = vld [vmem:[#allocation2 + $0x10] sm:$0xff]
      %v1298 = vld [vmem:[#allocation2 + $0x18] sm:$0xff]
      %v1299 = vld [vmem:[#allocation2 + $0x20] sm:$0xff]
      %v1300 = vld [vmem:[#allocation2 + $0x28] sm:$0xff]
      %v1301 = vld [vmem:[#allocation2 + $0x30] sm:$0xff]
      %v1302 = vld [vmem:[#allocation2 + $0x38] sm:$0xff]
      %v1303 = vld [vmem:[#allocation2 + $0x40] sm:$0xff]
      %v1304 = vld [vmem:[#allocation2 + $0x48] sm:$0xff]
      %v1305 = vld [vmem:[#allocation2 + $0x50] sm:$0xff]
      %v1306 = vld [vmem:[#allocation2 + $0x58] sm:$0xff]
      %v1307 = vld [vmem:[#allocation2 + $0x60] sm:$0xff]
      %v1308 = vld [vmem:[#allocation2 + $0x68] sm:$0xff]
      %v1309 = vld [vmem:[#allocation2 + $0x70] sm:$0xff]
      %v1310 = vld [vmem:[#allocation2 + $0x78] sm:$0xff]
      %v1311 = vld [vmem:[#allocation2 + $0x80] sm:$0xff]
      %v1312 = vld [vmem:[#allocation2 + $0x88] sm:$0xff]
      %v1313 = vld [vmem:[#allocation2 + $0x90] sm:$0xff]
      %v1314 = vld [vmem:[#allocation2 + $0x98] sm:$0xff]
      %v1315 = vld [vmem:[#allocation2 + $0xa0] sm:$0xff]
      %v1316 = vld [vmem:[#allocation2 + $0xa8] sm:$0xff]
      %v1317 = vld [vmem:[#allocation2 + $0xb0] sm:$0xff]
      %v1318 = vld [vmem:[#allocation2 + $0xb8] sm:$0xff]
      %v1319 = vld [vmem:[#allocation2 + $0xc0] sm:$0xff]
      %v1320 = vld [vmem:[#allocation2 + $0xc8] sm:$0xff]
      %v1321 = vld [vmem:[#allocation2 + $0xd0] sm:$0xff]
      %v1322 = vld [vmem:[#allocation2 + $0xd8] sm:$0xff]
      %v1323 = vld [vmem:[#allocation2 + $0xe0] sm:$0xff]
      %v1324 = vld [vmem:[#allocation2 + $0xe8] sm:$0xff]
      %v1325 = vld [vmem:[#allocation2 + $0xf0] sm:$0xff]
      %v1326 = vld [vmem:[#allocation2 + $0xf8] sm:$0xff]
      %v1327 = vld [vmem:[#allocation2 + $0x100] sm:$0xff]
      %v1328 = vld [vmem:[#allocation2 + $0x108] sm:$0xff]
      %v1329 = vld [vmem:[#allocation2 + $0x110] sm:$0xff]
      %v1330 = vld [vmem:[#allocation2 + $0x118] sm:$0xff]
      %v1331 = vld [vmem:[#allocation2 + $0x120] sm:$0xff]
      %v1332 = vld [vmem:[#allocation2 + $0x128] sm:$0xff]
      %v1333 = vld [vmem:[#allocation2 + $0x130] sm:$0xff]
      %v1334 = vld [vmem:[#allocation2 + $0x138] sm:$0xff]
      %v1335 = vld [vmem:[#allocation2 + $0x140] sm:$0xff]
      %v1336 = vld [vmem:[#allocation2 + $0x148] sm:$0xff]
      %v1337 = vld [vmem:[#allocation2 + $0x150] sm:$0xff]
      %v1338 = vld [vmem:[#allocation2 + $0x158] sm:$0xff]
      %v1339 = vld [vmem:[#allocation2 + $0x160] sm:$0xff]
      %v1340 = vld [vmem:[#allocation2 + $0x168] sm:$0xff]
      %v1341 = vld [vmem:[#allocation2 + $0x170] sm:$0xff]
      %v1342 = vld [vmem:[#allocation2 + $0x178] sm:$0xff]
      %v1343 = vld [vmem:[#allocation2 + $0x180] sm:$0xff]
      %v1344 = vld [vmem:[#allocation2 + $0x188] sm:$0xff]
      %v1345 = vld [vmem:[#allocation2 + $0x190] sm:$0xff]
      %v1346 = vld [vmem:[#allocation2 + $0x198] sm:$0xff]
      %v1347 = vld [vmem:[#allocation2 + $0x1a0] sm:$0xff]
      %v1348 = vld [vmem:[#allocation2 + $0x1a8] sm:$0xff]
      %v1349 = vld [vmem:[#allocation2 + $0x1b0] sm:$0xff]
      %v1350 = vld [vmem:[#allocation2 + $0x1b8] sm:$0xff]
      %v1351 = vld [vmem:[#allocation2 + $0x1c0] sm:$0xff]
      %v1352 = vld [vmem:[#allocation2 + $0x1c8] sm:$0xff]
      %v1353 = vld [vmem:[#allocation2 + $0x1d0] sm:$0xff]
      %v1354 = vld [vmem:[#allocation2 + $0x1d8] sm:$0xff]
      %v1355 = vld [vmem:[#allocation2 + $0x1e0] sm:$0xff]
      %v1356 = vld [vmem:[#allocation2 + $0x1e8] sm:$0xff]
      %v1357 = vld [vmem:[#allocation2 + $0x1f0] sm:$0xff]
      %v1358 = vld [vmem:[#allocation2 + $0x1f8] sm:$0xff]
      %v1359 = vld [vmem:[#allocation2 + $0x200] sm:$0xff]
      %v1360 = vld [vmem:[#allocation2 + $0x208] sm:$0xff]
      %v1361 = vld [vmem:[#allocation2 + $0x210] sm:$0xff]
      %v1362 = vld [vmem:[#allocation2 + $0x218] sm:$0xff]
      %v1363 = vld [vmem:[#allocation2 + $0x220] sm:$0xff]
      %v1364 = vld [vmem:[#allocation2 + $0x228] sm:$0xff]
      %v1365 = vld [vmem:[#allocation2 + $0x230] sm:$0xff]
      %v1366 = vld [vmem:[#allocation2 + $0x238] sm:$0xff]
      %v1367 = vld [vmem:[#allocation2 + $0x240] sm:$0xff]
      %v1368 = vld [vmem:[#allocation2 + $0x248] sm:$0xff]
      %v1369 = vld [vmem:[#allocation2 + $0x250] sm:$0xff]
      %v1370 = vld [vmem:[#allocation2 + $0x258] sm:$0xff]
      %v1371 = vld [vmem:[#allocation2 + $0x260] sm:$0xff]
      %v1372 = vld [vmem:[#allocation2 + $0x268] sm:$0xff]
      %v1373 = vld [vmem:[#allocation2 + $0x270] sm:$0xff]
      %v1374 = vld [vmem:[#allocation2 + $0x278] sm:$0xff]
      %v1375 = vld [vmem:[#allocation2 + $0x280] sm:$0xff]
      %v1376 = vld [vmem:[#allocation2 + $0x288] sm:$0xff]
      %v1377 = vld [vmem:[#allocation2 + $0x290] sm:$0xff]
      %v1378 = vld [vmem:[#allocation2 + $0x298] sm:$0xff]
      %v1379 = vld [vmem:[#allocation2 + $0x2a0] sm:$0xff]
      %v1380 = vld [vmem:[#allocation2 + $0x2a8] sm:$0xff]
      %v1381 = vld [vmem:[#allocation2 + $0x2b0] sm:$0xff]
      %v1382 = vld [vmem:[#allocation2 + $0x2b8] sm:$0xff]
      %v1383 = vld [vmem:[#allocation2 + $0x2c0] sm:$0xff]
      %v1384 = vld [vmem:[#allocation2 + $0x2c8] sm:$0xff]
      %v1385 = vld [vmem:[#allocation2 + $0x2d0] sm:$0xff]
      %v1386 = vld [vmem:[#allocation2 + $0x2d8] sm:$0xff]
      %v1387 = vld [vmem:[#allocation2 + $0x2e0] sm:$0xff]
      %v1388 = vld [vmem:[#allocation2 + $0x2e8] sm:$0xff]
      %v1389 = vld [vmem:[#allocation2 + $0x2f0] sm:$0xff]
      %v1390 = vld [vmem:[#allocation2 + $0x2f8] sm:$0xff]
      %v1391 = vld [vmem:[%s2] sm:$0xf]
      %v1392 = vld [vmem:[%s2 + $0x4] sm:$0xf]
      %v1393 = vld [vmem:[%s2 + $0x8] sm:$0xf]
      %v1394 = vld [vmem:[%s2 + $0xc] sm:$0xf]
      %v1395 = vld [vmem:[%s2 + $0x10] sm:$0xf]
      %v1396 = vld [vmem:[%s2 + $0x14] sm:$0xf]
      %v1397 = vld [vmem:[%s2 + $0x18] sm:$0xf]
      %v1398 = vld [vmem:[%s2 + $0x1c] sm:$0xf]
      %v1399 = vld [vmem:[%s2 + $0x20] sm:$0xf]
      %v1400 = vld [vmem:[%s2 + $0x24] sm:$0xf]
      %v1401 = vld [vmem:[%s2 + $0x28] sm:$0xf]
      %v1402 = vld [vmem:[%s2 + $0x2c] sm:$0xf]
      %v1403 = vld [vmem:[%s2 + $0x30] sm:$0xf]
      %v1404 = vld [vmem:[%s2 + $0x34] sm:$0xf]
      %v1405 = vld [vmem:[%s2 + $0x38] sm:$0xf]
      %v1406 = vld [vmem:[%s2 + $0x3c] sm:$0xf]
      %v1407 = vld [vmem:[%s2 + $0x40] sm:$0xf]
      %v1408 = vld [vmem:[%s2 + $0x44] sm:$0xf]
      %v1409 = vld [vmem:[%s2 + $0x48] sm:$0xf]
      %v1410 = vld [vmem:[%s2 + $0x4c] sm:$0xf]
      %v1411 = vld [vmem:[%s2 + $0x50] sm:$0xf]
      %v1412 = vld [vmem:[%s2 + $0x54] sm:$0xf]
      %v1413 = vld [vmem:[%s2 + $0x58] sm:$0xf]
      %v1414 = vld [vmem:[%s2 + $0x5c] sm:$0xf]
      %v1415 = vld [vmem:[%s2 + $0x60] sm:$0xf]
      %v1416 = vld [vmem:[%s2 + $0x64] sm:$0xf]
      %v1417 = vld [vmem:[%s2 + $0x68] sm:$0xf]
      %v1418 = vld [vmem:[%s2 + $0x6c] sm:$0xf]
      %v1419 = vld [vmem:[%s2 + $0x70] sm:$0xf]
      %v1420 = vld [vmem:[%s2 + $0x74] sm:$0xf]
      %v1421 = vld [vmem:[%s2 + $0x78] sm:$0xf]
      %v1422 = vld [vmem:[%s2 + $0x7c] sm:$0xf]
      %v1423 = vld [vmem:[%s2 + $0x80] sm:$0xf]
      %v1424 = vld [vmem:[%s2 + $0x84] sm:$0xf]
      %v1425 = vld [vmem:[%s2 + $0x88] sm:$0xf]
      %v1426 = vld [vmem:[%s2 + $0x8c] sm:$0xf]
      %v1427 = vld [vmem:[%s2 + $0x90] sm:$0xf]
      %v1428 = vld [vmem:[%s2 + $0x94] sm:$0xf]
      %v1429 = vld [vmem:[%s2 + $0x98] sm:$0xf]
      %v1430 = vld [vmem:[%s2 + $0x9c] sm:$0xf]
      %v1431 = vld [vmem:[%s2 + $0xa0] sm:$0xf]
      %v1432 = vld [vmem:[%s2 + $0xa4] sm:$0xf]
      %v1433 = vld [vmem:[%s2 + $0xa8] sm:$0xf]
      %v1434 = vld [vmem:[%s2 + $0xac] sm:$0xf]
      %v1435 = vld [vmem:[%s2 + $0xb0] sm:$0xf]
      %v1436 = vld [vmem:[%s2 + $0xb4] sm:$0xf]
      %v1437 = vld [vmem:[%s2 + $0xb8] sm:$0xf]
      %v1438 = vld [vmem:[%s2 + $0xbc] sm:$0xf]
      %v1439 = vld [vmem:[%s2 + $0xc0] sm:$0xf]
      %v1440 = vld [vmem:[%s2 + $0xc4] sm:$0xf]
      %v1441 = vld [vmem:[%s2 + $0xc8] sm:$0xf]
      %v1442 = vld [vmem:[%s2 + $0xcc] sm:$0xf]
      %v1443 = vld [vmem:[%s2 + $0xd0] sm:$0xf]
      %v1444 = vld [vmem:[%s2 + $0xd4] sm:$0xf]
      %v1445 = vld [vmem:[%s2 + $0xd8] sm:$0xf]
      %v1446 = vld [vmem:[%s2 + $0xdc] sm:$0xf]
      %v1447 = vld [vmem:[%s2 + $0xe0] sm:$0xf]
      %v1448 = vld [vmem:[%s2 + $0xe4] sm:$0xf]
      %v1449 = vld [vmem:[%s2 + $0xe8] sm:$0xf]
      %v1450 = vld [vmem:[%s2 + $0xec] sm:$0xf]
      %v1451 = vld [vmem:[%s2 + $0xf0] sm:$0xf]
      %v1452 = vld [vmem:[%s2 + $0xf4] sm:$0xf]
      %v1453 = vld [vmem:[%s2 + $0xf8] sm:$0xf]
      %v1454 = vld [vmem:[%s2 + $0xfc] sm:$0xf]
      %v1455 = vld [vmem:[%s2 + $0x100] sm:$0xf]
      %v1456 = vld [vmem:[%s2 + $0x104] sm:$0xf]
      %v1457 = vld [vmem:[%s2 + $0x108] sm:$0xf]
      %v1458 = vld [vmem:[%s2 + $0x10c] sm:$0xf]
      %v1459 = vld [vmem:[%s2 + $0x110] sm:$0xf]
      %v1460 = vld [vmem:[%s2 + $0x114] sm:$0xf]
      %v1461 = vld [vmem:[%s2 + $0x118] sm:$0xf]
      %v1462 = vld [vmem:[%s2 + $0x11c] sm:$0xf]
      %v1463 = vld [vmem:[%s2 + $0x120] sm:$0xf]
      %v1464 = vld [vmem:[%s2 + $0x124] sm:$0xf]
      %v1465 = vld [vmem:[%s2 + $0x128] sm:$0xf]
      %v1466 = vld [vmem:[%s2 + $0x12c] sm:$0xf]
      %v1467 = vld [vmem:[%s2 + $0x130] sm:$0xf]
      %v1468 = vld [vmem:[%s2 + $0x134] sm:$0xf]
      %v1469 = vld [vmem:[%s2 + $0x138] sm:$0xf]
      %v1470 = vld [vmem:[%s2 + $0x13c] sm:$0xf]
      %v1471 = vld [vmem:[%s2 + $0x140] sm:$0xf]
      %v1472 = vld [vmem:[%s2 + $0x144] sm:$0xf]
      %v1473 = vld [vmem:[%s2 + $0x148] sm:$0xf]
      %v1474 = vld [vmem:[%s2 + $0x14c] sm:$0xf]
      %v1475 = vld [vmem:[%s2 + $0x150] sm:$0xf]
      %v1476 = vld [vmem:[%s2 + $0x154] sm:$0xf]
      %v1477 = vld [vmem:[%s2 + $0x158] sm:$0xf]
      %v1478 = vld [vmem:[%s2 + $0x15c] sm:$0xf]
      %v1479 = vld [vmem:[%s2 + $0x160] sm:$0xf]
      %v1480 = vld [vmem:[%s2 + $0x164] sm:$0xf]
      %v1481 = vld [vmem:[%s2 + $0x168] sm:$0xf]
      %v1482 = vld [vmem:[%s2 + $0x16c] sm:$0xf]
      %v1483 = vld [vmem:[%s2 + $0x170] sm:$0xf]
      %v1484 = vld [vmem:[%s2 + $0x174] sm:$0xf]
      %v1485 = vld [vmem:[%s2 + $0x178] sm:$0xf]
      %v1486 = vld [vmem:[%s2 + $0x17c] sm:$0xf]
      %v1487 = vld [vmem:[%s259] sm:$0xff]
      %v1488 = vld [vmem:[%s259 + $0x8] sm:$0xff]
      %v1489 = vld [vmem:[%s259 + $0x10] sm:$0xff]
      %v1490 = vld [vmem:[%s259 + $0x18] sm:$0xff]
      %v1491 = vld [vmem:[%s259 + $0x20] sm:$0xff]
      %v1492 = vld [vmem:[%s259 + $0x28] sm:$0xff]
      %v1493 = vld [vmem:[%s259 + $0x30] sm:$0xff]
      %v1494 = vld [vmem:[%s259 + $0x38] sm:$0xff]
      %v1495 = vld [vmem:[%s259 + $0x40] sm:$0xff]
      %v1496 = vld [vmem:[%s259 + $0x48] sm:$0xff]
      %v1497 = vld [vmem:[%s259 + $0x50] sm:$0xff]
      %v1498 = vld [vmem:[%s259 + $0x58] sm:$0xff]
      %v1499 = vld [vmem:[%s259 + $0x60] sm:$0xff]
      %v1500 = vld [vmem:[%s259 + $0x68] sm:$0xff]
      %v1501 = vld [vmem:[%s259 + $0x70] sm:$0xff]
      %v1502 = vld [vmem:[%s259 + $0x78] sm:$0xff]
      %v1503 = vld [vmem:[%s259 + $0x80] sm:$0xff]
      %v1504 = vld [vmem:[%s259 + $0x88] sm:$0xff]
      %v1505 = vld [vmem:[%s259 + $0x90] sm:$0xff]
      %v1506 = vld [vmem:[%s259 + $0x98] sm:$0xff]
      %v1507 = vld [vmem:[%s259 + $0xa0] sm:$0xff]
      %v1508 = vld [vmem:[%s259 + $0xa8] sm:$0xff]
      %v1509 = vld [vmem:[%s259 + $0xb0] sm:$0xff]
      %v1510 = vld [vmem:[%s259 + $0xb8] sm:$0xff]
      %v1511 = vld [vmem:[%s259 + $0xc0] sm:$0xff]
      %v1512 = vld [vmem:[%s259 + $0xc8] sm:$0xff]
      %v1513 = vld [vmem:[%s259 + $0xd0] sm:$0xff]
      %v1514 = vld [vmem:[%s259 + $0xd8] sm:$0xff]
      %v1515 = vld [vmem:[%s259 + $0xe0] sm:$0xff]
      %v1516 = vld [vmem:[%s259 + $0xe8] sm:$0xff]
      %v1517 = vld [vmem:[%s259 + $0xf0] sm:$0xff]
      %v1518 = vld [vmem:[%s259 + $0xf8] sm:$0xff]
      %v1519 = vld [vmem:[%s259 + $0x100] sm:$0xff]
      %v1520 = vld [vmem:[%s259 + $0x108] sm:$0xff]
      %v1521 = vld [vmem:[%s259 + $0x110] sm:$0xff]
      %v1522 = vld [vmem:[%s259 + $0x118] sm:$0xff]
      %v1523 = vld [vmem:[%s259 + $0x120] sm:$0xff]
      %v1524 = vld [vmem:[%s259 + $0x128] sm:$0xff]
      %v1525 = vld [vmem:[%s259 + $0x130] sm:$0xff]
      %v1526 = vld [vmem:[%s259 + $0x138] sm:$0xff]
      %v1527 = vld [vmem:[%s259 + $0x140] sm:$0xff]
      %v1528 = vld [vmem:[%s259 + $0x148] sm:$0xff]
      %v1529 = vld [vmem:[%s259 + $0x150] sm:$0xff]
      %v1530 = vld [vmem:[%s259 + $0x158] sm:$0xff]
      %v1531 = vld [vmem:[%s259 + $0x160] sm:$0xff]
      %v1532 = vld [vmem:[%s259 + $0x168] sm:$0xff]
      %v1533 = vld [vmem:[%s259 + $0x170] sm:$0xff]
      %v1534 = vld [vmem:[%s259 + $0x178] sm:$0xff]
      %v1535 = vld [vmem:[%s259 + $0x180] sm:$0xff]
      %v1536 = vld [vmem:[%s259 + $0x188] sm:$0xff]
      %v1537 = vld [vmem:[%s259 + $0x190] sm:$0xff]
      %v1538 = vld [vmem:[%s259 + $0x198] sm:$0xff]
      %v1539 = vld [vmem:[%s259 + $0x1a0] sm:$0xff]
      %v1540 = vld [vmem:[%s259 + $0x1a8] sm:$0xff]
      %v1541 = vld [vmem:[%s259 + $0x1b0] sm:$0xff]
      %v1542 = vld [vmem:[%s259 + $0x1b8] sm:$0xff]
      %v1543 = vld [vmem:[%s259 + $0x1c0] sm:$0xff]
      %v1544 = vld [vmem:[%s259 + $0x1c8] sm:$0xff]
      %v1545 = vld [vmem:[%s259 + $0x1d0] sm:$0xff]
      %v1546 = vld [vmem:[%s259 + $0x1d8] sm:$0xff]
      %v1547 = vld [vmem:[%s259 + $0x1e0] sm:$0xff]
      %v1548 = vld [vmem:[%s259 + $0x1e8] sm:$0xff]
      %v1549 = vld [vmem:[%s259 + $0x1f0] sm:$0xff]
      %v1550 = vld [vmem:[%s259 + $0x1f8] sm:$0xff]
      %v1551 = vld [vmem:[%s259 + $0x200] sm:$0xff]
      %v1552 = vld [vmem:[%s259 + $0x208] sm:$0xff]
      %v1553 = vld [vmem:[%s259 + $0x210] sm:$0xff]
      %v1554 = vld [vmem:[%s259 + $0x218] sm:$0xff]
      %v1555 = vld [vmem:[%s259 + $0x220] sm:$0xff]
      %v1556 = vld [vmem:[%s259 + $0x228] sm:$0xff]
      %v1557 = vld [vmem:[%s259 + $0x230] sm:$0xff]
      %v1558 = vld [vmem:[%s259 + $0x238] sm:$0xff]
      %v1559 = vld [vmem:[%s259 + $0x240] sm:$0xff]
      %v1560 = vld [vmem:[%s259 + $0x248] sm:$0xff]
      %v1561 = vld [vmem:[%s259 + $0x250] sm:$0xff]
      %v1562 = vld [vmem:[%s259 + $0x258] sm:$0xff]
      %v1563 = vld [vmem:[%s259 + $0x260] sm:$0xff]
      %v1564 = vld [vmem:[%s259 + $0x268] sm:$0xff]
      %v1565 = vld [vmem:[%s259 + $0x270] sm:$0xff]
      %v1566 = vld [vmem:[%s259 + $0x278] sm:$0xff]
      %v1567 = vld [vmem:[%s259 + $0x280] sm:$0xff]
      %v1568 = vld [vmem:[%s259 + $0x288] sm:$0xff]
      %v1569 = vld [vmem:[%s259 + $0x290] sm:$0xff]
      %v1570 = vld [vmem:[%s259 + $0x298] sm:$0xff]
      %v1571 = vld [vmem:[%s259 + $0x2a0] sm:$0xff]
      %v1572 = vld [vmem:[%s259 + $0x2a8] sm:$0xff]
      %v1573 = vld [vmem:[%s259 + $0x2b0] sm:$0xff]
      %v1574 = vld [vmem:[%s259 + $0x2b8] sm:$0xff]
      %v1575 = vld [vmem:[%s259 + $0x2c0] sm:$0xff]
      %v1576 = vld [vmem:[%s259 + $0x2c8] sm:$0xff]
      %v1577 = vld [vmem:[%s259 + $0x2d0] sm:$0xff]
      %v1578 = vld [vmem:[%s259 + $0x2d8] sm:$0xff]
      %v1579 = vld [vmem:[%s259 + $0x2e0] sm:$0xff]
      %v1580 = vld [vmem:[%s259 + $0x2e8] sm:$0xff]
      %v1581 = vld [vmem:[%s259 + $0x2f0] sm:$0xff]
      %v1582 = vld [vmem:[%s259 + $0x2f8] sm:$0xff]
      %s1583 = scalar_lea.vmem %s2, 384
      %v1584 = vld [vmem:[%s1583] sm:$0xf]
      %v1585 = vld [vmem:[%s1583 + $0x4] sm:$0xf]
      %v1586 = vld [vmem:[%s1583 + $0x8] sm:$0xf]
      %v1587 = vld [vmem:[%s1583 + $0xc] sm:$0xf]
      %v1588 = vld [vmem:[%s1583 + $0x10] sm:$0xf]
      %v1589 = vld [vmem:[%s1583 + $0x14] sm:$0xf]
      %v1590 = vld [vmem:[%s1583 + $0x18] sm:$0xf]
      %v1591 = vld [vmem:[%s1583 + $0x1c] sm:$0xf]
      %v1592 = vld [vmem:[%s1583 + $0x20] sm:$0xf]
      %v1593 = vld [vmem:[%s1583 + $0x24] sm:$0xf]
      %v1594 = vld [vmem:[%s1583 + $0x28] sm:$0xf]
      %v1595 = vld [vmem:[%s1583 + $0x2c] sm:$0xf]
      %v1596 = vld [vmem:[%s1583 + $0x30] sm:$0xf]
      %v1597 = vld [vmem:[%s1583 + $0x34] sm:$0xf]
      %v1598 = vld [vmem:[%s1583 + $0x38] sm:$0xf]
      %v1599 = vld [vmem:[%s1583 + $0x3c] sm:$0xf]
      %v1600 = vld [vmem:[%s1583 + $0x40] sm:$0xf]
      %v1601 = vld [vmem:[%s1583 + $0x44] sm:$0xf]
      %v1602 = vld [vmem:[%s1583 + $0x48] sm:$0xf]
      %v1603 = vld [vmem:[%s1583 + $0x4c] sm:$0xf]
      %v1604 = vld [vmem:[%s1583 + $0x50] sm:$0xf]
      %v1605 = vld [vmem:[%s1583 + $0x54] sm:$0xf]
      %v1606 = vld [vmem:[%s1583 + $0x58] sm:$0xf]
      %v1607 = vld [vmem:[%s1583 + $0x5c] sm:$0xf]
      %v1608 = vld [vmem:[%s1583 + $0x60] sm:$0xf]
      %v1609 = vld [vmem:[%s1583 + $0x64] sm:$0xf]
      %v1610 = vld [vmem:[%s1583 + $0x68] sm:$0xf]
      %v1611 = vld [vmem:[%s1583 + $0x6c] sm:$0xf]
      %v1612 = vld [vmem:[%s1583 + $0x70] sm:$0xf]
      %v1613 = vld [vmem:[%s1583 + $0x74] sm:$0xf]
      %v1614 = vld [vmem:[%s1583 + $0x78] sm:$0xf]
      %v1615 = vld [vmem:[%s1583 + $0x7c] sm:$0xf]
      %v1616 = vld [vmem:[%s1583 + $0x80] sm:$0xf]
      %v1617 = vld [vmem:[%s1583 + $0x84] sm:$0xf]
      %v1618 = vld [vmem:[%s1583 + $0x88] sm:$0xf]
      %v1619 = vld [vmem:[%s1583 + $0x8c] sm:$0xf]
      %v1620 = vld [vmem:[%s1583 + $0x90] sm:$0xf]
      %v1621 = vld [vmem:[%s1583 + $0x94] sm:$0xf]
      %v1622 = vld [vmem:[%s1583 + $0x98] sm:$0xf]
      %v1623 = vld [vmem:[%s1583 + $0x9c] sm:$0xf]
      %v1624 = vld [vmem:[%s1583 + $0xa0] sm:$0xf]
      %v1625 = vld [vmem:[%s1583 + $0xa4] sm:$0xf]
      %v1626 = vld [vmem:[%s1583 + $0xa8] sm:$0xf]
      %v1627 = vld [vmem:[%s1583 + $0xac] sm:$0xf]
      %v1628 = vld [vmem:[%s1583 + $0xb0] sm:$0xf]
      %v1629 = vld [vmem:[%s1583 + $0xb4] sm:$0xf]
      %v1630 = vld [vmem:[%s1583 + $0xb8] sm:$0xf]
      %v1631 = vld [vmem:[%s1583 + $0xbc] sm:$0xf]
      %v1632 = vld [vmem:[%s1583 + $0xc0] sm:$0xf]
      %v1633 = vld [vmem:[%s1583 + $0xc4] sm:$0xf]
      %v1634 = vld [vmem:[%s1583 + $0xc8] sm:$0xf]
      %v1635 = vld [vmem:[%s1583 + $0xcc] sm:$0xf]
      %v1636 = vld [vmem:[%s1583 + $0xd0] sm:$0xf]
      %v1637 = vld [vmem:[%s1583 + $0xd4] sm:$0xf]
      %v1638 = vld [vmem:[%s1583 + $0xd8] sm:$0xf]
      %v1639 = vld [vmem:[%s1583 + $0xdc] sm:$0xf]
      %v1640 = vld [vmem:[%s1583 + $0xe0] sm:$0xf]
      %v1641 = vld [vmem:[%s1583 + $0xe4] sm:$0xf]
      %v1642 = vld [vmem:[%s1583 + $0xe8] sm:$0xf]
      %v1643 = vld [vmem:[%s1583 + $0xec] sm:$0xf]
      %v1644 = vld [vmem:[%s1583 + $0xf0] sm:$0xf]
      %v1645 = vld [vmem:[%s1583 + $0xf4] sm:$0xf]
      %v1646 = vld [vmem:[%s1583 + $0xf8] sm:$0xf]
      %v1647 = vld [vmem:[%s1583 + $0xfc] sm:$0xf]
      %v1648 = vld [vmem:[%s1583 + $0x100] sm:$0xf]
      %v1649 = vld [vmem:[%s1583 + $0x104] sm:$0xf]
      %v1650 = vld [vmem:[%s1583 + $0x108] sm:$0xf]
      %v1651 = vld [vmem:[%s1583 + $0x10c] sm:$0xf]
      %v1652 = vld [vmem:[%s1583 + $0x110] sm:$0xf]
      %v1653 = vld [vmem:[%s1583 + $0x114] sm:$0xf]
      %v1654 = vld [vmem:[%s1583 + $0x118] sm:$0xf]
      %v1655 = vld [vmem:[%s1583 + $0x11c] sm:$0xf]
      %v1656 = vld [vmem:[%s1583 + $0x120] sm:$0xf]
      %v1657 = vld [vmem:[%s1583 + $0x124] sm:$0xf]
      %v1658 = vld [vmem:[%s1583 + $0x128] sm:$0xf]
      %v1659 = vld [vmem:[%s1583 + $0x12c] sm:$0xf]
      %v1660 = vld [vmem:[%s1583 + $0x130] sm:$0xf]
      %v1661 = vld [vmem:[%s1583 + $0x134] sm:$0xf]
      %v1662 = vld [vmem:[%s1583 + $0x138] sm:$0xf]
      %v1663 = vld [vmem:[%s1583 + $0x13c] sm:$0xf]
      %v1664 = vld [vmem:[%s1583 + $0x140] sm:$0xf]
      %v1665 = vld [vmem:[%s1583 + $0x144] sm:$0xf]
      %v1666 = vld [vmem:[%s1583 + $0x148] sm:$0xf]
      %v1667 = vld [vmem:[%s1583 + $0x14c] sm:$0xf]
      %v1668 = vld [vmem:[%s1583 + $0x150] sm:$0xf]
      %v1669 = vld [vmem:[%s1583 + $0x154] sm:$0xf]
      %v1670 = vld [vmem:[%s1583 + $0x158] sm:$0xf]
      %v1671 = vld [vmem:[%s1583 + $0x15c] sm:$0xf]
      %v1672 = vld [vmem:[%s1583 + $0x160] sm:$0xf]
      %v1673 = vld [vmem:[%s1583 + $0x164] sm:$0xf]
      %v1674 = vld [vmem:[%s1583 + $0x168] sm:$0xf]
      %v1675 = vld [vmem:[%s1583 + $0x16c] sm:$0xf]
      %v1676 = vld [vmem:[%s1583 + $0x170] sm:$0xf]
      %v1677 = vld [vmem:[%s1583 + $0x174] sm:$0xf]
      %v1678 = vld [vmem:[%s1583 + $0x178] sm:$0xf]
      %v1679 = vld [vmem:[%s1583 + $0x17c] sm:$0xf]
      %v1776 = vunpack.c.l.b16 %v1584
      %v1777 = vunpack.c.l.b16 %v1585
      %v1778 = vunpack.c.l.b16 %v1586
      %v1779 = vunpack.c.l.b16 %v1587
      %v1780 = vunpack.c.l.b16 %v1588
      %v1781 = vunpack.c.l.b16 %v1589
      %v1782 = vunpack.c.l.b16 %v1590
      %v1783 = vunpack.c.l.b16 %v1591
      %v1784 = vunpack.c.l.b16 %v1592
      %v1785 = vunpack.c.l.b16 %v1593
      %v1786 = vunpack.c.l.b16 %v1594
      %v1787 = vunpack.c.l.b16 %v1595
      %v1788 = vunpack.c.l.b16 %v1596
      %v1789 = vunpack.c.l.b16 %v1597
      %v1790 = vunpack.c.l.b16 %v1598
      %v1791 = vunpack.c.l.b16 %v1599
      %v1792 = vunpack.c.l.b16 %v1600
      %v1793 = vunpack.c.l.b16 %v1601
      %v1794 = vunpack.c.l.b16 %v1602
      %v1795 = vunpack.c.l.b16 %v1603
      %v1796 = vunpack.c.l.b16 %v1604
      %v1797 = vunpack.c.l.b16 %v1605
      %v1798 = vunpack.c.l.b16 %v1606
      %v1799 = vunpack.c.l.b16 %v1607
      %v1800 = vunpack.c.l.b16 %v1608
      %v1801 = vunpack.c.l.b16 %v1609
      %v1802 = vunpack.c.l.b16 %v1610
      %v1803 = vunpack.c.l.b16 %v1611
      %v1804 = vunpack.c.l.b16 %v1612
      %v1805 = vunpack.c.l.b16 %v1613
      %v1806 = vunpack.c.l.b16 %v1614
      %v1807 = vunpack.c.l.b16 %v1615
      %v1808 = vunpack.c.l.b16 %v1616
      %v1809 = vunpack.c.l.b16 %v1617
      %v1810 = vunpack.c.l.b16 %v1618
      %v1811 = vunpack.c.l.b16 %v1619
      %v1812 = vunpack.c.l.b16 %v1620
      %v1813 = vunpack.c.l.b16 %v1621
      %v1814 = vunpack.c.l.b16 %v1622
      %v1815 = vunpack.c.l.b16 %v1623
      %v1816 = vunpack.c.l.b16 %v1624
      %v1817 = vunpack.c.l.b16 %v1625
      %v1818 = vunpack.c.l.b16 %v1626
      %v1819 = vunpack.c.l.b16 %v1627
      %v1820 = vunpack.c.l.b16 %v1628
      %v1821 = vunpack.c.l.b16 %v1629
      %v1822 = vunpack.c.l.b16 %v1630
      %v1823 = vunpack.c.l.b16 %v1631
      %v1824 = vunpack.c.l.b16 %v1632
      %v1825 = vunpack.c.l.b16 %v1633
      %v1826 = vunpack.c.l.b16 %v1634
      %v1827 = vunpack.c.l.b16 %v1635
      %v1828 = vunpack.c.l.b16 %v1636
      %v1829 = vunpack.c.l.b16 %v1637
      %v1830 = vunpack.c.l.b16 %v1638
      %v1831 = vunpack.c.l.b16 %v1639
      %v1832 = vunpack.c.l.b16 %v1640
      %v1833 = vunpack.c.l.b16 %v1641
      %v1834 = vunpack.c.l.b16 %v1642
      %v1835 = vunpack.c.l.b16 %v1643
      %v1836 = vunpack.c.l.b16 %v1644
      %v1837 = vunpack.c.l.b16 %v1645
      %v1838 = vunpack.c.l.b16 %v1646
      %v1839 = vunpack.c.l.b16 %v1647
      %v1840 = vunpack.c.l.b16 %v1648
      %v1841 = vunpack.c.l.b16 %v1649
      %v1842 = vunpack.c.l.b16 %v1650
      %v1843 = vunpack.c.l.b16 %v1651
      %v1844 = vunpack.c.l.b16 %v1652
      %v1845 = vunpack.c.l.b16 %v1653
      %v1846 = vunpack.c.l.b16 %v1654
      %v1847 = vunpack.c.l.b16 %v1655
      %v1848 = vunpack.c.l.b16 %v1656
      %v1849 = vunpack.c.l.b16 %v1657
      %v1850 = vunpack.c.l.b16 %v1658
      %v1851 = vunpack.c.l.b16 %v1659
      %v1852 = vunpack.c.l.b16 %v1660
      %v1853 = vunpack.c.l.b16 %v1661
      %v1854 = vunpack.c.l.b16 %v1662
      %v1855 = vunpack.c.l.b16 %v1663
      %v1856 = vunpack.c.l.b16 %v1664
      %v1857 = vunpack.c.l.b16 %v1665
      %v1858 = vunpack.c.l.b16 %v1666
      %v1859 = vunpack.c.l.b16 %v1667
      %v1860 = vunpack.c.l.b16 %v1668
      %v1861 = vunpack.c.l.b16 %v1669
      %v1862 = vunpack.c.l.b16 %v1670
      %v1863 = vunpack.c.l.b16 %v1671
      %v1864 = vunpack.c.l.b16 %v1672
      %v1865 = vunpack.c.l.b16 %v1673
      %v1866 = vunpack.c.l.b16 %v1674
      %v1867 = vunpack.c.l.b16 %v1675
      %v1868 = vunpack.c.l.b16 %v1676
      %v1869 = vunpack.c.l.b16 %v1677
      %v1870 = vunpack.c.l.b16 %v1678
      %v1871 = vunpack.c.l.b16 %v1679
      %v1872 = vpack.c.b16 %v1777, %v1776
      %v1873 = vpack.c.b16 %v1779, %v1778
      %v1874 = vpack.c.b16 %v1781, %v1780
      %v1875 = vpack.c.b16 %v1783, %v1782
      %v1876 = vpack.c.b16 %v1785, %v1784
      %v1877 = vpack.c.b16 %v1787, %v1786
      %v1878 = vpack.c.b16 %v1789, %v1788
      %v1879 = vpack.c.b16 %v1791, %v1790
      %v1880 = vpack.c.b16 %v1793, %v1792
      %v1881 = vpack.c.b16 %v1795, %v1794
      %v1882 = vpack.c.b16 %v1797, %v1796
      %v1883 = vpack.c.b16 %v1799, %v1798
      %v1884 = vpack.c.b16 %v1801, %v1800
      %v1885 = vpack.c.b16 %v1803, %v1802
      %v1886 = vpack.c.b16 %v1805, %v1804
      %v1887 = vpack.c.b16 %v1807, %v1806
      %v1888 = vpack.c.b16 %v1809, %v1808
      %v1889 = vpack.c.b16 %v1811, %v1810
      %v1890 = vpack.c.b16 %v1813, %v1812
      %v1891 = vpack.c.b16 %v1815, %v1814
      %v1892 = vpack.c.b16 %v1817, %v1816
      %v1893 = vpack.c.b16 %v1819, %v1818
      %v1894 = vpack.c.b16 %v1821, %v1820
      %v1895 = vpack.c.b16 %v1823, %v1822
      %v1896 = vpack.c.b16 %v1825, %v1824
      %v1897 = vpack.c.b16 %v1827, %v1826
      %v1898 = vpack.c.b16 %v1829, %v1828
      %v1899 = vpack.c.b16 %v1831, %v1830
      %v1900 = vpack.c.b16 %v1833, %v1832
      %v1901 = vpack.c.b16 %v1835, %v1834
      %v1902 = vpack.c.b16 %v1837, %v1836
      %v1903 = vpack.c.b16 %v1839, %v1838
      %v1904 = vpack.c.b16 %v1841, %v1840
      %v1905 = vpack.c.b16 %v1843, %v1842
      %v1906 = vpack.c.b16 %v1845, %v1844
      %v1907 = vpack.c.b16 %v1847, %v1846
      %v1908 = vpack.c.b16 %v1849, %v1848
      %v1909 = vpack.c.b16 %v1851, %v1850
      %v1910 = vpack.c.b16 %v1853, %v1852
      %v1911 = vpack.c.b16 %v1855, %v1854
      %v1912 = vpack.c.b16 %v1857, %v1856
      %v1913 = vpack.c.b16 %v1859, %v1858
      %v1914 = vpack.c.b16 %v1861, %v1860
      %v1915 = vpack.c.b16 %v1863, %v1862
      %v1916 = vpack.c.b16 %v1865, %v1864
      %v1917 = vpack.c.b16 %v1867, %v1866
      %v1918 = vpack.c.b16 %v1869, %v1868
      %v1919 = vpack.c.b16 %v1871, %v1870
      %1968 = vmatprep.subr.bf16.mxu0 0
      %1969 = vmatpush1.bf16.msra.mxu0 %v1872
      %1970 = vmatprep.subr.bf16.mxu0 0
      %1971 = vmatpush1.bf16.msra.mxu0 %v1873
      %1972 = vmatprep.subr.bf16.mxu0 0
      %1973 = vmatpush1.bf16.msra.mxu0 %v1874
      %1974 = vmatprep.subr.bf16.mxu0 0
      %1975 = vmatpush1.bf16.msra.mxu0 %v1875
      %1976 = vmatprep.subr.bf16.mxu0 0
      %1977 = vmatpush1.bf16.msra.mxu0 %v1876
      %1978 = vmatprep.subr.bf16.mxu0 0
      %1979 = vmatpush1.bf16.msra.mxu0 %v1877
      %1980 = vmatprep.subr.bf16.mxu0 0
      %1981 = vmatpush1.bf16.msra.mxu0 %v1878
      %1982 = vmatprep.subr.bf16.mxu0 0
      %1983 = vmatpush1.bf16.msra.mxu0 %v1879
      %1984 = vmatprep.subr.bf16.mxu0 0
      %1985 = vmatpush1.bf16.msra.mxu0 %v1880
      %1986 = vmatprep.subr.bf16.mxu0 0
      %1987 = vmatpush1.bf16.msra.mxu0 %v1881
      %1988 = vmatprep.subr.bf16.mxu0 0
      %1989 = vmatpush1.bf16.msra.mxu0 %v1882
      %1990 = vmatprep.subr.bf16.mxu0 0
      %1991 = vmatpush1.bf16.msra.mxu0 %v1883
      %1992 = vmatprep.subr.bf16.mxu0 0
      %1993 = vmatpush1.bf16.msra.mxu0 %v1884
      %1994 = vmatprep.subr.bf16.mxu0 0
      %1995 = vmatpush1.bf16.msra.mxu0 %v1885
      %1996 = vmatprep.subr.bf16.mxu0 0
      %1997 = vmatpush1.bf16.msra.mxu0 %v1886
      %1998 = vmatprep.subr.bf16.mxu0 0
      %1999 = vmatpush1.bf16.msra.mxu0 %v1887
      %2000 = vmatprep.mubr.bf16.mxu0 %v1488
      %2001 = vmatmul.mubr.bf16.gmra.mrb[0].mxu0 %v1487
      %v2002 = vpop.f32.mrb[0].mxu0
      %v2003 = vadd.f32 0.0, %v2002
      %v2004 = vpop.f32.mrb[0].mxu0
      %v2005 = vpop.f32.mrb[0].mxu0
      %v2006 = vadd.f32 0.0, %v2005
      %v2007 = vpop.f32.mrb[0].mxu0
      %2008 = vmatprep.mubr.bf16.mxu0 %v1494
      %2009 = vmatmul.mubr.bf16.gmra.mrb[0].mxu0 %v1493
      %v2010 = vpop.f32.mrb[0].mxu0
      %v2011 = vadd.f32 0.0, %v2010
      %v2012 = vpop.f32.mrb[0].mxu0
      %v2013 = vpop.f32.mrb[0].mxu0
      %v2014 = vadd.f32 0.0, %v2013
      %v2015 = vpop.f32.mrb[0].mxu0
      %2016 = vmatprep.mubr.bf16.mxu0 %v1500
      %2017 = vmatmul.mubr.bf16.gmra.mrb[0].mxu0 %v1499
      %v2018 = vpop.f32.mrb[0].mxu0
      %v2019 = vadd.f32 0.0, %v2018
      %v2020 = vpop.f32.mrb[0].mxu0
      %v2021 = vpop.f32.mrb[0].mxu0
      %v2022 = vadd.f32 0.0, %v2021
      %v2023 = vpop.f32.mrb[0].mxu0
      %2024 = vmatprep.mubr.bf16.mxu0 %v1506
      %2025 = vmatmul.mubr.bf16.gmra.mrb[0].mxu0 %v1505
      %v2026 = vpop.f32.mrb[0].mxu0
      %v2027 = vadd.f32 0.0, %v2026
      %v2028 = vpop.f32.mrb[0].mxu0
      %v2029 = vpop.f32.mrb[0].mxu0
      %v2030 = vadd.f32 0.0, %v2029
      %v2031 = vpop.f32.mrb[0].mxu0
      %2032 = vmatprep.mubr.bf16.mxu0 %v1512
      %2033 = vmatmul.mubr.bf16.gmra.mrb[0].mxu0 %v1511
      %v2034 = vpop.f32.mrb[0].mxu0
      %v2035 = vadd.f32 0.0, %v2034
      %v2036 = vpop.f32.mrb[0].mxu0
      %v2037 = vpop.f32.mrb[0].mxu0
      %v2038 = vadd.f32 0.0, %v2037
      %v2039 = vpop.f32.mrb[0].mxu0
      %2040 = vmatprep.mubr.bf16.mxu0 %v1518
      %2041 = vmatmul.mubr.bf16.gmra.mrb[0].mxu0 %v1517
      %v2042 = vpop.f32.mrb[0].mxu0
      %v2043 = vadd.f32 0.0, %v2042
      %v2044 = vpop.f32.mrb[0].mxu0
      %v2045 = vpop.f32.mrb[0].mxu0
      %v2046 = vadd.f32 0.0, %v2045
      %v2047 = vpop.f32.mrb[0].mxu0
      %2048 = vmatprep.mubr.bf16.mxu0 %v1524
      %2049 = vmatmul.mubr.bf16.gmra.mrb[0].mxu0 %v1523
      %v2050 = vpop.f32.mrb[0].mxu0
      %v2051 = vadd.f32 0.0, %v2050
      %v2052 = vpop.f32.mrb[0].mxu0
      %v2053 = vpop.f32.mrb[0].mxu0
      %v2054 = vadd.f32 0.0, %v2053
      %v2055 = vpop.f32.mrb[0].mxu0
      %2056 = vmatprep.mubr.bf16.mxu0 %v1530
      %2057 = vmatmul.mubr.bf16.gmra.mrb[0].mxu0 %v1529
      %v2058 = vpop.f32.mrb[0].mxu0
      %v2059 = vadd.f32 0.0, %v2058
      %v2060 = vpop.f32.mrb[0].mxu0
      %v2061 = vpop.f32.mrb[0].mxu0
      %v2062 = vadd.f32 0.0, %v2061
      %v2063 = vpop.f32.mrb[0].mxu0
      %2064 = vmatprep.mubr.bf16.mxu0 %v1536
      %2065 = vmatmul.mubr.bf16.gmra.mrb[0].mxu0 %v1535
      %v2066 = vpop.f32.mrb[0].mxu0
      %v2067 = vadd.f32 0.0, %v2066
      %v2068 = vpop.f32.mrb[0].mxu0
      %v2069 = vpop.f32.mrb[0].mxu0
      %v2070 = vadd.f32 0.0, %v2069
      %v2071 = vpop.f32.mrb[0].mxu0
      %2072 = vmatprep.mubr.bf16.mxu0 %v1542
      %2073 = vmatmul.mubr.bf16.gmra.mrb[0].mxu0 %v1541
      %v2074 = vpop.f32.mrb[0].mxu0
      %v2075 = vadd.f32 0.0, %v2074
      %v2076 = vpop.f32.mrb[0].mxu0
      %v2077 = vpop.f32.mrb[0].mxu0
      %v2078 = vadd.f32 0.0, %v2077
      %v2079 = vpop.f32.mrb[0].mxu0
      %2080 = vmatprep.mubr.bf16.mxu0 %v1548
      %2081 = vmatmul.mubr.bf16.gmra.mrb[0].mxu0 %v1547
      %v2082 = vpop.f32.mrb[0].mxu0
      %v2083 = vadd.f32 0.0, %v2082
      %v2084 = vpop.f32.mrb[0].mxu0
      %v2085 = vpop.f32.mrb[0].mxu0
      %v2086 = vadd.f32 0.0, %v2085
      %v2087 = vpop.f32.mrb[0].mxu0
      %2088 = vmatprep.mubr.bf16.mxu0 %v1554
      %2089 = vmatmul.mubr.bf16.gmra.mrb[0].mxu0 %v1553
      %v2090 = vpop.f32.mrb[0].mxu0
      %v2091 = vadd.f32 0.0, %v2090
      %v2092 = vpop.f32.mrb[0].mxu0
      %v2093 = vpop.f32.mrb[0].mxu0
      %v2094 = vadd.f32 0.0, %v2093
      %v2095 = vpop.f32.mrb[0].mxu0
      %2096 = vmatprep.mubr.bf16.mxu0 %v1560
      %2097 = vmatmul.mubr.bf16.gmra.mrb[0].mxu0 %v1559
      %v2098 = vpop.f32.mrb[0].mxu0
      %v2099 = vadd.f32 0.0, %v2098
      %v2100 = vpop.f32.mrb[0].mxu0
      %v2101 = vpop.f32.mrb[0].mxu0
      %v2102 = vadd.f32 0.0, %v2101
      %v2103 = vpop.f32.mrb[0].mxu0
      %2104 = vmatprep.mubr.bf16.mxu0 %v1566
      %2105 = vmatmul.mubr.bf16.gmra.mrb[0].mxu0 %v1565
      %v2106 = vpop.f32.mrb[0].mxu0
      %v2107 = vadd.f32 0.0, %v2106
      %v2108 = vpop.f32.mrb[0].mxu0
      %v2109 = vpop.f32.mrb[0].mxu0
      %v2110 = vadd.f32 0.0, %v2109
      %v2111 = vpop.f32.mrb[0].mxu0
      %2112 = vmatprep.mubr.bf16.mxu0 %v1572
      %2113 = vmatmul.mubr.bf16.gmra.mrb[0].mxu0 %v1571
      %v2114 = vpop.f32.mrb[0].mxu0
      %v2115 = vadd.f32 0.0, %v2114
      %v2116 = vpop.f32.mrb[0].mxu0
      %v2117 = vpop.f32.mrb[0].mxu0
      %v2118 = vadd.f32 0.0, %v2117
      %v2119 = vpop.f32.mrb[0].mxu0
      %2120 = vmatprep.mubr.bf16.mxu0 %v1578
      %2121 = vmatmul.mubr.bf16.gmra.mrb[0].mxu0 %v1577
      %v2122 = vpop.f32.mrb[0].mxu0
      %v2123 = vadd.f32 0.0, %v2122
      %v2124 = vpop.f32.mrb[0].mxu0
      %v2125 = vpop.f32.mrb[0].mxu0
      %v2126 = vadd.f32 0.0, %v2125
      %v2127 = vpop.f32.mrb[0].mxu0
      %2128 = vdwg.mxu0
      %2129 = vmatprep.subr.bf16.mxu0 0
      %2130 = vmatpush1.bf16.msra.mxu0 %v1888
      %2131 = vmatprep.subr.bf16.mxu0 0
      %2132 = vmatpush1.bf16.msra.mxu0 %v1889
      %2133 = vmatprep.subr.bf16.mxu0 0
      %2134 = vmatpush1.bf16.msra.mxu0 %v1890
      %2135 = vmatprep.subr.bf16.mxu0 0
      %2136 = vmatpush1.bf16.msra.mxu0 %v1891
      %2137 = vmatprep.subr.bf16.mxu0 0
      %2138 = vmatpush1.bf16.msra.mxu0 %v1892
      %2139 = vmatprep.subr.bf16.mxu0 0
      %2140 = vmatpush1.bf16.msra.mxu0 %v1893
      %2141 = vmatprep.subr.bf16.mxu0 0
      %2142 = vmatpush1.bf16.msra.mxu0 %v1894
      %2143 = vmatprep.subr.bf16.mxu0 0
      %2144 = vmatpush1.bf16.msra.mxu0 %v1895
      %2145 = vmatprep.subr.bf16.mxu0 0
      %2146 = vmatpush1.bf16.msra.mxu0 %v1896
      %2147 = vmatprep.subr.bf16.mxu0 0
      %2148 = vmatpush1.bf16.msra.mxu0 %v1897
      %2149 = vmatprep.subr.bf16.mxu0 0
      %2150 = vmatpush1.bf16.msra.mxu0 %v1898
      %2151 = vmatprep.subr.bf16.mxu0 0
      %2152 = vmatpush1.bf16.msra.mxu0 %v1899
      %2153 = vmatprep.subr.bf16.mxu0 0
      %2154 = vmatpush1.bf16.msra.mxu0 %v1900
      %2155 = vmatprep.subr.bf16.mxu0 0
      %2156 = vmatpush1.bf16.msra.mxu0 %v1901
      %2157 = vmatprep.subr.bf16.mxu0 0
      %2158 = vmatpush1.bf16.msra.mxu0 %v1902
      %2159 = vmatprep.subr.bf16.mxu0 0
      %2160 = vmatpush1.bf16.msra.mxu0 %v1903
      %2161 = vmatprep.mubr.bf16.mxu0 %v1490
      %2162 = vmatmul.mubr.bf16.gmra.mrb[0].mxu0 %v1489
      %v2163 = vpop.f32.mrb[0].mxu0
      %v2164 = vadd.f32 %v2003, %v2163
      %v2165 = vpop.f32.mrb[0].mxu0
      %v2166 = vpop.f32.mrb[0].mxu0
      %v2167 = vadd.f32 %v2006, %v2166
      %v2168 = vpop.f32.mrb[0].mxu0
      %2169 = vmatprep.mubr.bf16.mxu0 %v1496
      %2170 = vmatmul.mubr.bf16.gmra.mrb[0].mxu0 %v1495
      %v2171 = vpop.f32.mrb[0].mxu0
      %v2172 = vadd.f32 %v2011, %v2171
      %v2173 = vpop.f32.mrb[0].mxu0
      %v2174 = vpop.f32.mrb[0].mxu0
      %v2175 = vadd.f32 %v2014, %v2174
      %v2176 = vpop.f32.mrb[0].mxu0
      %2177 = vmatprep.mubr.bf16.mxu0 %v1502
      %2178 = vmatmul.mubr.bf16.gmra.mrb[0].mxu0 %v1501
      %v2179 = vpop.f32.mrb[0].mxu0
      %v2180 = vadd.f32 %v2019, %v2179
      %v2181 = vpop.f32.mrb[0].mxu0
      %v2182 = vpop.f32.mrb[0].mxu0
      %v2183 = vadd.f32 %v2022, %v2182
      %v2184 = vpop.f32.mrb[0].mxu0
      %2185 = vmatprep.mubr.bf16.mxu0 %v1508
      %2186 = vmatmul.mubr.bf16.gmra.mrb[0].mxu0 %v1507
      %v2187 = vpop.f32.mrb[0].mxu0
      %v2188 = vadd.f32 %v2027, %v2187
      %v2189 = vpop.f32.mrb[0].mxu0
      %v2190 = vpop.f32.mrb[0].mxu0
      %v2191 = vadd.f32 %v2030, %v2190
      %v2192 = vpop.f32.mrb[0].mxu0
      %2193 = vmatprep.mubr.bf16.mxu0 %v1514
      %2194 = vmatmul.mubr.bf16.gmra.mrb[0].mxu0 %v1513
      %v2195 = vpop.f32.mrb[0].mxu0
      %v2196 = vadd.f32 %v2035, %v2195
      %v2197 = vpop.f32.mrb[0].mxu0
      %v2198 = vpop.f32.mrb[0].mxu0
      %v2199 = vadd.f32 %v2038, %v2198
      %v2200 = vpop.f32.mrb[0].mxu0
      %2201 = vmatprep.mubr.bf16.mxu0 %v1520
      %2202 = vmatmul.mubr.bf16.gmra.mrb[0].mxu0 %v1519
      %v2203 = vpop.f32.mrb[0].mxu0
      %v2204 = vadd.f32 %v2043, %v2203
      %v2205 = vpop.f32.mrb[0].mxu0
      %v2206 = vpop.f32.mrb[0].mxu0
      %v2207 = vadd.f32 %v2046, %v2206
      %v2208 = vpop.f32.mrb[0].mxu0
      %2209 = vmatprep.mubr.bf16.mxu0 %v1526
      %2210 = vmatmul.mubr.bf16.gmra.mrb[0].mxu0 %v1525
      %v2211 = vpop.f32.mrb[0].mxu0
      %v2212 = vadd.f32 %v2051, %v2211
      %v2213 = vpop.f32.mrb[0].mxu0
      %v2214 = vpop.f32.mrb[0].mxu0
      %v2215 = vadd.f32 %v2054, %v2214
      %v2216 = vpop.f32.mrb[0].mxu0
      %2217 = vmatprep.mubr.bf16.mxu0 %v1532
      %2218 = vmatmul.mubr.bf16.gmra.mrb[0].mxu0 %v1531
      %v2219 = vpop.f32.mrb[0].mxu0
      %v2220 = vadd.f32 %v2059, %v2219
      %v2221 = vpop.f32.mrb[0].mxu0
      %v2222 = vpop.f32.mrb[0].mxu0
      %v2223 = vadd.f32 %v2062, %v2222
      %v2224 = vpop.f32.mrb[0].mxu0
      %2225 = vmatprep.mubr.bf16.mxu0 %v1538
      %2226 = vmatmul.mubr.bf16.gmra.mrb[0].mxu0 %v1537
      %v2227 = vpop.f32.mrb[0].mxu0
      %v2228 = vadd.f32 %v2067, %v2227
      %v2229 = vpop.f32.mrb[0].mxu0
      %v2230 = vpop.f32.mrb[0].mxu0
      %v2231 = vadd.f32 %v2070, %v2230
      %v2232 = vpop.f32.mrb[0].mxu0
      %2233 = vmatprep.mubr.bf16.mxu0 %v1544
      %2234 = vmatmul.mubr.bf16.gmra.mrb[0].mxu0 %v1543
      %v2235 = vpop.f32.mrb[0].mxu0
      %v2236 = vadd.f32 %v2075, %v2235
      %v2237 = vpop.f32.mrb[0].mxu0
      %v2238 = vpop.f32.mrb[0].mxu0
      %v2239 = vadd.f32 %v2078, %v2238
      %v2240 = vpop.f32.mrb[0].mxu0
      %2241 = vmatprep.mubr.bf16.mxu0 %v1550
      %2242 = vmatmul.mubr.bf16.gmra.mrb[0].mxu0 %v1549
      %v2243 = vpop.f32.mrb[0].mxu0
      %v2244 = vadd.f32 %v2083, %v2243
      %v2245 = vpop.f32.mrb[0].mxu0
      %v2246 = vpop.f32.mrb[0].mxu0
      %v2247 = vadd.f32 %v2086, %v2246
      %v2248 = vpop.f32.mrb[0].mxu0
      %2249 = vmatprep.mubr.bf16.mxu0 %v1556
      %2250 = vmatmul.mubr.bf16.gmra.mrb[0].mxu0 %v1555
      %v2251 = vpop.f32.mrb[0].mxu0
      %v2252 = vadd.f32 %v2091, %v2251
      %v2253 = vpop.f32.mrb[0].mxu0
      %v2254 = vpop.f32.mrb[0].mxu0
      %v2255 = vadd.f32 %v2094, %v2254
      %v2256 = vpop.f32.mrb[0].mxu0
      %2257 = vmatprep.mubr.bf16.mxu0 %v1562
      %2258 = vmatmul.mubr.bf16.gmra.mrb[0].mxu0 %v1561
      %v2259 = vpop.f32.mrb[0].mxu0
      %v2260 = vadd.f32 %v2099, %v2259
      %v2261 = vpop.f32.mrb[0].mxu0
      %v2262 = vpop.f32.mrb[0].mxu0
      %v2263 = vadd.f32 %v2102, %v2262
      %v2264 = vpop.f32.mrb[0].mxu0
      %2265 = vmatprep.mubr.bf16.mxu0 %v1568
      %2266 = vmatmul.mubr.bf16.gmra.mrb[0].mxu0 %v1567
      %v2267 = vpop.f32.mrb[0].mxu0
      %v2268 = vadd.f32 %v2107, %v2267
      %v2269 = vpop.f32.mrb[0].mxu0
      %v2270 = vpop.f32.mrb[0].mxu0
      %v2271 = vadd.f32 %v2110, %v2270
      %v2272 = vpop.f32.mrb[0].mxu0
      %2273 = vmatprep.mubr.bf16.mxu0 %v1574
      %2274 = vmatmul.mubr.bf16.gmra.mrb[0].mxu0 %v1573
      %v2275 = vpop.f32.mrb[0].mxu0
      %v2276 = vadd.f32 %v2115, %v2275
      %v2277 = vpop.f32.mrb[0].mxu0
      %v2278 = vpop.f32.mrb[0].mxu0
      %v2279 = vadd.f32 %v2118, %v2278
      %v2280 = vpop.f32.mrb[0].mxu0
      %2281 = vmatprep.mubr.bf16.mxu0 %v1580
      %2282 = vmatmul.mubr.bf16.gmra.mrb[0].mxu0 %v1579
      %v2283 = vpop.f32.mrb[0].mxu0
      %v2284 = vadd.f32 %v2123, %v2283
      %v2285 = vpop.f32.mrb[0].mxu0
      %v2286 = vpop.f32.mrb[0].mxu0
      %v2287 = vadd.f32 %v2126, %v2286
      %v2288 = vpop.f32.mrb[0].mxu0
      %2289 = vdwg.mxu0
      %2290 = vmatprep.subr.bf16.mxu0 0
      %2291 = vmatpush1.bf16.msra.mxu0 %v1904
      %2292 = vmatprep.subr.bf16.mxu0 0
      %2293 = vmatpush1.bf16.msra.mxu0 %v1905
      %2294 = vmatprep.subr.bf16.mxu0 0
      %2295 = vmatpush1.bf16.msra.mxu0 %v1906
      %2296 = vmatprep.subr.bf16.mxu0 0
      %2297 = vmatpush1.bf16.msra.mxu0 %v1907
      %2298 = vmatprep.subr.bf16.mxu0 0
      %2299 = vmatpush1.bf16.msra.mxu0 %v1908
      %2300 = vmatprep.subr.bf16.mxu0 0
      %2301 = vmatpush1.bf16.msra.mxu0 %v1909
      %2302 = vmatprep.subr.bf16.mxu0 0
      %2303 = vmatpush1.bf16.msra.mxu0 %v1910
      %2304 = vmatprep.subr.bf16.mxu0 0
      %2305 = vmatpush1.bf16.msra.mxu0 %v1911
      %2306 = vmatprep.subr.bf16.mxu0 0
      %2307 = vmatpush1.bf16.msra.mxu0 %v1912
      %2308 = vmatprep.subr.bf16.mxu0 0
      %2309 = vmatpush1.bf16.msra.mxu0 %v1913
      %2310 = vmatprep.subr.bf16.mxu0 0
      %2311 = vmatpush1.bf16.msra.mxu0 %v1914
      %2312 = vmatprep.subr.bf16.mxu0 0
      %2313 = vmatpush1.bf16.msra.mxu0 %v1915
      %2314 = vmatprep.subr.bf16.mxu0 0
      %2315 = vmatpush1.bf16.msra.mxu0 %v1916
      %2316 = vmatprep.subr.bf16.mxu0 0
      %2317 = vmatpush1.bf16.msra.mxu0 %v1917
      %2318 = vmatprep.subr.bf16.mxu0 0
      %2319 = vmatpush1.bf16.msra.mxu0 %v1918
      %2320 = vmatprep.subr.bf16.mxu0 0
      %2321 = vmatpush1.bf16.msra.mxu0 %v1919
      %2322 = vmatprep.mubr.bf16.mxu0 %v1492
      %2323 = vmatmul.mubr.bf16.gmra.mrb[0].mxu0 %v1491
      %v2324 = vpop.f32.mrb[0].mxu0
      %v2325 = vadd.f32 %v2164, %v2324
      %v2326 = vpop.f32.mrb[0].mxu0
      %v2327 = vpop.f32.mrb[0].mxu0
      %v2328 = vadd.f32 %v2167, %v2327
      %v2329 = vpop.f32.mrb[0].mxu0
      %2330 = vmatprep.mubr.bf16.mxu0 %v1498
      %2331 = vmatmul.mubr.bf16.gmra.mrb[0].mxu0 %v1497
      %v2332 = vpop.f32.mrb[0].mxu0
      %v2333 = vadd.f32 %v2172, %v2332
      %v2334 = vpop.f32.mrb[0].mxu0
      %v2335 = vpop.f32.mrb[0].mxu0
      %v2336 = vadd.f32 %v2175, %v2335
      %v2337 = vpop.f32.mrb[0].mxu0
      %2338 = vmatprep.mubr.bf16.mxu0 %v1504
      %2339 = vmatmul.mubr.bf16.gmra.mrb[0].mxu0 %v1503
      %v2340 = vpop.f32.mrb[0].mxu0
      %v2341 = vadd.f32 %v2180, %v2340
      %v2342 = vpop.f32.mrb[0].mxu0
      %v2343 = vpop.f32.mrb[0].mxu0
      %v2344 = vadd.f32 %v2183, %v2343
      %v2345 = vpop.f32.mrb[0].mxu0
      %2346 = vmatprep.mubr.bf16.mxu0 %v1510
      %2347 = vmatmul.mubr.bf16.gmra.mrb[0].mxu0 %v1509
      %v2348 = vpop.f32.mrb[0].mxu0
      %v2349 = vadd.f32 %v2188, %v2348
      %v2350 = vpop.f32.mrb[0].mxu0
      %v2351 = vpop.f32.mrb[0].mxu0
      %v2352 = vadd.f32 %v2191, %v2351
      %v2353 = vpop.f32.mrb[0].mxu0
      %2354 = vmatprep.mubr.bf16.mxu0 %v1516
      %2355 = vmatmul.mubr.bf16.gmra.mrb[0].mxu0 %v1515
      %v2356 = vpop.f32.mrb[0].mxu0
      %v2357 = vadd.f32 %v2196, %v2356
      %v2358 = vpop.f32.mrb[0].mxu0
      %v2359 = vpop.f32.mrb[0].mxu0
      %v2360 = vadd.f32 %v2199, %v2359
      %v2361 = vpop.f32.mrb[0].mxu0
      %2362 = vmatprep.mubr.bf16.mxu0 %v1522
      %2363 = vmatmul.mubr.bf16.gmra.mrb[0].mxu0 %v1521
      %v2364 = vpop.f32.mrb[0].mxu0
      %v2365 = vadd.f32 %v2204, %v2364
      %v2366 = vpop.f32.mrb[0].mxu0
      %v2367 = vpop.f32.mrb[0].mxu0
      %v2368 = vadd.f32 %v2207, %v2367
      %v2369 = vpop.f32.mrb[0].mxu0
      %2370 = vmatprep.mubr.bf16.mxu0 %v1528
      %2371 = vmatmul.mubr.bf16.gmra.mrb[0].mxu0 %v1527
      %v2372 = vpop.f32.mrb[0].mxu0
      %v2373 = vadd.f32 %v2212, %v2372
      %v2374 = vpop.f32.mrb[0].mxu0
      %v2375 = vpop.f32.mrb[0].mxu0
      %v2376 = vadd.f32 %v2215, %v2375
      %v2377 = vpop.f32.mrb[0].mxu0
      %2378 = vmatprep.mubr.bf16.mxu0 %v1534
      %2379 = vmatmul.mubr.bf16.gmra.mrb[0].mxu0 %v1533
      %v2380 = vpop.f32.mrb[0].mxu0
      %v2381 = vadd.f32 %v2220, %v2380
      %v2382 = vpop.f32.mrb[0].mxu0
      %v2383 = vpop.f32.mrb[0].mxu0
      %v2384 = vadd.f32 %v2223, %v2383
      %v2385 = vpop.f32.mrb[0].mxu0
      %2386 = vmatprep.mubr.bf16.mxu0 %v1540
      %2387 = vmatmul.mubr.bf16.gmra.mrb[0].mxu0 %v1539
      %v2388 = vpop.f32.mrb[0].mxu0
      %v2389 = vadd.f32 %v2228, %v2388
      %v2390 = vpop.f32.mrb[0].mxu0
      %v2391 = vpop.f32.mrb[0].mxu0
      %v2392 = vadd.f32 %v2231, %v2391
      %v2393 = vpop.f32.mrb[0].mxu0
      %2394 = vmatprep.mubr.bf16.mxu0 %v1546
      %2395 = vmatmul.mubr.bf16.gmra.mrb[0].mxu0 %v1545
      %v2396 = vpop.f32.mrb[0].mxu0
      %v2397 = vadd.f32 %v2236, %v2396
      %v2398 = vpop.f32.mrb[0].mxu0
      %v2399 = vpop.f32.mrb[0].mxu0
      %v2400 = vadd.f32 %v2239, %v2399
      %v2401 = vpop.f32.mrb[0].mxu0
      %2402 = vmatprep.mubr.bf16.mxu0 %v1552
      %2403 = vmatmul.mubr.bf16.gmra.mrb[0].mxu0 %v1551
      %v2404 = vpop.f32.mrb[0].mxu0
      %v2405 = vadd.f32 %v2244, %v2404
      %v2406 = vpop.f32.mrb[0].mxu0
      %v2407 = vpop.f32.mrb[0].mxu0
      %v2408 = vadd.f32 %v2247, %v2407
      %v2409 = vpop.f32.mrb[0].mxu0
      %2410 = vmatprep.mubr.bf16.mxu0 %v1558
      %2411 = vmatmul.mubr.bf16.gmra.mrb[0].mxu0 %v1557
      %v2412 = vpop.f32.mrb[0].mxu0
      %v2413 = vadd.f32 %v2252, %v2412
      %v2414 = vpop.f32.mrb[0].mxu0
      %v2415 = vpop.f32.mrb[0].mxu0
      %v2416 = vadd.f32 %v2255, %v2415
      %v2417 = vpop.f32.mrb[0].mxu0
      %2418 = vmatprep.mubr.bf16.mxu0 %v1564
      %2419 = vmatmul.mubr.bf16.gmra.mrb[0].mxu0 %v1563
      %v2420 = vpop.f32.mrb[0].mxu0
      %v2421 = vadd.f32 %v2260, %v2420
      %v2422 = vpop.f32.mrb[0].mxu0
      %v2423 = vpop.f32.mrb[0].mxu0
      %v2424 = vadd.f32 %v2263, %v2423
      %v2425 = vpop.f32.mrb[0].mxu0
      %2426 = vmatprep.mubr.bf16.mxu0 %v1570
      %2427 = vmatmul.mubr.bf16.gmra.mrb[0].mxu0 %v1569
      %v2428 = vpop.f32.mrb[0].mxu0
      %v2429 = vadd.f32 %v2268, %v2428
      %v2430 = vpop.f32.mrb[0].mxu0
      %v2431 = vpop.f32.mrb[0].mxu0
      %v2432 = vadd.f32 %v2271, %v2431
      %v2433 = vpop.f32.mrb[0].mxu0
      %2434 = vmatprep.mubr.bf16.mxu0 %v1576
      %2435 = vmatmul.mubr.bf16.gmra.mrb[0].mxu0 %v1575
      %v2436 = vpop.f32.mrb[0].mxu0
      %v2437 = vadd.f32 %v2276, %v2436
      %v2438 = vpop.f32.mrb[0].mxu0
      %v2439 = vpop.f32.mrb[0].mxu0
      %v2440 = vadd.f32 %v2279, %v2439
      %v2441 = vpop.f32.mrb[0].mxu0
      %2442 = vmatprep.mubr.bf16.mxu0 %v1582
      %2443 = vmatmul.mubr.bf16.gmra.mrb[0].mxu0 %v1581
      %v2444 = vpop.f32.mrb[0].mxu0
      %v2445 = vadd.f32 %v2284, %v2444
      %v2446 = vpop.f32.mrb[0].mxu0
      %v2447 = vpop.f32.mrb[0].mxu0
      %v2448 = vadd.f32 %v2287, %v2447
      %v2449 = vpop.f32.mrb[0].mxu0
      %2450 = vdwg.mxu0
      %v2547 = vunpack.c.l.b16 %v1391
      %v2548 = vunpack.c.l.b16 %v1392
      %v2549 = vunpack.c.l.b16 %v1393
      %v2550 = vunpack.c.l.b16 %v1394
      %v2551 = vunpack.c.l.b16 %v1395
      %v2552 = vunpack.c.l.b16 %v1396
      %v2553 = vunpack.c.l.b16 %v1397
      %v2554 = vunpack.c.l.b16 %v1398
      %v2555 = vunpack.c.l.b16 %v1399
      %v2556 = vunpack.c.l.b16 %v1400
      %v2557 = vunpack.c.l.b16 %v1401
      %v2558 = vunpack.c.l.b16 %v1402
      %v2559 = vunpack.c.l.b16 %v1403
      %v2560 = vunpack.c.l.b16 %v1404
      %v2561 = vunpack.c.l.b16 %v1405
      %v2562 = vunpack.c.l.b16 %v1406
      %v2563 = vunpack.c.l.b16 %v1407
      %v2564 = vunpack.c.l.b16 %v1408
      %v2565 = vunpack.c.l.b16 %v1409
      %v2566 = vunpack.c.l.b16 %v1410
      %v2567 = vunpack.c.l.b16 %v1411
      %v2568 = vunpack.c.l.b16 %v1412
      %v2569 = vunpack.c.l.b16 %v1413
      %v2570 = vunpack.c.l.b16 %v1414
      %v2571 = vunpack.c.l.b16 %v1415
      %v2572 = vunpack.c.l.b16 %v1416
      %v2573 = vunpack.c.l.b16 %v1417
      %v2574 = vunpack.c.l.b16 %v1418
      %v2575 = vunpack.c.l.b16 %v1419
      %v2576 = vunpack.c.l.b16 %v1420
      %v2577 = vunpack.c.l.b16 %v1421
      %v2578 = vunpack.c.l.b16 %v1422
      %v2579 = vunpack.c.l.b16 %v1423
      %v2580 = vunpack.c.l.b16 %v1424
      %v2581 = vunpack.c.l.b16 %v1425
      %v2582 = vunpack.c.l.b16 %v1426
      %v2583 = vunpack.c.l.b16 %v1427
      %v2584 = vunpack.c.l.b16 %v1428
      %v2585 = vunpack.c.l.b16 %v1429
      %v2586 = vunpack.c.l.b16 %v1430
      %v2587 = vunpack.c.l.b16 %v1431
      %v2588 = vunpack.c.l.b16 %v1432
      %v2589 = vunpack.c.l.b16 %v1433
      %v2590 = vunpack.c.l.b16 %v1434
      %v2591 = vunpack.c.l.b16 %v1435
      %v2592 = vunpack.c.l.b16 %v1436
      %v2593 = vunpack.c.l.b16 %v1437
      %v2594 = vunpack.c.l.b16 %v1438
      %v2595 = vunpack.c.l.b16 %v1439
      %v2596 = vunpack.c.l.b16 %v1440
      %v2597 = vunpack.c.l.b16 %v1441
      %v2598 = vunpack.c.l.b16 %v1442
      %v2599 = vunpack.c.l.b16 %v1443
      %v2600 = vunpack.c.l.b16 %v1444
      %v2601 = vunpack.c.l.b16 %v1445
      %v2602 = vunpack.c.l.b16 %v1446
      %v2603 = vunpack.c.l.b16 %v1447
      %v2604 = vunpack.c.l.b16 %v1448
      %v2605 = vunpack.c.l.b16 %v1449
      %v2606 = vunpack.c.l.b16 %v1450
      %v2607 = vunpack.c.l.b16 %v1451
      %v2608 = vunpack.c.l.b16 %v1452
      %v2609 = vunpack.c.l.b16 %v1453
      %v2610 = vunpack.c.l.b16 %v1454
      %v2611 = vunpack.c.l.b16 %v1455
      %v2612 = vunpack.c.l.b16 %v1456
      %v2613 = vunpack.c.l.b16 %v1457
      %v2614 = vunpack.c.l.b16 %v1458
      %v2615 = vunpack.c.l.b16 %v1459
      %v2616 = vunpack.c.l.b16 %v1460
      %v2617 = vunpack.c.l.b16 %v1461
      %v2618 = vunpack.c.l.b16 %v1462
      %v2619 = vunpack.c.l.b16 %v1463
      %v2620 = vunpack.c.l.b16 %v1464
      %v2621 = vunpack.c.l.b16 %v1465
      %v2622 = vunpack.c.l.b16 %v1466
      %v2623 = vunpack.c.l.b16 %v1467
      %v2624 = vunpack.c.l.b16 %v1468
      %v2625 = vunpack.c.l.b16 %v1469
      %v2626 = vunpack.c.l.b16 %v1470
      %v2627 = vunpack.c.l.b16 %v1471
      %v2628 = vunpack.c.l.b16 %v1472
      %v2629 = vunpack.c.l.b16 %v1473
      %v2630 = vunpack.c.l.b16 %v1474
      %v2631 = vunpack.c.l.b16 %v1475
      %v2632 = vunpack.c.l.b16 %v1476
      %v2633 = vunpack.c.l.b16 %v1477
      %v2634 = vunpack.c.l.b16 %v1478
      %v2635 = vunpack.c.l.b16 %v1479
      %v2636 = vunpack.c.l.b16 %v1480
      %v2637 = vunpack.c.l.b16 %v1481
      %v2638 = vunpack.c.l.b16 %v1482
      %v2639 = vunpack.c.l.b16 %v1483
      %v2640 = vunpack.c.l.b16 %v1484
      %v2641 = vunpack.c.l.b16 %v1485
      %v2642 = vunpack.c.l.b16 %v1486
      %v2643 = vpack.c.b16 %v2548, %v2547
      %v2644 = vpack.c.b16 %v2550, %v2549
      %v2645 = vpack.c.b16 %v2552, %v2551
      %v2646 = vpack.c.b16 %v2554, %v2553
      %v2647 = vpack.c.b16 %v2556, %v2555
      %v2648 = vpack.c.b16 %v2558, %v2557
      %v2649 = vpack.c.b16 %v2560, %v2559
      %v2650 = vpack.c.b16 %v2562, %v2561
      %v2651 = vpack.c.b16 %v2564, %v2563
      %v2652 = vpack.c.b16 %v2566, %v2565
      %v2653 = vpack.c.b16 %v2568, %v2567
      %v2654 = vpack.c.b16 %v2570, %v2569
      %v2655 = vpack.c.b16 %v2572, %v2571
      %v2656 = vpack.c.b16 %v2574, %v2573
      %v2657 = vpack.c.b16 %v2576, %v2575
      %v2658 = vpack.c.b16 %v2578, %v2577
      %v2659 = vpack.c.b16 %v2580, %v2579
      %v2660 = vpack.c.b16 %v2582, %v2581
      %v2661 = vpack.c.b16 %v2584, %v2583
      %v2662 = vpack.c.b16 %v2586, %v2585
      %v2663 = vpack.c.b16 %v2588, %v2587
      %v2664 = vpack.c.b16 %v2590, %v2589
      %v2665 = vpack.c.b16 %v2592, %v2591
      %v2666 = vpack.c.b16 %v2594, %v2593
      %v2667 = vpack.c.b16 %v2596, %v2595
      %v2668 = vpack.c.b16 %v2598, %v2597
      %v2669 = vpack.c.b16 %v2600, %v2599
      %v2670 = vpack.c.b16 %v2602, %v2601
      %v2671 = vpack.c.b16 %v2604, %v2603
      %v2672 = vpack.c.b16 %v2606, %v2605
      %v2673 = vpack.c.b16 %v2608, %v2607
      %v2674 = vpack.c.b16 %v2610, %v2609
      %v2675 = vpack.c.b16 %v2612, %v2611
      %v2676 = vpack.c.b16 %v2614, %v2613
      %v2677 = vpack.c.b16 %v2616, %v2615
      %v2678 = vpack.c.b16 %v2618, %v2617
      %v2679 = vpack.c.b16 %v2620, %v2619
      %v2680 = vpack.c.b16 %v2622, %v2621
      %v2681 = vpack.c.b16 %v2624, %v2623
      %v2682 = vpack.c.b16 %v2626, %v2625
      %v2683 = vpack.c.b16 %v2628, %v2627
      %v2684 = vpack.c.b16 %v2630, %v2629
      %v2685 = vpack.c.b16 %v2632, %v2631
      %v2686 = vpack.c.b16 %v2634, %v2633
      %v2687 = vpack.c.b16 %v2636, %v2635
      %v2688 = vpack.c.b16 %v2638, %v2637
      %v2689 = vpack.c.b16 %v2640, %v2639
      %v2690 = vpack.c.b16 %v2642, %v2641
      %2739 = vmatprep.subr.bf16.mxu0 0
      %2740 = vmatpush1.bf16.msra.mxu0 %v2643
      %2741 = vmatprep.subr.bf16.mxu0 0
      %2742 = vmatpush1.bf16.msra.mxu0 %v2644
      %2743 = vmatprep.subr.bf16.mxu0 0
      %2744 = vmatpush1.bf16.msra.mxu0 %v2645
      %2745 = vmatprep.subr.bf16.mxu0 0
      %2746 = vmatpush1.bf16.msra.mxu0 %v2646
      %2747 = vmatprep.subr.bf16.mxu0 0
      %2748 = vmatpush1.bf16.msra.mxu0 %v2647
      %2749 = vmatprep.subr.bf16.mxu0 0
      %2750 = vmatpush1.bf16.msra.mxu0 %v2648
      %2751 = vmatprep.subr.bf16.mxu0 0
      %2752 = vmatpush1.bf16.msra.mxu0 %v2649
      %2753 = vmatprep.subr.bf16.mxu0 0
      %2754 = vmatpush1.bf16.msra.mxu0 %v2650
      %2755 = vmatprep.subr.bf16.mxu0 0
      %2756 = vmatpush1.bf16.msra.mxu0 %v2651
      %2757 = vmatprep.subr.bf16.mxu0 0
      %2758 = vmatpush1.bf16.msra.mxu0 %v2652
      %2759 = vmatprep.subr.bf16.mxu0 0
      %2760 = vmatpush1.bf16.msra.mxu0 %v2653
      %2761 = vmatprep.subr.bf16.mxu0 0
      %2762 = vmatpush1.bf16.msra.mxu0 %v2654
      %2763 = vmatprep.subr.bf16.mxu0 0
      %2764 = vmatpush1.bf16.msra.mxu0 %v2655
      %2765 = vmatprep.subr.bf16.mxu0 0
      %2766 = vmatpush1.bf16.msra.mxu0 %v2656
      %2767 = vmatprep.subr.bf16.mxu0 0
      %2768 = vmatpush1.bf16.msra.mxu0 %v2657
      %2769 = vmatprep.subr.bf16.mxu0 0
      %2770 = vmatpush1.bf16.msra.mxu0 %v2658
      %2771 = vmatprep.mubr.bf16.mxu0 %v1296
      %2772 = vmatmul.mubr.bf16.gmra.mrb[0].mxu0 %v1295
      %v2773 = vpop.f32.mrb[0].mxu0
      %v2774 = vadd.f32 %v2325, %v2773
      %v2775 = vpop.f32.mrb[0].mxu0
      %v2776 = vpop.f32.mrb[0].mxu0
      %v2777 = vadd.f32 %v2328, %v2776
      %v2778 = vpop.f32.mrb[0].mxu0
      %2779 = vmatprep.mubr.bf16.mxu0 %v1302
      %2780 = vmatmul.mubr.bf16.gmra.mrb[0].mxu0 %v1301
      %v2781 = vpop.f32.mrb[0].mxu0
      %v2782 = vadd.f32 %v2333, %v2781
      %v2783 = vpop.f32.mrb[0].mxu0
      %v2784 = vpop.f32.mrb[0].mxu0
      %v2785 = vadd.f32 %v2336, %v2784
      %v2786 = vpop.f32.mrb[0].mxu0
      %2787 = vmatprep.mubr.bf16.mxu0 %v1308
      %2788 = vmatmul.mubr.bf16.gmra.mrb[0].mxu0 %v1307
      %v2789 = vpop.f32.mrb[0].mxu0
      %v2790 = vadd.f32 %v2341, %v2789
      %v2791 = vpop.f32.mrb[0].mxu0
      %v2792 = vpop.f32.mrb[0].mxu0
      %v2793 = vadd.f32 %v2344, %v2792
      %v2794 = vpop.f32.mrb[0].mxu0
      %2795 = vmatprep.mubr.bf16.mxu0 %v1314
      %2796 = vmatmul.mubr.bf16.gmra.mrb[0].mxu0 %v1313
      %v2797 = vpop.f32.mrb[0].mxu0
      %v2798 = vadd.f32 %v2349, %v2797
      %v2799 = vpop.f32.mrb[0].mxu0
      %v2800 = vpop.f32.mrb[0].mxu0
      %v2801 = vadd.f32 %v2352, %v2800
      %v2802 = vpop.f32.mrb[0].mxu0
      %2803 = vmatprep.mubr.bf16.mxu0 %v1320
      %2804 = vmatmul.mubr.bf16.gmra.mrb[0].mxu0 %v1319
      %v2805 = vpop.f32.mrb[0].mxu0
      %v2806 = vadd.f32 %v2357, %v2805
      %v2807 = vpop.f32.mrb[0].mxu0
      %v2808 = vpop.f32.mrb[0].mxu0
      %v2809 = vadd.f32 %v2360, %v2808
      %v2810 = vpop.f32.mrb[0].mxu0
      %2811 = vmatprep.mubr.bf16.mxu0 %v1326
      %2812 = vmatmul.mubr.bf16.gmra.mrb[0].mxu0 %v1325
      %v2813 = vpop.f32.mrb[0].mxu0
      %v2814 = vadd.f32 %v2365, %v2813
      %v2815 = vpop.f32.mrb[0].mxu0
      %v2816 = vpop.f32.mrb[0].mxu0
      %v2817 = vadd.f32 %v2368, %v2816
      %v2818 = vpop.f32.mrb[0].mxu0
      %2819 = vmatprep.mubr.bf16.mxu0 %v1332
      %2820 = vmatmul.mubr.bf16.gmra.mrb[0].mxu0 %v1331
      %v2821 = vpop.f32.mrb[0].mxu0
      %v2822 = vadd.f32 %v2373, %v2821
      %v2823 = vpop.f32.mrb[0].mxu0
      %v2824 = vpop.f32.mrb[0].mxu0
      %v2825 = vadd.f32 %v2376, %v2824
      %v2826 = vpop.f32.mrb[0].mxu0
      %2827 = vmatprep.mubr.bf16.mxu0 %v1338
      %2828 = vmatmul.mubr.bf16.gmra.mrb[0].mxu0 %v1337
      %v2829 = vpop.f32.mrb[0].mxu0
      %v2830 = vadd.f32 %v2381, %v2829
      %v2831 = vpop.f32.mrb[0].mxu0
      %v2832 = vpop.f32.mrb[0].mxu0
      %v2833 = vadd.f32 %v2384, %v2832
      %v2834 = vpop.f32.mrb[0].mxu0
      %2835 = vmatprep.mubr.bf16.mxu0 %v1344
      %2836 = vmatmul.mubr.bf16.gmra.mrb[0].mxu0 %v1343
      %v2837 = vpop.f32.mrb[0].mxu0
      %v2838 = vadd.f32 %v2389, %v2837
      %v2839 = vpop.f32.mrb[0].mxu0
      %v2840 = vpop.f32.mrb[0].mxu0
      %v2841 = vadd.f32 %v2392, %v2840
      %v2842 = vpop.f32.mrb[0].mxu0
      %2843 = vmatprep.mubr.bf16.mxu0 %v1350
      %2844 = vmatmul.mubr.bf16.gmra.mrb[0].mxu0 %v1349
      %v2845 = vpop.f32.mrb[0].mxu0
      %v2846 = vadd.f32 %v2397, %v2845
      %v2847 = vpop.f32.mrb[0].mxu0
      %v2848 = vpop.f32.mrb[0].mxu0
      %v2849 = vadd.f32 %v2400, %v2848
      %v2850 = vpop.f32.mrb[0].mxu0
      %2851 = vmatprep.mubr.bf16.mxu0 %v1356
      %2852 = vmatmul.mubr.bf16.gmra.mrb[0].mxu0 %v1355
      %v2853 = vpop.f32.mrb[0].mxu0
      %v2854 = vadd.f32 %v2405, %v2853
      %v2855 = vpop.f32.mrb[0].mxu0
      %v2856 = vpop.f32.mrb[0].mxu0
      %v2857 = vadd.f32 %v2408, %v2856
      %v2858 = vpop.f32.mrb[0].mxu0
      %2859 = vmatprep.mubr.bf16.mxu0 %v1362
      %2860 = vmatmul.mubr.bf16.gmra.mrb[0].mxu0 %v1361
      %v2861 = vpop.f32.mrb[0].mxu0
      %v2862 = vadd.f32 %v2413, %v2861
      %v2863 = vpop.f32.mrb[0].mxu0
      %v2864 = vpop.f32.mrb[0].mxu0
      %v2865 = vadd.f32 %v2416, %v2864
      %v2866 = vpop.f32.mrb[0].mxu0
      %2867 = vmatprep.mubr.bf16.mxu0 %v1368
      %2868 = vmatmul.mubr.bf16.gmra.mrb[0].mxu0 %v1367
      %v2869 = vpop.f32.mrb[0].mxu0
      %v2870 = vadd.f32 %v2421, %v2869
      %v2871 = vpop.f32.mrb[0].mxu0
      %v2872 = vpop.f32.mrb[0].mxu0
      %v2873 = vadd.f32 %v2424, %v2872
      %v2874 = vpop.f32.mrb[0].mxu0
      %2875 = vmatprep.mubr.bf16.mxu0 %v1374
      %2876 = vmatmul.mubr.bf16.gmra.mrb[0].mxu0 %v1373
      %v2877 = vpop.f32.mrb[0].mxu0
      %v2878 = vadd.f32 %v2429, %v2877
      %v2879 = vpop.f32.mrb[0].mxu0
      %v2880 = vpop.f32.mrb[0].mxu0
      %v2881 = vadd.f32 %v2432, %v2880
      %v2882 = vpop.f32.mrb[0].mxu0
      %2883 = vmatprep.mubr.bf16.mxu0 %v1380
      %2884 = vmatmul.mubr.bf16.gmra.mrb[0].mxu0 %v1379
      %v2885 = vpop.f32.mrb[0].mxu0
      %v2886 = vadd.f32 %v2437, %v2885
      %v2887 = vpop.f32.mrb[0].mxu0
      %v2888 = vpop.f32.mrb[0].mxu0
      %v2889 = vadd.f32 %v2440, %v2888
      %v2890 = vpop.f32.mrb[0].mxu0
      %2891 = vmatprep.mubr.bf16.mxu0 %v1386
      %2892 = vmatmul.mubr.bf16.gmra.mrb[0].mxu0 %v1385
      %v2893 = vpop.f32.mrb[0].mxu0
      %v2894 = vadd.f32 %v2445, %v2893
      %v2895 = vpop.f32.mrb[0].mxu0
      %v2896 = vpop.f32.mrb[0].mxu0
      %v2897 = vadd.f32 %v2448, %v2896
      %v2898 = vpop.f32.mrb[0].mxu0
      %2899 = vdwg.mxu0
      %2900 = vmatprep.subr.bf16.mxu0 0
      %2901 = vmatpush1.bf16.msra.mxu0 %v2659
      %2902 = vmatprep.subr.bf16.mxu0 0
      %2903 = vmatpush1.bf16.msra.mxu0 %v2660
      %2904 = vmatprep.subr.bf16.mxu0 0
      %2905 = vmatpush1.bf16.msra.mxu0 %v2661
      %2906 = vmatprep.subr.bf16.mxu0 0
      %2907 = vmatpush1.bf16.msra.mxu0 %v2662
      %2908 = vmatprep.subr.bf16.mxu0 0
      %2909 = vmatpush1.bf16.msra.mxu0 %v2663
      %2910 = vmatprep.subr.bf16.mxu0 0
      %2911 = vmatpush1.bf16.msra.mxu0 %v2664
      %2912 = vmatprep.subr.bf16.mxu0 0
      %2913 = vmatpush1.bf16.msra.mxu0 %v2665
      %2914 = vmatprep.subr.bf16.mxu0 0
      %2915 = vmatpush1.bf16.msra.mxu0 %v2666
      %2916 = vmatprep.subr.bf16.mxu0 0
      %2917 = vmatpush1.bf16.msra.mxu0 %v2667
      %2918 = vmatprep.subr.bf16.mxu0 0
      %2919 = vmatpush1.bf16.msra.mxu0 %v2668
      %2920 = vmatprep.subr.bf16.mxu0 0
      %2921 = vmatpush1.bf16.msra.mxu0 %v2669
      %2922 = vmatprep.subr.bf16.mxu0 0
      %2923 = vmatpush1.bf16.msra.mxu0 %v2670
      %2924 = vmatprep.subr.bf16.mxu0 0
      %2925 = vmatpush1.bf16.msra.mxu0 %v2671
      %2926 = vmatprep.subr.bf16.mxu0 0
      %2927 = vmatpush1.bf16.msra.mxu0 %v2672
      %2928 = vmatprep.subr.bf16.mxu0 0
      %2929 = vmatpush1.bf16.msra.mxu0 %v2673
      %2930 = vmatprep.subr.bf16.mxu0 0
      %2931 = vmatpush1.bf16.msra.mxu0 %v2674
      %2932 = vmatprep.mubr.bf16.mxu0 %v1298
      %2933 = vmatmul.mubr.bf16.gmra.mrb[0].mxu0 %v1297
      %v2934 = vpop.f32.mrb[0].mxu0
      %v2935 = vadd.f32 %v2774, %v2934
      %v2936 = vpop.f32.mrb[0].mxu0
      %v2937 = vpop.f32.mrb[0].mxu0
      %v2938 = vadd.f32 %v2777, %v2937
      %v2939 = vpop.f32.mrb[0].mxu0
      %2940 = vmatprep.mubr.bf16.mxu0 %v1304
      %2941 = vmatmul.mubr.bf16.gmra.mrb[0].mxu0 %v1303
      %v2942 = vpop.f32.mrb[0].mxu0
      %v2943 = vadd.f32 %v2782, %v2942
      %v2944 = vpop.f32.mrb[0].mxu0
      %v2945 = vpop.f32.mrb[0].mxu0
      %v2946 = vadd.f32 %v2785, %v2945
      %v2947 = vpop.f32.mrb[0].mxu0
      %2948 = vmatprep.mubr.bf16.mxu0 %v1310
      %2949 = vmatmul.mubr.bf16.gmra.mrb[0].mxu0 %v1309
      %v2950 = vpop.f32.mrb[0].mxu0
      %v2951 = vadd.f32 %v2790, %v2950
      %v2952 = vpop.f32.mrb[0].mxu0
      %v2953 = vpop.f32.mrb[0].mxu0
      %v2954 = vadd.f32 %v2793, %v2953
      %v2955 = vpop.f32.mrb[0].mxu0
      %2956 = vmatprep.mubr.bf16.mxu0 %v1316
      %2957 = vmatmul.mubr.bf16.gmra.mrb[0].mxu0 %v1315
      %v2958 = vpop.f32.mrb[0].mxu0
      %v2959 = vadd.f32 %v2798, %v2958
      %v2960 = vpop.f32.mrb[0].mxu0
      %v2961 = vpop.f32.mrb[0].mxu0
      %v2962 = vadd.f32 %v2801, %v2961
      %v2963 = vpop.f32.mrb[0].mxu0
      %2964 = vmatprep.mubr.bf16.mxu0 %v1322
      %2965 = vmatmul.mubr.bf16.gmra.mrb[0].mxu0 %v1321
      %v2966 = vpop.f32.mrb[0].mxu0
      %v2967 = vadd.f32 %v2806, %v2966
      %v2968 = vpop.f32.mrb[0].mxu0
      %v2969 = vpop.f32.mrb[0].mxu0
      %v2970 = vadd.f32 %v2809, %v2969
      %v2971 = vpop.f32.mrb[0].mxu0
      %2972 = vmatprep.mubr.bf16.mxu0 %v1328
      %2973 = vmatmul.mubr.bf16.gmra.mrb[0].mxu0 %v1327
      %v2974 = vpop.f32.mrb[0].mxu0
      %v2975 = vadd.f32 %v2814, %v2974
      %v2976 = vpop.f32.mrb[0].mxu0
      %v2977 = vpop.f32.mrb[0].mxu0
      %v2978 = vadd.f32 %v2817, %v2977
      %v2979 = vpop.f32.mrb[0].mxu0
      %2980 = vmatprep.mubr.bf16.mxu0 %v1334
      %2981 = vmatmul.mubr.bf16.gmra.mrb[0].mxu0 %v1333
      %v2982 = vpop.f32.mrb[0].mxu0
      %v2983 = vadd.f32 %v2822, %v2982
      %v2984 = vpop.f32.mrb[0].mxu0
      %v2985 = vpop.f32.mrb[0].mxu0
      %v2986 = vadd.f32 %v2825, %v2985
      %v2987 = vpop.f32.mrb[0].mxu0
      %2988 = vmatprep.mubr.bf16.mxu0 %v1340
      %2989 = vmatmul.mubr.bf16.gmra.mrb[0].mxu0 %v1339
      %v2990 = vpop.f32.mrb[0].mxu0
      %v2991 = vadd.f32 %v2830, %v2990
      %v2992 = vpop.f32.mrb[0].mxu0
      %v2993 = vpop.f32.mrb[0].mxu0
      %v2994 = vadd.f32 %v2833, %v2993
      %v2995 = vpop.f32.mrb[0].mxu0
      %2996 = vmatprep.mubr.bf16.mxu0 %v1346
      %2997 = vmatmul.mubr.bf16.gmra.mrb[0].mxu0 %v1345
      %v2998 = vpop.f32.mrb[0].mxu0
      %v2999 = vadd.f32 %v2838, %v2998
      %v3000 = vpop.f32.mrb[0].mxu0
      %v3001 = vpop.f32.mrb[0].mxu0
      %v3002 = vadd.f32 %v2841, %v3001
      %v3003 = vpop.f32.mrb[0].mxu0
      %3004 = vmatprep.mubr.bf16.mxu0 %v1352
      %3005 = vmatmul.mubr.bf16.gmra.mrb[0].mxu0 %v1351
      %v3006 = vpop.f32.mrb[0].mxu0
      %v3007 = vadd.f32 %v2846, %v3006
      %v3008 = vpop.f32.mrb[0].mxu0
      %v3009 = vpop.f32.mrb[0].mxu0
      %v3010 = vadd.f32 %v2849, %v3009
      %v3011 = vpop.f32.mrb[0].mxu0
      %3012 = vmatprep.mubr.bf16.mxu0 %v1358
      %3013 = vmatmul.mubr.bf16.gmra.mrb[0].mxu0 %v1357
      %v3014 = vpop.f32.mrb[0].mxu0
      %v3015 = vadd.f32 %v2854, %v3014
      %v3016 = vpop.f32.mrb[0].mxu0
      %v3017 = vpop.f32.mrb[0].mxu0
      %v3018 = vadd.f32 %v2857, %v3017
      %v3019 = vpop.f32.mrb[0].mxu0
      %3020 = vmatprep.mubr.bf16.mxu0 %v1364
      %3021 = vmatmul.mubr.bf16.gmra.mrb[0].mxu0 %v1363
      %v3022 = vpop.f32.mrb[0].mxu0
      %v3023 = vadd.f32 %v2862, %v3022
      %v3024 = vpop.f32.mrb[0].mxu0
      %v3025 = vpop.f32.mrb[0].mxu0
      %v3026 = vadd.f32 %v2865, %v3025
      %v3027 = vpop.f32.mrb[0].mxu0
      %3028 = vmatprep.mubr.bf16.mxu0 %v1370
      %3029 = vmatmul.mubr.bf16.gmra.mrb[0].mxu0 %v1369
      %v3030 = vpop.f32.mrb[0].mxu0
      %v3031 = vadd.f32 %v2870, %v3030
      %v3032 = vpop.f32.mrb[0].mxu0
      %v3033 = vpop.f32.mrb[0].mxu0
      %v3034 = vadd.f32 %v2873, %v3033
      %v3035 = vpop.f32.mrb[0].mxu0
      %3036 = vmatprep.mubr.bf16.mxu0 %v1376
      %3037 = vmatmul.mubr.bf16.gmra.mrb[0].mxu0 %v1375
      %v3038 = vpop.f32.mrb[0].mxu0
      %v3039 = vadd.f32 %v2878, %v3038
      %v3040 = vpop.f32.mrb[0].mxu0
      %v3041 = vpop.f32.mrb[0].mxu0
      %v3042 = vadd.f32 %v2881, %v3041
      %v3043 = vpop.f32.mrb[0].mxu0
      %3044 = vmatprep.mubr.bf16.mxu0 %v1382
      %3045 = vmatmul.mubr.bf16.gmra.mrb[0].mxu0 %v1381
      %v3046 = vpop.f32.mrb[0].mxu0
      %v3047 = vadd.f32 %v2886, %v3046
      %v3048 = vpop.f32.mrb[0].mxu0
      %v3049 = vpop.f32.mrb[0].mxu0
      %v3050 = vadd.f32 %v2889, %v3049
      %v3051 = vpop.f32.mrb[0].mxu0
      %3052 = vmatprep.mubr.bf16.mxu0 %v1388
      %3053 = vmatmul.mubr.bf16.gmra.mrb[0].mxu0 %v1387
      %v3054 = vpop.f32.mrb[0].mxu0
      %v3055 = vadd.f32 %v2894, %v3054
      %v3056 = vpop.f32.mrb[0].mxu0
      %v3057 = vpop.f32.mrb[0].mxu0
      %v3058 = vadd.f32 %v2897, %v3057
      %v3059 = vpop.f32.mrb[0].mxu0
      %3060 = vdwg.mxu0
      %3061 = vmatprep.subr.bf16.mxu0 0
      %3062 = vmatpush1.bf16.msra.mxu0 %v2675
      %3063 = vmatprep.subr.bf16.mxu0 0
      %3064 = vmatpush1.bf16.msra.mxu0 %v2676
      %3065 = vmatprep.subr.bf16.mxu0 0
      %3066 = vmatpush1.bf16.msra.mxu0 %v2677
      %3067 = vmatprep.subr.bf16.mxu0 0
      %3068 = vmatpush1.bf16.msra.mxu0 %v2678
      %3069 = vmatprep.subr.bf16.mxu0 0
      %3070 = vmatpush1.bf16.msra.mxu0 %v2679
      %3071 = vmatprep.subr.bf16.mxu0 0
      %3072 = vmatpush1.bf16.msra.mxu0 %v2680
      %3073 = vmatprep.subr.bf16.mxu0 0
      %3074 = vmatpush1.bf16.msra.mxu0 %v2681
      %3075 = vmatprep.subr.bf16.mxu0 0
      %3076 = vmatpush1.bf16.msra.mxu0 %v2682
      %3077 = vmatprep.subr.bf16.mxu0 0
      %3078 = vmatpush1.bf16.msra.mxu0 %v2683
      %3079 = vmatprep.subr.bf16.mxu0 0
      %3080 = vmatpush1.bf16.msra.mxu0 %v2684
      %3081 = vmatprep.subr.bf16.mxu0 0
      %3082 = vmatpush1.bf16.msra.mxu0 %v2685
      %3083 = vmatprep.subr.bf16.mxu0 0
      %3084 = vmatpush1.bf16.msra.mxu0 %v2686
      %3085 = vmatprep.subr.bf16.mxu0 0
      %3086 = vmatpush1.bf16.msra.mxu0 %v2687
      %3087 = vmatprep.subr.bf16.mxu0 0
      %3088 = vmatpush1.bf16.msra.mxu0 %v2688
      %3089 = vmatprep.subr.bf16.mxu0 0
      %3090 = vmatpush1.bf16.msra.mxu0 %v2689
      %3091 = vmatprep.subr.bf16.mxu0 0
      %3092 = vmatpush1.bf16.msra.mxu0 %v2690
      %3093 = vmatprep.mubr.bf16.mxu0 %v1300
      %3094 = vmatmul.mubr.bf16.gmra.mrb[0].mxu0 %v1299
      %v3095 = vpop.f32.mrb[0].mxu0
      %v3096 = vadd.f32 %v2935, %v3095
      %v3097 = vpop.f32.mrb[0].mxu0
      %v3098 = vpop.f32.mrb[0].mxu0
      %v3099 = vadd.f32 %v2938, %v3098
      %v3100 = vpop.f32.mrb[0].mxu0
      %3101 = vmatprep.mubr.bf16.mxu0 %v1306
      %3102 = vmatmul.mubr.bf16.gmra.mrb[0].mxu0 %v1305
      %v3103 = vpop.f32.mrb[0].mxu0
      %v3104 = vadd.f32 %v2943, %v3103
      %v3105 = vpop.f32.mrb[0].mxu0
      %v3106 = vpop.f32.mrb[0].mxu0
      %v3107 = vadd.f32 %v2946, %v3106
      %v3108 = vpop.f32.mrb[0].mxu0
      %3109 = vmatprep.mubr.bf16.mxu0 %v1312
      %3110 = vmatmul.mubr.bf16.gmra.mrb[0].mxu0 %v1311
      %v3111 = vpop.f32.mrb[0].mxu0
      %v3112 = vadd.f32 %v2951, %v3111
      %v3113 = vpop.f32.mrb[0].mxu0
      %v3114 = vpop.f32.mrb[0].mxu0
      %v3115 = vadd.f32 %v2954, %v3114
      %v3116 = vpop.f32.mrb[0].mxu0
      %3117 = vmatprep.mubr.bf16.mxu0 %v1318
      %3118 = vmatmul.mubr.bf16.gmra.mrb[0].mxu0 %v1317
      %v3119 = vpop.f32.mrb[0].mxu0
      %v3120 = vadd.f32 %v2959, %v3119
      %v3121 = vpop.f32.mrb[0].mxu0
      %v3122 = vpop.f32.mrb[0].mxu0
      %v3123 = vadd.f32 %v2962, %v3122
      %v3124 = vpop.f32.mrb[0].mxu0
      %3125 = vmatprep.mubr.bf16.mxu0 %v1324
      %3126 = vmatmul.mubr.bf16.gmra.mrb[0].mxu0 %v1323
      %v3127 = vpop.f32.mrb[0].mxu0
      %v3128 = vadd.f32 %v2967, %v3127
      %v3129 = vpop.f32.mrb[0].mxu0
      %v3130 = vpop.f32.mrb[0].mxu0
      %v3131 = vadd.f32 %v2970, %v3130
      %v3132 = vpop.f32.mrb[0].mxu0
      %3133 = vmatprep.mubr.bf16.mxu0 %v1330
      %3134 = vmatmul.mubr.bf16.gmra.mrb[0].mxu0 %v1329
      %v3135 = vpop.f32.mrb[0].mxu0
      %v3136 = vadd.f32 %v2975, %v3135
      %v3137 = vpop.f32.mrb[0].mxu0
      %v3138 = vpop.f32.mrb[0].mxu0
      %v3139 = vadd.f32 %v2978, %v3138
      %v3140 = vpop.f32.mrb[0].mxu0
      %3141 = vmatprep.mubr.bf16.mxu0 %v1336
      %3142 = vmatmul.mubr.bf16.gmra.mrb[0].mxu0 %v1335
      %v3143 = vpop.f32.mrb[0].mxu0
      %v3144 = vadd.f32 %v2983, %v3143
      %v3145 = vpop.f32.mrb[0].mxu0
      %v3146 = vpop.f32.mrb[0].mxu0
      %v3147 = vadd.f32 %v2986, %v3146
      %v3148 = vpop.f32.mrb[0].mxu0
      %3149 = vmatprep.mubr.bf16.mxu0 %v1342
      %3150 = vmatmul.mubr.bf16.gmra.mrb[0].mxu0 %v1341
      %v3151 = vpop.f32.mrb[0].mxu0
      %v3152 = vadd.f32 %v2991, %v3151
      %v3153 = vpop.f32.mrb[0].mxu0
      %v3154 = vpop.f32.mrb[0].mxu0
      %v3155 = vadd.f32 %v2994, %v3154
      %v3156 = vpop.f32.mrb[0].mxu0
      %3157 = vmatprep.mubr.bf16.mxu0 %v1348
      %3158 = vmatmul.mubr.bf16.gmra.mrb[0].mxu0 %v1347
      %v3159 = vpop.f32.mrb[0].mxu0
      %v3160 = vadd.f32 %v2999, %v3159
      %v3161 = vpop.f32.mrb[0].mxu0
      %v3162 = vpop.f32.mrb[0].mxu0
      %v3163 = vadd.f32 %v3002, %v3162
      %v3164 = vpop.f32.mrb[0].mxu0
      %3165 = vmatprep.mubr.bf16.mxu0 %v1354
      %3166 = vmatmul.mubr.bf16.gmra.mrb[0].mxu0 %v1353
      %v3167 = vpop.f32.mrb[0].mxu0
      %v3168 = vadd.f32 %v3007, %v3167
      %v3169 = vpop.f32.mrb[0].mxu0
      %v3170 = vpop.f32.mrb[0].mxu0
      %v3171 = vadd.f32 %v3010, %v3170
      %v3172 = vpop.f32.mrb[0].mxu0
      %3173 = vmatprep.mubr.bf16.mxu0 %v1360
      %3174 = vmatmul.mubr.bf16.gmra.mrb[0].mxu0 %v1359
      %v3175 = vpop.f32.mrb[0].mxu0
      %v3176 = vadd.f32 %v3015, %v3175
      %v3177 = vpop.f32.mrb[0].mxu0
      %v3178 = vpop.f32.mrb[0].mxu0
      %v3179 = vadd.f32 %v3018, %v3178
      %v3180 = vpop.f32.mrb[0].mxu0
      %3181 = vmatprep.mubr.bf16.mxu0 %v1366
      %3182 = vmatmul.mubr.bf16.gmra.mrb[0].mxu0 %v1365
      %v3183 = vpop.f32.mrb[0].mxu0
      %v3184 = vadd.f32 %v3023, %v3183
      %v3185 = vpop.f32.mrb[0].mxu0
      %v3186 = vpop.f32.mrb[0].mxu0
      %v3187 = vadd.f32 %v3026, %v3186
      %v3188 = vpop.f32.mrb[0].mxu0
      %3189 = vmatprep.mubr.bf16.mxu0 %v1372
      %3190 = vmatmul.mubr.bf16.gmra.mrb[0].mxu0 %v1371
      %v3191 = vpop.f32.mrb[0].mxu0
      %v3192 = vadd.f32 %v3031, %v3191
      %v3193 = vpop.f32.mrb[0].mxu0
      %v3194 = vpop.f32.mrb[0].mxu0
      %v3195 = vadd.f32 %v3034, %v3194
      %v3196 = vpop.f32.mrb[0].mxu0
      %3197 = vmatprep.mubr.bf16.mxu0 %v1378
      %3198 = vmatmul.mubr.bf16.gmra.mrb[0].mxu0 %v1377
      %v3199 = vpop.f32.mrb[0].mxu0
      %v3200 = vadd.f32 %v3039, %v3199
      %v3201 = vpop.f32.mrb[0].mxu0
      %v3202 = vpop.f32.mrb[0].mxu0
      %v3203 = vadd.f32 %v3042, %v3202
      %v3204 = vpop.f32.mrb[0].mxu0
      %3205 = vmatprep.mubr.bf16.mxu0 %v1384
      %3206 = vmatmul.mubr.bf16.gmra.mrb[0].mxu0 %v1383
      %v3207 = vpop.f32.mrb[0].mxu0
      %v3208 = vadd.f32 %v3047, %v3207
      %v3209 = vpop.f32.mrb[0].mxu0
      %v3210 = vpop.f32.mrb[0].mxu0
      %v3211 = vadd.f32 %v3050, %v3210
      %v3212 = vpop.f32.mrb[0].mxu0
      %3213 = vmatprep.mubr.bf16.mxu0 %v1390
      %3214 = vmatmul.mubr.bf16.gmra.mrb[0].mxu0 %v1389
      %v3215 = vpop.f32.mrb[0].mxu0
      %v3216 = vadd.f32 %v3055, %v3215
      %v3217 = vpop.f32.mrb[0].mxu0
      %v3218 = vpop.f32.mrb[0].mxu0
      %v3219 = vadd.f32 %v3058, %v3218
      %v3220 = vpop.f32.mrb[0].mxu0
      %3221 = vdwg.mxu0
      %s3222 = scalar_lea.vmem [#allocation2], 96
      %v3223 = vld [vmem:[%s3222] sm:$0xff]
      %v3224 = vld [vmem:[%s3222 + $0x8] sm:$0xff]
      %v3225 = vld [vmem:[%s3222 + $0x10] sm:$0xff]
      %v3226 = vld [vmem:[%s3222 + $0x18] sm:$0xff]
      %v3227 = vld [vmem:[%s3222 + $0x20] sm:$0xff]
      %v3228 = vld [vmem:[%s3222 + $0x28] sm:$0xff]
      %v3229 = vld [vmem:[%s3222 + $0x30] sm:$0xff]
      %v3230 = vld [vmem:[%s3222 + $0x38] sm:$0xff]
      %v3231 = vld [vmem:[%s3222 + $0x40] sm:$0xff]
      %v3232 = vld [vmem:[%s3222 + $0x48] sm:$0xff]
      %v3233 = vld [vmem:[%s3222 + $0x50] sm:$0xff]
      %v3234 = vld [vmem:[%s3222 + $0x58] sm:$0xff]
      %v3235 = vld [vmem:[%s3222 + $0x60] sm:$0xff]
      %v3236 = vld [vmem:[%s3222 + $0x68] sm:$0xff]
      %v3237 = vld [vmem:[%s3222 + $0x70] sm:$0xff]
      %v3238 = vld [vmem:[%s3222 + $0x78] sm:$0xff]
      %v3239 = vld [vmem:[%s3222 + $0x80] sm:$0xff]
      %v3240 = vld [vmem:[%s3222 + $0x88] sm:$0xff]
      %v3241 = vld [vmem:[%s3222 + $0x90] sm:$0xff]
      %v3242 = vld [vmem:[%s3222 + $0x98] sm:$0xff]
      %v3243 = vld [vmem:[%s3222 + $0xa0] sm:$0xff]
      %v3244 = vld [vmem:[%s3222 + $0xa8] sm:$0xff]
      %v3245 = vld [vmem:[%s3222 + $0xb0] sm:$0xff]
      %v3246 = vld [vmem:[%s3222 + $0xb8] sm:$0xff]
      %v3247 = vld [vmem:[%s3222 + $0xc0] sm:$0xff]
      %v3248 = vld [vmem:[%s3222 + $0xc8] sm:$0xff]
      %v3249 = vld [vmem:[%s3222 + $0xd0] sm:$0xff]
      %v3250 = vld [vmem:[%s3222 + $0xd8] sm:$0xff]
      %v3251 = vld [vmem:[%s3222 + $0xe0] sm:$0xff]
      %v3252 = vld [vmem:[%s3222 + $0xe8] sm:$0xff]
      %v3253 = vld [vmem:[%s3222 + $0xf0] sm:$0xff]
      %v3254 = vld [vmem:[%s3222 + $0xf8] sm:$0xff]
      %v3255 = vld [vmem:[%s3222 + $0x100] sm:$0xff]
      %v3256 = vld [vmem:[%s3222 + $0x108] sm:$0xff]
      %v3257 = vld [vmem:[%s3222 + $0x110] sm:$0xff]
      %v3258 = vld [vmem:[%s3222 + $0x118] sm:$0xff]
      %v3259 = vld [vmem:[%s3222 + $0x120] sm:$0xff]
      %v3260 = vld [vmem:[%s3222 + $0x128] sm:$0xff]
      %v3261 = vld [vmem:[%s3222 + $0x130] sm:$0xff]
      %v3262 = vld [vmem:[%s3222 + $0x138] sm:$0xff]
      %v3263 = vld [vmem:[%s3222 + $0x140] sm:$0xff]
      %v3264 = vld [vmem:[%s3222 + $0x148] sm:$0xff]
      %v3265 = vld [vmem:[%s3222 + $0x150] sm:$0xff]
      %v3266 = vld [vmem:[%s3222 + $0x158] sm:$0xff]
      %v3267 = vld [vmem:[%s3222 + $0x160] sm:$0xff]
      %v3268 = vld [vmem:[%s3222 + $0x168] sm:$0xff]
      %v3269 = vld [vmem:[%s3222 + $0x170] sm:$0xff]
      %v3270 = vld [vmem:[%s3222 + $0x178] sm:$0xff]
      %v3271 = vld [vmem:[%s3222 + $0x180] sm:$0xff]
      %v3272 = vld [vmem:[%s3222 + $0x188] sm:$0xff]
      %v3273 = vld [vmem:[%s3222 + $0x190] sm:$0xff]
      %v3274 = vld [vmem:[%s3222 + $0x198] sm:$0xff]
      %v3275 = vld [vmem:[%s3222 + $0x1a0] sm:$0xff]
      %v3276 = vld [vmem:[%s3222 + $0x1a8] sm:$0xff]
      %v3277 = vld [vmem:[%s3222 + $0x1b0] sm:$0xff]
      %v3278 = vld [vmem:[%s3222 + $0x1b8] sm:$0xff]
      %v3279 = vld [vmem:[%s3222 + $0x1c0] sm:$0xff]
      %v3280 = vld [vmem:[%s3222 + $0x1c8] sm:$0xff]
      %v3281 = vld [vmem:[%s3222 + $0x1d0] sm:$0xff]
      %v3282 = vld [vmem:[%s3222 + $0x1d8] sm:$0xff]
      %v3283 = vld [vmem:[%s3222 + $0x1e0] sm:$0xff]
      %v3284 = vld [vmem:[%s3222 + $0x1e8] sm:$0xff]
      %v3285 = vld [vmem:[%s3222 + $0x1f0] sm:$0xff]
      %v3286 = vld [vmem:[%s3222 + $0x1f8] sm:$0xff]
      %v3287 = vld [vmem:[%s3222 + $0x200] sm:$0xff]
      %v3288 = vld [vmem:[%s3222 + $0x208] sm:$0xff]
      %v3289 = vld [vmem:[%s3222 + $0x210] sm:$0xff]
      %v3290 = vld [vmem:[%s3222 + $0x218] sm:$0xff]
      %v3291 = vld [vmem:[%s3222 + $0x220] sm:$0xff]
      %v3292 = vld [vmem:[%s3222 + $0x228] sm:$0xff]
      %v3293 = vld [vmem:[%s3222 + $0x230] sm:$0xff]
      %v3294 = vld [vmem:[%s3222 + $0x238] sm:$0xff]
      %v3295 = vld [vmem:[%s3222 + $0x240] sm:$0xff]
      %v3296 = vld [vmem:[%s3222 + $0x248] sm:$0xff]
      %v3297 = vld [vmem:[%s3222 + $0x250] sm:$0xff]
      %v3298 = vld [vmem:[%s3222 + $0x258] sm:$0xff]
      %v3299 = vld [vmem:[%s3222 + $0x260] sm:$0xff]
      %v3300 = vld [vmem:[%s3222 + $0x268] sm:$0xff]
      %v3301 = vld [vmem:[%s3222 + $0x270] sm:$0xff]
      %v3302 = vld [vmem:[%s3222 + $0x278] sm:$0xff]
      %v3303 = vld [vmem:[%s3222 + $0x280] sm:$0xff]
      %v3304 = vld [vmem:[%s3222 + $0x288] sm:$0xff]
      %v3305 = vld [vmem:[%s3222 + $0x290] sm:$0xff]
      %v3306 = vld [vmem:[%s3222 + $0x298] sm:$0xff]
      %v3307 = vld [vmem:[%s3222 + $0x2a0] sm:$0xff]
      %v3308 = vld [vmem:[%s3222 + $0x2a8] sm:$0xff]
      %v3309 = vld [vmem:[%s3222 + $0x2b0] sm:$0xff]
      %v3310 = vld [vmem:[%s3222 + $0x2b8] sm:$0xff]
      %v3311 = vld [vmem:[%s3222 + $0x2c0] sm:$0xff]
      %v3312 = vld [vmem:[%s3222 + $0x2c8] sm:$0xff]
      %v3313 = vld [vmem:[%s3222 + $0x2d0] sm:$0xff]
      %v3314 = vld [vmem:[%s3222 + $0x2d8] sm:$0xff]
      %v3315 = vld [vmem:[%s3222 + $0x2e0] sm:$0xff]
      %v3316 = vld [vmem:[%s3222 + $0x2e8] sm:$0xff]
      %v3317 = vld [vmem:[%s3222 + $0x2f0] sm:$0xff]
      %v3318 = vld [vmem:[%s3222 + $0x2f8] sm:$0xff]
      %s3319 = scalar_lea.vmem %s2, 768
      %v3320 = vld [vmem:[%s3319] sm:$0xf]
      %v3321 = vld [vmem:[%s3319 + $0x4] sm:$0xf]
      %v3322 = vld [vmem:[%s3319 + $0x8] sm:$0xf]
      %v3323 = vld [vmem:[%s3319 + $0xc] sm:$0xf]
      %v3324 = vld [vmem:[%s3319 + $0x10] sm:$0xf]
      %v3325 = vld [vmem:[%s3319 + $0x14] sm:$0xf]
      %v3326 = vld [vmem:[%s3319 + $0x18] sm:$0xf]
      %v3327 = vld [vmem:[%s3319 + $0x1c] sm:$0xf]
      %v3328 = vld [vmem:[%s3319 + $0x20] sm:$0xf]
      %v3329 = vld [vmem:[%s3319 + $0x24] sm:$0xf]
      %v3330 = vld [vmem:[%s3319 + $0x28] sm:$0xf]
      %v3331 = vld [vmem:[%s3319 + $0x2c] sm:$0xf]
      %v3332 = vld [vmem:[%s3319 + $0x30] sm:$0xf]
      %v3333 = vld [vmem:[%s3319 + $0x34] sm:$0xf]
      %v3334 = vld [vmem:[%s3319 + $0x38] sm:$0xf]
      %v3335 = vld [vmem:[%s3319 + $0x3c] sm:$0xf]
      %v3336 = vld [vmem:[%s3319 + $0x40] sm:$0xf]
      %v3337 = vld [vmem:[%s3319 + $0x44] sm:$0xf]
      %v3338 = vld [vmem:[%s3319 + $0x48] sm:$0xf]
      %v3339 = vld [vmem:[%s3319 + $0x4c] sm:$0xf]
      %v3340 = vld [vmem:[%s3319 + $0x50] sm:$0xf]
      %v3341 = vld [vmem:[%s3319 + $0x54] sm:$0xf]
      %v3342 = vld [vmem:[%s3319 + $0x58] sm:$0xf]
      %v3343 = vld [vmem:[%s3319 + $0x5c] sm:$0xf]
      %v3344 = vld [vmem:[%s3319 + $0x60] sm:$0xf]
      %v3345 = vld [vmem:[%s3319 + $0x64] sm:$0xf]
      %v3346 = vld [vmem:[%s3319 + $0x68] sm:$0xf]
      %v3347 = vld [vmem:[%s3319 + $0x6c] sm:$0xf]
      %v3348 = vld [vmem:[%s3319 + $0x70] sm:$0xf]
      %v3349 = vld [vmem:[%s3319 + $0x74] sm:$0xf]
      %v3350 = vld [vmem:[%s3319 + $0x78] sm:$0xf]
      %v3351 = vld [vmem:[%s3319 + $0x7c] sm:$0xf]
      %v3352 = vld [vmem:[%s3319 + $0x80] sm:$0xf]
      %v3353 = vld [vmem:[%s3319 + $0x84] sm:$0xf]
      %v3354 = vld [vmem:[%s3319 + $0x88] sm:$0xf]
      %v3355 = vld [vmem:[%s3319 + $0x8c] sm:$0xf]
      %v3356 = vld [vmem:[%s3319 + $0x90] sm:$0xf]
      %v3357 = vld [vmem:[%s3319 + $0x94] sm:$0xf]
      %v3358 = vld [vmem:[%s3319 + $0x98] sm:$0xf]
      %v3359 = vld [vmem:[%s3319 + $0x9c] sm:$0xf]
      %v3360 = vld [vmem:[%s3319 + $0xa0] sm:$0xf]
      %v3361 = vld [vmem:[%s3319 + $0xa4] sm:$0xf]
      %v3362 = vld [vmem:[%s3319 + $0xa8] sm:$0xf]
      %v3363 = vld [vmem:[%s3319 + $0xac] sm:$0xf]
      %v3364 = vld [vmem:[%s3319 + $0xb0] sm:$0xf]
      %v3365 = vld [vmem:[%s3319 + $0xb4] sm:$0xf]
      %v3366 = vld [vmem:[%s3319 + $0xb8] sm:$0xf]
      %v3367 = vld [vmem:[%s3319 + $0xbc] sm:$0xf]
      %v3368 = vld [vmem:[%s3319 + $0xc0] sm:$0xf]
      %v3369 = vld [vmem:[%s3319 + $0xc4] sm:$0xf]
      %v3370 = vld [vmem:[%s3319 + $0xc8] sm:$0xf]
      %v3371 = vld [vmem:[%s3319 + $0xcc] sm:$0xf]
      %v3372 = vld [vmem:[%s3319 + $0xd0] sm:$0xf]
      %v3373 = vld [vmem:[%s3319 + $0xd4] sm:$0xf]
      %v3374 = vld [vmem:[%s3319 + $0xd8] sm:$0xf]
      %v3375 = vld [vmem:[%s3319 + $0xdc] sm:$0xf]
      %v3376 = vld [vmem:[%s3319 + $0xe0] sm:$0xf]
      %v3377 = vld [vmem:[%s3319 + $0xe4] sm:$0xf]
      %v3378 = vld [vmem:[%s3319 + $0xe8] sm:$0xf]
      %v3379 = vld [vmem:[%s3319 + $0xec] sm:$0xf]
      %v3380 = vld [vmem:[%s3319 + $0xf0] sm:$0xf]
      %v3381 = vld [vmem:[%s3319 + $0xf4] sm:$0xf]
      %v3382 = vld [vmem:[%s3319 + $0xf8] sm:$0xf]
      %v3383 = vld [vmem:[%s3319 + $0xfc] sm:$0xf]
      %v3384 = vld [vmem:[%s3319 + $0x100] sm:$0xf]
      %v3385 = vld [vmem:[%s3319 + $0x104] sm:$0xf]
      %v3386 = vld [vmem:[%s3319 + $0x108] sm:$0xf]
      %v3387 = vld [vmem:[%s3319 + $0x10c] sm:$0xf]
      %v3388 = vld [vmem:[%s3319 + $0x110] sm:$0xf]
      %v3389 = vld [vmem:[%s3319 + $0x114] sm:$0xf]
      %v3390 = vld [vmem:[%s3319 + $0x118] sm:$0xf]
      %v3391 = vld [vmem:[%s3319 + $0x11c] sm:$0xf]
      %v3392 = vld [vmem:[%s3319 + $0x120] sm:$0xf]
      %v3393 = vld [vmem:[%s3319 + $0x124] sm:$0xf]
      %v3394 = vld [vmem:[%s3319 + $0x128] sm:$0xf]
      %v3395 = vld [vmem:[%s3319 + $0x12c] sm:$0xf]
      %v3396 = vld [vmem:[%s3319 + $0x130] sm:$0xf]
      %v3397 = vld [vmem:[%s3319 + $0x134] sm:$0xf]
      %v3398 = vld [vmem:[%s3319 + $0x138] sm:$0xf]
      %v3399 = vld [vmem:[%s3319 + $0x13c] sm:$0xf]
      %v3400 = vld [vmem:[%s3319 + $0x140] sm:$0xf]
      %v3401 = vld [vmem:[%s3319 + $0x144] sm:$0xf]
      %v3402 = vld [vmem:[%s3319 + $0x148] sm:$0xf]
      %v3403 = vld [vmem:[%s3319 + $0x14c] sm:$0xf]
      %v3404 = vld [vmem:[%s3319 + $0x150] sm:$0xf]
      %v3405 = vld [vmem:[%s3319 + $0x154] sm:$0xf]
      %v3406 = vld [vmem:[%s3319 + $0x158] sm:$0xf]
      %v3407 = vld [vmem:[%s3319 + $0x15c] sm:$0xf]
      %v3408 = vld [vmem:[%s3319 + $0x160] sm:$0xf]
      %v3409 = vld [vmem:[%s3319 + $0x164] sm:$0xf]
      %v3410 = vld [vmem:[%s3319 + $0x168] sm:$0xf]
      %v3411 = vld [vmem:[%s3319 + $0x16c] sm:$0xf]
      %v3412 = vld [vmem:[%s3319 + $0x170] sm:$0xf]
      %v3413 = vld [vmem:[%s3319 + $0x174] sm:$0xf]
      %v3414 = vld [vmem:[%s3319 + $0x178] sm:$0xf]
      %v3415 = vld [vmem:[%s3319 + $0x17c] sm:$0xf]
      %v3512 = vunpack.c.l.b16 %v3320
      %v3513 = vunpack.c.l.b16 %v3321
      %v3514 = vunpack.c.l.b16 %v3322
      %v3515 = vunpack.c.l.b16 %v3323
      %v3516 = vunpack.c.l.b16 %v3324
      %v3517 = vunpack.c.l.b16 %v3325
      %v3518 = vunpack.c.l.b16 %v3326
      %v3519 = vunpack.c.l.b16 %v3327
      %v3520 = vunpack.c.l.b16 %v3328
      %v3521 = vunpack.c.l.b16 %v3329
      %v3522 = vunpack.c.l.b16 %v3330
      %v3523 = vunpack.c.l.b16 %v3331
      %v3524 = vunpack.c.l.b16 %v3332
      %v3525 = vunpack.c.l.b16 %v3333
      %v3526 = vunpack.c.l.b16 %v3334
      %v3527 = vunpack.c.l.b16 %v3335
      %v3528 = vunpack.c.l.b16 %v3336
      %v3529 = vunpack.c.l.b16 %v3337
      %v3530 = vunpack.c.l.b16 %v3338
      %v3531 = vunpack.c.l.b16 %v3339
      %v3532 = vunpack.c.l.b16 %v3340
      %v3533 = vunpack.c.l.b16 %v3341
      %v3534 = vunpack.c.l.b16 %v3342
      %v3535 = vunpack.c.l.b16 %v3343
      %v3536 = vunpack.c.l.b16 %v3344
      %v3537 = vunpack.c.l.b16 %v3345
      %v3538 = vunpack.c.l.b16 %v3346
      %v3539 = vunpack.c.l.b16 %v3347
      %v3540 = vunpack.c.l.b16 %v3348
      %v3541 = vunpack.c.l.b16 %v3349
      %v3542 = vunpack.c.l.b16 %v3350
      %v3543 = vunpack.c.l.b16 %v3351
      %v3544 = vunpack.c.l.b16 %v3352
      %v3545 = vunpack.c.l.b16 %v3353
      %v3546 = vunpack.c.l.b16 %v3354
      %v3547 = vunpack.c.l.b16 %v3355
      %v3548 = vunpack.c.l.b16 %v3356
      %v3549 = vunpack.c.l.b16 %v3357
      %v3550 = vunpack.c.l.b16 %v3358
      %v3551 = vunpack.c.l.b16 %v3359
      %v3552 = vunpack.c.l.b16 %v3360
      %v3553 = vunpack.c.l.b16 %v3361
      %v3554 = vunpack.c.l.b16 %v3362
      %v3555 = vunpack.c.l.b16 %v3363
      %v3556 = vunpack.c.l.b16 %v3364
      %v3557 = vunpack.c.l.b16 %v3365
      %v3558 = vunpack.c.l.b16 %v3366
      %v3559 = vunpack.c.l.b16 %v3367
      %v3560 = vunpack.c.l.b16 %v3368
      %v3561 = vunpack.c.l.b16 %v3369
      %v3562 = vunpack.c.l.b16 %v3370
      %v3563 = vunpack.c.l.b16 %v3371
      %v3564 = vunpack.c.l.b16 %v3372
      %v3565 = vunpack.c.l.b16 %v3373
      %v3566 = vunpack.c.l.b16 %v3374
      %v3567 = vunpack.c.l.b16 %v3375
      %v3568 = vunpack.c.l.b16 %v3376
      %v3569 = vunpack.c.l.b16 %v3377
      %v3570 = vunpack.c.l.b16 %v3378
      %v3571 = vunpack.c.l.b16 %v3379
      %v3572 = vunpack.c.l.b16 %v3380
      %v3573 = vunpack.c.l.b16 %v3381
      %v3574 = vunpack.c.l.b16 %v3382
      %v3575 = vunpack.c.l.b16 %v3383
      %v3576 = vunpack.c.l.b16 %v3384
      %v3577 = vunpack.c.l.b16 %v3385
      %v3578 = vunpack.c.l.b16 %v3386
      %v3579 = vunpack.c.l.b16 %v3387
      %v3580 = vunpack.c.l.b16 %v3388
      %v3581 = vunpack.c.l.b16 %v3389
      %v3582 = vunpack.c.l.b16 %v3390
      %v3583 = vunpack.c.l.b16 %v3391
      %v3584 = vunpack.c.l.b16 %v3392
      %v3585 = vunpack.c.l.b16 %v3393
      %v3586 = vunpack.c.l.b16 %v3394
      %v3587 = vunpack.c.l.b16 %v3395
      %v3588 = vunpack.c.l.b16 %v3396
      %v3589 = vunpack.c.l.b16 %v3397
      %v3590 = vunpack.c.l.b16 %v3398
      %v3591 = vunpack.c.l.b16 %v3399
      %v3592 = vunpack.c.l.b16 %v3400
      %v3593 = vunpack.c.l.b16 %v3401
      %v3594 = vunpack.c.l.b16 %v3402
      %v3595 = vunpack.c.l.b16 %v3403
      %v3596 = vunpack.c.l.b16 %v3404
      %v3597 = vunpack.c.l.b16 %v3405
      %v3598 = vunpack.c.l.b16 %v3406
      %v3599 = vunpack.c.l.b16 %v3407
      %v3600 = vunpack.c.l.b16 %v3408
      %v3601 = vunpack.c.l.b16 %v3409
      %v3602 = vunpack.c.l.b16 %v3410
      %v3603 = vunpack.c.l.b16 %v3411
      %v3604 = vunpack.c.l.b16 %v3412
      %v3605 = vunpack.c.l.b16 %v3413
      %v3606 = vunpack.c.l.b16 %v3414
      %v3607 = vunpack.c.l.b16 %v3415
      %v3608 = vpack.c.b16 %v3513, %v3512
      %v3609 = vpack.c.b16 %v3515, %v3514
      %v3610 = vpack.c.b16 %v3517, %v3516
      %v3611 = vpack.c.b16 %v3519, %v3518
      %v3612 = vpack.c.b16 %v3521, %v3520
      %v3613 = vpack.c.b16 %v3523, %v3522
      %v3614 = vpack.c.b16 %v3525, %v3524
      %v3615 = vpack.c.b16 %v3527, %v3526
      %v3616 = vpack.c.b16 %v3529, %v3528
      %v3617 = vpack.c.b16 %v3531, %v3530
      %v3618 = vpack.c.b16 %v3533, %v3532
      %v3619 = vpack.c.b16 %v3535, %v3534
      %v3620 = vpack.c.b16 %v3537, %v3536
      %v3621 = vpack.c.b16 %v3539, %v3538
      %v3622 = vpack.c.b16 %v3541, %v3540
      %v3623 = vpack.c.b16 %v3543, %v3542
      %v3624 = vpack.c.b16 %v3545, %v3544
      %v3625 = vpack.c.b16 %v3547, %v3546
      %v3626 = vpack.c.b16 %v3549, %v3548
      %v3627 = vpack.c.b16 %v3551, %v3550
      %v3628 = vpack.c.b16 %v3553, %v3552
      %v3629 = vpack.c.b16 %v3555, %v3554
      %v3630 = vpack.c.b16 %v3557, %v3556
      %v3631 = vpack.c.b16 %v3559, %v3558
      %v3632 = vpack.c.b16 %v3561, %v3560
      %v3633 = vpack.c.b16 %v3563, %v3562
      %v3634 = vpack.c.b16 %v3565, %v3564
      %v3635 = vpack.c.b16 %v3567, %v3566
      %v3636 = vpack.c.b16 %v3569, %v3568
      %v3637 = vpack.c.b16 %v3571, %v3570
      %v3638 = vpack.c.b16 %v3573, %v3572
      %v3639 = vpack.c.b16 %v3575, %v3574
      %v3640 = vpack.c.b16 %v3577, %v3576
      %v3641 = vpack.c.b16 %v3579, %v3578
      %v3642 = vpack.c.b16 %v3581, %v3580
      %v3643 = vpack.c.b16 %v3583, %v3582
      %v3644 = vpack.c.b16 %v3585, %v3584
      %v3645 = vpack.c.b16 %v3587, %v3586
      %v3646 = vpack.c.b16 %v3589, %v3588
      %v3647 = vpack.c.b16 %v3591, %v3590
      %v3648 = vpack.c.b16 %v3593, %v3592
      %v3649 = vpack.c.b16 %v3595, %v3594
      %v3650 = vpack.c.b16 %v3597, %v3596
      %v3651 = vpack.c.b16 %v3599, %v3598
      %v3652 = vpack.c.b16 %v3601, %v3600
      %v3653 = vpack.c.b16 %v3603, %v3602
      %v3654 = vpack.c.b16 %v3605, %v3604
      %v3655 = vpack.c.b16 %v3607, %v3606
      %3704 = vmatprep.subr.bf16.mxu0 0
      %3705 = vmatpush1.bf16.msra.mxu0 %v3608
      %3706 = vmatprep.subr.bf16.mxu0 0
      %3707 = vmatpush1.bf16.msra.mxu0 %v3609
      %3708 = vmatprep.subr.bf16.mxu0 0
      %3709 = vmatpush1.bf16.msra.mxu0 %v3610
      %3710 = vmatprep.subr.bf16.mxu0 0
      %3711 = vmatpush1.bf16.msra.mxu0 %v3611
      %3712 = vmatprep.subr.bf16.mxu0 0
      %3713 = vmatpush1.bf16.msra.mxu0 %v3612
      %3714 = vmatprep.subr.bf16.mxu0 0
      %3715 = vmatpush1.bf16.msra.mxu0 %v3613
      %3716 = vmatprep.subr.bf16.mxu0 0
      %3717 = vmatpush1.bf16.msra.mxu0 %v3614
      %3718 = vmatprep.subr.bf16.mxu0 0
      %3719 = vmatpush1.bf16.msra.mxu0 %v3615
      %3720 = vmatprep.subr.bf16.mxu0 0
      %3721 = vmatpush1.bf16.msra.mxu0 %v3616
      %3722 = vmatprep.subr.bf16.mxu0 0
      %3723 = vmatpush1.bf16.msra.mxu0 %v3617
      %3724 = vmatprep.subr.bf16.mxu0 0
      %3725 = vmatpush1.bf16.msra.mxu0 %v3618
      %3726 = vmatprep.subr.bf16.mxu0 0
      %3727 = vmatpush1.bf16.msra.mxu0 %v3619
      %3728 = vmatprep.subr.bf16.mxu0 0
      %3729 = vmatpush1.bf16.msra.mxu0 %v3620
      %3730 = vmatprep.subr.bf16.mxu0 0
      %3731 = vmatpush1.bf16.msra.mxu0 %v3621
      %3732 = vmatprep.subr.bf16.mxu0 0
      %3733 = vmatpush1.bf16.msra.mxu0 %v3622
      %3734 = vmatprep.subr.bf16.mxu0 0
      %3735 = vmatpush1.bf16.msra.mxu0 %v3623
      %3736 = vmatprep.mubr.bf16.mxu0 %v3224
      %3737 = vmatmul.mubr.bf16.gmra.mrb[0].mxu0 %v3223
      %v3738 = vpop.f32.mrb[0].mxu0
      %v3739 = vadd.f32 0.0, %v3738
      %v3740 = vpop.f32.mrb[0].mxu0
      %v3741 = vpop.f32.mrb[0].mxu0
      %v3742 = vadd.f32 0.0, %v3741
      %v3743 = vpop.f32.mrb[0].mxu0
      %3744 = vmatprep.mubr.bf16.mxu0 %v3230
      %3745 = vmatmul.mubr.bf16.gmra.mrb[0].mxu0 %v3229
      %v3746 = vpop.f32.mrb[0].mxu0
      %v3747 = vadd.f32 0.0, %v3746
      %v3748 = vpop.f32.mrb[0].mxu0
      %v3749 = vpop.f32.mrb[0].mxu0
      %v3750 = vadd.f32 0.0, %v3749
      %v3751 = vpop.f32.mrb[0].mxu0
      %3752 = vmatprep.mubr.bf16.mxu0 %v3236
      %3753 = vmatmul.mubr.bf16.gmra.mrb[0].mxu0 %v3235
      %v3754 = vpop.f32.mrb[0].mxu0
      %v3755 = vadd.f32 0.0, %v3754
      %v3756 = vpop.f32.mrb[0].mxu0
      %v3757 = vpop.f32.mrb[0].mxu0
      %v3758 = vadd.f32 0.0, %v3757
      %v3759 = vpop.f32.mrb[0].mxu0
      %3760 = vmatprep.mubr.bf16.mxu0 %v3242
      %3761 = vmatmul.mubr.bf16.gmra.mrb[0].mxu0 %v3241
      %v3762 = vpop.f32.mrb[0].mxu0
      %v3763 = vadd.f32 0.0, %v3762
      %v3764 = vpop.f32.mrb[0].mxu0
      %v3765 = vpop.f32.mrb[0].mxu0
      %v3766 = vadd.f32 0.0, %v3765
      %v3767 = vpop.f32.mrb[0].mxu0
      %3768 = vmatprep.mubr.bf16.mxu0 %v3248
      %3769 = vmatmul.mubr.bf16.gmra.mrb[0].mxu0 %v3247
      %v3770 = vpop.f32.mrb[0].mxu0
      %v3771 = vadd.f32 0.0, %v3770
      %v3772 = vpop.f32.mrb[0].mxu0
      %v3773 = vpop.f32.mrb[0].mxu0
      %v3774 = vadd.f32 0.0, %v3773
      %v3775 = vpop.f32.mrb[0].mxu0
      %3776 = vmatprep.mubr.bf16.mxu0 %v3254
      %3777 = vmatmul.mubr.bf16.gmra.mrb[0].mxu0 %v3253
      %v3778 = vpop.f32.mrb[0].mxu0
      %v3779 = vadd.f32 0.0, %v3778
      %v3780 = vpop.f32.mrb[0].mxu0
      %v3781 = vpop.f32.mrb[0].mxu0
      %v3782 = vadd.f32 0.0, %v3781
      %v3783 = vpop.f32.mrb[0].mxu0
      %3784 = vmatprep.mubr.bf16.mxu0 %v3260
      %3785 = vmatmul.mubr.bf16.gmra.mrb[0].mxu0 %v3259
      %v3786 = vpop.f32.mrb[0].mxu0
      %v3787 = vadd.f32 0.0, %v3786
      %v3788 = vpop.f32.mrb[0].mxu0
      %v3789 = vpop.f32.mrb[0].mxu0
      %v3790 = vadd.f32 0.0, %v3789
      %v3791 = vpop.f32.mrb[0].mxu0
      %3792 = vmatprep.mubr.bf16.mxu0 %v3266
      %3793 = vmatmul.mubr.bf16.gmra.mrb[0].mxu0 %v3265
      %v3794 = vpop.f32.mrb[0].mxu0
      %v3795 = vadd.f32 0.0, %v3794
      %v3796 = vpop.f32.mrb[0].mxu0
      %v3797 = vpop.f32.mrb[0].mxu0
      %v3798 = vadd.f32 0.0, %v3797
      %v3799 = vpop.f32.mrb[0].mxu0
      %3800 = vmatprep.mubr.bf16.mxu0 %v3272
      %3801 = vmatmul.mubr.bf16.gmra.mrb[0].mxu0 %v3271
      %v3802 = vpop.f32.mrb[0].mxu0
      %v3803 = vadd.f32 0.0, %v3802
      %v3804 = vpop.f32.mrb[0].mxu0
      %v3805 = vpop.f32.mrb[0].mxu0
      %v3806 = vadd.f32 0.0, %v3805
      %v3807 = vpop.f32.mrb[0].mxu0
      %3808 = vmatprep.mubr.bf16.mxu0 %v3278
      %3809 = vmatmul.mubr.bf16.gmra.mrb[0].mxu0 %v3277
      %v3810 = vpop.f32.mrb[0].mxu0
      %v3811 = vadd.f32 0.0, %v3810
      %v3812 = vpop.f32.mrb[0].mxu0
      %v3813 = vpop.f32.mrb[0].mxu0
      %v3814 = vadd.f32 0.0, %v3813
      %v3815 = vpop.f32.mrb[0].mxu0
      %3816 = vmatprep.mubr.bf16.mxu0 %v3284
      %3817 = vmatmul.mubr.bf16.gmra.mrb[0].mxu0 %v3283
      %v3818 = vpop.f32.mrb[0].mxu0
      %v3819 = vadd.f32 0.0, %v3818
      %v3820 = vpop.f32.mrb[0].mxu0
      %v3821 = vpop.f32.mrb[0].mxu0
      %v3822 = vadd.f32 0.0, %v3821
      %v3823 = vpop.f32.mrb[0].mxu0
      %3824 = vmatprep.mubr.bf16.mxu0 %v3290
      %3825 = vmatmul.mubr.bf16.gmra.mrb[0].mxu0 %v3289
      %v3826 = vpop.f32.mrb[0].mxu0
      %v3827 = vadd.f32 0.0, %v3826
      %v3828 = vpop.f32.mrb[0].mxu0
      %v3829 = vpop.f32.mrb[0].mxu0
      %v3830 = vadd.f32 0.0, %v3829
      %v3831 = vpop.f32.mrb[0].mxu0
      %3832 = vmatprep.mubr.bf16.mxu0 %v3296
      %3833 = vmatmul.mubr.bf16.gmra.mrb[0].mxu0 %v3295
      %v3834 = vpop.f32.mrb[0].mxu0
      %v3835 = vadd.f32 0.0, %v3834
      %v3836 = vpop.f32.mrb[0].mxu0
      %v3837 = vpop.f32.mrb[0].mxu0
      %v3838 = vadd.f32 0.0, %v3837
      %v3839 = vpop.f32.mrb[0].mxu0
      %3840 = vmatprep.mubr.bf16.mxu0 %v3302
      %3841 = vmatmul.mubr.bf16.gmra.mrb[0].mxu0 %v3301
      %v3842 = vpop.f32.mrb[0].mxu0
      %v3843 = vadd.f32 0.0, %v3842
      %v3844 = vpop.f32.mrb[0].mxu0
      %v3845 = vpop.f32.mrb[0].mxu0
      %v3846 = vadd.f32 0.0, %v3845
      %v3847 = vpop.f32.mrb[0].mxu0
      %3848 = vmatprep.mubr.bf16.mxu0 %v3308
      %3849 = vmatmul.mubr.bf16.gmra.mrb[0].mxu0 %v3307
      %v3850 = vpop.f32.mrb[0].mxu0
      %v3851 = vadd.f32 0.0, %v3850
      %v3852 = vpop.f32.mrb[0].mxu0
      %v3853 = vpop.f32.mrb[0].mxu0
      %v3854 = vadd.f32 0.0, %v3853
      %v3855 = vpop.f32.mrb[0].mxu0
      %3856 = vmatprep.mubr.bf16.mxu0 %v3314
      %3857 = vmatmul.mubr.bf16.gmra.mrb[0].mxu0 %v3313
      %v3858 = vpop.f32.mrb[0].mxu0
      %v3859 = vadd.f32 0.0, %v3858
      %v3860 = vpop.f32.mrb[0].mxu0
      %v3861 = vpop.f32.mrb[0].mxu0
      %v3862 = vadd.f32 0.0, %v3861
      %v3863 = vpop.f32.mrb[0].mxu0
      %3864 = vdwg.mxu0
      %3865 = vmatprep.subr.bf16.mxu0 0
      %3866 = vmatpush1.bf16.msra.mxu0 %v3624
      %3867 = vmatprep.subr.bf16.mxu0 0
      %3868 = vmatpush1.bf16.msra.mxu0 %v3625
      %3869 = vmatprep.subr.bf16.mxu0 0
      %3870 = vmatpush1.bf16.msra.mxu0 %v3626
      %3871 = vmatprep.subr.bf16.mxu0 0
      %3872 = vmatpush1.bf16.msra.mxu0 %v3627
      %3873 = vmatprep.subr.bf16.mxu0 0
      %3874 = vmatpush1.bf16.msra.mxu0 %v3628
      %3875 = vmatprep.subr.bf16.mxu0 0
      %3876 = vmatpush1.bf16.msra.mxu0 %v3629
      %3877 = vmatprep.subr.bf16.mxu0 0
      %3878 = vmatpush1.bf16.msra.mxu0 %v3630
      %3879 = vmatprep.subr.bf16.mxu0 0
      %3880 = vmatpush1.bf16.msra.mxu0 %v3631
      %3881 = vmatprep.subr.bf16.mxu0 0
      %3882 = vmatpush1.bf16.msra.mxu0 %v3632
      %3883 = vmatprep.subr.bf16.mxu0 0
      %3884 = vmatpush1.bf16.msra.mxu0 %v3633
      %3885 = vmatprep.subr.bf16.mxu0 0
      %3886 = vmatpush1.bf16.msra.mxu0 %v3634
      %3887 = vmatprep.subr.bf16.mxu0 0
      %3888 = vmatpush1.bf16.msra.mxu0 %v3635
      %3889 = vmatprep.subr.bf16.mxu0 0
      %3890 = vmatpush1.bf16.msra.mxu0 %v3636
      %3891 = vmatprep.subr.bf16.mxu0 0
      %3892 = vmatpush1.bf16.msra.mxu0 %v3637
      %3893 = vmatprep.subr.bf16.mxu0 0
      %3894 = vmatpush1.bf16.msra.mxu0 %v3638
      %3895 = vmatprep.subr.bf16.mxu0 0
      %3896 = vmatpush1.bf16.msra.mxu0 %v3639
      %3897 = vmatprep.mubr.bf16.mxu0 %v3226
      %3898 = vmatmul.mubr.bf16.gmra.mrb[0].mxu0 %v3225
      %v3899 = vpop.f32.mrb[0].mxu0
      %v3900 = vadd.f32 %v3739, %v3899
      %v3901 = vpop.f32.mrb[0].mxu0
      %v3902 = vpop.f32.mrb[0].mxu0
      %v3903 = vadd.f32 %v3742, %v3902
      %v3904 = vpop.f32.mrb[0].mxu0
      %3905 = vmatprep.mubr.bf16.mxu0 %v3232
      %3906 = vmatmul.mubr.bf16.gmra.mrb[0].mxu0 %v3231
      %v3907 = vpop.f32.mrb[0].mxu0
      %v3908 = vadd.f32 %v3747, %v3907
      %v3909 = vpop.f32.mrb[0].mxu0
      %v3910 = vpop.f32.mrb[0].mxu0
      %v3911 = vadd.f32 %v3750, %v3910
      %v3912 = vpop.f32.mrb[0].mxu0
      %3913 = vmatprep.mubr.bf16.mxu0 %v3238
      %3914 = vmatmul.mubr.bf16.gmra.mrb[0].mxu0 %v3237
      %v3915 = vpop.f32.mrb[0].mxu0
      %v3916 = vadd.f32 %v3755, %v3915
      %v3917 = vpop.f32.mrb[0].mxu0
      %v3918 = vpop.f32.mrb[0].mxu0
      %v3919 = vadd.f32 %v3758, %v3918
      %v3920 = vpop.f32.mrb[0].mxu0
      %3921 = vmatprep.mubr.bf16.mxu0 %v3244
      %3922 = vmatmul.mubr.bf16.gmra.mrb[0].mxu0 %v3243
      %v3923 = vpop.f32.mrb[0].mxu0
      %v3924 = vadd.f32 %v3763, %v3923
      %v3925 = vpop.f32.mrb[0].mxu0
      %v3926 = vpop.f32.mrb[0].mxu0
      %v3927 = vadd.f32 %v3766, %v3926
      %v3928 = vpop.f32.mrb[0].mxu0
      %3929 = vmatprep.mubr.bf16.mxu0 %v3250
      %3930 = vmatmul.mubr.bf16.gmra.mrb[0].mxu0 %v3249
      %v3931 = vpop.f32.mrb[0].mxu0
      %v3932 = vadd.f32 %v3771, %v3931
      %v3933 = vpop.f32.mrb[0].mxu0
      %v3934 = vpop.f32.mrb[0].mxu0
      %v3935 = vadd.f32 %v3774, %v3934
      %v3936 = vpop.f32.mrb[0].mxu0
      %3937 = vmatprep.mubr.bf16.mxu0 %v3256
      %3938 = vmatmul.mubr.bf16.gmra.mrb[0].mxu0 %v3255
      %v3939 = vpop.f32.mrb[0].mxu0
      %v3940 = vadd.f32 %v3779, %v3939
      %v3941 = vpop.f32.mrb[0].mxu0
      %v3942 = vpop.f32.mrb[0].mxu0
      %v3943 = vadd.f32 %v3782, %v3942
      %v3944 = vpop.f32.mrb[0].mxu0
      %3945 = vmatprep.mubr.bf16.mxu0 %v3262
      %3946 = vmatmul.mubr.bf16.gmra.mrb[0].mxu0 %v3261
      %v3947 = vpop.f32.mrb[0].mxu0
      %v3948 = vadd.f32 %v3787, %v3947
      %v3949 = vpop.f32.mrb[0].mxu0
      %v3950 = vpop.f32.mrb[0].mxu0
      %v3951 = vadd.f32 %v3790, %v3950
      %v3952 = vpop.f32.mrb[0].mxu0
      %3953 = vmatprep.mubr.bf16.mxu0 %v3268
      %3954 = vmatmul.mubr.bf16.gmra.mrb[0].mxu0 %v3267
      %v3955 = vpop.f32.mrb[0].mxu0
      %v3956 = vadd.f32 %v3795, %v3955
      %v3957 = vpop.f32.mrb[0].mxu0
      %v3958 = vpop.f32.mrb[0].mxu0
      %v3959 = vadd.f32 %v3798, %v3958
      %v3960 = vpop.f32.mrb[0].mxu0
      %3961 = vmatprep.mubr.bf16.mxu0 %v3274
      %3962 = vmatmul.mubr.bf16.gmra.mrb[0].mxu0 %v3273
      %v3963 = vpop.f32.mrb[0].mxu0
      %v3964 = vadd.f32 %v3803, %v3963
      %v3965 = vpop.f32.mrb[0].mxu0
      %v3966 = vpop.f32.mrb[0].mxu0
      %v3967 = vadd.f32 %v3806, %v3966
      %v3968 = vpop.f32.mrb[0].mxu0
      %3969 = vmatprep.mubr.bf16.mxu0 %v3280
      %3970 = vmatmul.mubr.bf16.gmra.mrb[0].mxu0 %v3279
      %v3971 = vpop.f32.mrb[0].mxu0
      %v3972 = vadd.f32 %v3811, %v3971
      %v3973 = vpop.f32.mrb[0].mxu0
      %v3974 = vpop.f32.mrb[0].mxu0
      %v3975 = vadd.f32 %v3814, %v3974
      %v3976 = vpop.f32.mrb[0].mxu0
      %3977 = vmatprep.mubr.bf16.mxu0 %v3286
      %3978 = vmatmul.mubr.bf16.gmra.mrb[0].mxu0 %v3285
      %v3979 = vpop.f32.mrb[0].mxu0
      %v3980 = vadd.f32 %v3819, %v3979
      %v3981 = vpop.f32.mrb[0].mxu0
      %v3982 = vpop.f32.mrb[0].mxu0
      %v3983 = vadd.f32 %v3822, %v3982
      %v3984 = vpop.f32.mrb[0].mxu0
      %3985 = vmatprep.mubr.bf16.mxu0 %v3292
      %3986 = vmatmul.mubr.bf16.gmra.mrb[0].mxu0 %v3291
      %v3987 = vpop.f32.mrb[0].mxu0
      %v3988 = vadd.f32 %v3827, %v3987
      %v3989 = vpop.f32.mrb[0].mxu0
      %v3990 = vpop.f32.mrb[0].mxu0
      %v3991 = vadd.f32 %v3830, %v3990
      %v3992 = vpop.f32.mrb[0].mxu0
      %3993 = vmatprep.mubr.bf16.mxu0 %v3298
      %3994 = vmatmul.mubr.bf16.gmra.mrb[0].mxu0 %v3297
      %v3995 = vpop.f32.mrb[0].mxu0
      %v3996 = vadd.f32 %v3835, %v3995
      %v3997 = vpop.f32.mrb[0].mxu0
      %v3998 = vpop.f32.mrb[0].mxu0
      %v3999 = vadd.f32 %v3838, %v3998
      %v4000 = vpop.f32.mrb[0].mxu0
      %4001 = vmatprep.mubr.bf16.mxu0 %v3304
      %4002 = vmatmul.mubr.bf16.gmra.mrb[0].mxu0 %v3303
      %v4003 = vpop.f32.mrb[0].mxu0
      %v4004 = vadd.f32 %v3843, %v4003
      %v4005 = vpop.f32.mrb[0].mxu0
      %v4006 = vpop.f32.mrb[0].mxu0
      %v4007 = vadd.f32 %v3846, %v4006
      %v4008 = vpop.f32.mrb[0].mxu0
      %4009 = vmatprep.mubr.bf16.mxu0 %v3310
      %4010 = vmatmul.mubr.bf16.gmra.mrb[0].mxu0 %v3309
      %v4011 = vpop.f32.mrb[0].mxu0
      %v4012 = vadd.f32 %v3851, %v4011
      %v4013 = vpop.f32.mrb[0].mxu0
      %v4014 = vpop.f32.mrb[0].mxu0
      %v4015 = vadd.f32 %v3854, %v4014
      %v4016 = vpop.f32.mrb[0].mxu0
      %4017 = vmatprep.mubr.bf16.mxu0 %v3316
      %4018 = vmatmul.mubr.bf16.gmra.mrb[0].mxu0 %v3315
      %v4019 = vpop.f32.mrb[0].mxu0
      %v4020 = vadd.f32 %v3859, %v4019
      %v4021 = vpop.f32.mrb[0].mxu0
      %v4022 = vpop.f32.mrb[0].mxu0
      %v4023 = vadd.f32 %v3862, %v4022
      %v4024 = vpop.f32.mrb[0].mxu0
      %4025 = vdwg.mxu0
      %4026 = vmatprep.subr.bf16.mxu0 0
      %4027 = vmatpush1.bf16.msra.mxu0 %v3640
      %4028 = vmatprep.subr.bf16.mxu0 0
      %4029 = vmatpush1.bf16.msra.mxu0 %v3641
      %4030 = vmatprep.subr.bf16.mxu0 0
      %4031 = vmatpush1.bf16.msra.mxu0 %v3642
      %4032 = vmatprep.subr.bf16.mxu0 0
      %4033 = vmatpush1.bf16.msra.mxu0 %v3643
      %4034 = vmatprep.subr.bf16.mxu0 0
      %4035 = vmatpush1.bf16.msra.mxu0 %v3644
      %4036 = vmatprep.subr.bf16.mxu0 0
      %4037 = vmatpush1.bf16.msra.mxu0 %v3645
      %4038 = vmatprep.subr.bf16.mxu0 0
      %4039 = vmatpush1.bf16.msra.mxu0 %v3646
      %4040 = vmatprep.subr.bf16.mxu0 0
      %4041 = vmatpush1.bf16.msra.mxu0 %v3647
      %4042 = vmatprep.subr.bf16.mxu0 0
      %4043 = vmatpush1.bf16.msra.mxu0 %v3648
      %4044 = vmatprep.subr.bf16.mxu0 0
      %4045 = vmatpush1.bf16.msra.mxu0 %v3649
      %4046 = vmatprep.subr.bf16.mxu0 0
      %4047 = vmatpush1.bf16.msra.mxu0 %v3650
      %4048 = vmatprep.subr.bf16.mxu0 0
      %4049 = vmatpush1.bf16.msra.mxu0 %v3651
      %4050 = vmatprep.subr.bf16.mxu0 0
      %4051 = vmatpush1.bf16.msra.mxu0 %v3652
      %4052 = vmatprep.subr.bf16.mxu0 0
      %4053 = vmatpush1.bf16.msra.mxu0 %v3653
      %4054 = vmatprep.subr.bf16.mxu0 0
      %4055 = vmatpush1.bf16.msra.mxu0 %v3654
      %4056 = vmatprep.subr.bf16.mxu0 0
      %4057 = vmatpush1.bf16.msra.mxu0 %v3655
      %4058 = vmatprep.mubr.bf16.mxu0 %v3228
      %4059 = vmatmul.mubr.bf16.gmra.mrb[0].mxu0 %v3227
      %v4060 = vpop.f32.mrb[0].mxu0
      %v4061 = vadd.f32 %v3900, %v4060
      %v4062 = vpop.f32.mrb[0].mxu0
      %v4063 = vpop.f32.mrb[0].mxu0
      %v4064 = vadd.f32 %v3903, %v4063
      %v4065 = vpop.f32.mrb[0].mxu0
      %4066 = vmatprep.mubr.bf16.mxu0 %v3234
      %4067 = vmatmul.mubr.bf16.gmra.mrb[0].mxu0 %v3233
      %v4068 = vpop.f32.mrb[0].mxu0
      %v4069 = vadd.f32 %v3908, %v4068
      %v4070 = vpop.f32.mrb[0].mxu0
      %v4071 = vpop.f32.mrb[0].mxu0
      %v4072 = vadd.f32 %v3911, %v4071
      %v4073 = vpop.f32.mrb[0].mxu0
      %4074 = vmatprep.mubr.bf16.mxu0 %v3240
      %4075 = vmatmul.mubr.bf16.gmra.mrb[0].mxu0 %v3239
      %v4076 = vpop.f32.mrb[0].mxu0
      %v4077 = vadd.f32 %v3916, %v4076
      %v4078 = vpop.f32.mrb[0].mxu0
      %v4079 = vpop.f32.mrb[0].mxu0
      %v4080 = vadd.f32 %v3919, %v4079
      %v4081 = vpop.f32.mrb[0].mxu0
      %4082 = vmatprep.mubr.bf16.mxu0 %v3246
      %4083 = vmatmul.mubr.bf16.gmra.mrb[0].mxu0 %v3245
      %v4084 = vpop.f32.mrb[0].mxu0
      %v4085 = vadd.f32 %v3924, %v4084
      %v4086 = vpop.f32.mrb[0].mxu0
      %v4087 = vpop.f32.mrb[0].mxu0
      %v4088 = vadd.f32 %v3927, %v4087
      %v4089 = vpop.f32.mrb[0].mxu0
      %4090 = vmatprep.mubr.bf16.mxu0 %v3252
      %4091 = vmatmul.mubr.bf16.gmra.mrb[0].mxu0 %v3251
      %v4092 = vpop.f32.mrb[0].mxu0
      %v4093 = vadd.f32 %v3932, %v4092
      %v4094 = vpop.f32.mrb[0].mxu0
      %v4095 = vpop.f32.mrb[0].mxu0
      %v4096 = vadd.f32 %v3935, %v4095
      %v4097 = vpop.f32.mrb[0].mxu0
      %4098 = vmatprep.mubr.bf16.mxu0 %v3258
      %4099 = vmatmul.mubr.bf16.gmra.mrb[0].mxu0 %v3257
      %v4100 = vpop.f32.mrb[0].mxu0
      %v4101 = vadd.f32 %v3940, %v4100
      %v4102 = vpop.f32.mrb[0].mxu0
      %v4103 = vpop.f32.mrb[0].mxu0
      %v4104 = vadd.f32 %v3943, %v4103
      %v4105 = vpop.f32.mrb[0].mxu0
      %4106 = vmatprep.mubr.bf16.mxu0 %v3264
      %4107 = vmatmul.mubr.bf16.gmra.mrb[0].mxu0 %v3263
      %v4108 = vpop.f32.mrb[0].mxu0
      %v4109 = vadd.f32 %v3948, %v4108
      %v4110 = vpop.f32.mrb[0].mxu0
      %v4111 = vpop.f32.mrb[0].mxu0
      %v4112 = vadd.f32 %v3951, %v4111
      %v4113 = vpop.f32.mrb[0].mxu0
      %4114 = vmatprep.mubr.bf16.mxu0 %v3270
      %4115 = vmatmul.mubr.bf16.gmra.mrb[0].mxu0 %v3269
      %v4116 = vpop.f32.mrb[0].mxu0
      %v4117 = vadd.f32 %v3956, %v4116
      %v4118 = vpop.f32.mrb[0].mxu0
      %v4119 = vpop.f32.mrb[0].mxu0
      %v4120 = vadd.f32 %v3959, %v4119
      %v4121 = vpop.f32.mrb[0].mxu0
      %4122 = vmatprep.mubr.bf16.mxu0 %v3276
      %4123 = vmatmul.mubr.bf16.gmra.mrb[0].mxu0 %v3275
      %v4124 = vpop.f32.mrb[0].mxu0
      %v4125 = vadd.f32 %v3964, %v4124
      %v4126 = vpop.f32.mrb[0].mxu0
      %v4127 = vpop.f32.mrb[0].mxu0
      %v4128 = vadd.f32 %v3967, %v4127
      %v4129 = vpop.f32.mrb[0].mxu0
      %4130 = vmatprep.mubr.bf16.mxu0 %v3282
      %4131 = vmatmul.mubr.bf16.gmra.mrb[0].mxu0 %v3281
      %v4132 = vpop.f32.mrb[0].mxu0
      %v4133 = vadd.f32 %v3972, %v4132
      %v4134 = vpop.f32.mrb[0].mxu0
      %v4135 = vpop.f32.mrb[0].mxu0
      %v4136 = vadd.f32 %v3975, %v4135
      %v4137 = vpop.f32.mrb[0].mxu0
      %4138 = vmatprep.mubr.bf16.mxu0 %v3288
      %4139 = vmatmul.mubr.bf16.gmra.mrb[0].mxu0 %v3287
      %v4140 = vpop.f32.mrb[0].mxu0
      %v4141 = vadd.f32 %v3980, %v4140
      %v4142 = vpop.f32.mrb[0].mxu0
      %v4143 = vpop.f32.mrb[0].mxu0
      %v4144 = vadd.f32 %v3983, %v4143
      %v4145 = vpop.f32.mrb[0].mxu0
      %4146 = vmatprep.mubr.bf16.mxu0 %v3294
      %4147 = vmatmul.mubr.bf16.gmra.mrb[0].mxu0 %v3293
      %v4148 = vpop.f32.mrb[0].mxu0
      %v4149 = vadd.f32 %v3988, %v4148
      %v4150 = vpop.f32.mrb[0].mxu0
      %v4151 = vpop.f32.mrb[0].mxu0
      %v4152 = vadd.f32 %v3991, %v4151
      %v4153 = vpop.f32.mrb[0].mxu0
      %4154 = vmatprep.mubr.bf16.mxu0 %v3300
      %4155 = vmatmul.mubr.bf16.gmra.mrb[0].mxu0 %v3299
      %v4156 = vpop.f32.mrb[0].mxu0
      %v4157 = vadd.f32 %v3996, %v4156
      %v4158 = vpop.f32.mrb[0].mxu0
      %v4159 = vpop.f32.mrb[0].mxu0
      %v4160 = vadd.f32 %v3999, %v4159
      %v4161 = vpop.f32.mrb[0].mxu0
      %4162 = vmatprep.mubr.bf16.mxu0 %v3306
      %4163 = vmatmul.mubr.bf16.gmra.mrb[0].mxu0 %v3305
      %v4164 = vpop.f32.mrb[0].mxu0
      %v4165 = vadd.f32 %v4004, %v4164
      %v4166 = vpop.f32.mrb[0].mxu0
      %v4167 = vpop.f32.mrb[0].mxu0
      %v4168 = vadd.f32 %v4007, %v4167
      %v4169 = vpop.f32.mrb[0].mxu0
      %4170 = vmatprep.mubr.bf16.mxu0 %v3312
      %4171 = vmatmul.mubr.bf16.gmra.mrb[0].mxu0 %v3311
      %v4172 = vpop.f32.mrb[0].mxu0
      %v4173 = vadd.f32 %v4012, %v4172
      %v4174 = vpop.f32.mrb[0].mxu0
      %v4175 = vpop.f32.mrb[0].mxu0
      %v4176 = vadd.f32 %v4015, %v4175
      %v4177 = vpop.f32.mrb[0].mxu0
      %4178 = vmatprep.mubr.bf16.mxu0 %v3318
      %4179 = vmatmul.mubr.bf16.gmra.mrb[0].mxu0 %v3317
      %v4180 = vpop.f32.mrb[0].mxu0
      %v4181 = vadd.f32 %v4020, %v4180
      %v4182 = vpop.f32.mrb[0].mxu0
      %v4183 = vpop.f32.mrb[0].mxu0
      %v4184 = vadd.f32 %v4023, %v4183
      %v4185 = vpop.f32.mrb[0].mxu0
      %4186 = vdwg.mxu0
      %v4187 = vadd.f32 %v3096, %v4061
      %v4188 = vadd.f32 %v3099, %v4064
      %v4189 = vadd.f32 %v3104, %v4069
      %v4190 = vadd.f32 %v3107, %v4072
      %v4191 = vadd.f32 %v3112, %v4077
      %v4192 = vadd.f32 %v3115, %v4080
      %v4193 = vadd.f32 %v3120, %v4085
      %v4194 = vadd.f32 %v3123, %v4088
      %v4195 = vadd.f32 %v3128, %v4093
      %v4196 = vadd.f32 %v3131, %v4096
      %v4197 = vadd.f32 %v3136, %v4101
      %v4198 = vadd.f32 %v3139, %v4104
      %v4199 = vadd.f32 %v3144, %v4109
      %v4200 = vadd.f32 %v3147, %v4112
      %v4201 = vadd.f32 %v3152, %v4117
      %v4202 = vadd.f32 %v3155, %v4120
      %v4203 = vadd.f32 %v3160, %v4125
      %v4204 = vadd.f32 %v3163, %v4128
      %v4205 = vadd.f32 %v3168, %v4133
      %v4206 = vadd.f32 %v3171, %v4136
      %v4207 = vadd.f32 %v3176, %v4141
      %v4208 = vadd.f32 %v3179, %v4144
      %v4209 = vadd.f32 %v3184, %v4149
      %v4210 = vadd.f32 %v3187, %v4152
      %v4211 = vadd.f32 %v3192, %v4157
      %v4212 = vadd.f32 %v3195, %v4160
      %v4213 = vadd.f32 %v3200, %v4165
      %v4214 = vadd.f32 %v3203, %v4168
      %v4215 = vadd.f32 %v3208, %v4173
      %v4216 = vadd.f32 %v3211, %v4176
      %v4217 = vadd.f32 %v3216, %v4181
      %v4218 = vadd.f32 %v3219, %v4184
      %v4219 = vld [vmem:[%s3] sm:$0x1]
      %v4221 = vlaneseq
      %v4222 = vshrl.u32 %v4221, 7
      %v4223 = vsub.s32 0, %v4222
      %v4224 = vrot.slane %v4219, %v4223
      %v4226 = vmul.f32 %v4187, %v4224
      %v4227 = vmul.f32 %v4188, %v4224
      %v4228 = vmul.f32 %v4189, %v4224
      %v4229 = vmul.f32 %v4190, %v4224
      %v4230 = vmul.f32 %v4191, %v4224
      %v4231 = vmul.f32 %v4192, %v4224
      %v4232 = vmul.f32 %v4193, %v4224
      %v4233 = vmul.f32 %v4194, %v4224
      %v4234 = vmul.f32 %v4195, %v4224
      %v4235 = vmul.f32 %v4196, %v4224
      %v4236 = vmul.f32 %v4197, %v4224
      %v4237 = vmul.f32 %v4198, %v4224
      %v4238 = vmul.f32 %v4199, %v4224
      %v4239 = vmul.f32 %v4200, %v4224
      %v4240 = vmul.f32 %v4201, %v4224
      %v4241 = vmul.f32 %v4202, %v4224
      %v4242 = vmul.f32 %v4203, %v4224
      %v4243 = vmul.f32 %v4204, %v4224
      %v4244 = vmul.f32 %v4205, %v4224
      %v4245 = vmul.f32 %v4206, %v4224
      %v4246 = vmul.f32 %v4207, %v4224
      %v4247 = vmul.f32 %v4208, %v4224
      %v4248 = vmul.f32 %v4209, %v4224
      %v4249 = vmul.f32 %v4210, %v4224
      %v4250 = vmul.f32 %v4211, %v4224
      %v4251 = vmul.f32 %v4212, %v4224
      %v4252 = vmul.f32 %v4213, %v4224
      %v4253 = vmul.f32 %v4214, %v4224
      %v4254 = vmul.f32 %v4215, %v4224
      %v4255 = vmul.f32 %v4216, %v4224
      %v4256 = vmul.f32 %v4217, %v4224
      %v4257 = vmul.f32 %v4218, %v4224
      %v4258 = vld [vmem:[%s4] sm:$0x1]
      %v4260 = vlaneseq
      %v4261 = vshrl.u32 %v4260, 7
      %v4262 = vsub.s32 0, %v4261
      %v4263 = vrot.slane %v4258, %v4262
      %v4265 = vadd.f32 %v4226, %v4263
      %v4266 = vadd.f32 %v4227, %v4263
      %v4267 = vadd.f32 %v4228, %v4263
      %v4268 = vadd.f32 %v4229, %v4263
      %v4269 = vadd.f32 %v4230, %v4263
      %v4270 = vadd.f32 %v4231, %v4263
      %v4271 = vadd.f32 %v4232, %v4263
      %v4272 = vadd.f32 %v4233, %v4263
      %v4273 = vadd.f32 %v4234, %v4263
      %v4274 = vadd.f32 %v4235, %v4263
      %v4275 = vadd.f32 %v4236, %v4263
      %v4276 = vadd.f32 %v4237, %v4263
      %v4277 = vadd.f32 %v4238, %v4263
      %v4278 = vadd.f32 %v4239, %v4263
      %v4279 = vadd.f32 %v4240, %v4263
      %v4280 = vadd.f32 %v4241, %v4263
      %v4281 = vadd.f32 %v4242, %v4263
      %v4282 = vadd.f32 %v4243, %v4263
      %v4283 = vadd.f32 %v4244, %v4263
      %v4284 = vadd.f32 %v4245, %v4263
      %v4285 = vadd.f32 %v4246, %v4263
      %v4286 = vadd.f32 %v4247, %v4263
      %v4287 = vadd.f32 %v4248, %v4263
      %v4288 = vadd.f32 %v4249, %v4263
      %v4289 = vadd.f32 %v4250, %v4263
      %v4290 = vadd.f32 %v4251, %v4263
      %v4291 = vadd.f32 %v4252, %v4263
      %v4292 = vadd.f32 %v4253, %v4263
      %v4293 = vadd.f32 %v4254, %v4263
      %v4294 = vadd.f32 %v4255, %v4263
      %v4295 = vadd.f32 %v4256, %v4263
      %v4296 = vadd.f32 %v4257, %v4263
      %v4297 = vmax.f32 %v4265, 0.0
      %v4298 = vmax.f32 %v4266, 0.0
      %v4299 = vmax.f32 %v4267, 0.0
      %v4300 = vmax.f32 %v4268, 0.0
      %v4301 = vmax.f32 %v4269, 0.0
      %v4302 = vmax.f32 %v4270, 0.0
      %v4303 = vmax.f32 %v4271, 0.0
      %v4304 = vmax.f32 %v4272, 0.0
      %v4305 = vmax.f32 %v4273, 0.0
      %v4306 = vmax.f32 %v4274, 0.0
      %v4307 = vmax.f32 %v4275, 0.0
      %v4308 = vmax.f32 %v4276, 0.0
      %v4309 = vmax.f32 %v4277, 0.0
      %v4310 = vmax.f32 %v4278, 0.0
      %v4311 = vmax.f32 %v4279, 0.0
      %v4312 = vmax.f32 %v4280, 0.0
      %v4313 = vmax.f32 %v4281, 0.0
      %v4314 = vmax.f32 %v4282, 0.0
      %v4315 = vmax.f32 %v4283, 0.0
      %v4316 = vmax.f32 %v4284, 0.0
      %v4317 = vmax.f32 %v4285, 0.0
      %v4318 = vmax.f32 %v4286, 0.0
      %v4319 = vmax.f32 %v4287, 0.0
      %v4320 = vmax.f32 %v4288, 0.0
      %v4321 = vmax.f32 %v4289, 0.0
      %v4322 = vmax.f32 %v4290, 0.0
      %v4323 = vmax.f32 %v4291, 0.0
      %v4324 = vmax.f32 %v4292, 0.0
      %v4325 = vmax.f32 %v4293, 0.0
      %v4326 = vmax.f32 %v4294, 0.0
      %v4327 = vmax.f32 %v4295, 0.0
      %v4328 = vmax.f32 %v4296, 0.0
      %v4329 = vpack.c.bf16 %v4298, %v4297
      %v4330 = vpack.c.bf16 %v4300, %v4299
      %v4331 = vpack.c.bf16 %v4302, %v4301
      %v4332 = vpack.c.bf16 %v4304, %v4303
      %v4333 = vpack.c.bf16 %v4306, %v4305
      %v4334 = vpack.c.bf16 %v4308, %v4307
      %v4335 = vpack.c.bf16 %v4310, %v4309
      %v4336 = vpack.c.bf16 %v4312, %v4311
      %v4337 = vpack.c.bf16 %v4314, %v4313
      %v4338 = vpack.c.bf16 %v4316, %v4315
      %v4339 = vpack.c.bf16 %v4318, %v4317
      %v4340 = vpack.c.bf16 %v4320, %v4319
      %v4341 = vpack.c.bf16 %v4322, %v4321
      %v4342 = vpack.c.bf16 %v4324, %v4323
      %v4343 = vpack.c.bf16 %v4326, %v4325
      %v4344 = vpack.c.bf16 %v4328, %v4327
      %v4361 = vunpack.c.l.b16 %v4329
      %v4362 = vunpack.c.h.b16 %v4329
      %v4363 = vunpack.c.l.b16 %v4330
      %v4364 = vunpack.c.h.b16 %v4330
      %v4365 = vunpack.c.l.b16 %v4331
      %v4366 = vunpack.c.h.b16 %v4331
      %v4367 = vunpack.c.l.b16 %v4332
      %v4368 = vunpack.c.h.b16 %v4332
      %v4369 = vunpack.c.l.b16 %v4333
      %v4370 = vunpack.c.h.b16 %v4333
      %v4371 = vunpack.c.l.b16 %v4334
      %v4372 = vunpack.c.h.b16 %v4334
      %v4373 = vunpack.c.l.b16 %v4335
      %v4374 = vunpack.c.h.b16 %v4335
      %v4375 = vunpack.c.l.b16 %v4336
      %v4376 = vunpack.c.h.b16 %v4336
      %v4377 = vunpack.c.l.b16 %v4337
      %v4378 = vunpack.c.h.b16 %v4337
      %v4379 = vunpack.c.l.b16 %v4338
      %v4380 = vunpack.c.h.b16 %v4338
      %v4381 = vunpack.c.l.b16 %v4339
      %v4382 = vunpack.c.h.b16 %v4339
      %v4383 = vunpack.c.l.b16 %v4340
      %v4384 = vunpack.c.h.b16 %v4340
      %v4385 = vunpack.c.l.b16 %v4341
      %v4386 = vunpack.c.h.b16 %v4341
      %v4387 = vunpack.c.l.b16 %v4342
      %v4388 = vunpack.c.h.b16 %v4342
      %v4389 = vunpack.c.l.b16 %v4343
      %v4390 = vunpack.c.h.b16 %v4343
      %v4391 = vunpack.c.l.b16 %v4344
      %v4392 = vunpack.c.h.b16 %v4344
      %v4393 = vpack.c.b16 %v4361, %v4361
      %v4394 = vpack.c.b16 %v4362, %v4362
      %v4395 = vpack.c.b16 %v4363, %v4363
      %v4396 = vpack.c.b16 %v4364, %v4364
      %v4397 = vpack.c.b16 %v4365, %v4365
      %v4398 = vpack.c.b16 %v4366, %v4366
      %v4399 = vpack.c.b16 %v4367, %v4367
      %v4400 = vpack.c.b16 %v4368, %v4368
      %v4401 = vpack.c.b16 %v4369, %v4369
      %v4402 = vpack.c.b16 %v4370, %v4370
      %v4403 = vpack.c.b16 %v4371, %v4371
      %v4404 = vpack.c.b16 %v4372, %v4372
      %v4405 = vpack.c.b16 %v4373, %v4373
      %v4406 = vpack.c.b16 %v4374, %v4374
      %v4407 = vpack.c.b16 %v4375, %v4375
      %v4408 = vpack.c.b16 %v4376, %v4376
      %v4409 = vpack.c.b16 %v4377, %v4377
      %v4410 = vpack.c.b16 %v4378, %v4378
      %v4411 = vpack.c.b16 %v4379, %v4379
      %v4412 = vpack.c.b16 %v4380, %v4380
      %v4413 = vpack.c.b16 %v4381, %v4381
      %v4414 = vpack.c.b16 %v4382, %v4382
      %v4415 = vpack.c.b16 %v4383, %v4383
      %v4416 = vpack.c.b16 %v4384, %v4384
      %v4417 = vpack.c.b16 %v4385, %v4385
      %v4418 = vpack.c.b16 %v4386, %v4386
      %v4419 = vpack.c.b16 %v4387, %v4387
      %v4420 = vpack.c.b16 %v4388, %v4388
      %v4421 = vpack.c.b16 %v4389, %v4389
      %v4422 = vpack.c.b16 %v4390, %v4390
      %v4423 = vpack.c.b16 %v4391, %v4391
      %v4424 = vpack.c.b16 %v4392, %v4392
      %4457 = vst [vmem:[%s244] sm:$0xf] %v4393
      %4458 = vst [vmem:[%s244 + $0x4] sm:$0xf] %v4394
      %4459 = vst [vmem:[%s244 + $0x8] sm:$0xf] %v4395
      %4460 = vst [vmem:[%s244 + $0xc] sm:$0xf] %v4396
      %4461 = vst [vmem:[%s244 + $0x10] sm:$0xf] %v4397
      %4462 = vst [vmem:[%s244 + $0x14] sm:$0xf] %v4398
      %4463 = vst [vmem:[%s244 + $0x18] sm:$0xf] %v4399
      %4464 = vst [vmem:[%s244 + $0x1c] sm:$0xf] %v4400
      %4465 = vst [vmem:[%s244 + $0x20] sm:$0xf] %v4401
      %4466 = vst [vmem:[%s244 + $0x24] sm:$0xf] %v4402
      %4467 = vst [vmem:[%s244 + $0x28] sm:$0xf] %v4403
      %4468 = vst [vmem:[%s244 + $0x2c] sm:$0xf] %v4404
      %4469 = vst [vmem:[%s244 + $0x30] sm:$0xf] %v4405
      %4470 = vst [vmem:[%s244 + $0x34] sm:$0xf] %v4406
      %4471 = vst [vmem:[%s244 + $0x38] sm:$0xf] %v4407
      %4472 = vst [vmem:[%s244 + $0x3c] sm:$0xf] %v4408
      %4473 = vst [vmem:[%s244 + $0x40] sm:$0xf] %v4409
      %4474 = vst [vmem:[%s244 + $0x44] sm:$0xf] %v4410
      %4475 = vst [vmem:[%s244 + $0x48] sm:$0xf] %v4411
      %4476 = vst [vmem:[%s244 + $0x4c] sm:$0xf] %v4412
      %4477 = vst [vmem:[%s244 + $0x50] sm:$0xf] %v4413
      %4478 = vst [vmem:[%s244 + $0x54] sm:$0xf] %v4414
      %4479 = vst [vmem:[%s244 + $0x58] sm:$0xf] %v4415
      %4480 = vst [vmem:[%s244 + $0x5c] sm:$0xf] %v4416
      %4481 = vst [vmem:[%s244 + $0x60] sm:$0xf] %v4417
      %4482 = vst [vmem:[%s244 + $0x64] sm:$0xf] %v4418
      %4483 = vst [vmem:[%s244 + $0x68] sm:$0xf] %v4419
      %4484 = vst [vmem:[%s244 + $0x6c] sm:$0xf] %v4420
      %4485 = vst [vmem:[%s244 + $0x70] sm:$0xf] %v4421
      %4486 = vst [vmem:[%s244 + $0x74] sm:$0xf] %v4422
      %4487 = vst [vmem:[%s244 + $0x78] sm:$0xf] %v4423
      %4488 = vst [vmem:[%s244 + $0x7c] sm:$0xf] %v4424
      %p4489 = scmp.lt.s32.totalorder %s16, 1
      %s4490 = scalar_select %p4489, %s16, 1
      %s4491 = smul.addr %s4490, 32
      %s4492 = smul.addr %s4491, 4
      %s4493 = scalar_lea.vmem %s5, %s4492
      // Predicated region
      $region41: #{up_block_forward.4} parent=39 // pred_check
        %p4494 = pneg %p149
      $region42: #{up_block_forward.4} parent=39 // pred_check_branch
        %4496 = sbr.rel (%p4494) target = $region44
      $region43: #{up_block_forward.4} parent=39 // pred_region
        _
      $region44: #{up_block_forward.4} parent=39 // pred_fallthru
        _
    $region40: #{up_block_forward.4} parent=5 // pred_fallthru
      _
    %p4497 = scmp.le.s32.totalorder 2, %s11
    // Predicated region
    $region45: #{up_block_forward.4} parent=5 // pred_check
      %p4498 = pneg %p4497
    $region46: #{up_block_forward.4} parent=5 // pred_check_branch
      %4500 = sbr.rel (%p4498) target = $region48
    $region47: #{up_block_forward.4} parent=5 // pred_region
      %s4501 = ssub.s32 %s11, 2
      // Predicated region
      $region49: #{up_block_forward.4} parent=47 // pred_check
        %p4502 = pneg %p155
      $region50: #{up_block_forward.4} parent=47 // pred_check_branch
        %4504 = sbr.rel (%p4502) target = $region52
      $region51: #{up_block_forward.4} parent=47 // pred_region
        %p4505 = scmp.lt.s32.totalorder %s17, 1
        %s4506 = scalar_select %p4505, %s17, 1
        %s4507 = smul.addr %s4506, 32
        %s4508 = smul.addr %s4507, 4
        %s4509 = scalar_lea.vmem %s5, %s4508
      $region52: #{up_block_forward.4} parent=47 // pred_fallthru
        _
    $region48: #{up_block_forward.4} parent=5 // pred_fallthru
      _
  $region6: #{up_block_forward.4} parent=0 // loop_footer
    %s15 = sadd.s32 1, %s11
  $region7: #{up_block_forward.4} parent=0 // loop_footer_branch
    %10 = sbr.rel target = $region3
  $region8: #{up_block_forward.4} parent=0 // loop_exit
    _

</llo_original>
